<compile_context>
chip_gen: v6e
topology: v6e:2x2x1
jax: 0.10.0
libtpu: 0.0.40
codegen_flags: <defaults>
</compile_context>

<pallas_src>
import functools

import jax
import jax.numpy as jnp
from jax.experimental import pallas as pl
from jax.experimental.pallas import tpu as pltpu


def _silu(x):
    return x * jax.nn.sigmoid(x)


def _round_up(n, m):
    return ((n + m - 1) // m) * m


def _num_tensorcores():
    """2 TensorCores per chip on v7x, 1 on v5e/v6e. Best-effort detection."""
    try:
        kind = jax.devices()[0].device_kind.lower()
    except Exception:
        return 1
    return 2 if "v7" in kind else 1


# ----------------------------------------------------------------------------
# Kernel
# ----------------------------------------------------------------------------
def linearvae_kernel(x_ref,
                     w0_ref, b0_ref,
                     w1_ref, b1_ref,
                     w2_ref, b2_ref,
                     out_ref, *, dim_out):
    # trunk: Linear -> (identity norm) -> SiLU   (bf16 MXU inputs, f32 accum)
    x = x_ref[...].astype(jnp.bfloat16)                       # in-kernel cast
    h = jnp.dot(x, w0_ref[...],
                preferred_element_type=jnp.float32) + b0_ref[...]
    h = _silu(h)                                              # (tm, H) f32

    # fused fc_mu / fc_logvar layer-1: one (H, 2H) matmul instead of two (H, H)
    hc = jnp.dot(h.astype(jnp.bfloat16), w1_ref[...],
                 preferred_element_type=jnp.float32) + b1_ref[...]
    hc = _silu(hc)                                            # (tm, 2H) f32

    # fused layer-2: block-diagonal (2H, OUT_PAD) weight -> [mu | logvar | pad]
    y = jnp.dot(hc.astype(jnp.bfloat16), w2_ref[...],
                preferred_element_type=jnp.float32) + b2_ref[...]

    # std = exp(logvar / 2) on columns >= dim_out (pad columns also exp'd; they
    # are never read).  (1, out_pad) iota broadcast in the compare keeps this
    # to one cheap per-lane select; single lane-dense unmasked store.
    col = jax.lax.broadcasted_iota(jnp.int32, (1, y.shape[1]), 1)
    out_ref[...] = jnp.where(col >= dim_out, jnp.exp(y * 0.5), y).astype(out_ref.dtype)


# ----------------------------------------------------------------------------
# One-time parameter preparation (hoisted out of the hot path)
# ----------------------------------------------------------------------------
def prepare_params(params):
    """Fuse / pad / cast raw (in,out) weights once. Call at init, not per step."""
    H = params["w0"].shape[1]
    dim_out = params["wm2"].shape[1]
    out_pad = _round_up(2 * dim_out, 128)     # lane-dense output slab width

    w2 = jnp.zeros((2 * H, out_pad), jnp.float32)
    w2 = w2.at[:H, :dim_out].set(params["wm2"])
    w2 = w2.at[H:, dim_out:2 * dim_out].set(params["wv2"])
    b2 = jnp.zeros((1, out_pad), jnp.float32)
    b2 = b2.at[:, :dim_out].set(params["bm2"])
    b2 = b2.at[:, dim_out:2 * dim_out].set(params["bv2"])

    return {
        "w0": params["w0"].astype(jnp.bfloat16),
        "b0": params["b0"].astype(jnp.float32),
        "w1": jnp.concatenate([params["wm1"], params["wv1"]], axis=1).astype(jnp.bfloat16),
        "b1": jnp.concatenate([params["bm1"], params["bv1"]], axis=1).astype(jnp.float32),
        "w2": w2.astype(jnp.bfloat16),
        "b2": b2,
        "dim_out": dim_out,
        "hidden": H,
        "out_pad": out_pad,
    }


# ----------------------------------------------------------------------------
# Forward (hot path: one pallas_call, two output slices)
# ----------------------------------------------------------------------------
def linearvae_forward(x, fused, *, num_cores=None, max_tm=2048):
    """x: (N, dim_in) float32. fused: output of prepare_params()."""
    N, dim_in = x.shape
    H = fused["hidden"]
    dim_out = fused["dim_out"]
    out_pad = fused["out_pad"]

    if num_cores is None:
        num_cores = _num_tensorcores()

    # Batch tile sized from the batch: grid collapses to 1 on single-TC chips,
    # and is a multiple of the core count on v7x.  Multiple of 16 keeps the
    # bf16-sublane layout happy; the 2048 cap keeps live VMEM to a few MiB.
    tm = min(max_tm, _round_up(max(1, -(-N // num_cores)), 16))
    grid = (pl.cdiv(N, tm),)       # Pallas masks the ragged tail block

    full = lambda shape: pl.BlockSpec(shape, lambda i: (0,) * len(shape))

    out = pl.pallas_call(
        functools.partial(linearvae_kernel, dim_out=dim_out),
        out_shape=jax.ShapeDtypeStruct((N, out_pad), jnp.float32),
        grid_spec=pltpu.PrefetchScalarGridSpec(
            num_scalar_prefetch=0,
            grid=grid,
            in_specs=[
                pl.BlockSpec((tm, dim_in), lambda i: (i, 0)),  # x tile (f32)
                full((dim_in, H)), full((1, H)),               # trunk
                full((H, 2 * H)), full((1, 2 * H)),            # fused head L1
                full((2 * H, out_pad)), full((1, out_pad)),    # fused head L2
            ],
            out_specs=pl.BlockSpec((tm, out_pad), lambda i: (i, 0)),
        ),
        compiler_params=pltpu.CompilerParams(
            dimension_semantics=("parallel",),     # megacore shard on v7x
            vmem_limit_bytes=32 * 1024 * 1024),
    )(x, fused["w0"], fused["b0"], fused["w1"], fused["b1"],
      fused["w2"], fused["b2"])

    mu = out[:, :dim_out]
    std = out[:, dim_out:2 * dim_out]
    # num_mixture_components == 1: reshape (n,1,dim_out) then squeeze(1) == identity.
    return mu, std


# ----------------------------------------------------------------------------
# Synthetic params + references
# ----------------------------------------------------------------------------
def make_params(key, dim_in, hidden, dim_out):
    """Deterministic synthetic init; weights stored as (in, out)."""
    ks = jax.random.split(key, 10)
    s = 0.05
    return {
        "w0":  jax.random.normal(ks[0], (dim_in, hidden), jnp.float32) * s,
        "b0":  jax.random.normal(ks[1], (1, hidden), jnp.float32) * s,
        "wm1": jax.random.normal(ks[2], (hidden, hidden), jnp.float32) * s,
        "bm1": jax.random.normal(ks[3], (1, hidden), jnp.float32) * s,
        "wm2": jax.random.normal(ks[4], (hidden, dim_out), jnp.float32) * s,
        "bm2": jax.random.normal(ks[5], (1, dim_out), jnp.float32) * s,
        "wv1": jax.random.normal(ks[6], (hidden, hidden), jnp.float32) * s,
        "bv1": jax.random.normal(ks[7], (1, hidden), jnp.float32) * s,
        "wv2": jax.random.normal(ks[8], (hidden, dim_out), jnp.float32) * s,
        "bv2": jax.random.normal(ks[9], (1, dim_out), jnp.float32) * s,
    }


def reference_forward_bf16(x, p):
    """Pure-JAX reference with the same bf16-input / f32-accumulate matmuls."""
    bf = lambda a: a.astype(jnp.bfloat16)
    h = _silu(jnp.dot(bf(x), bf(p["w0"]), preferred_element_type=jnp.float32) + p["b0"])
    hm = _silu(jnp.dot(bf(h), bf(p["wm1"]), preferred_element_type=jnp.float32) + p["bm1"])
    mu = jnp.dot(bf(hm), bf(p["wm2"]), preferred_element_type=jnp.float32) + p["bm2"]
    hv = _silu(jnp.dot(bf(h), bf(p["wv1"]), preferred_element_type=jnp.float32) + p["bv1"])
    logvar = jnp.dot(bf(hv), bf(p["wv2"]), preferred_element_type=jnp.float32) + p["bv2"]
    return mu, jnp.exp(logvar / 2.0)


def reference_forward_f32(x, p):
    """Pure-f32 reference matching the PyTorch LinearVAE semantics exactly."""
    hp = jnp.float32
    h = _silu(jnp.dot(x, p["w0"], preferred_element_type=hp) + p["b0"])
    hm = _silu(jnp.dot(h, p["wm1"], preferred_element_type=hp) + p["bm1"])
    mu = jnp.dot(hm, p["wm2"], preferred_element_type=hp) + p["bm2"]
    hv = _silu(jnp.dot(h, p["wv1"], preferred_element_type=hp) + p["bv1"])
    logvar = jnp.dot(hv, p["wv2"], preferred_element_type=hp) + p["bv2"]
    return mu, jnp.exp(logvar / 2.0)


if __name__ == "__main__":
    # dim_in=64, hidden=256, dim_out=32.  Batch 1000 exercises the ragged-tail
    # path (grid=1, tile 1008 on 1-TC chips; grid=2, tile 512 on v7x).
    N, DIM_IN, HIDDEN, DIM_OUT = 1000, 64, 256, 32

    key = jax.random.PRNGKey(0)
    kx, kp = jax.random.split(key)
    x = jax.random.normal(kx, (N, DIM_IN), jnp.float32)
    params = make_params(kp, DIM_IN, HIDDEN, DIM_OUT)

    # One-time parameter preparation (off the hot path).
    fused = prepare_params(params)
    jax.block_until_ready([v for v in fused.values() if isinstance(v, jax.Array)])

    mu, std = linearvae_forward(x, fused)
    jax.block_until_ready((mu, std))

    assert mu.shape == (N, DIM_OUT) and std.shape == (N, DIM_OUT)

    # Self-consistency vs a reference using the same bf16 MXU inputs (tight).
    mu_bf, std_bf = reference_forward_bf16(x, params)
    assert jnp.allclose(mu, mu_bf, atol=1e-3, rtol=1e-3), \
        float(jnp.max(jnp.abs(mu - mu_bf)))
    assert jnp.allclose(std, std_bf, atol=1e-3, rtol=1e-3), \
        float(jnp.max(jnp.abs(std - std_bf)))

    # Fidelity vs the pure-f32 PyTorch-equivalent reference (bounds the
    # deviation introduced by the bf16 MXU inputs).
    mu_f32, std_f32 = reference_forward_f32(x, params)
    assert jnp.allclose(mu, mu_f32, atol=2e-2, rtol=2e-2), \
        float(jnp.max(jnp.abs(mu - mu_f32)))
    assert jnp.allclose(std, std_f32, atol=2e-2, rtol=2e-2), \
        float(jnp.max(jnp.abs(std - std_f32)))

    # TODO(synk): num_mixture_components > 1 (fc_mixture + softmax head) not wired; defaults use 1.
    print("KERNEL_OK")
</pallas_src>

<mosaic_0001>
module attributes {stable_mosaic.version = 11 : i64} {
  func.func @linearvae_kernel(%arg0: i32, %arg1: memref<1008x64xf32, #tpu.memory_space<vmem>>, %arg2: memref<64x256xbf16, #tpu.memory_space<vmem>>, %arg3: memref<1x256xf32, #tpu.memory_space<vmem>>, %arg4: memref<256x512xbf16, #tpu.memory_space<vmem>>, %arg5: memref<1x512xf32, #tpu.memory_space<vmem>>, %arg6: memref<512x128xbf16, #tpu.memory_space<vmem>>, %arg7: memref<1x128xf32, #tpu.memory_space<vmem>>, %arg8: memref<1008x128xf32, #tpu.memory_space<vmem>>) attributes {dimension_semantics = [#tpu.dimension_semantics<parallel>], iteration_bounds = array<i64: 1>, scalar_prefetch = 0 : i64, scratch_operands = 0 : i64, tpu.core_type = #tpu.core_type<tc>, window_params = [{transform_indices = @transform_0, window_bounds = array<i64: 1008, 64>}, {pipeline_mode = #tpu.pipeline_mode<synchronous>, transform_indices = @transform_1, window_bounds = array<i64: 64, 256>}, {pipeline_mode = #tpu.pipeline_mode<synchronous>, transform_indices = @transform_2, window_bounds = array<i64: 1, 256>}, {pipeline_mode = #tpu.pipeline_mode<synchronous>, transform_indices = @transform_3, window_bounds = array<i64: 256, 512>}, {pipeline_mode = #tpu.pipeline_mode<synchronous>, transform_indices = @transform_4, window_bounds = array<i64: 1, 512>}, {pipeline_mode = #tpu.pipeline_mode<synchronous>, transform_indices = @transform_5, window_bounds = array<i64: 512, 128>}, {pipeline_mode = #tpu.pipeline_mode<synchronous>, transform_indices = @transform_6, window_bounds = array<i64: 1, 128>}, {transform_indices = @transform_7, window_bounds = array<i64: 1008, 128>}]} {
    %c0 = arith.constant 0 : index
    %c0_0 = arith.constant 0 : index
    %0 = vector.load %arg1[%c0, %c0_0] : memref<1008x64xf32, #tpu.memory_space<vmem>>, vector<1008x64xf32>
    %1 = arith.truncf %0 : vector<1008x64xf32> to vector<1008x64xbf16>
    %c0_1 = arith.constant 0 : index
    %c0_2 = arith.constant 0 : index
    %2 = vector.load %arg2[%c0_1, %c0_2] : memref<64x256xbf16, #tpu.memory_space<vmem>>, vector<64x256xbf16>
    %cst = arith.constant dense<0.000000e+00> : vector<1008x256xf32>
    %3 = tpu.matmul %1, %2, %cst {dimension_numbers = #tpu.dot_dimension_numbers<[1], [0], [0], [1], [0, 0, 1, 1], [], []>} : vector<1008x64xbf16>, vector<64x256xbf16>, vector<1008x256xf32> -> vector<1008x256xf32>
    %c0_3 = arith.constant 0 : index
    %c0_4 = arith.constant 0 : index
    %4 = vector.load %arg3[%c0_3, %c0_4] : memref<1x256xf32, #tpu.memory_space<vmem>>, vector<1x256xf32>
    %5 = vector.broadcast %4 : vector<1x256xf32> to vector<1008x256xf32>
    %6 = arith.addf %3, %5 : vector<1008x256xf32>
    %7 = arith.negf %6 : vector<1008x256xf32>
    %8 = math.exp %7 : vector<1008x256xf32>
    %cst_5 = arith.constant 1.000000e+00 : f32
    %9 = vector.broadcast %cst_5 : f32 to vector<1008x256xf32>
    %10 = arith.addf %9, %8 : vector<1008x256xf32>
    %11 = arith.divf %9, %10 : vector<1008x256xf32>
    %12 = arith.mulf %6, %11 : vector<1008x256xf32>
    %13 = arith.truncf %12 : vector<1008x256xf32> to vector<1008x256xbf16>
    %c0_6 = arith.constant 0 : index
    %c0_7 = arith.constant 0 : index
    %14 = vector.load %arg4[%c0_6, %c0_7] : memref<256x512xbf16, #tpu.memory_space<vmem>>, vector<256x512xbf16>
    %cst_8 = arith.constant dense<0.000000e+00> : vector<1008x512xf32>
    %15 = tpu.matmul %13, %14, %cst_8 {dimension_numbers = #tpu.dot_dimension_numbers<[1], [0], [0], [1], [0, 0, 1, 1], [], []>} : vector<1008x256xbf16>, vector<256x512xbf16>, vector<1008x512xf32> -> vector<1008x512xf32>
    %c0_9 = arith.constant 0 : index
    %c0_10 = arith.constant 0 : index
    %16 = vector.load %arg5[%c0_9, %c0_10] : memref<1x512xf32, #tpu.memory_space<vmem>>, vector<1x512xf32>
    %17 = vector.broadcast %16 : vector<1x512xf32> to vector<1008x512xf32>
    %18 = arith.addf %15, %17 : vector<1008x512xf32>
    %19 = arith.negf %18 : vector<1008x512xf32>
    %20 = math.exp %19 : vector<1008x512xf32>
    %cst_11 = arith.constant 1.000000e+00 : f32
    %21 = vector.broadcast %cst_11 : f32 to vector<1008x512xf32>
    %22 = arith.addf %21, %20 : vector<1008x512xf32>
    %23 = arith.divf %21, %22 : vector<1008x512xf32>
    %24 = arith.mulf %18, %23 : vector<1008x512xf32>
    %25 = arith.truncf %24 : vector<1008x512xf32> to vector<1008x512xbf16>
    %c0_12 = arith.constant 0 : index
    %c0_13 = arith.constant 0 : index
    %26 = vector.load %arg6[%c0_12, %c0_13] : memref<512x128xbf16, #tpu.memory_space<vmem>>, vector<512x128xbf16>
    %cst_14 = arith.constant dense<0.000000e+00> : vector<1008x128xf32>
    %27 = tpu.matmul %25, %26, %cst_14 {dimension_numbers = #tpu.dot_dimension_numbers<[1], [0], [0], [1], [0, 0, 1, 1], [], []>} : vector<1008x512xbf16>, vector<512x128xbf16>, vector<1008x128xf32> -> vector<1008x128xf32>
    %c0_15 = arith.constant 0 : index
    %c0_16 = arith.constant 0 : index
    %28 = vector.load %arg7[%c0_15, %c0_16] : memref<1x128xf32, #tpu.memory_space<vmem>>, vector<1x128xf32>
    %29 = vector.broadcast %28 : vector<1x128xf32> to vector<1008x128xf32>
    %30 = arith.addf %27, %29 : vector<1008x128xf32>
    %31 = tpu.iota {dimensions = array<i32: 1>} : vector<1x128xi32>
    %c32_i32 = arith.constant 32 : i32
    %32 = vector.broadcast %c32_i32 : i32 to vector<1x128xi32>
    %33 = arith.cmpi sge, %31, %32 : vector<1x128xi32>
    %cst_17 = arith.constant 5.000000e-01 : f32
    %34 = vector.broadcast %cst_17 : f32 to vector<1008x128xf32>
    %35 = arith.mulf %30, %34 : vector<1008x128xf32>
    %36 = math.exp %35 : vector<1008x128xf32>
    %37 = vector.shape_cast %33 : vector<1x128xi1> to vector<1x128xi1>
    %38 = vector.broadcast %37 : vector<1x128xi1> to vector<1008x128xi1>
    %39 = arith.select %38, %36, %30 : vector<1008x128xi1>, vector<1008x128xf32>
    %c0_18 = arith.constant 0 : index
    %c0_19 = arith.constant 0 : index
    %40 = vector.load %arg8[%c0_18, %c0_19] : memref<1008x128xf32, #tpu.memory_space<vmem>>, vector<1008x128xf32>
    tpu.vector_store %arg8[%c0_18, %c0_19], %39 {strides = array<i32>} : memref<1008x128xf32, #tpu.memory_space<vmem>>, vector<1008x128xf32>,
    return
  }
  func.func @transform_0(%arg0: i32) -> (i32, i32) {
    %c0_i32 = arith.constant 0 : i32
    %c0_i32_0 = arith.constant 0 : i32
    return %arg0, %c0_i32 : i32, i32
  }
  func.func @transform_1(%arg0: i32) -> (i32, i32) {
    %c0_i32 = arith.constant 0 : i32
    %c0_i32_0 = arith.constant 0 : i32
    %c0_i32_1 = arith.constant 0 : i32
    return %c0_i32, %c0_i32_0 : i32, i32
  }
  func.func @transform_2(%arg0: i32) -> (i32, i32) {
    %c0_i32 = arith.constant 0 : i32
    %c0_i32_0 = arith.constant 0 : i32
    %c0_i32_1 = arith.constant 0 : i32
    return %c0_i32, %c0_i32_0 : i32, i32
  }
  func.func @transform_3(%arg0: i32) -> (i32, i32) {
    %c0_i32 = arith.constant 0 : i32
    %c0_i32_0 = arith.constant 0 : i32
    %c0_i32_1 = arith.constant 0 : i32
    return %c0_i32, %c0_i32_0 : i32, i32
  }
  func.func @transform_4(%arg0: i32) -> (i32, i32) {
    %c0_i32 = arith.constant 0 : i32
    %c0_i32_0 = arith.constant 0 : i32
    %c0_i32_1 = arith.constant 0 : i32
    return %c0_i32, %c0_i32_0 : i32, i32
  }
  func.func @transform_5(%arg0: i32) -> (i32, i32) {
    %c0_i32 = arith.constant 0 : i32
    %c0_i32_0 = arith.constant 0 : i32
    %c0_i32_1 = arith.constant 0 : i32
    return %c0_i32, %c0_i32_0 : i32, i32
  }
  func.func @transform_6(%arg0: i32) -> (i32, i32) {
    %c0_i32 = arith.constant 0 : i32
    %c0_i32_0 = arith.constant 0 : i32
    %c0_i32_1 = arith.constant 0 : i32
    return %c0_i32, %c0_i32_0 : i32, i32
  }
  func.func @transform_7(%arg0: i32) -> (i32, i32) {
    %c0_i32 = arith.constant 0 : i32
    %c0_i32_0 = arith.constant 0 : i32
    return %arg0, %c0_i32 : i32, i32
  }
}

</mosaic_0001>

<llo_original>
// kernel: tpu_custom_call.1
$region0: #{tpu_custom_call.1}
  #allocation0 [shape = 'u32[]', space=smem, size = 0x4, offset = 0x4, fixed_abs, tag = 'smem constant byte address 0x4 - core index']
  #allocation1 [shape = 'u32[144,128]{1,0:T(1,128)}', space=vmem, size = 0x12000, scoped, tag = 'internal scratch']
  %s0 = inlined_call_operand.vmem [shape: f32[1000,64], index: 0, kind: input, shape index: {}]
  %s1 = inlined_call_operand.vmem [shape: bf16[64,256], index: 1, kind: input, shape index: {}]
  %s2 = inlined_call_operand.vmem [shape: f32[1,256], index: 2, kind: input, shape index: {}]
  %s3 = inlined_call_operand.vmem [shape: bf16[256,512], index: 3, kind: input, shape index: {}]
  %s4 = inlined_call_operand.vmem [shape: f32[1,512], index: 4, kind: input, shape index: {}]
  %s5 = inlined_call_operand.vmem [shape: bf16[512,128], index: 5, kind: input, shape index: {}]
  %s6 = inlined_call_operand.vmem [shape: f32[1,128], index: 6, kind: input, shape index: {}]
  %s7 = inlined_call_operand.hbm [shape: f32[1000,128], index: 7, kind: output, shape index: {}]
  %s8 = sld [smem:[#allocation0]]
  $region38: #{tpu_custom_call.1} parent=0
    _
  %s10 = ssub.s32 1, %s8
  %s11 = scalar_select 0, %s10, %s8
  $region1: #{tpu_custom_call.1} parent=0
    #allocation2 [shape = 'u8[516096]{0}', space=vmem, size = 0x7e000, scoped, tag = 'output window, operand 0, single buffered']
    #allocation3 [shape = 's32[1]{0}', space=sflag, size = 0x4, scoped, tag = 'scoped memory for tpu_custom_call.1']
    %12 = vsyncpa [#allocation3], 0
    // Predicated region
    $region2: #{tpu_custom_call.1} parent=1 // pred_check
      _
    $region3: #{tpu_custom_call.1} parent=1 // pred_check_branch
      %14 = sbr.rel (0) target = $region5
    $region4: #{tpu_custom_call.1} parent=1 // pred_region
      _
    $region5: #{tpu_custom_call.1} parent=1 // pred_fallthru
      _
    // Predicated region
    $region6: #{tpu_custom_call.1} parent=1 // pred_check
      _
    $region7: #{tpu_custom_call.1} parent=1 // pred_check_branch
      %16 = sbr.rel (0) target = $region9
    $region8: #{tpu_custom_call.1} parent=1 // pred_region
      _
    $region9: #{tpu_custom_call.1} parent=1 // pred_fallthru
      _
    // Predicated region
    $region10: #{tpu_custom_call.1} parent=1 // pred_check
      _
    $region11: #{tpu_custom_call.1} parent=1 // pred_check_branch
      %18 = sbr.rel (0) target = $region13
    $region12: #{tpu_custom_call.1} parent=1 // pred_region
      _
    $region13: #{tpu_custom_call.1} parent=1 // pred_fallthru
      _
    // Predicated region
    $region14: #{tpu_custom_call.1} parent=1 // pred_check
      _
    $region15: #{tpu_custom_call.1} parent=1 // pred_check_branch
      %20 = sbr.rel (0) target = $region17
    $region16: #{tpu_custom_call.1} parent=1 // pred_region
      _
    $region17: #{tpu_custom_call.1} parent=1 // pred_fallthru
      _
    // Predicated region
    $region18: #{tpu_custom_call.1} parent=1 // pred_check
      _
    $region19: #{tpu_custom_call.1} parent=1 // pred_check_branch
      %22 = sbr.rel (0) target = $region21
    $region20: #{tpu_custom_call.1} parent=1 // pred_region
      _
    $region21: #{tpu_custom_call.1} parent=1 // pred_fallthru
      _
    // Predicated region
    $region22: #{tpu_custom_call.1} parent=1 // pred_check
      _
    $region23: #{tpu_custom_call.1} parent=1 // pred_check_branch
      %24 = sbr.rel (0) target = $region25
    $region24: #{tpu_custom_call.1} parent=1 // pred_region
      _
    $region25: #{tpu_custom_call.1} parent=1 // pred_fallthru
      _
    // Predicated region
    $region26: #{tpu_custom_call.1} parent=1 // pred_check
      _
    $region27: #{tpu_custom_call.1} parent=1 // pred_check_branch
      %26 = sbr.rel (0) target = $region29
    $region28: #{tpu_custom_call.1} parent=1 // pred_region
      _
    $region29: #{tpu_custom_call.1} parent=1 // pred_fallthru
      _
    %v28 = vld [vmem:[%s0] sm:$0xff]
    %v29 = vld [vmem:[%s0 + $0x8] sm:$0xff]
    %v30 = vld [vmem:[%s0 + $0x10] sm:$0xff]
    %v31 = vld [vmem:[%s0 + $0x18] sm:$0xff]
    %v32 = vld [vmem:[%s0 + $0x20] sm:$0xff]
    %v33 = vld [vmem:[%s0 + $0x28] sm:$0xff]
    %v34 = vld [vmem:[%s0 + $0x30] sm:$0xff]
    %v35 = vld [vmem:[%s0 + $0x38] sm:$0xff]
    %v36 = vld [vmem:[%s0 + $0x40] sm:$0xff]
    %v37 = vld [vmem:[%s0 + $0x48] sm:$0xff]
    %v38 = vld [vmem:[%s0 + $0x50] sm:$0xff]
    %v39 = vld [vmem:[%s0 + $0x58] sm:$0xff]
    %v40 = vld [vmem:[%s0 + $0x60] sm:$0xff]
    %v41 = vld [vmem:[%s0 + $0x68] sm:$0xff]
    %v42 = vld [vmem:[%s0 + $0x70] sm:$0xff]
    %v43 = vld [vmem:[%s0 + $0x78] sm:$0xff]
    %v44 = vld [vmem:[%s0 + $0x80] sm:$0xff]
    %v45 = vld [vmem:[%s0 + $0x88] sm:$0xff]
    %v46 = vld [vmem:[%s0 + $0x90] sm:$0xff]
    %v47 = vld [vmem:[%s0 + $0x98] sm:$0xff]
    %v48 = vld [vmem:[%s0 + $0xa0] sm:$0xff]
    %v49 = vld [vmem:[%s0 + $0xa8] sm:$0xff]
    %v50 = vld [vmem:[%s0 + $0xb0] sm:$0xff]
    %v51 = vld [vmem:[%s0 + $0xb8] sm:$0xff]
    %v52 = vld [vmem:[%s0 + $0xc0] sm:$0xff]
    %v53 = vld [vmem:[%s0 + $0xc8] sm:$0xff]
    %v54 = vld [vmem:[%s0 + $0xd0] sm:$0xff]
    %v55 = vld [vmem:[%s0 + $0xd8] sm:$0xff]
    %v56 = vld [vmem:[%s0 + $0xe0] sm:$0xff]
    %v57 = vld [vmem:[%s0 + $0xe8] sm:$0xff]
    %v58 = vld [vmem:[%s0 + $0xf0] sm:$0xff]
    %v59 = vld [vmem:[%s0 + $0xf8] sm:$0xff]
    %v60 = vld [vmem:[%s0 + $0x100] sm:$0xff]
    %v61 = vld [vmem:[%s0 + $0x108] sm:$0xff]
    %v62 = vld [vmem:[%s0 + $0x110] sm:$0xff]
    %v63 = vld [vmem:[%s0 + $0x118] sm:$0xff]
    %v64 = vld [vmem:[%s0 + $0x120] sm:$0xff]
    %v65 = vld [vmem:[%s0 + $0x128] sm:$0xff]
    %v66 = vld [vmem:[%s0 + $0x130] sm:$0xff]
    %v67 = vld [vmem:[%s0 + $0x138] sm:$0xff]
    %v68 = vld [vmem:[%s0 + $0x140] sm:$0xff]
    %v69 = vld [vmem:[%s0 + $0x148] sm:$0xff]
    %v70 = vld [vmem:[%s0 + $0x150] sm:$0xff]
    %v71 = vld [vmem:[%s0 + $0x158] sm:$0xff]
    %v72 = vld [vmem:[%s0 + $0x160] sm:$0xff]
    %v73 = vld [vmem:[%s0 + $0x168] sm:$0xff]
    %v74 = vld [vmem:[%s0 + $0x170] sm:$0xff]
    %v75 = vld [vmem:[%s0 + $0x178] sm:$0xff]
    %v76 = vld [vmem:[%s0 + $0x180] sm:$0xff]
    %v77 = vld [vmem:[%s0 + $0x188] sm:$0xff]
    %v78 = vld [vmem:[%s0 + $0x190] sm:$0xff]
    %v79 = vld [vmem:[%s0 + $0x198] sm:$0xff]
    %v80 = vld [vmem:[%s0 + $0x1a0] sm:$0xff]
    %v81 = vld [vmem:[%s0 + $0x1a8] sm:$0xff]
    %v82 = vld [vmem:[%s0 + $0x1b0] sm:$0xff]
    %v83 = vld [vmem:[%s0 + $0x1b8] sm:$0xff]
    %v84 = vld [vmem:[%s0 + $0x1c0] sm:$0xff]
    %v85 = vld [vmem:[%s0 + $0x1c8] sm:$0xff]
    %v86 = vld [vmem:[%s0 + $0x1d0] sm:$0xff]
    %v87 = vld [vmem:[%s0 + $0x1d8] sm:$0xff]
    %v88 = vld [vmem:[%s0 + $0x1e0] sm:$0xff]
    %v89 = vld [vmem:[%s0 + $0x1e8] sm:$0xff]
    %v90 = vld [vmem:[%s0 + $0x1f0] sm:$0xff]
    %v91 = vld [vmem:[%s0 + $0x1f8] sm:$0xff]
    %v92 = vld [vmem:[%s0 + $0x200] sm:$0xff]
    %v93 = vld [vmem:[%s0 + $0x208] sm:$0xff]
    %v94 = vld [vmem:[%s0 + $0x210] sm:$0xff]
    %v95 = vld [vmem:[%s0 + $0x218] sm:$0xff]
    %v96 = vld [vmem:[%s0 + $0x220] sm:$0xff]
    %v97 = vld [vmem:[%s0 + $0x228] sm:$0xff]
    %v98 = vld [vmem:[%s0 + $0x230] sm:$0xff]
    %v99 = vld [vmem:[%s0 + $0x238] sm:$0xff]
    %v100 = vld [vmem:[%s0 + $0x240] sm:$0xff]
    %v101 = vld [vmem:[%s0 + $0x248] sm:$0xff]
    %v102 = vld [vmem:[%s0 + $0x250] sm:$0xff]
    %v103 = vld [vmem:[%s0 + $0x258] sm:$0xff]
    %v104 = vld [vmem:[%s0 + $0x260] sm:$0xff]
    %v105 = vld [vmem:[%s0 + $0x268] sm:$0xff]
    %v106 = vld [vmem:[%s0 + $0x270] sm:$0xff]
    %v107 = vld [vmem:[%s0 + $0x278] sm:$0xff]
    %v108 = vld [vmem:[%s0 + $0x280] sm:$0xff]
    %v109 = vld [vmem:[%s0 + $0x288] sm:$0xff]
    %v110 = vld [vmem:[%s0 + $0x290] sm:$0xff]
    %v111 = vld [vmem:[%s0 + $0x298] sm:$0xff]
    %v112 = vld [vmem:[%s0 + $0x2a0] sm:$0xff]
    %v113 = vld [vmem:[%s0 + $0x2a8] sm:$0xff]
    %v114 = vld [vmem:[%s0 + $0x2b0] sm:$0xff]
    %v115 = vld [vmem:[%s0 + $0x2b8] sm:$0xff]
    %v116 = vld [vmem:[%s0 + $0x2c0] sm:$0xff]
    %v117 = vld [vmem:[%s0 + $0x2c8] sm:$0xff]
    %v118 = vld [vmem:[%s0 + $0x2d0] sm:$0xff]
    %v119 = vld [vmem:[%s0 + $0x2d8] sm:$0xff]
    %v120 = vld [vmem:[%s0 + $0x2e0] sm:$0xff]
    %v121 = vld [vmem:[%s0 + $0x2e8] sm:$0xff]
    %v122 = vld [vmem:[%s0 + $0x2f0] sm:$0xff]
    %v123 = vld [vmem:[%s0 + $0x2f8] sm:$0xff]
    %v124 = vld [vmem:[%s0 + $0x300] sm:$0xff]
    %v125 = vld [vmem:[%s0 + $0x308] sm:$0xff]
    %v126 = vld [vmem:[%s0 + $0x310] sm:$0xff]
    %v127 = vld [vmem:[%s0 + $0x318] sm:$0xff]
    %v128 = vld [vmem:[%s0 + $0x320] sm:$0xff]
    %v129 = vld [vmem:[%s0 + $0x328] sm:$0xff]
    %v130 = vld [vmem:[%s0 + $0x330] sm:$0xff]
    %v131 = vld [vmem:[%s0 + $0x338] sm:$0xff]
    %v132 = vld [vmem:[%s0 + $0x340] sm:$0xff]
    %v133 = vld [vmem:[%s0 + $0x348] sm:$0xff]
    %v134 = vld [vmem:[%s0 + $0x350] sm:$0xff]
    %v135 = vld [vmem:[%s0 + $0x358] sm:$0xff]
    %v136 = vld [vmem:[%s0 + $0x360] sm:$0xff]
    %v137 = vld [vmem:[%s0 + $0x368] sm:$0xff]
    %v138 = vld [vmem:[%s0 + $0x370] sm:$0xff]
    %v139 = vld [vmem:[%s0 + $0x378] sm:$0xff]
    %v140 = vld [vmem:[%s0 + $0x380] sm:$0xff]
    %v141 = vld [vmem:[%s0 + $0x388] sm:$0xff]
    %v142 = vld [vmem:[%s0 + $0x390] sm:$0xff]
    %v143 = vld [vmem:[%s0 + $0x398] sm:$0xff]
    %v144 = vld [vmem:[%s0 + $0x3a0] sm:$0xff]
    %v145 = vld [vmem:[%s0 + $0x3a8] sm:$0xff]
    %v146 = vld [vmem:[%s0 + $0x3b0] sm:$0xff]
    %v147 = vld [vmem:[%s0 + $0x3b8] sm:$0xff]
    %v148 = vld [vmem:[%s0 + $0x3c0] sm:$0xff]
    %v149 = vld [vmem:[%s0 + $0x3c8] sm:$0xff]
    %v150 = vld [vmem:[%s0 + $0x3d0] sm:$0xff]
    %v151 = vld [vmem:[%s0 + $0x3d8] sm:$0xff]
    %v152 = vld [vmem:[%s0 + $0x3e0] sm:$0xff]
    %v153 = vld [vmem:[%s0 + $0x3e8] sm:$0xff]
    %v154 = vpack.c.bf16 %v29, %v28
    %v155 = vpack.c.bf16 %v31, %v30
    %v156 = vpack.c.bf16 %v33, %v32
    %v157 = vpack.c.bf16 %v35, %v34
    %v158 = vpack.c.bf16 %v37, %v36
    %v159 = vpack.c.bf16 %v39, %v38
    %v160 = vpack.c.bf16 %v41, %v40
    %v161 = vpack.c.bf16 %v43, %v42
    %v162 = vpack.c.bf16 %v45, %v44
    %v163 = vpack.c.bf16 %v47, %v46
    %v164 = vpack.c.bf16 %v49, %v48
    %v165 = vpack.c.bf16 %v51, %v50
    %v166 = vpack.c.bf16 %v53, %v52
    %v167 = vpack.c.bf16 %v55, %v54
    %v168 = vpack.c.bf16 %v57, %v56
    %v169 = vpack.c.bf16 %v59, %v58
    %v170 = vpack.c.bf16 %v61, %v60
    %v171 = vpack.c.bf16 %v63, %v62
    %v172 = vpack.c.bf16 %v65, %v64
    %v173 = vpack.c.bf16 %v67, %v66
    %v174 = vpack.c.bf16 %v69, %v68
    %v175 = vpack.c.bf16 %v71, %v70
    %v176 = vpack.c.bf16 %v73, %v72
    %v177 = vpack.c.bf16 %v75, %v74
    %v178 = vpack.c.bf16 %v77, %v76
    %v179 = vpack.c.bf16 %v79, %v78
    %v180 = vpack.c.bf16 %v81, %v80
    %v181 = vpack.c.bf16 %v83, %v82
    %v182 = vpack.c.bf16 %v85, %v84
    %v183 = vpack.c.bf16 %v87, %v86
    %v184 = vpack.c.bf16 %v89, %v88
    %v185 = vpack.c.bf16 %v91, %v90
    %v186 = vpack.c.bf16 %v93, %v92
    %v187 = vpack.c.bf16 %v95, %v94
    %v188 = vpack.c.bf16 %v97, %v96
    %v189 = vpack.c.bf16 %v99, %v98
    %v190 = vpack.c.bf16 %v101, %v100
    %v191 = vpack.c.bf16 %v103, %v102
    %v192 = vpack.c.bf16 %v105, %v104
    %v193 = vpack.c.bf16 %v107, %v106
    %v194 = vpack.c.bf16 %v109, %v108
    %v195 = vpack.c.bf16 %v111, %v110
    %v196 = vpack.c.bf16 %v113, %v112
    %v197 = vpack.c.bf16 %v115, %v114
    %v198 = vpack.c.bf16 %v117, %v116
    %v199 = vpack.c.bf16 %v119, %v118
    %v200 = vpack.c.bf16 %v121, %v120
    %v201 = vpack.c.bf16 %v123, %v122
    %v202 = vpack.c.bf16 %v125, %v124
    %v203 = vpack.c.bf16 %v127, %v126
    %v204 = vpack.c.bf16 %v129, %v128
    %v205 = vpack.c.bf16 %v131, %v130
    %v206 = vpack.c.bf16 %v133, %v132
    %v207 = vpack.c.bf16 %v135, %v134
    %v208 = vpack.c.bf16 %v137, %v136
    %v209 = vpack.c.bf16 %v139, %v138
    %v210 = vpack.c.bf16 %v141, %v140
    %v211 = vpack.c.bf16 %v143, %v142
    %v212 = vpack.c.bf16 %v145, %v144
    %v213 = vpack.c.bf16 %v147, %v146
    %v214 = vpack.c.bf16 %v149, %v148
    %v215 = vpack.c.bf16 %v151, %v150
    %v216 = vpack.c.bf16 %v153, %v152
    %v217 = vld [vmem:[%s1] sm:$0xff]
    %v218 = vld [vmem:[%s1 + $0x8] sm:$0xff]
    %v219 = vld [vmem:[%s1 + $0x10] sm:$0xff]
    %v220 = vld [vmem:[%s1 + $0x18] sm:$0xff]
    %v221 = vld [vmem:[%s1 + $0x20] sm:$0xff]
    %v222 = vld [vmem:[%s1 + $0x28] sm:$0xff]
    %v223 = vld [vmem:[%s1 + $0x30] sm:$0xff]
    %v224 = vld [vmem:[%s1 + $0x38] sm:$0xff]
    %v225 = vld [vmem:[%s2] sm:$0x3]
    %v227 = vlaneseq
    %v228 = vshrl.u32 %v227, 7
    %v229 = vsub.s32 0, %v228
    %v230 = vrot.slane %v225, %v229
    %v231 = vlaneseq
    %v232 = vshrl.u32 %v231, 7
    %v233 = vsub.s32 1, %v232
    %v234 = vrot.slane %v225, %v233
    %v245 = vunpack.c.l.b16 %v217
    %v246 = vunpack.c.h.b16 %v217
    %v247 = vunpack.c.l.b16 %v218
    %v248 = vunpack.c.h.b16 %v218
    %v249 = vunpack.c.l.b16 %v219
    %v250 = vunpack.c.h.b16 %v219
    %v251 = vunpack.c.l.b16 %v220
    %v252 = vunpack.c.h.b16 %v220
    %v253 = vunpack.c.l.b16 %v221
    %v254 = vunpack.c.h.b16 %v221
    %v255 = vunpack.c.l.b16 %v222
    %v256 = vunpack.c.h.b16 %v222
    %v257 = vunpack.c.l.b16 %v223
    %v258 = vunpack.c.h.b16 %v223
    %v259 = vunpack.c.l.b16 %v224
    %v260 = vunpack.c.h.b16 %v224
    %v261 = vpack.c.b16 %v247, %v245
    %v262 = vpack.c.b16 %v248, %v246
    %v263 = vpack.c.b16 %v251, %v249
    %v264 = vpack.c.b16 %v252, %v250
    %v265 = vpack.c.b16 %v255, %v253
    %v266 = vpack.c.b16 %v256, %v254
    %v267 = vpack.c.b16 %v259, %v257
    %v268 = vpack.c.b16 %v260, %v258
    %vm277 = vcmask 523264
    %v279 = vsel %vm277, %v154, 0
    %v282 = vsel %vm277, %v155, 0
    %v285 = vsel %vm277, %v156, 0
    %v288 = vsel %vm277, %v157, 0
    %v291 = vsel %vm277, %v158, 0
    %v294 = vsel %vm277, %v159, 0
    %v297 = vsel %vm277, %v160, 0
    %v300 = vsel %vm277, %v161, 0
    %v303 = vsel %vm277, %v162, 0
    %v306 = vsel %vm277, %v163, 0
    %v309 = vsel %vm277, %v164, 0
    %v312 = vsel %vm277, %v165, 0
    %v315 = vsel %vm277, %v166, 0
    %v318 = vsel %vm277, %v167, 0
    %v321 = vsel %vm277, %v168, 0
    %v324 = vsel %vm277, %v169, 0
    %v327 = vsel %vm277, %v170, 0
    %v330 = vsel %vm277, %v171, 0
    %v333 = vsel %vm277, %v172, 0
    %v336 = vsel %vm277, %v173, 0
    %v339 = vsel %vm277, %v174, 0
    %v342 = vsel %vm277, %v175, 0
    %v345 = vsel %vm277, %v176, 0
    %v348 = vsel %vm277, %v177, 0
    %v351 = vsel %vm277, %v178, 0
    %v354 = vsel %vm277, %v179, 0
    %v357 = vsel %vm277, %v180, 0
    %v360 = vsel %vm277, %v181, 0
    %v363 = vsel %vm277, %v182, 0
    %v366 = vsel %vm277, %v183, 0
    %v369 = vsel %vm277, %v184, 0
    %v372 = vsel %vm277, %v185, 0
    %v375 = vsel %vm277, %v186, 0
    %v378 = vsel %vm277, %v187, 0
    %v381 = vsel %vm277, %v188, 0
    %v384 = vsel %vm277, %v189, 0
    %v387 = vsel %vm277, %v190, 0
    %v390 = vsel %vm277, %v191, 0
    %v393 = vsel %vm277, %v192, 0
    %v396 = vsel %vm277, %v193, 0
    %v399 = vsel %vm277, %v194, 0
    %v402 = vsel %vm277, %v195, 0
    %v405 = vsel %vm277, %v196, 0
    %v408 = vsel %vm277, %v197, 0
    %v411 = vsel %vm277, %v198, 0
    %v414 = vsel %vm277, %v199, 0
    %v417 = vsel %vm277, %v200, 0
    %v420 = vsel %vm277, %v201, 0
    %v423 = vsel %vm277, %v202, 0
    %v426 = vsel %vm277, %v203, 0
    %v429 = vsel %vm277, %v204, 0
    %v432 = vsel %vm277, %v205, 0
    %v435 = vsel %vm277, %v206, 0
    %v438 = vsel %vm277, %v207, 0
    %v441 = vsel %vm277, %v208, 0
    %v444 = vsel %vm277, %v209, 0
    %v447 = vsel %vm277, %v210, 0
    %v450 = vsel %vm277, %v211, 0
    %v453 = vsel %vm277, %v212, 0
    %v456 = vsel %vm277, %v213, 0
    %v459 = vsel %vm277, %v214, 0
    %v462 = vsel %vm277, %v215, 0
    %v465 = vsel %vm277, %v216, 0
    %467 = vmatprep.subr.bf16.mxu0 0
    %468 = vmatpush1.bf16.msra.mxu0 0
    %469 = vmatprep.subr.bf16.mxu0 0
    %470 = vmatpush1.bf16.msra.mxu0 0
    %471 = vmatprep.subr.bf16.mxu0 0
    %472 = vmatpush1.bf16.msra.mxu0 0
    %473 = vmatprep.subr.bf16.mxu0 0
    %474 = vmatpush1.bf16.msra.mxu0 0
    %475 = vmatprep.subr.bf16.mxu0 %v268
    %476 = vmatpush1.bf16.msra.mxu0 %v267
    %477 = vmatprep.subr.bf16.mxu0 %v266
    %478 = vmatpush1.bf16.msra.mxu0 %v265
    %479 = vmatprep.subr.bf16.mxu0 %v264
    %480 = vmatpush1.bf16.msra.mxu0 %v263
    %481 = vmatprep.subr.bf16.mxu0 %v262
    %482 = vmatpush1.bf16.msra.mxu0 %v261
    %483 = vmatprep.subr.bf16.mxu0 0
    %484 = vmatpush2.bf16.msra.mxu0 0
    %485 = vmatprep.subr.bf16.mxu0 0
    %486 = vmatpush2.bf16.msra.mxu0 0
    %487 = vmatprep.subr.bf16.mxu0 0
    %488 = vmatpush2.bf16.msra.mxu0 0
    %489 = vmatprep.subr.bf16.mxu0 0
    %490 = vmatpush2.bf16.msra.mxu0 0
    %491 = vmatprep.subr.bf16.mxu0 0
    %492 = vmatpush2.bf16.msra.mxu0 0
    %493 = vmatprep.subr.bf16.mxu0 0
    %494 = vmatpush2.bf16.msra.mxu0 0
    %495 = vmatprep.subr.bf16.mxu0 0
    %496 = vmatpush2.bf16.msra.mxu0 0
    %497 = vmatprep.subr.bf16.mxu0 0
    %498 = vmatpush2.bf16.msra.mxu0 0
    %499 = vmatprep.mubr.bf16.mxu0 0
    %500 = vmatmul.mubr.bf16.gmra.mxu0 %v279
    %v501 = vpop.f32.mrf.mxu0
    %v502 = vadd.f32 %v230, %v501
    %v503 = vpop.f32.mrf.mxu0
    %v504 = vadd.f32 %v234, %v503
    %v505 = vpop.f32.mrf.mxu0
    %v506 = vadd.f32 %v230, %v505
    %v507 = vpop.f32.mrf.mxu0
    %v508 = vadd.f32 %v234, %v507
    %509 = vmatprep.mubr.bf16.mxu0 0
    %510 = vmatmul.mubr.bf16.gmra.mxu0 %v282
    %v511 = vpop.f32.mrf.mxu0
    %v512 = vadd.f32 %v230, %v511
    %v513 = vpop.f32.mrf.mxu0
    %v514 = vadd.f32 %v234, %v513
    %v515 = vpop.f32.mrf.mxu0
    %v516 = vadd.f32 %v230, %v515
    %v517 = vpop.f32.mrf.mxu0
    %v518 = vadd.f32 %v234, %v517
    %519 = vmatprep.mubr.bf16.mxu0 0
    %520 = vmatmul.mubr.bf16.gmra.mxu0 %v285
    %v521 = vpop.f32.mrf.mxu0
    %v522 = vadd.f32 %v230, %v521
    %v523 = vpop.f32.mrf.mxu0
    %v524 = vadd.f32 %v234, %v523
    %v525 = vpop.f32.mrf.mxu0
    %v526 = vadd.f32 %v230, %v525
    %v527 = vpop.f32.mrf.mxu0
    %v528 = vadd.f32 %v234, %v527
    %529 = vmatprep.mubr.bf16.mxu0 0
    %530 = vmatmul.mubr.bf16.gmra.mxu0 %v288
    %v531 = vpop.f32.mrf.mxu0
    %v532 = vadd.f32 %v230, %v531
    %v533 = vpop.f32.mrf.mxu0
    %v534 = vadd.f32 %v234, %v533
    %v535 = vpop.f32.mrf.mxu0
    %v536 = vadd.f32 %v230, %v535
    %v537 = vpop.f32.mrf.mxu0
    %v538 = vadd.f32 %v234, %v537
    %539 = vmatprep.mubr.bf16.mxu0 0
    %540 = vmatmul.mubr.bf16.gmra.mxu0 %v291
    %v541 = vpop.f32.mrf.mxu0
    %v542 = vadd.f32 %v230, %v541
    %v543 = vpop.f32.mrf.mxu0
    %v544 = vadd.f32 %v234, %v543
    %v545 = vpop.f32.mrf.mxu0
    %v546 = vadd.f32 %v230, %v545
    %v547 = vpop.f32.mrf.mxu0
    %v548 = vadd.f32 %v234, %v547
    %549 = vmatprep.mubr.bf16.mxu0 0
    %550 = vmatmul.mubr.bf16.gmra.mxu0 %v294
    %v551 = vpop.f32.mrf.mxu0
    %v552 = vadd.f32 %v230, %v551
    %v553 = vpop.f32.mrf.mxu0
    %v554 = vadd.f32 %v234, %v553
    %v555 = vpop.f32.mrf.mxu0
    %v556 = vadd.f32 %v230, %v555
    %v557 = vpop.f32.mrf.mxu0
    %v558 = vadd.f32 %v234, %v557
    %559 = vmatprep.mubr.bf16.mxu0 0
    %560 = vmatmul.mubr.bf16.gmra.mxu0 %v297
    %v561 = vpop.f32.mrf.mxu0
    %v562 = vadd.f32 %v230, %v561
    %v563 = vpop.f32.mrf.mxu0
    %v564 = vadd.f32 %v234, %v563
    %v565 = vpop.f32.mrf.mxu0
    %v566 = vadd.f32 %v230, %v565
    %v567 = vpop.f32.mrf.mxu0
    %v568 = vadd.f32 %v234, %v567
    %569 = vmatprep.mubr.bf16.mxu0 0
    %570 = vmatmul.mubr.bf16.gmra.mxu0 %v300
    %v571 = vpop.f32.mrf.mxu0
    %v572 = vadd.f32 %v230, %v571
    %v573 = vpop.f32.mrf.mxu0
    %v574 = vadd.f32 %v234, %v573
    %v575 = vpop.f32.mrf.mxu0
    %v576 = vadd.f32 %v230, %v575
    %v577 = vpop.f32.mrf.mxu0
    %v578 = vadd.f32 %v234, %v577
    %579 = vmatprep.mubr.bf16.mxu0 0
    %580 = vmatmul.mubr.bf16.gmra.mxu0 %v303
    %v581 = vpop.f32.mrf.mxu0
    %v582 = vadd.f32 %v230, %v581
    %v583 = vpop.f32.mrf.mxu0
    %v584 = vadd.f32 %v234, %v583
    %v585 = vpop.f32.mrf.mxu0
    %v586 = vadd.f32 %v230, %v585
    %v587 = vpop.f32.mrf.mxu0
    %v588 = vadd.f32 %v234, %v587
    %589 = vmatprep.mubr.bf16.mxu0 0
    %590 = vmatmul.mubr.bf16.gmra.mxu0 %v306
    %v591 = vpop.f32.mrf.mxu0
    %v592 = vadd.f32 %v230, %v591
    %v593 = vpop.f32.mrf.mxu0
    %v594 = vadd.f32 %v234, %v593
    %v595 = vpop.f32.mrf.mxu0
    %v596 = vadd.f32 %v230, %v595
    %v597 = vpop.f32.mrf.mxu0
    %v598 = vadd.f32 %v234, %v597
    %599 = vmatprep.mubr.bf16.mxu0 0
    %600 = vmatmul.mubr.bf16.gmra.mxu0 %v309
    %v601 = vpop.f32.mrf.mxu0
    %v602 = vadd.f32 %v230, %v601
    %v603 = vpop.f32.mrf.mxu0
    %v604 = vadd.f32 %v234, %v603
    %v605 = vpop.f32.mrf.mxu0
    %v606 = vadd.f32 %v230, %v605
    %v607 = vpop.f32.mrf.mxu0
    %v608 = vadd.f32 %v234, %v607
    %609 = vmatprep.mubr.bf16.mxu0 0
    %610 = vmatmul.mubr.bf16.gmra.mxu0 %v312
    %v611 = vpop.f32.mrf.mxu0
    %v612 = vadd.f32 %v230, %v611
    %v613 = vpop.f32.mrf.mxu0
    %v614 = vadd.f32 %v234, %v613
    %v615 = vpop.f32.mrf.mxu0
    %v616 = vadd.f32 %v230, %v615
    %v617 = vpop.f32.mrf.mxu0
    %v618 = vadd.f32 %v234, %v617
    %619 = vmatprep.mubr.bf16.mxu0 0
    %620 = vmatmul.mubr.bf16.gmra.mxu0 %v315
    %v621 = vpop.f32.mrf.mxu0
    %v622 = vadd.f32 %v230, %v621
    %v623 = vpop.f32.mrf.mxu0
    %v624 = vadd.f32 %v234, %v623
    %v625 = vpop.f32.mrf.mxu0
    %v626 = vadd.f32 %v230, %v625
    %v627 = vpop.f32.mrf.mxu0
    %v628 = vadd.f32 %v234, %v627
    %629 = vmatprep.mubr.bf16.mxu0 0
    %630 = vmatmul.mubr.bf16.gmra.mxu0 %v318
    %v631 = vpop.f32.mrf.mxu0
    %v632 = vadd.f32 %v230, %v631
    %v633 = vpop.f32.mrf.mxu0
    %v634 = vadd.f32 %v234, %v633
    %v635 = vpop.f32.mrf.mxu0
    %v636 = vadd.f32 %v230, %v635
    %v637 = vpop.f32.mrf.mxu0
    %v638 = vadd.f32 %v234, %v637
    %639 = vmatprep.mubr.bf16.mxu0 0
    %640 = vmatmul.mubr.bf16.gmra.mxu0 %v321
    %v641 = vpop.f32.mrf.mxu0
    %v642 = vadd.f32 %v230, %v641
    %v643 = vpop.f32.mrf.mxu0
    %v644 = vadd.f32 %v234, %v643
    %v645 = vpop.f32.mrf.mxu0
    %v646 = vadd.f32 %v230, %v645
    %v647 = vpop.f32.mrf.mxu0
    %v648 = vadd.f32 %v234, %v647
    %649 = vmatprep.mubr.bf16.mxu0 0
    %650 = vmatmul.mubr.bf16.gmra.mxu0 %v324
    %v651 = vpop.f32.mrf.mxu0
    %v652 = vadd.f32 %v230, %v651
    %v653 = vpop.f32.mrf.mxu0
    %v654 = vadd.f32 %v234, %v653
    %v655 = vpop.f32.mrf.mxu0
    %v656 = vadd.f32 %v230, %v655
    %v657 = vpop.f32.mrf.mxu0
    %v658 = vadd.f32 %v234, %v657
    %659 = vmatprep.mubr.bf16.mxu0 0
    %660 = vmatmul.mubr.bf16.gmra.mxu0 %v327
    %v661 = vpop.f32.mrf.mxu0
    %v662 = vadd.f32 %v230, %v661
    %v663 = vpop.f32.mrf.mxu0
    %v664 = vadd.f32 %v234, %v663
    %v665 = vpop.f32.mrf.mxu0
    %v666 = vadd.f32 %v230, %v665
    %v667 = vpop.f32.mrf.mxu0
    %v668 = vadd.f32 %v234, %v667
    %669 = vmatprep.mubr.bf16.mxu0 0
    %670 = vmatmul.mubr.bf16.gmra.mxu0 %v330
    %v671 = vpop.f32.mrf.mxu0
    %v672 = vadd.f32 %v230, %v671
    %v673 = vpop.f32.mrf.mxu0
    %v674 = vadd.f32 %v234, %v673
    %v675 = vpop.f32.mrf.mxu0
    %v676 = vadd.f32 %v230, %v675
    %v677 = vpop.f32.mrf.mxu0
    %v678 = vadd.f32 %v234, %v677
    %679 = vmatprep.mubr.bf16.mxu0 0
    %680 = vmatmul.mubr.bf16.gmra.mxu0 %v333
    %v681 = vpop.f32.mrf.mxu0
    %v682 = vadd.f32 %v230, %v681
    %v683 = vpop.f32.mrf.mxu0
    %v684 = vadd.f32 %v234, %v683
    %v685 = vpop.f32.mrf.mxu0
    %v686 = vadd.f32 %v230, %v685
    %v687 = vpop.f32.mrf.mxu0
    %v688 = vadd.f32 %v234, %v687
    %689 = vmatprep.mubr.bf16.mxu0 0
    %690 = vmatmul.mubr.bf16.gmra.mxu0 %v336
    %v691 = vpop.f32.mrf.mxu0
    %v692 = vadd.f32 %v230, %v691
    %v693 = vpop.f32.mrf.mxu0
    %v694 = vadd.f32 %v234, %v693
    %v695 = vpop.f32.mrf.mxu0
    %v696 = vadd.f32 %v230, %v695
    %v697 = vpop.f32.mrf.mxu0
    %v698 = vadd.f32 %v234, %v697
    %699 = vmatprep.mubr.bf16.mxu0 0
    %700 = vmatmul.mubr.bf16.gmra.mxu0 %v339
    %v701 = vpop.f32.mrf.mxu0
    %v702 = vadd.f32 %v230, %v701
    %v703 = vpop.f32.mrf.mxu0
    %v704 = vadd.f32 %v234, %v703
    %v705 = vpop.f32.mrf.mxu0
    %v706 = vadd.f32 %v230, %v705
    %v707 = vpop.f32.mrf.mxu0
    %v708 = vadd.f32 %v234, %v707
    %709 = vmatprep.mubr.bf16.mxu0 0
    %710 = vmatmul.mubr.bf16.gmra.mxu0 %v342
    %v711 = vpop.f32.mrf.mxu0
    %v712 = vadd.f32 %v230, %v711
    %v713 = vpop.f32.mrf.mxu0
    %v714 = vadd.f32 %v234, %v713
    %v715 = vpop.f32.mrf.mxu0
    %v716 = vadd.f32 %v230, %v715
    %v717 = vpop.f32.mrf.mxu0
    %v718 = vadd.f32 %v234, %v717
    %719 = vmatprep.mubr.bf16.mxu0 0
    %720 = vmatmul.mubr.bf16.gmra.mxu0 %v345
    %v721 = vpop.f32.mrf.mxu0
    %v722 = vadd.f32 %v230, %v721
    %v723 = vpop.f32.mrf.mxu0
    %v724 = vadd.f32 %v234, %v723
    %v725 = vpop.f32.mrf.mxu0
    %v726 = vadd.f32 %v230, %v725
    %v727 = vpop.f32.mrf.mxu0
    %v728 = vadd.f32 %v234, %v727
    %729 = vmatprep.mubr.bf16.mxu0 0
    %730 = vmatmul.mubr.bf16.gmra.mxu0 %v348
    %v731 = vpop.f32.mrf.mxu0
    %v732 = vadd.f32 %v230, %v731
    %v733 = vpop.f32.mrf.mxu0
    %v734 = vadd.f32 %v234, %v733
    %v735 = vpop.f32.mrf.mxu0
    %v736 = vadd.f32 %v230, %v735
    %v737 = vpop.f32.mrf.mxu0
    %v738 = vadd.f32 %v234, %v737
    %739 = vmatprep.mubr.bf16.mxu0 0
    %740 = vmatmul.mubr.bf16.gmra.mxu0 %v351
    %v741 = vpop.f32.mrf.mxu0
    %v742 = vadd.f32 %v230, %v741
    %v743 = vpop.f32.mrf.mxu0
    %v744 = vadd.f32 %v234, %v743
    %v745 = vpop.f32.mrf.mxu0
    %v746 = vadd.f32 %v230, %v745
    %v747 = vpop.f32.mrf.mxu0
    %v748 = vadd.f32 %v234, %v747
    %749 = vmatprep.mubr.bf16.mxu0 0
    %750 = vmatmul.mubr.bf16.gmra.mxu0 %v354
    %v751 = vpop.f32.mrf.mxu0
    %v752 = vadd.f32 %v230, %v751
    %v753 = vpop.f32.mrf.mxu0
    %v754 = vadd.f32 %v234, %v753
    %v755 = vpop.f32.mrf.mxu0
    %v756 = vadd.f32 %v230, %v755
    %v757 = vpop.f32.mrf.mxu0
    %v758 = vadd.f32 %v234, %v757
    %759 = vmatprep.mubr.bf16.mxu0 0
    %760 = vmatmul.mubr.bf16.gmra.mxu0 %v357
    %v761 = vpop.f32.mrf.mxu0
    %v762 = vadd.f32 %v230, %v761
    %v763 = vpop.f32.mrf.mxu0
    %v764 = vadd.f32 %v234, %v763
    %v765 = vpop.f32.mrf.mxu0
    %v766 = vadd.f32 %v230, %v765
    %v767 = vpop.f32.mrf.mxu0
    %v768 = vadd.f32 %v234, %v767
    %769 = vmatprep.mubr.bf16.mxu0 0
    %770 = vmatmul.mubr.bf16.gmra.mxu0 %v360
    %v771 = vpop.f32.mrf.mxu0
    %v772 = vadd.f32 %v230, %v771
    %v773 = vpop.f32.mrf.mxu0
    %v774 = vadd.f32 %v234, %v773
    %v775 = vpop.f32.mrf.mxu0
    %v776 = vadd.f32 %v230, %v775
    %v777 = vpop.f32.mrf.mxu0
    %v778 = vadd.f32 %v234, %v777
    %779 = vmatprep.mubr.bf16.mxu0 0
    %780 = vmatmul.mubr.bf16.gmra.mxu0 %v363
    %v781 = vpop.f32.mrf.mxu0
    %v782 = vadd.f32 %v230, %v781
    %v783 = vpop.f32.mrf.mxu0
    %v784 = vadd.f32 %v234, %v783
    %v785 = vpop.f32.mrf.mxu0
    %v786 = vadd.f32 %v230, %v785
    %v787 = vpop.f32.mrf.mxu0
    %v788 = vadd.f32 %v234, %v787
    %789 = vmatprep.mubr.bf16.mxu0 0
    %790 = vmatmul.mubr.bf16.gmra.mxu0 %v366
    %v791 = vpop.f32.mrf.mxu0
    %v792 = vadd.f32 %v230, %v791
    %v793 = vpop.f32.mrf.mxu0
    %v794 = vadd.f32 %v234, %v793
    %v795 = vpop.f32.mrf.mxu0
    %v796 = vadd.f32 %v230, %v795
    %v797 = vpop.f32.mrf.mxu0
    %v798 = vadd.f32 %v234, %v797
    %799 = vmatprep.mubr.bf16.mxu0 0
    %800 = vmatmul.mubr.bf16.gmra.mxu0 %v369
    %v801 = vpop.f32.mrf.mxu0
    %v802 = vadd.f32 %v230, %v801
    %v803 = vpop.f32.mrf.mxu0
    %v804 = vadd.f32 %v234, %v803
    %v805 = vpop.f32.mrf.mxu0
    %v806 = vadd.f32 %v230, %v805
    %v807 = vpop.f32.mrf.mxu0
    %v808 = vadd.f32 %v234, %v807
    %809 = vmatprep.mubr.bf16.mxu0 0
    %810 = vmatmul.mubr.bf16.gmra.mxu0 %v372
    %v811 = vpop.f32.mrf.mxu0
    %v812 = vadd.f32 %v230, %v811
    %v813 = vpop.f32.mrf.mxu0
    %v814 = vadd.f32 %v234, %v813
    %v815 = vpop.f32.mrf.mxu0
    %v816 = vadd.f32 %v230, %v815
    %v817 = vpop.f32.mrf.mxu0
    %v818 = vadd.f32 %v234, %v817
    %819 = vmatprep.mubr.bf16.mxu0 0
    %820 = vmatmul.mubr.bf16.gmra.mxu0 %v375
    %v821 = vpop.f32.mrf.mxu0
    %v822 = vadd.f32 %v230, %v821
    %v823 = vpop.f32.mrf.mxu0
    %v824 = vadd.f32 %v234, %v823
    %v825 = vpop.f32.mrf.mxu0
    %v826 = vadd.f32 %v230, %v825
    %v827 = vpop.f32.mrf.mxu0
    %v828 = vadd.f32 %v234, %v827
    %829 = vmatprep.mubr.bf16.mxu0 0
    %830 = vmatmul.mubr.bf16.gmra.mxu0 %v378
    %v831 = vpop.f32.mrf.mxu0
    %v832 = vadd.f32 %v230, %v831
    %v833 = vpop.f32.mrf.mxu0
    %v834 = vadd.f32 %v234, %v833
    %v835 = vpop.f32.mrf.mxu0
    %v836 = vadd.f32 %v230, %v835
    %v837 = vpop.f32.mrf.mxu0
    %v838 = vadd.f32 %v234, %v837
    %839 = vmatprep.mubr.bf16.mxu0 0
    %840 = vmatmul.mubr.bf16.gmra.mxu0 %v381
    %v841 = vpop.f32.mrf.mxu0
    %v842 = vadd.f32 %v230, %v841
    %v843 = vpop.f32.mrf.mxu0
    %v844 = vadd.f32 %v234, %v843
    %v845 = vpop.f32.mrf.mxu0
    %v846 = vadd.f32 %v230, %v845
    %v847 = vpop.f32.mrf.mxu0
    %v848 = vadd.f32 %v234, %v847
    %849 = vmatprep.mubr.bf16.mxu0 0
    %850 = vmatmul.mubr.bf16.gmra.mxu0 %v384
    %v851 = vpop.f32.mrf.mxu0
    %v852 = vadd.f32 %v230, %v851
    %v853 = vpop.f32.mrf.mxu0
    %v854 = vadd.f32 %v234, %v853
    %v855 = vpop.f32.mrf.mxu0
    %v856 = vadd.f32 %v230, %v855
    %v857 = vpop.f32.mrf.mxu0
    %v858 = vadd.f32 %v234, %v857
    %859 = vmatprep.mubr.bf16.mxu0 0
    %860 = vmatmul.mubr.bf16.gmra.mxu0 %v387
    %v861 = vpop.f32.mrf.mxu0
    %v862 = vadd.f32 %v230, %v861
    %v863 = vpop.f32.mrf.mxu0
    %v864 = vadd.f32 %v234, %v863
    %v865 = vpop.f32.mrf.mxu0
    %v866 = vadd.f32 %v230, %v865
    %v867 = vpop.f32.mrf.mxu0
    %v868 = vadd.f32 %v234, %v867
    %869 = vmatprep.mubr.bf16.mxu0 0
    %870 = vmatmul.mubr.bf16.gmra.mxu0 %v390
    %v871 = vpop.f32.mrf.mxu0
    %v872 = vadd.f32 %v230, %v871
    %v873 = vpop.f32.mrf.mxu0
    %v874 = vadd.f32 %v234, %v873
    %v875 = vpop.f32.mrf.mxu0
    %v876 = vadd.f32 %v230, %v875
    %v877 = vpop.f32.mrf.mxu0
    %v878 = vadd.f32 %v234, %v877
    %879 = vmatprep.mubr.bf16.mxu0 0
    %880 = vmatmul.mubr.bf16.gmra.mxu0 %v393
    %v881 = vpop.f32.mrf.mxu0
    %v882 = vadd.f32 %v230, %v881
    %v883 = vpop.f32.mrf.mxu0
    %v884 = vadd.f32 %v234, %v883
    %v885 = vpop.f32.mrf.mxu0
    %v886 = vadd.f32 %v230, %v885
    %v887 = vpop.f32.mrf.mxu0
    %v888 = vadd.f32 %v234, %v887
    %889 = vmatprep.mubr.bf16.mxu0 0
    %890 = vmatmul.mubr.bf16.gmra.mxu0 %v396
    %v891 = vpop.f32.mrf.mxu0
    %v892 = vadd.f32 %v230, %v891
    %v893 = vpop.f32.mrf.mxu0
    %v894 = vadd.f32 %v234, %v893
    %v895 = vpop.f32.mrf.mxu0
    %v896 = vadd.f32 %v230, %v895
    %v897 = vpop.f32.mrf.mxu0
    %v898 = vadd.f32 %v234, %v897
    %899 = vmatprep.mubr.bf16.mxu0 0
    %900 = vmatmul.mubr.bf16.gmra.mxu0 %v399
    %v901 = vpop.f32.mrf.mxu0
    %v902 = vadd.f32 %v230, %v901
    %v903 = vpop.f32.mrf.mxu0
    %v904 = vadd.f32 %v234, %v903
    %v905 = vpop.f32.mrf.mxu0
    %v906 = vadd.f32 %v230, %v905
    %v907 = vpop.f32.mrf.mxu0
    %v908 = vadd.f32 %v234, %v907
    %909 = vmatprep.mubr.bf16.mxu0 0
    %910 = vmatmul.mubr.bf16.gmra.mxu0 %v402
    %v911 = vpop.f32.mrf.mxu0
    %v912 = vadd.f32 %v230, %v911
    %v913 = vpop.f32.mrf.mxu0
    %v914 = vadd.f32 %v234, %v913
    %v915 = vpop.f32.mrf.mxu0
    %v916 = vadd.f32 %v230, %v915
    %v917 = vpop.f32.mrf.mxu0
    %v918 = vadd.f32 %v234, %v917
    %919 = vmatprep.mubr.bf16.mxu0 0
    %920 = vmatmul.mubr.bf16.gmra.mxu0 %v405
    %v921 = vpop.f32.mrf.mxu0
    %v922 = vadd.f32 %v230, %v921
    %v923 = vpop.f32.mrf.mxu0
    %v924 = vadd.f32 %v234, %v923
    %v925 = vpop.f32.mrf.mxu0
    %v926 = vadd.f32 %v230, %v925
    %v927 = vpop.f32.mrf.mxu0
    %v928 = vadd.f32 %v234, %v927
    %929 = vmatprep.mubr.bf16.mxu0 0
    %930 = vmatmul.mubr.bf16.gmra.mxu0 %v408
    %v931 = vpop.f32.mrf.mxu0
    %v932 = vadd.f32 %v230, %v931
    %v933 = vpop.f32.mrf.mxu0
    %v934 = vadd.f32 %v234, %v933
    %v935 = vpop.f32.mrf.mxu0
    %v936 = vadd.f32 %v230, %v935
    %v937 = vpop.f32.mrf.mxu0
    %v938 = vadd.f32 %v234, %v937
    %939 = vmatprep.mubr.bf16.mxu0 0
    %940 = vmatmul.mubr.bf16.gmra.mxu0 %v411
    %v941 = vpop.f32.mrf.mxu0
    %v942 = vadd.f32 %v230, %v941
    %v943 = vpop.f32.mrf.mxu0
    %v944 = vadd.f32 %v234, %v943
    %v945 = vpop.f32.mrf.mxu0
    %v946 = vadd.f32 %v230, %v945
    %v947 = vpop.f32.mrf.mxu0
    %v948 = vadd.f32 %v234, %v947
    %949 = vmatprep.mubr.bf16.mxu0 0
    %950 = vmatmul.mubr.bf16.gmra.mxu0 %v414
    %v951 = vpop.f32.mrf.mxu0
    %v952 = vadd.f32 %v230, %v951
    %v953 = vpop.f32.mrf.mxu0
    %v954 = vadd.f32 %v234, %v953
    %v955 = vpop.f32.mrf.mxu0
    %v956 = vadd.f32 %v230, %v955
    %v957 = vpop.f32.mrf.mxu0
    %v958 = vadd.f32 %v234, %v957
    %959 = vmatprep.mubr.bf16.mxu0 0
    %960 = vmatmul.mubr.bf16.gmra.mxu0 %v417
    %v961 = vpop.f32.mrf.mxu0
    %v962 = vadd.f32 %v230, %v961
    %v963 = vpop.f32.mrf.mxu0
    %v964 = vadd.f32 %v234, %v963
    %v965 = vpop.f32.mrf.mxu0
    %v966 = vadd.f32 %v230, %v965
    %v967 = vpop.f32.mrf.mxu0
    %v968 = vadd.f32 %v234, %v967
    %969 = vmatprep.mubr.bf16.mxu0 0
    %970 = vmatmul.mubr.bf16.gmra.mxu0 %v420
    %v971 = vpop.f32.mrf.mxu0
    %v972 = vadd.f32 %v230, %v971
    %v973 = vpop.f32.mrf.mxu0
    %v974 = vadd.f32 %v234, %v973
    %v975 = vpop.f32.mrf.mxu0
    %v976 = vadd.f32 %v230, %v975
    %v977 = vpop.f32.mrf.mxu0
    %v978 = vadd.f32 %v234, %v977
    %979 = vmatprep.mubr.bf16.mxu0 0
    %980 = vmatmul.mubr.bf16.gmra.mxu0 %v423
    %v981 = vpop.f32.mrf.mxu0
    %v982 = vadd.f32 %v230, %v981
    %v983 = vpop.f32.mrf.mxu0
    %v984 = vadd.f32 %v234, %v983
    %v985 = vpop.f32.mrf.mxu0
    %v986 = vadd.f32 %v230, %v985
    %v987 = vpop.f32.mrf.mxu0
    %v988 = vadd.f32 %v234, %v987
    %989 = vmatprep.mubr.bf16.mxu0 0
    %990 = vmatmul.mubr.bf16.gmra.mxu0 %v426
    %v991 = vpop.f32.mrf.mxu0
    %v992 = vadd.f32 %v230, %v991
    %v993 = vpop.f32.mrf.mxu0
    %v994 = vadd.f32 %v234, %v993
    %v995 = vpop.f32.mrf.mxu0
    %v996 = vadd.f32 %v230, %v995
    %v997 = vpop.f32.mrf.mxu0
    %v998 = vadd.f32 %v234, %v997
    %999 = vmatprep.mubr.bf16.mxu0 0
    %1000 = vmatmul.mubr.bf16.gmra.mxu0 %v429
    %v1001 = vpop.f32.mrf.mxu0
    %v1002 = vadd.f32 %v230, %v1001
    %v1003 = vpop.f32.mrf.mxu0
    %v1004 = vadd.f32 %v234, %v1003
    %v1005 = vpop.f32.mrf.mxu0
    %v1006 = vadd.f32 %v230, %v1005
    %v1007 = vpop.f32.mrf.mxu0
    %v1008 = vadd.f32 %v234, %v1007
    %1009 = vmatprep.mubr.bf16.mxu0 0
    %1010 = vmatmul.mubr.bf16.gmra.mxu0 %v432
    %v1011 = vpop.f32.mrf.mxu0
    %v1012 = vadd.f32 %v230, %v1011
    %v1013 = vpop.f32.mrf.mxu0
    %v1014 = vadd.f32 %v234, %v1013
    %v1015 = vpop.f32.mrf.mxu0
    %v1016 = vadd.f32 %v230, %v1015
    %v1017 = vpop.f32.mrf.mxu0
    %v1018 = vadd.f32 %v234, %v1017
    %1019 = vmatprep.mubr.bf16.mxu0 0
    %1020 = vmatmul.mubr.bf16.gmra.mxu0 %v435
    %v1021 = vpop.f32.mrf.mxu0
    %v1022 = vadd.f32 %v230, %v1021
    %v1023 = vpop.f32.mrf.mxu0
    %v1024 = vadd.f32 %v234, %v1023
    %v1025 = vpop.f32.mrf.mxu0
    %v1026 = vadd.f32 %v230, %v1025
    %v1027 = vpop.f32.mrf.mxu0
    %v1028 = vadd.f32 %v234, %v1027
    %1029 = vmatprep.mubr.bf16.mxu0 0
    %1030 = vmatmul.mubr.bf16.gmra.mxu0 %v438
    %v1031 = vpop.f32.mrf.mxu0
    %v1032 = vadd.f32 %v230, %v1031
    %v1033 = vpop.f32.mrf.mxu0
    %v1034 = vadd.f32 %v234, %v1033
    %v1035 = vpop.f32.mrf.mxu0
    %v1036 = vadd.f32 %v230, %v1035
    %v1037 = vpop.f32.mrf.mxu0
    %v1038 = vadd.f32 %v234, %v1037
    %1039 = vmatprep.mubr.bf16.mxu0 0
    %1040 = vmatmul.mubr.bf16.gmra.mxu0 %v441
    %v1041 = vpop.f32.mrf.mxu0
    %v1042 = vadd.f32 %v230, %v1041
    %v1043 = vpop.f32.mrf.mxu0
    %v1044 = vadd.f32 %v234, %v1043
    %v1045 = vpop.f32.mrf.mxu0
    %v1046 = vadd.f32 %v230, %v1045
    %v1047 = vpop.f32.mrf.mxu0
    %v1048 = vadd.f32 %v234, %v1047
    %1049 = vmatprep.mubr.bf16.mxu0 0
    %1050 = vmatmul.mubr.bf16.gmra.mxu0 %v444
    %v1051 = vpop.f32.mrf.mxu0
    %v1052 = vadd.f32 %v230, %v1051
    %v1053 = vpop.f32.mrf.mxu0
    %v1054 = vadd.f32 %v234, %v1053
    %v1055 = vpop.f32.mrf.mxu0
    %v1056 = vadd.f32 %v230, %v1055
    %v1057 = vpop.f32.mrf.mxu0
    %v1058 = vadd.f32 %v234, %v1057
    %1059 = vmatprep.mubr.bf16.mxu0 0
    %1060 = vmatmul.mubr.bf16.gmra.mxu0 %v447
    %v1061 = vpop.f32.mrf.mxu0
    %v1062 = vadd.f32 %v230, %v1061
    %v1063 = vpop.f32.mrf.mxu0
    %v1064 = vadd.f32 %v234, %v1063
    %v1065 = vpop.f32.mrf.mxu0
    %v1066 = vadd.f32 %v230, %v1065
    %v1067 = vpop.f32.mrf.mxu0
    %v1068 = vadd.f32 %v234, %v1067
    %1069 = vmatprep.mubr.bf16.mxu0 0
    %1070 = vmatmul.mubr.bf16.gmra.mxu0 %v450
    %v1071 = vpop.f32.mrf.mxu0
    %v1072 = vadd.f32 %v230, %v1071
    %v1073 = vpop.f32.mrf.mxu0
    %v1074 = vadd.f32 %v234, %v1073
    %v1075 = vpop.f32.mrf.mxu0
    %v1076 = vadd.f32 %v230, %v1075
    %v1077 = vpop.f32.mrf.mxu0
    %v1078 = vadd.f32 %v234, %v1077
    %1079 = vmatprep.mubr.bf16.mxu0 0
    %1080 = vmatmul.mubr.bf16.gmra.mxu0 %v453
    %v1081 = vpop.f32.mrf.mxu0
    %v1082 = vadd.f32 %v230, %v1081
    %v1083 = vpop.f32.mrf.mxu0
    %v1084 = vadd.f32 %v234, %v1083
    %v1085 = vpop.f32.mrf.mxu0
    %v1086 = vadd.f32 %v230, %v1085
    %v1087 = vpop.f32.mrf.mxu0
    %v1088 = vadd.f32 %v234, %v1087
    %1089 = vmatprep.mubr.bf16.mxu0 0
    %1090 = vmatmul.mubr.bf16.gmra.mxu0 %v456
    %v1091 = vpop.f32.mrf.mxu0
    %v1092 = vadd.f32 %v230, %v1091
    %v1093 = vpop.f32.mrf.mxu0
    %v1094 = vadd.f32 %v234, %v1093
    %v1095 = vpop.f32.mrf.mxu0
    %v1096 = vadd.f32 %v230, %v1095
    %v1097 = vpop.f32.mrf.mxu0
    %v1098 = vadd.f32 %v234, %v1097
    %1099 = vmatprep.mubr.bf16.mxu0 0
    %1100 = vmatmul.mubr.bf16.gmra.mxu0 %v459
    %v1101 = vpop.f32.mrf.mxu0
    %v1102 = vadd.f32 %v230, %v1101
    %v1103 = vpop.f32.mrf.mxu0
    %v1104 = vadd.f32 %v234, %v1103
    %v1105 = vpop.f32.mrf.mxu0
    %v1106 = vadd.f32 %v230, %v1105
    %v1107 = vpop.f32.mrf.mxu0
    %v1108 = vadd.f32 %v234, %v1107
    %1109 = vmatprep.mubr.bf16.mxu0 0
    %1110 = vmatmul.mubr.bf16.gmra.mxu0 %v462
    %v1111 = vpop.f32.mrf.mxu0
    %v1112 = vadd.f32 %v230, %v1111
    %v1113 = vpop.f32.mrf.mxu0
    %v1114 = vadd.f32 %v234, %v1113
    %v1115 = vpop.f32.mrf.mxu0
    %v1116 = vadd.f32 %v230, %v1115
    %v1117 = vpop.f32.mrf.mxu0
    %v1118 = vadd.f32 %v234, %v1117
    %1119 = vmatprep.mubr.bf16.mxu0 0
    %1120 = vmatmul.mubr.bf16.gmra.mxu0 %v465
    %v1121 = vpop.f32.mrf.mxu0
    %v1122 = vadd.f32 %v230, %v1121
    %v1123 = vpop.f32.mrf.mxu0
    %v1124 = vadd.f32 %v234, %v1123
    %v1125 = vpop.f32.mrf.mxu0
    %v1126 = vadd.f32 %v230, %v1125
    %v1127 = vpop.f32.mrf.mxu0
    %v1128 = vadd.f32 %v234, %v1127
    %1129 = vdwg.mxu0
    %v1130 = vxor.u32 %v502, 2147483648
    %v1131 = vxor.u32 %v504, 2147483648
    %v1132 = vxor.u32 %v506, 2147483648
    %v1133 = vxor.u32 %v508, 2147483648
    %v1134 = vxor.u32 %v512, 2147483648
    %v1135 = vxor.u32 %v514, 2147483648
    %v1136 = vxor.u32 %v516, 2147483648
    %v1137 = vxor.u32 %v518, 2147483648
    %v1138 = vxor.u32 %v522, 2147483648
    %v1139 = vxor.u32 %v524, 2147483648
    %v1140 = vxor.u32 %v526, 2147483648
    %v1141 = vxor.u32 %v528, 2147483648
    %v1142 = vxor.u32 %v532, 2147483648
    %v1143 = vxor.u32 %v534, 2147483648
    %v1144 = vxor.u32 %v536, 2147483648
    %v1145 = vxor.u32 %v538, 2147483648
    %v1146 = vxor.u32 %v542, 2147483648
    %v1147 = vxor.u32 %v544, 2147483648
    %v1148 = vxor.u32 %v546, 2147483648
    %v1149 = vxor.u32 %v548, 2147483648
    %v1150 = vxor.u32 %v552, 2147483648
    %v1151 = vxor.u32 %v554, 2147483648
    %v1152 = vxor.u32 %v556, 2147483648
    %v1153 = vxor.u32 %v558, 2147483648
    %v1154 = vxor.u32 %v562, 2147483648
    %v1155 = vxor.u32 %v564, 2147483648
    %v1156 = vxor.u32 %v566, 2147483648
    %v1157 = vxor.u32 %v568, 2147483648
    %v1158 = vxor.u32 %v572, 2147483648
    %v1159 = vxor.u32 %v574, 2147483648
    %v1160 = vxor.u32 %v576, 2147483648
    %v1161 = vxor.u32 %v578, 2147483648
    %v1162 = vxor.u32 %v582, 2147483648
    %v1163 = vxor.u32 %v584, 2147483648
    %v1164 = vxor.u32 %v586, 2147483648
    %v1165 = vxor.u32 %v588, 2147483648
    %v1166 = vxor.u32 %v592, 2147483648
    %v1167 = vxor.u32 %v594, 2147483648
    %v1168 = vxor.u32 %v596, 2147483648
    %v1169 = vxor.u32 %v598, 2147483648
    %v1170 = vxor.u32 %v602, 2147483648
    %v1171 = vxor.u32 %v604, 2147483648
    %v1172 = vxor.u32 %v606, 2147483648
    %v1173 = vxor.u32 %v608, 2147483648
    %v1174 = vxor.u32 %v612, 2147483648
    %v1175 = vxor.u32 %v614, 2147483648
    %v1176 = vxor.u32 %v616, 2147483648
    %v1177 = vxor.u32 %v618, 2147483648
    %v1178 = vxor.u32 %v622, 2147483648
    %v1179 = vxor.u32 %v624, 2147483648
    %v1180 = vxor.u32 %v626, 2147483648
    %v1181 = vxor.u32 %v628, 2147483648
    %v1182 = vxor.u32 %v632, 2147483648
    %v1183 = vxor.u32 %v634, 2147483648
    %v1184 = vxor.u32 %v636, 2147483648
    %v1185 = vxor.u32 %v638, 2147483648
    %v1186 = vxor.u32 %v642, 2147483648
    %v1187 = vxor.u32 %v644, 2147483648
    %v1188 = vxor.u32 %v646, 2147483648
    %v1189 = vxor.u32 %v648, 2147483648
    %v1190 = vxor.u32 %v652, 2147483648
    %v1191 = vxor.u32 %v654, 2147483648
    %v1192 = vxor.u32 %v656, 2147483648
    %v1193 = vxor.u32 %v658, 2147483648
    %v1194 = vxor.u32 %v662, 2147483648
    %v1195 = vxor.u32 %v664, 2147483648
    %v1196 = vxor.u32 %v666, 2147483648
    %v1197 = vxor.u32 %v668, 2147483648
    %v1198 = vxor.u32 %v672, 2147483648
    %v1199 = vxor.u32 %v674, 2147483648
    %v1200 = vxor.u32 %v676, 2147483648
    %v1201 = vxor.u32 %v678, 2147483648
    %v1202 = vxor.u32 %v682, 2147483648
    %v1203 = vxor.u32 %v684, 2147483648
    %v1204 = vxor.u32 %v686, 2147483648
    %v1205 = vxor.u32 %v688, 2147483648
    %v1206 = vxor.u32 %v692, 2147483648
    %v1207 = vxor.u32 %v694, 2147483648
    %v1208 = vxor.u32 %v696, 2147483648
    %v1209 = vxor.u32 %v698, 2147483648
    %v1210 = vxor.u32 %v702, 2147483648
    %v1211 = vxor.u32 %v704, 2147483648
    %v1212 = vxor.u32 %v706, 2147483648
    %v1213 = vxor.u32 %v708, 2147483648
    %v1214 = vxor.u32 %v712, 2147483648
    %v1215 = vxor.u32 %v714, 2147483648
    %v1216 = vxor.u32 %v716, 2147483648
    %v1217 = vxor.u32 %v718, 2147483648
    %v1218 = vxor.u32 %v722, 2147483648
    %v1219 = vxor.u32 %v724, 2147483648
    %v1220 = vxor.u32 %v726, 2147483648
    %v1221 = vxor.u32 %v728, 2147483648
    %v1222 = vxor.u32 %v732, 2147483648
    %v1223 = vxor.u32 %v734, 2147483648
    %v1224 = vxor.u32 %v736, 2147483648
    %v1225 = vxor.u32 %v738, 2147483648
    %v1226 = vxor.u32 %v742, 2147483648
    %v1227 = vxor.u32 %v744, 2147483648
    %v1228 = vxor.u32 %v746, 2147483648
    %v1229 = vxor.u32 %v748, 2147483648
    %v1230 = vxor.u32 %v752, 2147483648
    %v1231 = vxor.u32 %v754, 2147483648
    %v1232 = vxor.u32 %v756, 2147483648
    %v1233 = vxor.u32 %v758, 2147483648
    %v1234 = vxor.u32 %v762, 2147483648
    %v1235 = vxor.u32 %v764, 2147483648
    %v1236 = vxor.u32 %v766, 2147483648
    %v1237 = vxor.u32 %v768, 2147483648
    %v1238 = vxor.u32 %v772, 2147483648
    %v1239 = vxor.u32 %v774, 2147483648
    %v1240 = vxor.u32 %v776, 2147483648
    %v1241 = vxor.u32 %v778, 2147483648
    %v1242 = vxor.u32 %v782, 2147483648
    %v1243 = vxor.u32 %v784, 2147483648
    %v1244 = vxor.u32 %v786, 2147483648
    %v1245 = vxor.u32 %v788, 2147483648
    %v1246 = vxor.u32 %v792, 2147483648
    %v1247 = vxor.u32 %v794, 2147483648
    %v1248 = vxor.u32 %v796, 2147483648
    %v1249 = vxor.u32 %v798, 2147483648
    %v1250 = vxor.u32 %v802, 2147483648
    %v1251 = vxor.u32 %v804, 2147483648
    %v1252 = vxor.u32 %v806, 2147483648
    %v1253 = vxor.u32 %v808, 2147483648
    %v1254 = vxor.u32 %v812, 2147483648
    %v1255 = vxor.u32 %v814, 2147483648
    %v1256 = vxor.u32 %v816, 2147483648
    %v1257 = vxor.u32 %v818, 2147483648
    %v1258 = vxor.u32 %v822, 2147483648
    %v1259 = vxor.u32 %v824, 2147483648
    %v1260 = vxor.u32 %v826, 2147483648
    %v1261 = vxor.u32 %v828, 2147483648
    %v1262 = vxor.u32 %v832, 2147483648
    %v1263 = vxor.u32 %v834, 2147483648
    %v1264 = vxor.u32 %v836, 2147483648
    %v1265 = vxor.u32 %v838, 2147483648
    %v1266 = vxor.u32 %v842, 2147483648
    %v1267 = vxor.u32 %v844, 2147483648
    %v1268 = vxor.u32 %v846, 2147483648
    %v1269 = vxor.u32 %v848, 2147483648
    %v1270 = vxor.u32 %v852, 2147483648
    %v1271 = vxor.u32 %v854, 2147483648
    %v1272 = vxor.u32 %v856, 2147483648
    %v1273 = vxor.u32 %v858, 2147483648
    %v1274 = vxor.u32 %v862, 2147483648
    %v1275 = vxor.u32 %v864, 2147483648
    %v1276 = vxor.u32 %v866, 2147483648
    %v1277 = vxor.u32 %v868, 2147483648
    %v1278 = vxor.u32 %v872, 2147483648
    %v1279 = vxor.u32 %v874, 2147483648
    %v1280 = vxor.u32 %v876, 2147483648
    %v1281 = vxor.u32 %v878, 2147483648
    %v1282 = vxor.u32 %v882, 2147483648
    %v1283 = vxor.u32 %v884, 2147483648
    %v1284 = vxor.u32 %v886, 2147483648
    %v1285 = vxor.u32 %v888, 2147483648
    %v1286 = vxor.u32 %v892, 2147483648
    %v1287 = vxor.u32 %v894, 2147483648
    %v1288 = vxor.u32 %v896, 2147483648
    %v1289 = vxor.u32 %v898, 2147483648
    %v1290 = vxor.u32 %v902, 2147483648
    %v1291 = vxor.u32 %v904, 2147483648
    %v1292 = vxor.u32 %v906, 2147483648
    %v1293 = vxor.u32 %v908, 2147483648
    %v1294 = vxor.u32 %v912, 2147483648
    %v1295 = vxor.u32 %v914, 2147483648
    %v1296 = vxor.u32 %v916, 2147483648
    %v1297 = vxor.u32 %v918, 2147483648
    %v1298 = vxor.u32 %v922, 2147483648
    %v1299 = vxor.u32 %v924, 2147483648
    %v1300 = vxor.u32 %v926, 2147483648
    %v1301 = vxor.u32 %v928, 2147483648
    %v1302 = vxor.u32 %v932, 2147483648
    %v1303 = vxor.u32 %v934, 2147483648
    %v1304 = vxor.u32 %v936, 2147483648
    %v1305 = vxor.u32 %v938, 2147483648
    %v1306 = vxor.u32 %v942, 2147483648
    %v1307 = vxor.u32 %v944, 2147483648
    %v1308 = vxor.u32 %v946, 2147483648
    %v1309 = vxor.u32 %v948, 2147483648
    %v1310 = vxor.u32 %v952, 2147483648
    %v1311 = vxor.u32 %v954, 2147483648
    %v1312 = vxor.u32 %v956, 2147483648
    %v1313 = vxor.u32 %v958, 2147483648
    %v1314 = vxor.u32 %v962, 2147483648
    %v1315 = vxor.u32 %v964, 2147483648
    %v1316 = vxor.u32 %v966, 2147483648
    %v1317 = vxor.u32 %v968, 2147483648
    %v1318 = vxor.u32 %v972, 2147483648
    %v1319 = vxor.u32 %v974, 2147483648
    %v1320 = vxor.u32 %v976, 2147483648
    %v1321 = vxor.u32 %v978, 2147483648
    %v1322 = vxor.u32 %v982, 2147483648
    %v1323 = vxor.u32 %v984, 2147483648
    %v1324 = vxor.u32 %v986, 2147483648
    %v1325 = vxor.u32 %v988, 2147483648
    %v1326 = vxor.u32 %v992, 2147483648
    %v1327 = vxor.u32 %v994, 2147483648
    %v1328 = vxor.u32 %v996, 2147483648
    %v1329 = vxor.u32 %v998, 2147483648
    %v1330 = vxor.u32 %v1002, 2147483648
    %v1331 = vxor.u32 %v1004, 2147483648
    %v1332 = vxor.u32 %v1006, 2147483648
    %v1333 = vxor.u32 %v1008, 2147483648
    %v1334 = vxor.u32 %v1012, 2147483648
    %v1335 = vxor.u32 %v1014, 2147483648
    %v1336 = vxor.u32 %v1016, 2147483648
    %v1337 = vxor.u32 %v1018, 2147483648
    %v1338 = vxor.u32 %v1022, 2147483648
    %v1339 = vxor.u32 %v1024, 2147483648
    %v1340 = vxor.u32 %v1026, 2147483648
    %v1341 = vxor.u32 %v1028, 2147483648
    %v1342 = vxor.u32 %v1032, 2147483648
    %v1343 = vxor.u32 %v1034, 2147483648
    %v1344 = vxor.u32 %v1036, 2147483648
    %v1345 = vxor.u32 %v1038, 2147483648
    %v1346 = vxor.u32 %v1042, 2147483648
    %v1347 = vxor.u32 %v1044, 2147483648
    %v1348 = vxor.u32 %v1046, 2147483648
    %v1349 = vxor.u32 %v1048, 2147483648
    %v1350 = vxor.u32 %v1052, 2147483648
    %v1351 = vxor.u32 %v1054, 2147483648
    %v1352 = vxor.u32 %v1056, 2147483648
    %v1353 = vxor.u32 %v1058, 2147483648
    %v1354 = vxor.u32 %v1062, 2147483648
    %v1355 = vxor.u32 %v1064, 2147483648
    %v1356 = vxor.u32 %v1066, 2147483648
    %v1357 = vxor.u32 %v1068, 2147483648
    %v1358 = vxor.u32 %v1072, 2147483648
    %v1359 = vxor.u32 %v1074, 2147483648
    %v1360 = vxor.u32 %v1076, 2147483648
    %v1361 = vxor.u32 %v1078, 2147483648
    %v1362 = vxor.u32 %v1082, 2147483648
    %v1363 = vxor.u32 %v1084, 2147483648
    %v1364 = vxor.u32 %v1086, 2147483648
    %v1365 = vxor.u32 %v1088, 2147483648
    %v1366 = vxor.u32 %v1092, 2147483648
    %v1367 = vxor.u32 %v1094, 2147483648
    %v1368 = vxor.u32 %v1096, 2147483648
    %v1369 = vxor.u32 %v1098, 2147483648
    %v1370 = vxor.u32 %v1102, 2147483648
    %v1371 = vxor.u32 %v1104, 2147483648
    %v1372 = vxor.u32 %v1106, 2147483648
    %v1373 = vxor.u32 %v1108, 2147483648
    %v1374 = vxor.u32 %v1112, 2147483648
    %v1375 = vxor.u32 %v1114, 2147483648
    %v1376 = vxor.u32 %v1116, 2147483648
    %v1377 = vxor.u32 %v1118, 2147483648
    %v1378 = vxor.u32 %v1122, 2147483648
    %v1379 = vxor.u32 %v1124, 2147483648
    %v1380 = vxor.u32 %v1126, 2147483648
    %v1381 = vxor.u32 %v1128, 2147483648
    %v1382 = vmul.f32 %v1130, 1.442695
    %v1383 = vpow.pop %v1382
    %v1384 = vmul.f32 %v1131, 1.442695
    %v1385 = vpow.pop %v1384
    %v1386 = vmul.f32 %v1132, 1.442695
    %v1387 = vpow.pop %v1386
    %v1388 = vmul.f32 %v1133, 1.442695
    %v1389 = vpow.pop %v1388
    %v1390 = vmul.f32 %v1134, 1.442695
    %v1391 = vpow.pop %v1390
    %v1392 = vmul.f32 %v1135, 1.442695
    %v1393 = vpow.pop %v1392
    %v1394 = vmul.f32 %v1136, 1.442695
    %v1395 = vpow.pop %v1394
    %v1396 = vmul.f32 %v1137, 1.442695
    %v1397 = vpow.pop %v1396
    %v1398 = vmul.f32 %v1138, 1.442695
    %v1399 = vpow.pop %v1398
    %v1400 = vmul.f32 %v1139, 1.442695
    %v1401 = vpow.pop %v1400
    %v1402 = vmul.f32 %v1140, 1.442695
    %v1403 = vpow.pop %v1402
    %v1404 = vmul.f32 %v1141, 1.442695
    %v1405 = vpow.pop %v1404
    %v1406 = vmul.f32 %v1142, 1.442695
    %v1407 = vpow.pop %v1406
    %v1408 = vmul.f32 %v1143, 1.442695
    %v1409 = vpow.pop %v1408
    %v1410 = vmul.f32 %v1144, 1.442695
    %v1411 = vpow.pop %v1410
    %v1412 = vmul.f32 %v1145, 1.442695
    %v1413 = vpow.pop %v1412
    %v1414 = vmul.f32 %v1146, 1.442695
    %v1415 = vpow.pop %v1414
    %v1416 = vmul.f32 %v1147, 1.442695
    %v1417 = vpow.pop %v1416
    %v1418 = vmul.f32 %v1148, 1.442695
    %v1419 = vpow.pop %v1418
    %v1420 = vmul.f32 %v1149, 1.442695
    %v1421 = vpow.pop %v1420
    %v1422 = vmul.f32 %v1150, 1.442695
    %v1423 = vpow.pop %v1422
    %v1424 = vmul.f32 %v1151, 1.442695
    %v1425 = vpow.pop %v1424
    %v1426 = vmul.f32 %v1152, 1.442695
    %v1427 = vpow.pop %v1426
    %v1428 = vmul.f32 %v1153, 1.442695
    %v1429 = vpow.pop %v1428
    %v1430 = vmul.f32 %v1154, 1.442695
    %v1431 = vpow.pop %v1430
    %v1432 = vmul.f32 %v1155, 1.442695
    %v1433 = vpow.pop %v1432
    %v1434 = vmul.f32 %v1156, 1.442695
    %v1435 = vpow.pop %v1434
    %v1436 = vmul.f32 %v1157, 1.442695
    %v1437 = vpow.pop %v1436
    %v1438 = vmul.f32 %v1158, 1.442695
    %v1439 = vpow.pop %v1438
    %v1440 = vmul.f32 %v1159, 1.442695
    %v1441 = vpow.pop %v1440
    %v1442 = vmul.f32 %v1160, 1.442695
    %v1443 = vpow.pop %v1442
    %v1444 = vmul.f32 %v1161, 1.442695
    %v1445 = vpow.pop %v1444
    %v1446 = vmul.f32 %v1162, 1.442695
    %v1447 = vpow.pop %v1446
    %v1448 = vmul.f32 %v1163, 1.442695
    %v1449 = vpow.pop %v1448
    %v1450 = vmul.f32 %v1164, 1.442695
    %v1451 = vpow.pop %v1450
    %v1452 = vmul.f32 %v1165, 1.442695
    %v1453 = vpow.pop %v1452
    %v1454 = vmul.f32 %v1166, 1.442695
    %v1455 = vpow.pop %v1454
    %v1456 = vmul.f32 %v1167, 1.442695
    %v1457 = vpow.pop %v1456
    %v1458 = vmul.f32 %v1168, 1.442695
    %v1459 = vpow.pop %v1458
    %v1460 = vmul.f32 %v1169, 1.442695
    %v1461 = vpow.pop %v1460
    %v1462 = vmul.f32 %v1170, 1.442695
    %v1463 = vpow.pop %v1462
    %v1464 = vmul.f32 %v1171, 1.442695
    %v1465 = vpow.pop %v1464
    %v1466 = vmul.f32 %v1172, 1.442695
    %v1467 = vpow.pop %v1466
    %v1468 = vmul.f32 %v1173, 1.442695
    %v1469 = vpow.pop %v1468
    %v1470 = vmul.f32 %v1174, 1.442695
    %v1471 = vpow.pop %v1470
    %v1472 = vmul.f32 %v1175, 1.442695
    %v1473 = vpow.pop %v1472
    %v1474 = vmul.f32 %v1176, 1.442695
    %v1475 = vpow.pop %v1474
    %v1476 = vmul.f32 %v1177, 1.442695
    %v1477 = vpow.pop %v1476
    %v1478 = vmul.f32 %v1178, 1.442695
    %v1479 = vpow.pop %v1478
    %v1480 = vmul.f32 %v1179, 1.442695
    %v1481 = vpow.pop %v1480
    %v1482 = vmul.f32 %v1180, 1.442695
    %v1483 = vpow.pop %v1482
    %v1484 = vmul.f32 %v1181, 1.442695
    %v1485 = vpow.pop %v1484
    %v1486 = vmul.f32 %v1182, 1.442695
    %v1487 = vpow.pop %v1486
    %v1488 = vmul.f32 %v1183, 1.442695
    %v1489 = vpow.pop %v1488
    %v1490 = vmul.f32 %v1184, 1.442695
    %v1491 = vpow.pop %v1490
    %v1492 = vmul.f32 %v1185, 1.442695
    %v1493 = vpow.pop %v1492
    %v1494 = vmul.f32 %v1186, 1.442695
    %v1495 = vpow.pop %v1494
    %v1496 = vmul.f32 %v1187, 1.442695
    %v1497 = vpow.pop %v1496
    %v1498 = vmul.f32 %v1188, 1.442695
    %v1499 = vpow.pop %v1498
    %v1500 = vmul.f32 %v1189, 1.442695
    %v1501 = vpow.pop %v1500
    %v1502 = vmul.f32 %v1190, 1.442695
    %v1503 = vpow.pop %v1502
    %v1504 = vmul.f32 %v1191, 1.442695
    %v1505 = vpow.pop %v1504
    %v1506 = vmul.f32 %v1192, 1.442695
    %v1507 = vpow.pop %v1506
    %v1508 = vmul.f32 %v1193, 1.442695
    %v1509 = vpow.pop %v1508
    %v1510 = vmul.f32 %v1194, 1.442695
    %v1511 = vpow.pop %v1510
    %v1512 = vmul.f32 %v1195, 1.442695
    %v1513 = vpow.pop %v1512
    %v1514 = vmul.f32 %v1196, 1.442695
    %v1515 = vpow.pop %v1514
    %v1516 = vmul.f32 %v1197, 1.442695
    %v1517 = vpow.pop %v1516
    %v1518 = vmul.f32 %v1198, 1.442695
    %v1519 = vpow.pop %v1518
    %v1520 = vmul.f32 %v1199, 1.442695
    %v1521 = vpow.pop %v1520
    %v1522 = vmul.f32 %v1200, 1.442695
    %v1523 = vpow.pop %v1522
    %v1524 = vmul.f32 %v1201, 1.442695
    %v1525 = vpow.pop %v1524
    %v1526 = vmul.f32 %v1202, 1.442695
    %v1527 = vpow.pop %v1526
    %v1528 = vmul.f32 %v1203, 1.442695
    %v1529 = vpow.pop %v1528
    %v1530 = vmul.f32 %v1204, 1.442695
    %v1531 = vpow.pop %v1530
    %v1532 = vmul.f32 %v1205, 1.442695
    %v1533 = vpow.pop %v1532
    %v1534 = vmul.f32 %v1206, 1.442695
    %v1535 = vpow.pop %v1534
    %v1536 = vmul.f32 %v1207, 1.442695
    %v1537 = vpow.pop %v1536
    %v1538 = vmul.f32 %v1208, 1.442695
    %v1539 = vpow.pop %v1538
    %v1540 = vmul.f32 %v1209, 1.442695
    %v1541 = vpow.pop %v1540
    %v1542 = vmul.f32 %v1210, 1.442695
    %v1543 = vpow.pop %v1542
    %v1544 = vmul.f32 %v1211, 1.442695
    %v1545 = vpow.pop %v1544
    %v1546 = vmul.f32 %v1212, 1.442695
    %v1547 = vpow.pop %v1546
    %v1548 = vmul.f32 %v1213, 1.442695
    %v1549 = vpow.pop %v1548
    %v1550 = vmul.f32 %v1214, 1.442695
    %v1551 = vpow.pop %v1550
    %v1552 = vmul.f32 %v1215, 1.442695
    %v1553 = vpow.pop %v1552
    %v1554 = vmul.f32 %v1216, 1.442695
    %v1555 = vpow.pop %v1554
    %v1556 = vmul.f32 %v1217, 1.442695
    %v1557 = vpow.pop %v1556
    %v1558 = vmul.f32 %v1218, 1.442695
    %v1559 = vpow.pop %v1558
    %v1560 = vmul.f32 %v1219, 1.442695
    %v1561 = vpow.pop %v1560
    %v1562 = vmul.f32 %v1220, 1.442695
    %v1563 = vpow.pop %v1562
    %v1564 = vmul.f32 %v1221, 1.442695
    %v1565 = vpow.pop %v1564
    %v1566 = vmul.f32 %v1222, 1.442695
    %v1567 = vpow.pop %v1566
    %v1568 = vmul.f32 %v1223, 1.442695
    %v1569 = vpow.pop %v1568
    %v1570 = vmul.f32 %v1224, 1.442695
    %v1571 = vpow.pop %v1570
    %v1572 = vmul.f32 %v1225, 1.442695
    %v1573 = vpow.pop %v1572
    %v1574 = vmul.f32 %v1226, 1.442695
    %v1575 = vpow.pop %v1574
    %v1576 = vmul.f32 %v1227, 1.442695
    %v1577 = vpow.pop %v1576
    %v1578 = vmul.f32 %v1228, 1.442695
    %v1579 = vpow.pop %v1578
    %v1580 = vmul.f32 %v1229, 1.442695
    %v1581 = vpow.pop %v1580
    %v1582 = vmul.f32 %v1230, 1.442695
    %v1583 = vpow.pop %v1582
    %v1584 = vmul.f32 %v1231, 1.442695
    %v1585 = vpow.pop %v1584
    %v1586 = vmul.f32 %v1232, 1.442695
    %v1587 = vpow.pop %v1586
    %v1588 = vmul.f32 %v1233, 1.442695
    %v1589 = vpow.pop %v1588
    %v1590 = vmul.f32 %v1234, 1.442695
    %v1591 = vpow.pop %v1590
    %v1592 = vmul.f32 %v1235, 1.442695
    %v1593 = vpow.pop %v1592
    %v1594 = vmul.f32 %v1236, 1.442695
    %v1595 = vpow.pop %v1594
    %v1596 = vmul.f32 %v1237, 1.442695
    %v1597 = vpow.pop %v1596
    %v1598 = vmul.f32 %v1238, 1.442695
    %v1599 = vpow.pop %v1598
    %v1600 = vmul.f32 %v1239, 1.442695
    %v1601 = vpow.pop %v1600
    %v1602 = vmul.f32 %v1240, 1.442695
    %v1603 = vpow.pop %v1602
    %v1604 = vmul.f32 %v1241, 1.442695
    %v1605 = vpow.pop %v1604
    %v1606 = vmul.f32 %v1242, 1.442695
    %v1607 = vpow.pop %v1606
    %v1608 = vmul.f32 %v1243, 1.442695
    %v1609 = vpow.pop %v1608
    %v1610 = vmul.f32 %v1244, 1.442695
    %v1611 = vpow.pop %v1610
    %v1612 = vmul.f32 %v1245, 1.442695
    %v1613 = vpow.pop %v1612
    %v1614 = vmul.f32 %v1246, 1.442695
    %v1615 = vpow.pop %v1614
    %v1616 = vmul.f32 %v1247, 1.442695
    %v1617 = vpow.pop %v1616
    %v1618 = vmul.f32 %v1248, 1.442695
    %v1619 = vpow.pop %v1618
    %v1620 = vmul.f32 %v1249, 1.442695
    %v1621 = vpow.pop %v1620
    %v1622 = vmul.f32 %v1250, 1.442695
    %v1623 = vpow.pop %v1622
    %v1624 = vmul.f32 %v1251, 1.442695
    %v1625 = vpow.pop %v1624
    %v1626 = vmul.f32 %v1252, 1.442695
    %v1627 = vpow.pop %v1626
    %v1628 = vmul.f32 %v1253, 1.442695
    %v1629 = vpow.pop %v1628
    %v1630 = vmul.f32 %v1254, 1.442695
    %v1631 = vpow.pop %v1630
    %v1632 = vmul.f32 %v1255, 1.442695
    %v1633 = vpow.pop %v1632
    %v1634 = vmul.f32 %v1256, 1.442695
    %v1635 = vpow.pop %v1634
    %v1636 = vmul.f32 %v1257, 1.442695
    %v1637 = vpow.pop %v1636
    %v1638 = vmul.f32 %v1258, 1.442695
    %v1639 = vpow.pop %v1638
    %v1640 = vmul.f32 %v1259, 1.442695
    %v1641 = vpow.pop %v1640
    %v1642 = vmul.f32 %v1260, 1.442695
    %v1643 = vpow.pop %v1642
    %v1644 = vmul.f32 %v1261, 1.442695
    %v1645 = vpow.pop %v1644
    %v1646 = vmul.f32 %v1262, 1.442695
    %v1647 = vpow.pop %v1646
    %v1648 = vmul.f32 %v1263, 1.442695
    %v1649 = vpow.pop %v1648
    %v1650 = vmul.f32 %v1264, 1.442695
    %v1651 = vpow.pop %v1650
    %v1652 = vmul.f32 %v1265, 1.442695
    %v1653 = vpow.pop %v1652
    %v1654 = vmul.f32 %v1266, 1.442695
    %v1655 = vpow.pop %v1654
    %v1656 = vmul.f32 %v1267, 1.442695
    %v1657 = vpow.pop %v1656
    %v1658 = vmul.f32 %v1268, 1.442695
    %v1659 = vpow.pop %v1658
    %v1660 = vmul.f32 %v1269, 1.442695
    %v1661 = vpow.pop %v1660
    %v1662 = vmul.f32 %v1270, 1.442695
    %v1663 = vpow.pop %v1662
    %v1664 = vmul.f32 %v1271, 1.442695
    %v1665 = vpow.pop %v1664
    %v1666 = vmul.f32 %v1272, 1.442695
    %v1667 = vpow.pop %v1666
    %v1668 = vmul.f32 %v1273, 1.442695
    %v1669 = vpow.pop %v1668
    %v1670 = vmul.f32 %v1274, 1.442695
    %v1671 = vpow.pop %v1670
    %v1672 = vmul.f32 %v1275, 1.442695
    %v1673 = vpow.pop %v1672
    %v1674 = vmul.f32 %v1276, 1.442695
    %v1675 = vpow.pop %v1674
    %v1676 = vmul.f32 %v1277, 1.442695
    %v1677 = vpow.pop %v1676
    %v1678 = vmul.f32 %v1278, 1.442695
    %v1679 = vpow.pop %v1678
    %v1680 = vmul.f32 %v1279, 1.442695
    %v1681 = vpow.pop %v1680
    %v1682 = vmul.f32 %v1280, 1.442695
    %v1683 = vpow.pop %v1682
    %v1684 = vmul.f32 %v1281, 1.442695
    %v1685 = vpow.pop %v1684
    %v1686 = vmul.f32 %v1282, 1.442695
    %v1687 = vpow.pop %v1686
    %v1688 = vmul.f32 %v1283, 1.442695
    %v1689 = vpow.pop %v1688
    %v1690 = vmul.f32 %v1284, 1.442695
    %v1691 = vpow.pop %v1690
    %v1692 = vmul.f32 %v1285, 1.442695
    %v1693 = vpow.pop %v1692
    %v1694 = vmul.f32 %v1286, 1.442695
    %v1695 = vpow.pop %v1694
    %v1696 = vmul.f32 %v1287, 1.442695
    %v1697 = vpow.pop %v1696
    %v1698 = vmul.f32 %v1288, 1.442695
    %v1699 = vpow.pop %v1698
    %v1700 = vmul.f32 %v1289, 1.442695
    %v1701 = vpow.pop %v1700
    %v1702 = vmul.f32 %v1290, 1.442695
    %v1703 = vpow.pop %v1702
    %v1704 = vmul.f32 %v1291, 1.442695
    %v1705 = vpow.pop %v1704
    %v1706 = vmul.f32 %v1292, 1.442695
    %v1707 = vpow.pop %v1706
    %v1708 = vmul.f32 %v1293, 1.442695
    %v1709 = vpow.pop %v1708
    %v1710 = vmul.f32 %v1294, 1.442695
    %v1711 = vpow.pop %v1710
    %v1712 = vmul.f32 %v1295, 1.442695
    %v1713 = vpow.pop %v1712
    %v1714 = vmul.f32 %v1296, 1.442695
    %v1715 = vpow.pop %v1714
    %v1716 = vmul.f32 %v1297, 1.442695
    %v1717 = vpow.pop %v1716
    %v1718 = vmul.f32 %v1298, 1.442695
    %v1719 = vpow.pop %v1718
    %v1720 = vmul.f32 %v1299, 1.442695
    %v1721 = vpow.pop %v1720
    %v1722 = vmul.f32 %v1300, 1.442695
    %v1723 = vpow.pop %v1722
    %v1724 = vmul.f32 %v1301, 1.442695
    %v1725 = vpow.pop %v1724
    %v1726 = vmul.f32 %v1302, 1.442695
    %v1727 = vpow.pop %v1726
    %v1728 = vmul.f32 %v1303, 1.442695
    %v1729 = vpow.pop %v1728
    %v1730 = vmul.f32 %v1304, 1.442695
    %v1731 = vpow.pop %v1730
    %v1732 = vmul.f32 %v1305, 1.442695
    %v1733 = vpow.pop %v1732
    %v1734 = vmul.f32 %v1306, 1.442695
    %v1735 = vpow.pop %v1734
    %v1736 = vmul.f32 %v1307, 1.442695
    %v1737 = vpow.pop %v1736
    %v1738 = vmul.f32 %v1308, 1.442695
    %v1739 = vpow.pop %v1738
    %v1740 = vmul.f32 %v1309, 1.442695
    %v1741 = vpow.pop %v1740
    %v1742 = vmul.f32 %v1310, 1.442695
    %v1743 = vpow.pop %v1742
    %v1744 = vmul.f32 %v1311, 1.442695
    %v1745 = vpow.pop %v1744
    %v1746 = vmul.f32 %v1312, 1.442695
    %v1747 = vpow.pop %v1746
    %v1748 = vmul.f32 %v1313, 1.442695
    %v1749 = vpow.pop %v1748
    %v1750 = vmul.f32 %v1314, 1.442695
    %v1751 = vpow.pop %v1750
    %v1752 = vmul.f32 %v1315, 1.442695
    %v1753 = vpow.pop %v1752
    %v1754 = vmul.f32 %v1316, 1.442695
    %v1755 = vpow.pop %v1754
    %v1756 = vmul.f32 %v1317, 1.442695
    %v1757 = vpow.pop %v1756
    %v1758 = vmul.f32 %v1318, 1.442695
    %v1759 = vpow.pop %v1758
    %v1760 = vmul.f32 %v1319, 1.442695
    %v1761 = vpow.pop %v1760
    %v1762 = vmul.f32 %v1320, 1.442695
    %v1763 = vpow.pop %v1762
    %v1764 = vmul.f32 %v1321, 1.442695
    %v1765 = vpow.pop %v1764
    %v1766 = vmul.f32 %v1322, 1.442695
    %v1767 = vpow.pop %v1766
    %v1768 = vmul.f32 %v1323, 1.442695
    %v1769 = vpow.pop %v1768
    %v1770 = vmul.f32 %v1324, 1.442695
    %v1771 = vpow.pop %v1770
    %v1772 = vmul.f32 %v1325, 1.442695
    %v1773 = vpow.pop %v1772
    %v1774 = vmul.f32 %v1326, 1.442695
    %v1775 = vpow.pop %v1774
    %v1776 = vmul.f32 %v1327, 1.442695
    %v1777 = vpow.pop %v1776
    %v1778 = vmul.f32 %v1328, 1.442695
    %v1779 = vpow.pop %v1778
    %v1780 = vmul.f32 %v1329, 1.442695
    %v1781 = vpow.pop %v1780
    %v1782 = vmul.f32 %v1330, 1.442695
    %v1783 = vpow.pop %v1782
    %v1784 = vmul.f32 %v1331, 1.442695
    %v1785 = vpow.pop %v1784
    %v1786 = vmul.f32 %v1332, 1.442695
    %v1787 = vpow.pop %v1786
    %v1788 = vmul.f32 %v1333, 1.442695
    %v1789 = vpow.pop %v1788
    %v1790 = vmul.f32 %v1334, 1.442695
    %v1791 = vpow.pop %v1790
    %v1792 = vmul.f32 %v1335, 1.442695
    %v1793 = vpow.pop %v1792
    %v1794 = vmul.f32 %v1336, 1.442695
    %v1795 = vpow.pop %v1794
    %v1796 = vmul.f32 %v1337, 1.442695
    %v1797 = vpow.pop %v1796
    %v1798 = vmul.f32 %v1338, 1.442695
    %v1799 = vpow.pop %v1798
    %v1800 = vmul.f32 %v1339, 1.442695
    %v1801 = vpow.pop %v1800
    %v1802 = vmul.f32 %v1340, 1.442695
    %v1803 = vpow.pop %v1802
    %v1804 = vmul.f32 %v1341, 1.442695
    %v1805 = vpow.pop %v1804
    %v1806 = vmul.f32 %v1342, 1.442695
    %v1807 = vpow.pop %v1806
    %v1808 = vmul.f32 %v1343, 1.442695
    %v1809 = vpow.pop %v1808
    %v1810 = vmul.f32 %v1344, 1.442695
    %v1811 = vpow.pop %v1810
    %v1812 = vmul.f32 %v1345, 1.442695
    %v1813 = vpow.pop %v1812
    %v1814 = vmul.f32 %v1346, 1.442695
    %v1815 = vpow.pop %v1814
    %v1816 = vmul.f32 %v1347, 1.442695
    %v1817 = vpow.pop %v1816
    %v1818 = vmul.f32 %v1348, 1.442695
    %v1819 = vpow.pop %v1818
    %v1820 = vmul.f32 %v1349, 1.442695
    %v1821 = vpow.pop %v1820
    %v1822 = vmul.f32 %v1350, 1.442695
    %v1823 = vpow.pop %v1822
    %v1824 = vmul.f32 %v1351, 1.442695
    %v1825 = vpow.pop %v1824
    %v1826 = vmul.f32 %v1352, 1.442695
    %v1827 = vpow.pop %v1826
    %v1828 = vmul.f32 %v1353, 1.442695
    %v1829 = vpow.pop %v1828
    %v1830 = vmul.f32 %v1354, 1.442695
    %v1831 = vpow.pop %v1830
    %v1832 = vmul.f32 %v1355, 1.442695
    %v1833 = vpow.pop %v1832
    %v1834 = vmul.f32 %v1356, 1.442695
    %v1835 = vpow.pop %v1834
    %v1836 = vmul.f32 %v1357, 1.442695
    %v1837 = vpow.pop %v1836
    %v1838 = vmul.f32 %v1358, 1.442695
    %v1839 = vpow.pop %v1838
    %v1840 = vmul.f32 %v1359, 1.442695
    %v1841 = vpow.pop %v1840
    %v1842 = vmul.f32 %v1360, 1.442695
    %v1843 = vpow.pop %v1842
    %v1844 = vmul.f32 %v1361, 1.442695
    %v1845 = vpow.pop %v1844
    %v1846 = vmul.f32 %v1362, 1.442695
    %v1847 = vpow.pop %v1846
    %v1848 = vmul.f32 %v1363, 1.442695
    %v1849 = vpow.pop %v1848
    %v1850 = vmul.f32 %v1364, 1.442695
    %v1851 = vpow.pop %v1850
    %v1852 = vmul.f32 %v1365, 1.442695
    %v1853 = vpow.pop %v1852
    %v1854 = vmul.f32 %v1366, 1.442695
    %v1855 = vpow.pop %v1854
    %v1856 = vmul.f32 %v1367, 1.442695
    %v1857 = vpow.pop %v1856
    %v1858 = vmul.f32 %v1368, 1.442695
    %v1859 = vpow.pop %v1858
    %v1860 = vmul.f32 %v1369, 1.442695
    %v1861 = vpow.pop %v1860
    %v1862 = vmul.f32 %v1370, 1.442695
    %v1863 = vpow.pop %v1862
    %v1864 = vmul.f32 %v1371, 1.442695
    %v1865 = vpow.pop %v1864
    %v1866 = vmul.f32 %v1372, 1.442695
    %v1867 = vpow.pop %v1866
    %v1868 = vmul.f32 %v1373, 1.442695
    %v1869 = vpow.pop %v1868
    %v1870 = vmul.f32 %v1374, 1.442695
    %v1871 = vpow.pop %v1870
    %v1872 = vmul.f32 %v1375, 1.442695
    %v1873 = vpow.pop %v1872
    %v1874 = vmul.f32 %v1376, 1.442695
    %v1875 = vpow.pop %v1874
    %v1876 = vmul.f32 %v1377, 1.442695
    %v1877 = vpow.pop %v1876
    %v1878 = vmul.f32 %v1378, 1.442695
    %v1879 = vpow.pop %v1878
    %v1880 = vmul.f32 %v1379, 1.442695
    %v1881 = vpow.pop %v1880
    %v1882 = vmul.f32 %v1380, 1.442695
    %v1883 = vpow.pop %v1882
    %v1884 = vmul.f32 %v1381, 1.442695
    %v1885 = vpow.pop %v1884
    %v1886 = vadd.f32 %v1383, 1.0
    %v1887 = vadd.f32 %v1385, 1.0
    %v1888 = vadd.f32 %v1387, 1.0
    %v1889 = vadd.f32 %v1389, 1.0
    %v1890 = vadd.f32 %v1391, 1.0
    %v1891 = vadd.f32 %v1393, 1.0
    %v1892 = vadd.f32 %v1395, 1.0
    %v1893 = vadd.f32 %v1397, 1.0
    %v1894 = vadd.f32 %v1399, 1.0
    %v1895 = vadd.f32 %v1401, 1.0
    %v1896 = vadd.f32 %v1403, 1.0
    %v1897 = vadd.f32 %v1405, 1.0
    %v1898 = vadd.f32 %v1407, 1.0
    %v1899 = vadd.f32 %v1409, 1.0
    %v1900 = vadd.f32 %v1411, 1.0
    %v1901 = vadd.f32 %v1413, 1.0
    %v1902 = vadd.f32 %v1415, 1.0
    %v1903 = vadd.f32 %v1417, 1.0
    %v1904 = vadd.f32 %v1419, 1.0
    %v1905 = vadd.f32 %v1421, 1.0
    %v1906 = vadd.f32 %v1423, 1.0
    %v1907 = vadd.f32 %v1425, 1.0
    %v1908 = vadd.f32 %v1427, 1.0
    %v1909 = vadd.f32 %v1429, 1.0
    %v1910 = vadd.f32 %v1431, 1.0
    %v1911 = vadd.f32 %v1433, 1.0
    %v1912 = vadd.f32 %v1435, 1.0
    %v1913 = vadd.f32 %v1437, 1.0
    %v1914 = vadd.f32 %v1439, 1.0
    %v1915 = vadd.f32 %v1441, 1.0
    %v1916 = vadd.f32 %v1443, 1.0
    %v1917 = vadd.f32 %v1445, 1.0
    %v1918 = vadd.f32 %v1447, 1.0
    %v1919 = vadd.f32 %v1449, 1.0
    %v1920 = vadd.f32 %v1451, 1.0
    %v1921 = vadd.f32 %v1453, 1.0
    %v1922 = vadd.f32 %v1455, 1.0
    %v1923 = vadd.f32 %v1457, 1.0
    %v1924 = vadd.f32 %v1459, 1.0
    %v1925 = vadd.f32 %v1461, 1.0
    %v1926 = vadd.f32 %v1463, 1.0
    %v1927 = vadd.f32 %v1465, 1.0
    %v1928 = vadd.f32 %v1467, 1.0
    %v1929 = vadd.f32 %v1469, 1.0
    %v1930 = vadd.f32 %v1471, 1.0
    %v1931 = vadd.f32 %v1473, 1.0
    %v1932 = vadd.f32 %v1475, 1.0
    %v1933 = vadd.f32 %v1477, 1.0
    %v1934 = vadd.f32 %v1479, 1.0
    %v1935 = vadd.f32 %v1481, 1.0
    %v1936 = vadd.f32 %v1483, 1.0
    %v1937 = vadd.f32 %v1485, 1.0
    %v1938 = vadd.f32 %v1487, 1.0
    %v1939 = vadd.f32 %v1489, 1.0
    %v1940 = vadd.f32 %v1491, 1.0
    %v1941 = vadd.f32 %v1493, 1.0
    %v1942 = vadd.f32 %v1495, 1.0
    %v1943 = vadd.f32 %v1497, 1.0
    %v1944 = vadd.f32 %v1499, 1.0
    %v1945 = vadd.f32 %v1501, 1.0
    %v1946 = vadd.f32 %v1503, 1.0
    %v1947 = vadd.f32 %v1505, 1.0
    %v1948 = vadd.f32 %v1507, 1.0
    %v1949 = vadd.f32 %v1509, 1.0
    %v1950 = vadd.f32 %v1511, 1.0
    %v1951 = vadd.f32 %v1513, 1.0
    %v1952 = vadd.f32 %v1515, 1.0
    %v1953 = vadd.f32 %v1517, 1.0
    %v1954 = vadd.f32 %v1519, 1.0
    %v1955 = vadd.f32 %v1521, 1.0
    %v1956 = vadd.f32 %v1523, 1.0
    %v1957 = vadd.f32 %v1525, 1.0
    %v1958 = vadd.f32 %v1527, 1.0
    %v1959 = vadd.f32 %v1529, 1.0
    %v1960 = vadd.f32 %v1531, 1.0
    %v1961 = vadd.f32 %v1533, 1.0
    %v1962 = vadd.f32 %v1535, 1.0
    %v1963 = vadd.f32 %v1537, 1.0
    %v1964 = vadd.f32 %v1539, 1.0
    %v1965 = vadd.f32 %v1541, 1.0
    %v1966 = vadd.f32 %v1543, 1.0
    %v1967 = vadd.f32 %v1545, 1.0
    %v1968 = vadd.f32 %v1547, 1.0
    %v1969 = vadd.f32 %v1549, 1.0
    %v1970 = vadd.f32 %v1551, 1.0
    %v1971 = vadd.f32 %v1553, 1.0
    %v1972 = vadd.f32 %v1555, 1.0
    %v1973 = vadd.f32 %v1557, 1.0
    %v1974 = vadd.f32 %v1559, 1.0
    %v1975 = vadd.f32 %v1561, 1.0
    %v1976 = vadd.f32 %v1563, 1.0
    %v1977 = vadd.f32 %v1565, 1.0
    %v1978 = vadd.f32 %v1567, 1.0
    %v1979 = vadd.f32 %v1569, 1.0
    %v1980 = vadd.f32 %v1571, 1.0
    %v1981 = vadd.f32 %v1573, 1.0
    %v1982 = vadd.f32 %v1575, 1.0
    %v1983 = vadd.f32 %v1577, 1.0
    %v1984 = vadd.f32 %v1579, 1.0
    %v1985 = vadd.f32 %v1581, 1.0
    %v1986 = vadd.f32 %v1583, 1.0
    %v1987 = vadd.f32 %v1585, 1.0
    %v1988 = vadd.f32 %v1587, 1.0
    %v1989 = vadd.f32 %v1589, 1.0
    %v1990 = vadd.f32 %v1591, 1.0
    %v1991 = vadd.f32 %v1593, 1.0
    %v1992 = vadd.f32 %v1595, 1.0
    %v1993 = vadd.f32 %v1597, 1.0
    %v1994 = vadd.f32 %v1599, 1.0
    %v1995 = vadd.f32 %v1601, 1.0
    %v1996 = vadd.f32 %v1603, 1.0
    %v1997 = vadd.f32 %v1605, 1.0
    %v1998 = vadd.f32 %v1607, 1.0
    %v1999 = vadd.f32 %v1609, 1.0
    %v2000 = vadd.f32 %v1611, 1.0
    %v2001 = vadd.f32 %v1613, 1.0
    %v2002 = vadd.f32 %v1615, 1.0
    %v2003 = vadd.f32 %v1617, 1.0
    %v2004 = vadd.f32 %v1619, 1.0
    %v2005 = vadd.f32 %v1621, 1.0
    %v2006 = vadd.f32 %v1623, 1.0
    %v2007 = vadd.f32 %v1625, 1.0
    %v2008 = vadd.f32 %v1627, 1.0
    %v2009 = vadd.f32 %v1629, 1.0
    %v2010 = vadd.f32 %v1631, 1.0
    %v2011 = vadd.f32 %v1633, 1.0
    %v2012 = vadd.f32 %v1635, 1.0
    %v2013 = vadd.f32 %v1637, 1.0
    %v2014 = vadd.f32 %v1639, 1.0
    %v2015 = vadd.f32 %v1641, 1.0
    %v2016 = vadd.f32 %v1643, 1.0
    %v2017 = vadd.f32 %v1645, 1.0
    %v2018 = vadd.f32 %v1647, 1.0
    %v2019 = vadd.f32 %v1649, 1.0
    %v2020 = vadd.f32 %v1651, 1.0
    %v2021 = vadd.f32 %v1653, 1.0
    %v2022 = vadd.f32 %v1655, 1.0
    %v2023 = vadd.f32 %v1657, 1.0
    %v2024 = vadd.f32 %v1659, 1.0
    %v2025 = vadd.f32 %v1661, 1.0
    %v2026 = vadd.f32 %v1663, 1.0
    %v2027 = vadd.f32 %v1665, 1.0
    %v2028 = vadd.f32 %v1667, 1.0
    %v2029 = vadd.f32 %v1669, 1.0
    %v2030 = vadd.f32 %v1671, 1.0
    %v2031 = vadd.f32 %v1673, 1.0
    %v2032 = vadd.f32 %v1675, 1.0
    %v2033 = vadd.f32 %v1677, 1.0
    %v2034 = vadd.f32 %v1679, 1.0
    %v2035 = vadd.f32 %v1681, 1.0
    %v2036 = vadd.f32 %v1683, 1.0
    %v2037 = vadd.f32 %v1685, 1.0
    %v2038 = vadd.f32 %v1687, 1.0
    %v2039 = vadd.f32 %v1689, 1.0
    %v2040 = vadd.f32 %v1691, 1.0
    %v2041 = vadd.f32 %v1693, 1.0
    %v2042 = vadd.f32 %v1695, 1.0
    %v2043 = vadd.f32 %v1697, 1.0
    %v2044 = vadd.f32 %v1699, 1.0
    %v2045 = vadd.f32 %v1701, 1.0
    %v2046 = vadd.f32 %v1703, 1.0
    %v2047 = vadd.f32 %v1705, 1.0
    %v2048 = vadd.f32 %v1707, 1.0
    %v2049 = vadd.f32 %v1709, 1.0
    %v2050 = vadd.f32 %v1711, 1.0
    %v2051 = vadd.f32 %v1713, 1.0
    %v2052 = vadd.f32 %v1715, 1.0
    %v2053 = vadd.f32 %v1717, 1.0
    %v2054 = vadd.f32 %v1719, 1.0
    %v2055 = vadd.f32 %v1721, 1.0
    %v2056 = vadd.f32 %v1723, 1.0
    %v2057 = vadd.f32 %v1725, 1.0
    %v2058 = vadd.f32 %v1727, 1.0
    %v2059 = vadd.f32 %v1729, 1.0
    %v2060 = vadd.f32 %v1731, 1.0
    %v2061 = vadd.f32 %v1733, 1.0
    %v2062 = vadd.f32 %v1735, 1.0
    %v2063 = vadd.f32 %v1737, 1.0
    %v2064 = vadd.f32 %v1739, 1.0
    %v2065 = vadd.f32 %v1741, 1.0
    %v2066 = vadd.f32 %v1743, 1.0
    %v2067 = vadd.f32 %v1745, 1.0
    %v2068 = vadd.f32 %v1747, 1.0
    %v2069 = vadd.f32 %v1749, 1.0
    %v2070 = vadd.f32 %v1751, 1.0
    %v2071 = vadd.f32 %v1753, 1.0
    %v2072 = vadd.f32 %v1755, 1.0
    %v2073 = vadd.f32 %v1757, 1.0
    %v2074 = vadd.f32 %v1759, 1.0
    %v2075 = vadd.f32 %v1761, 1.0
    %v2076 = vadd.f32 %v1763, 1.0
    %v2077 = vadd.f32 %v1765, 1.0
    %v2078 = vadd.f32 %v1767, 1.0
    %v2079 = vadd.f32 %v1769, 1.0
    %v2080 = vadd.f32 %v1771, 1.0
    %v2081 = vadd.f32 %v1773, 1.0
    %v2082 = vadd.f32 %v1775, 1.0
    %v2083 = vadd.f32 %v1777, 1.0
    %v2084 = vadd.f32 %v1779, 1.0
    %v2085 = vadd.f32 %v1781, 1.0
    %v2086 = vadd.f32 %v1783, 1.0
    %v2087 = vadd.f32 %v1785, 1.0
    %v2088 = vadd.f32 %v1787, 1.0
    %v2089 = vadd.f32 %v1789, 1.0
    %v2090 = vadd.f32 %v1791, 1.0
    %v2091 = vadd.f32 %v1793, 1.0
    %v2092 = vadd.f32 %v1795, 1.0
    %v2093 = vadd.f32 %v1797, 1.0
    %v2094 = vadd.f32 %v1799, 1.0
    %v2095 = vadd.f32 %v1801, 1.0
    %v2096 = vadd.f32 %v1803, 1.0
    %v2097 = vadd.f32 %v1805, 1.0
    %v2098 = vadd.f32 %v1807, 1.0
    %v2099 = vadd.f32 %v1809, 1.0
    %v2100 = vadd.f32 %v1811, 1.0
    %v2101 = vadd.f32 %v1813, 1.0
    %v2102 = vadd.f32 %v1815, 1.0
    %v2103 = vadd.f32 %v1817, 1.0
    %v2104 = vadd.f32 %v1819, 1.0
    %v2105 = vadd.f32 %v1821, 1.0
    %v2106 = vadd.f32 %v1823, 1.0
    %v2107 = vadd.f32 %v1825, 1.0
    %v2108 = vadd.f32 %v1827, 1.0
    %v2109 = vadd.f32 %v1829, 1.0
    %v2110 = vadd.f32 %v1831, 1.0
    %v2111 = vadd.f32 %v1833, 1.0
    %v2112 = vadd.f32 %v1835, 1.0
    %v2113 = vadd.f32 %v1837, 1.0
    %v2114 = vadd.f32 %v1839, 1.0
    %v2115 = vadd.f32 %v1841, 1.0
    %v2116 = vadd.f32 %v1843, 1.0
    %v2117 = vadd.f32 %v1845, 1.0
    %v2118 = vadd.f32 %v1847, 1.0
    %v2119 = vadd.f32 %v1849, 1.0
    %v2120 = vadd.f32 %v1851, 1.0
    %v2121 = vadd.f32 %v1853, 1.0
    %v2122 = vadd.f32 %v1855, 1.0
    %v2123 = vadd.f32 %v1857, 1.0
    %v2124 = vadd.f32 %v1859, 1.0
    %v2125 = vadd.f32 %v1861, 1.0
    %v2126 = vadd.f32 %v1863, 1.0
    %v2127 = vadd.f32 %v1865, 1.0
    %v2128 = vadd.f32 %v1867, 1.0
    %v2129 = vadd.f32 %v1869, 1.0
    %v2130 = vadd.f32 %v1871, 1.0
    %v2131 = vadd.f32 %v1873, 1.0
    %v2132 = vadd.f32 %v1875, 1.0
    %v2133 = vadd.f32 %v1877, 1.0
    %v2134 = vadd.f32 %v1879, 1.0
    %v2135 = vadd.f32 %v1881, 1.0
    %v2136 = vadd.f32 %v1883, 1.0
    %v2137 = vadd.f32 %v1885, 1.0
    %v2138 = vrcp.pop %v1886
    %v2139 = vmul.f32 1.0, %v2138
    %v2140 = vrcp.pop %v1887
    %v2141 = vmul.f32 1.0, %v2140
    %v2142 = vrcp.pop %v1888
    %v2143 = vmul.f32 1.0, %v2142
    %v2144 = vrcp.pop %v1889
    %v2145 = vmul.f32 1.0, %v2144
    %v2146 = vrcp.pop %v1890
    %v2147 = vmul.f32 1.0, %v2146
    %v2148 = vrcp.pop %v1891
    %v2149 = vmul.f32 1.0, %v2148
    %v2150 = vrcp.pop %v1892
    %v2151 = vmul.f32 1.0, %v2150
    %v2152 = vrcp.pop %v1893
    %v2153 = vmul.f32 1.0, %v2152
    %v2154 = vrcp.pop %v1894
    %v2155 = vmul.f32 1.0, %v2154
    %v2156 = vrcp.pop %v1895
    %v2157 = vmul.f32 1.0, %v2156
    %v2158 = vrcp.pop %v1896
    %v2159 = vmul.f32 1.0, %v2158
    %v2160 = vrcp.pop %v1897
    %v2161 = vmul.f32 1.0, %v2160
    %v2162 = vrcp.pop %v1898
    %v2163 = vmul.f32 1.0, %v2162
    %v2164 = vrcp.pop %v1899
    %v2165 = vmul.f32 1.0, %v2164
    %v2166 = vrcp.pop %v1900
    %v2167 = vmul.f32 1.0, %v2166
    %v2168 = vrcp.pop %v1901
    %v2169 = vmul.f32 1.0, %v2168
    %v2170 = vrcp.pop %v1902
    %v2171 = vmul.f32 1.0, %v2170
    %v2172 = vrcp.pop %v1903
    %v2173 = vmul.f32 1.0, %v2172
    %v2174 = vrcp.pop %v1904
    %v2175 = vmul.f32 1.0, %v2174
    %v2176 = vrcp.pop %v1905
    %v2177 = vmul.f32 1.0, %v2176
    %v2178 = vrcp.pop %v1906
    %v2179 = vmul.f32 1.0, %v2178
    %v2180 = vrcp.pop %v1907
    %v2181 = vmul.f32 1.0, %v2180
    %v2182 = vrcp.pop %v1908
    %v2183 = vmul.f32 1.0, %v2182
    %v2184 = vrcp.pop %v1909
    %v2185 = vmul.f32 1.0, %v2184
    %v2186 = vrcp.pop %v1910
    %v2187 = vmul.f32 1.0, %v2186
    %v2188 = vrcp.pop %v1911
    %v2189 = vmul.f32 1.0, %v2188
    %v2190 = vrcp.pop %v1912
    %v2191 = vmul.f32 1.0, %v2190
    %v2192 = vrcp.pop %v1913
    %v2193 = vmul.f32 1.0, %v2192
    %v2194 = vrcp.pop %v1914
    %v2195 = vmul.f32 1.0, %v2194
    %v2196 = vrcp.pop %v1915
    %v2197 = vmul.f32 1.0, %v2196
    %v2198 = vrcp.pop %v1916
    %v2199 = vmul.f32 1.0, %v2198
    %v2200 = vrcp.pop %v1917
    %v2201 = vmul.f32 1.0, %v2200
    %v2202 = vrcp.pop %v1918
    %v2203 = vmul.f32 1.0, %v2202
    %v2204 = vrcp.pop %v1919
    %v2205 = vmul.f32 1.0, %v2204
    %v2206 = vrcp.pop %v1920
    %v2207 = vmul.f32 1.0, %v2206
    %v2208 = vrcp.pop %v1921
    %v2209 = vmul.f32 1.0, %v2208
    %v2210 = vrcp.pop %v1922
    %v2211 = vmul.f32 1.0, %v2210
    %v2212 = vrcp.pop %v1923
    %v2213 = vmul.f32 1.0, %v2212
    %v2214 = vrcp.pop %v1924
    %v2215 = vmul.f32 1.0, %v2214
    %v2216 = vrcp.pop %v1925
    %v2217 = vmul.f32 1.0, %v2216
    %v2218 = vrcp.pop %v1926
    %v2219 = vmul.f32 1.0, %v2218
    %v2220 = vrcp.pop %v1927
    %v2221 = vmul.f32 1.0, %v2220
    %v2222 = vrcp.pop %v1928
    %v2223 = vmul.f32 1.0, %v2222
    %v2224 = vrcp.pop %v1929
    %v2225 = vmul.f32 1.0, %v2224
    %v2226 = vrcp.pop %v1930
    %v2227 = vmul.f32 1.0, %v2226
    %v2228 = vrcp.pop %v1931
    %v2229 = vmul.f32 1.0, %v2228
    %v2230 = vrcp.pop %v1932
    %v2231 = vmul.f32 1.0, %v2230
    %v2232 = vrcp.pop %v1933
    %v2233 = vmul.f32 1.0, %v2232
    %v2234 = vrcp.pop %v1934
    %v2235 = vmul.f32 1.0, %v2234
    %v2236 = vrcp.pop %v1935
    %v2237 = vmul.f32 1.0, %v2236
    %v2238 = vrcp.pop %v1936
    %v2239 = vmul.f32 1.0, %v2238
    %v2240 = vrcp.pop %v1937
    %v2241 = vmul.f32 1.0, %v2240
    %v2242 = vrcp.pop %v1938
    %v2243 = vmul.f32 1.0, %v2242
    %v2244 = vrcp.pop %v1939
    %v2245 = vmul.f32 1.0, %v2244
    %v2246 = vrcp.pop %v1940
    %v2247 = vmul.f32 1.0, %v2246
    %v2248 = vrcp.pop %v1941
    %v2249 = vmul.f32 1.0, %v2248
    %v2250 = vrcp.pop %v1942
    %v2251 = vmul.f32 1.0, %v2250
    %v2252 = vrcp.pop %v1943
    %v2253 = vmul.f32 1.0, %v2252
    %v2254 = vrcp.pop %v1944
    %v2255 = vmul.f32 1.0, %v2254
    %v2256 = vrcp.pop %v1945
    %v2257 = vmul.f32 1.0, %v2256
    %v2258 = vrcp.pop %v1946
    %v2259 = vmul.f32 1.0, %v2258
    %v2260 = vrcp.pop %v1947
    %v2261 = vmul.f32 1.0, %v2260
    %v2262 = vrcp.pop %v1948
    %v2263 = vmul.f32 1.0, %v2262
    %v2264 = vrcp.pop %v1949
    %v2265 = vmul.f32 1.0, %v2264
    %v2266 = vrcp.pop %v1950
    %v2267 = vmul.f32 1.0, %v2266
    %v2268 = vrcp.pop %v1951
    %v2269 = vmul.f32 1.0, %v2268
    %v2270 = vrcp.pop %v1952
    %v2271 = vmul.f32 1.0, %v2270
    %v2272 = vrcp.pop %v1953
    %v2273 = vmul.f32 1.0, %v2272
    %v2274 = vrcp.pop %v1954
    %v2275 = vmul.f32 1.0, %v2274
    %v2276 = vrcp.pop %v1955
    %v2277 = vmul.f32 1.0, %v2276
    %v2278 = vrcp.pop %v1956
    %v2279 = vmul.f32 1.0, %v2278
    %v2280 = vrcp.pop %v1957
    %v2281 = vmul.f32 1.0, %v2280
    %v2282 = vrcp.pop %v1958
    %v2283 = vmul.f32 1.0, %v2282
    %v2284 = vrcp.pop %v1959
    %v2285 = vmul.f32 1.0, %v2284
    %v2286 = vrcp.pop %v1960
    %v2287 = vmul.f32 1.0, %v2286
    %v2288 = vrcp.pop %v1961
    %v2289 = vmul.f32 1.0, %v2288
    %v2290 = vrcp.pop %v1962
    %v2291 = vmul.f32 1.0, %v2290
    %v2292 = vrcp.pop %v1963
    %v2293 = vmul.f32 1.0, %v2292
    %v2294 = vrcp.pop %v1964
    %v2295 = vmul.f32 1.0, %v2294
    %v2296 = vrcp.pop %v1965
    %v2297 = vmul.f32 1.0, %v2296
    %v2298 = vrcp.pop %v1966
    %v2299 = vmul.f32 1.0, %v2298
    %v2300 = vrcp.pop %v1967
    %v2301 = vmul.f32 1.0, %v2300
    %v2302 = vrcp.pop %v1968
    %v2303 = vmul.f32 1.0, %v2302
    %v2304 = vrcp.pop %v1969
    %v2305 = vmul.f32 1.0, %v2304
    %v2306 = vrcp.pop %v1970
    %v2307 = vmul.f32 1.0, %v2306
    %v2308 = vrcp.pop %v1971
    %v2309 = vmul.f32 1.0, %v2308
    %v2310 = vrcp.pop %v1972
    %v2311 = vmul.f32 1.0, %v2310
    %v2312 = vrcp.pop %v1973
    %v2313 = vmul.f32 1.0, %v2312
    %v2314 = vrcp.pop %v1974
    %v2315 = vmul.f32 1.0, %v2314
    %v2316 = vrcp.pop %v1975
    %v2317 = vmul.f32 1.0, %v2316
    %v2318 = vrcp.pop %v1976
    %v2319 = vmul.f32 1.0, %v2318
    %v2320 = vrcp.pop %v1977
    %v2321 = vmul.f32 1.0, %v2320
    %v2322 = vrcp.pop %v1978
    %v2323 = vmul.f32 1.0, %v2322
    %v2324 = vrcp.pop %v1979
    %v2325 = vmul.f32 1.0, %v2324
    %v2326 = vrcp.pop %v1980
    %v2327 = vmul.f32 1.0, %v2326
    %v2328 = vrcp.pop %v1981
    %v2329 = vmul.f32 1.0, %v2328
    %v2330 = vrcp.pop %v1982
    %v2331 = vmul.f32 1.0, %v2330
    %v2332 = vrcp.pop %v1983
    %v2333 = vmul.f32 1.0, %v2332
    %v2334 = vrcp.pop %v1984
    %v2335 = vmul.f32 1.0, %v2334
    %v2336 = vrcp.pop %v1985
    %v2337 = vmul.f32 1.0, %v2336
    %v2338 = vrcp.pop %v1986
    %v2339 = vmul.f32 1.0, %v2338
    %v2340 = vrcp.pop %v1987
    %v2341 = vmul.f32 1.0, %v2340
    %v2342 = vrcp.pop %v1988
    %v2343 = vmul.f32 1.0, %v2342
    %v2344 = vrcp.pop %v1989
    %v2345 = vmul.f32 1.0, %v2344
    %v2346 = vrcp.pop %v1990
    %v2347 = vmul.f32 1.0, %v2346
    %v2348 = vrcp.pop %v1991
    %v2349 = vmul.f32 1.0, %v2348
    %v2350 = vrcp.pop %v1992
    %v2351 = vmul.f32 1.0, %v2350
    %v2352 = vrcp.pop %v1993
    %v2353 = vmul.f32 1.0, %v2352
    %v2354 = vrcp.pop %v1994
    %v2355 = vmul.f32 1.0, %v2354
    %v2356 = vrcp.pop %v1995
    %v2357 = vmul.f32 1.0, %v2356
    %v2358 = vrcp.pop %v1996
    %v2359 = vmul.f32 1.0, %v2358
    %v2360 = vrcp.pop %v1997
    %v2361 = vmul.f32 1.0, %v2360
    %v2362 = vrcp.pop %v1998
    %v2363 = vmul.f32 1.0, %v2362
    %v2364 = vrcp.pop %v1999
    %v2365 = vmul.f32 1.0, %v2364
    %v2366 = vrcp.pop %v2000
    %v2367 = vmul.f32 1.0, %v2366
    %v2368 = vrcp.pop %v2001
    %v2369 = vmul.f32 1.0, %v2368
    %v2370 = vrcp.pop %v2002
    %v2371 = vmul.f32 1.0, %v2370
    %v2372 = vrcp.pop %v2003
    %v2373 = vmul.f32 1.0, %v2372
    %v2374 = vrcp.pop %v2004
    %v2375 = vmul.f32 1.0, %v2374
    %v2376 = vrcp.pop %v2005
    %v2377 = vmul.f32 1.0, %v2376
    %v2378 = vrcp.pop %v2006
    %v2379 = vmul.f32 1.0, %v2378
    %v2380 = vrcp.pop %v2007
    %v2381 = vmul.f32 1.0, %v2380
    %v2382 = vrcp.pop %v2008
    %v2383 = vmul.f32 1.0, %v2382
    %v2384 = vrcp.pop %v2009
    %v2385 = vmul.f32 1.0, %v2384
    %v2386 = vrcp.pop %v2010
    %v2387 = vmul.f32 1.0, %v2386
    %v2388 = vrcp.pop %v2011
    %v2389 = vmul.f32 1.0, %v2388
    %v2390 = vrcp.pop %v2012
    %v2391 = vmul.f32 1.0, %v2390
    %v2392 = vrcp.pop %v2013
    %v2393 = vmul.f32 1.0, %v2392
    %v2394 = vrcp.pop %v2014
    %v2395 = vmul.f32 1.0, %v2394
    %v2396 = vrcp.pop %v2015
    %v2397 = vmul.f32 1.0, %v2396
    %v2398 = vrcp.pop %v2016
    %v2399 = vmul.f32 1.0, %v2398
    %v2400 = vrcp.pop %v2017
    %v2401 = vmul.f32 1.0, %v2400
    %v2402 = vrcp.pop %v2018
    %v2403 = vmul.f32 1.0, %v2402
    %v2404 = vrcp.pop %v2019
    %v2405 = vmul.f32 1.0, %v2404
    %v2406 = vrcp.pop %v2020
    %v2407 = vmul.f32 1.0, %v2406
    %v2408 = vrcp.pop %v2021
    %v2409 = vmul.f32 1.0, %v2408
    %v2410 = vrcp.pop %v2022
    %v2411 = vmul.f32 1.0, %v2410
    %v2412 = vrcp.pop %v2023
    %v2413 = vmul.f32 1.0, %v2412
    %v2414 = vrcp.pop %v2024
    %v2415 = vmul.f32 1.0, %v2414
    %v2416 = vrcp.pop %v2025
    %v2417 = vmul.f32 1.0, %v2416
    %v2418 = vrcp.pop %v2026
    %v2419 = vmul.f32 1.0, %v2418
    %v2420 = vrcp.pop %v2027
    %v2421 = vmul.f32 1.0, %v2420
    %v2422 = vrcp.pop %v2028
    %v2423 = vmul.f32 1.0, %v2422
    %v2424 = vrcp.pop %v2029
    %v2425 = vmul.f32 1.0, %v2424
    %v2426 = vrcp.pop %v2030
    %v2427 = vmul.f32 1.0, %v2426
    %v2428 = vrcp.pop %v2031
    %v2429 = vmul.f32 1.0, %v2428
    %v2430 = vrcp.pop %v2032
    %v2431 = vmul.f32 1.0, %v2430
    %v2432 = vrcp.pop %v2033
    %v2433 = vmul.f32 1.0, %v2432
    %v2434 = vrcp.pop %v2034
    %v2435 = vmul.f32 1.0, %v2434
    %v2436 = vrcp.pop %v2035
    %v2437 = vmul.f32 1.0, %v2436
    %v2438 = vrcp.pop %v2036
    %v2439 = vmul.f32 1.0, %v2438
    %v2440 = vrcp.pop %v2037
    %v2441 = vmul.f32 1.0, %v2440
    %v2442 = vrcp.pop %v2038
    %v2443 = vmul.f32 1.0, %v2442
    %v2444 = vrcp.pop %v2039
    %v2445 = vmul.f32 1.0, %v2444
    %v2446 = vrcp.pop %v2040
    %v2447 = vmul.f32 1.0, %v2446
    %v2448 = vrcp.pop %v2041
    %v2449 = vmul.f32 1.0, %v2448
    %v2450 = vrcp.pop %v2042
    %v2451 = vmul.f32 1.0, %v2450
    %v2452 = vrcp.pop %v2043
    %v2453 = vmul.f32 1.0, %v2452
    %v2454 = vrcp.pop %v2044
    %v2455 = vmul.f32 1.0, %v2454
    %v2456 = vrcp.pop %v2045
    %v2457 = vmul.f32 1.0, %v2456
    %v2458 = vrcp.pop %v2046
    %v2459 = vmul.f32 1.0, %v2458
    %v2460 = vrcp.pop %v2047
    %v2461 = vmul.f32 1.0, %v2460
    %v2462 = vrcp.pop %v2048
    %v2463 = vmul.f32 1.0, %v2462
    %v2464 = vrcp.pop %v2049
    %v2465 = vmul.f32 1.0, %v2464
    %v2466 = vrcp.pop %v2050
    %v2467 = vmul.f32 1.0, %v2466
    %v2468 = vrcp.pop %v2051
    %v2469 = vmul.f32 1.0, %v2468
    %v2470 = vrcp.pop %v2052
    %v2471 = vmul.f32 1.0, %v2470
    %v2472 = vrcp.pop %v2053
    %v2473 = vmul.f32 1.0, %v2472
    %v2474 = vrcp.pop %v2054
    %v2475 = vmul.f32 1.0, %v2474
    %v2476 = vrcp.pop %v2055
    %v2477 = vmul.f32 1.0, %v2476
    %v2478 = vrcp.pop %v2056
    %v2479 = vmul.f32 1.0, %v2478
    %v2480 = vrcp.pop %v2057
    %v2481 = vmul.f32 1.0, %v2480
    %v2482 = vrcp.pop %v2058
    %v2483 = vmul.f32 1.0, %v2482
    %v2484 = vrcp.pop %v2059
    %v2485 = vmul.f32 1.0, %v2484
    %v2486 = vrcp.pop %v2060
    %v2487 = vmul.f32 1.0, %v2486
    %v2488 = vrcp.pop %v2061
    %v2489 = vmul.f32 1.0, %v2488
    %v2490 = vrcp.pop %v2062
    %v2491 = vmul.f32 1.0, %v2490
    %v2492 = vrcp.pop %v2063
    %v2493 = vmul.f32 1.0, %v2492
    %v2494 = vrcp.pop %v2064
    %v2495 = vmul.f32 1.0, %v2494
    %v2496 = vrcp.pop %v2065
    %v2497 = vmul.f32 1.0, %v2496
    %v2498 = vrcp.pop %v2066
    %v2499 = vmul.f32 1.0, %v2498
    %v2500 = vrcp.pop %v2067
    %v2501 = vmul.f32 1.0, %v2500
    %v2502 = vrcp.pop %v2068
    %v2503 = vmul.f32 1.0, %v2502
    %v2504 = vrcp.pop %v2069
    %v2505 = vmul.f32 1.0, %v2504
    %v2506 = vrcp.pop %v2070
    %v2507 = vmul.f32 1.0, %v2506
    %v2508 = vrcp.pop %v2071
    %v2509 = vmul.f32 1.0, %v2508
    %v2510 = vrcp.pop %v2072
    %v2511 = vmul.f32 1.0, %v2510
    %v2512 = vrcp.pop %v2073
    %v2513 = vmul.f32 1.0, %v2512
    %v2514 = vrcp.pop %v2074
    %v2515 = vmul.f32 1.0, %v2514
    %v2516 = vrcp.pop %v2075
    %v2517 = vmul.f32 1.0, %v2516
    %v2518 = vrcp.pop %v2076
    %v2519 = vmul.f32 1.0, %v2518
    %v2520 = vrcp.pop %v2077
    %v2521 = vmul.f32 1.0, %v2520
    %v2522 = vrcp.pop %v2078
    %v2523 = vmul.f32 1.0, %v2522
    %v2524 = vrcp.pop %v2079
    %v2525 = vmul.f32 1.0, %v2524
    %v2526 = vrcp.pop %v2080
    %v2527 = vmul.f32 1.0, %v2526
    %v2528 = vrcp.pop %v2081
    %v2529 = vmul.f32 1.0, %v2528
    %v2530 = vrcp.pop %v2082
    %v2531 = vmul.f32 1.0, %v2530
    %v2532 = vrcp.pop %v2083
    %v2533 = vmul.f32 1.0, %v2532
    %v2534 = vrcp.pop %v2084
    %v2535 = vmul.f32 1.0, %v2534
    %v2536 = vrcp.pop %v2085
    %v2537 = vmul.f32 1.0, %v2536
    %v2538 = vrcp.pop %v2086
    %v2539 = vmul.f32 1.0, %v2538
    %v2540 = vrcp.pop %v2087
    %v2541 = vmul.f32 1.0, %v2540
    %v2542 = vrcp.pop %v2088
    %v2543 = vmul.f32 1.0, %v2542
    %v2544 = vrcp.pop %v2089
    %v2545 = vmul.f32 1.0, %v2544
    %v2546 = vrcp.pop %v2090
    %v2547 = vmul.f32 1.0, %v2546
    %v2548 = vrcp.pop %v2091
    %v2549 = vmul.f32 1.0, %v2548
    %v2550 = vrcp.pop %v2092
    %v2551 = vmul.f32 1.0, %v2550
    %v2552 = vrcp.pop %v2093
    %v2553 = vmul.f32 1.0, %v2552
    %v2554 = vrcp.pop %v2094
    %v2555 = vmul.f32 1.0, %v2554
    %v2556 = vrcp.pop %v2095
    %v2557 = vmul.f32 1.0, %v2556
    %v2558 = vrcp.pop %v2096
    %v2559 = vmul.f32 1.0, %v2558
    %v2560 = vrcp.pop %v2097
    %v2561 = vmul.f32 1.0, %v2560
    %v2562 = vrcp.pop %v2098
    %v2563 = vmul.f32 1.0, %v2562
    %v2564 = vrcp.pop %v2099
    %v2565 = vmul.f32 1.0, %v2564
    %v2566 = vrcp.pop %v2100
    %v2567 = vmul.f32 1.0, %v2566
    %v2568 = vrcp.pop %v2101
    %v2569 = vmul.f32 1.0, %v2568
    %v2570 = vrcp.pop %v2102
    %v2571 = vmul.f32 1.0, %v2570
    %v2572 = vrcp.pop %v2103
    %v2573 = vmul.f32 1.0, %v2572
    %v2574 = vrcp.pop %v2104
    %v2575 = vmul.f32 1.0, %v2574
    %v2576 = vrcp.pop %v2105
    %v2577 = vmul.f32 1.0, %v2576
    %v2578 = vrcp.pop %v2106
    %v2579 = vmul.f32 1.0, %v2578
    %v2580 = vrcp.pop %v2107
    %v2581 = vmul.f32 1.0, %v2580
    %v2582 = vrcp.pop %v2108
    %v2583 = vmul.f32 1.0, %v2582
    %v2584 = vrcp.pop %v2109
    %v2585 = vmul.f32 1.0, %v2584
    %v2586 = vrcp.pop %v2110
    %v2587 = vmul.f32 1.0, %v2586
    %v2588 = vrcp.pop %v2111
    %v2589 = vmul.f32 1.0, %v2588
    %v2590 = vrcp.pop %v2112
    %v2591 = vmul.f32 1.0, %v2590
    %v2592 = vrcp.pop %v2113
    %v2593 = vmul.f32 1.0, %v2592
    %v2594 = vrcp.pop %v2114
    %v2595 = vmul.f32 1.0, %v2594
    %v2596 = vrcp.pop %v2115
    %v2597 = vmul.f32 1.0, %v2596
    %v2598 = vrcp.pop %v2116
    %v2599 = vmul.f32 1.0, %v2598
    %v2600 = vrcp.pop %v2117
    %v2601 = vmul.f32 1.0, %v2600
    %v2602 = vrcp.pop %v2118
    %v2603 = vmul.f32 1.0, %v2602
    %v2604 = vrcp.pop %v2119
    %v2605 = vmul.f32 1.0, %v2604
    %v2606 = vrcp.pop %v2120
    %v2607 = vmul.f32 1.0, %v2606
    %v2608 = vrcp.pop %v2121
    %v2609 = vmul.f32 1.0, %v2608
    %v2610 = vrcp.pop %v2122
    %v2611 = vmul.f32 1.0, %v2610
    %v2612 = vrcp.pop %v2123
    %v2613 = vmul.f32 1.0, %v2612
    %v2614 = vrcp.pop %v2124
    %v2615 = vmul.f32 1.0, %v2614
    %v2616 = vrcp.pop %v2125
    %v2617 = vmul.f32 1.0, %v2616
    %v2618 = vrcp.pop %v2126
    %v2619 = vmul.f32 1.0, %v2618
    %v2620 = vrcp.pop %v2127
    %v2621 = vmul.f32 1.0, %v2620
    %v2622 = vrcp.pop %v2128
    %v2623 = vmul.f32 1.0, %v2622
    %v2624 = vrcp.pop %v2129
    %v2625 = vmul.f32 1.0, %v2624
    %v2626 = vrcp.pop %v2130
    %v2627 = vmul.f32 1.0, %v2626
    %v2628 = vrcp.pop %v2131
    %v2629 = vmul.f32 1.0, %v2628
    %v2630 = vrcp.pop %v2132
    %v2631 = vmul.f32 1.0, %v2630
    %v2632 = vrcp.pop %v2133
    %v2633 = vmul.f32 1.0, %v2632
    %v2634 = vrcp.pop %v2134
    %v2635 = vmul.f32 1.0, %v2634
    %v2636 = vrcp.pop %v2135
    %v2637 = vmul.f32 1.0, %v2636
    %v2638 = vrcp.pop %v2136
    %v2639 = vmul.f32 1.0, %v2638
    %v2640 = vrcp.pop %v2137
    %v2641 = vmul.f32 1.0, %v2640
    %v2642 = vmul.f32 %v502, %v2139
    %v2643 = vmul.f32 %v504, %v2141
    %v2644 = vmul.f32 %v506, %v2143
    %v2645 = vmul.f32 %v508, %v2145
    %v2646 = vmul.f32 %v512, %v2147
    %v2647 = vmul.f32 %v514, %v2149
    %v2648 = vmul.f32 %v516, %v2151
    %v2649 = vmul.f32 %v518, %v2153
    %v2650 = vmul.f32 %v522, %v2155
    %v2651 = vmul.f32 %v524, %v2157
    %v2652 = vmul.f32 %v526, %v2159
    %v2653 = vmul.f32 %v528, %v2161
    %v2654 = vmul.f32 %v532, %v2163
    %v2655 = vmul.f32 %v534, %v2165
    %v2656 = vmul.f32 %v536, %v2167
    %v2657 = vmul.f32 %v538, %v2169
    %v2658 = vmul.f32 %v542, %v2171
    %v2659 = vmul.f32 %v544, %v2173
    %v2660 = vmul.f32 %v546, %v2175
    %v2661 = vmul.f32 %v548, %v2177
    %v2662 = vmul.f32 %v552, %v2179
    %v2663 = vmul.f32 %v554, %v2181
    %v2664 = vmul.f32 %v556, %v2183
    %v2665 = vmul.f32 %v558, %v2185
    %v2666 = vmul.f32 %v562, %v2187
    %v2667 = vmul.f32 %v564, %v2189
    %v2668 = vmul.f32 %v566, %v2191
    %v2669 = vmul.f32 %v568, %v2193
    %v2670 = vmul.f32 %v572, %v2195
    %v2671 = vmul.f32 %v574, %v2197
    %v2672 = vmul.f32 %v576, %v2199
    %v2673 = vmul.f32 %v578, %v2201
    %v2674 = vmul.f32 %v582, %v2203
    %v2675 = vmul.f32 %v584, %v2205
    %v2676 = vmul.f32 %v586, %v2207
    %v2677 = vmul.f32 %v588, %v2209
    %v2678 = vmul.f32 %v592, %v2211
    %v2679 = vmul.f32 %v594, %v2213
    %v2680 = vmul.f32 %v596, %v2215
    %v2681 = vmul.f32 %v598, %v2217
    %v2682 = vmul.f32 %v602, %v2219
    %v2683 = vmul.f32 %v604, %v2221
    %v2684 = vmul.f32 %v606, %v2223
    %v2685 = vmul.f32 %v608, %v2225
    %v2686 = vmul.f32 %v612, %v2227
    %v2687 = vmul.f32 %v614, %v2229
    %v2688 = vmul.f32 %v616, %v2231
    %v2689 = vmul.f32 %v618, %v2233
    %v2690 = vmul.f32 %v622, %v2235
    %v2691 = vmul.f32 %v624, %v2237
    %v2692 = vmul.f32 %v626, %v2239
    %v2693 = vmul.f32 %v628, %v2241
    %v2694 = vmul.f32 %v632, %v2243
    %v2695 = vmul.f32 %v634, %v2245
    %v2696 = vmul.f32 %v636, %v2247
    %v2697 = vmul.f32 %v638, %v2249
    %v2698 = vmul.f32 %v642, %v2251
    %v2699 = vmul.f32 %v644, %v2253
    %v2700 = vmul.f32 %v646, %v2255
    %v2701 = vmul.f32 %v648, %v2257
    %v2702 = vmul.f32 %v652, %v2259
    %v2703 = vmul.f32 %v654, %v2261
    %v2704 = vmul.f32 %v656, %v2263
    %v2705 = vmul.f32 %v658, %v2265
    %v2706 = vmul.f32 %v662, %v2267
    %v2707 = vmul.f32 %v664, %v2269
    %v2708 = vmul.f32 %v666, %v2271
    %v2709 = vmul.f32 %v668, %v2273
    %v2710 = vmul.f32 %v672, %v2275
    %v2711 = vmul.f32 %v674, %v2277
    %v2712 = vmul.f32 %v676, %v2279
    %v2713 = vmul.f32 %v678, %v2281
    %v2714 = vmul.f32 %v682, %v2283
    %v2715 = vmul.f32 %v684, %v2285
    %v2716 = vmul.f32 %v686, %v2287
    %v2717 = vmul.f32 %v688, %v2289
    %v2718 = vmul.f32 %v692, %v2291
    %v2719 = vmul.f32 %v694, %v2293
    %v2720 = vmul.f32 %v696, %v2295
    %v2721 = vmul.f32 %v698, %v2297
    %v2722 = vmul.f32 %v702, %v2299
    %v2723 = vmul.f32 %v704, %v2301
    %v2724 = vmul.f32 %v706, %v2303
    %v2725 = vmul.f32 %v708, %v2305
    %v2726 = vmul.f32 %v712, %v2307
    %v2727 = vmul.f32 %v714, %v2309
    %v2728 = vmul.f32 %v716, %v2311
    %v2729 = vmul.f32 %v718, %v2313
    %v2730 = vmul.f32 %v722, %v2315
    %v2731 = vmul.f32 %v724, %v2317
    %v2732 = vmul.f32 %v726, %v2319
    %v2733 = vmul.f32 %v728, %v2321
    %v2734 = vmul.f32 %v732, %v2323
    %v2735 = vmul.f32 %v734, %v2325
    %v2736 = vmul.f32 %v736, %v2327
    %v2737 = vmul.f32 %v738, %v2329
    %v2738 = vmul.f32 %v742, %v2331
    %v2739 = vmul.f32 %v744, %v2333
    %v2740 = vmul.f32 %v746, %v2335
    %v2741 = vmul.f32 %v748, %v2337
    %v2742 = vmul.f32 %v752, %v2339
    %v2743 = vmul.f32 %v754, %v2341
    %v2744 = vmul.f32 %v756, %v2343
    %v2745 = vmul.f32 %v758, %v2345
    %v2746 = vmul.f32 %v762, %v2347
    %v2747 = vmul.f32 %v764, %v2349
    %v2748 = vmul.f32 %v766, %v2351
    %v2749 = vmul.f32 %v768, %v2353
    %v2750 = vmul.f32 %v772, %v2355
    %v2751 = vmul.f32 %v774, %v2357
    %v2752 = vmul.f32 %v776, %v2359
    %v2753 = vmul.f32 %v778, %v2361
    %v2754 = vmul.f32 %v782, %v2363
    %v2755 = vmul.f32 %v784, %v2365
    %v2756 = vmul.f32 %v786, %v2367
    %v2757 = vmul.f32 %v788, %v2369
    %v2758 = vmul.f32 %v792, %v2371
    %v2759 = vmul.f32 %v794, %v2373
    %v2760 = vmul.f32 %v796, %v2375
    %v2761 = vmul.f32 %v798, %v2377
    %v2762 = vmul.f32 %v802, %v2379
    %v2763 = vmul.f32 %v804, %v2381
    %v2764 = vmul.f32 %v806, %v2383
    %v2765 = vmul.f32 %v808, %v2385
    %v2766 = vmul.f32 %v812, %v2387
    %v2767 = vmul.f32 %v814, %v2389
    %v2768 = vmul.f32 %v816, %v2391
    %v2769 = vmul.f32 %v818, %v2393
    %v2770 = vmul.f32 %v822, %v2395
    %v2771 = vmul.f32 %v824, %v2397
    %v2772 = vmul.f32 %v826, %v2399
    %v2773 = vmul.f32 %v828, %v2401
    %v2774 = vmul.f32 %v832, %v2403
    %v2775 = vmul.f32 %v834, %v2405
    %v2776 = vmul.f32 %v836, %v2407
    %v2777 = vmul.f32 %v838, %v2409
    %v2778 = vmul.f32 %v842, %v2411
    %v2779 = vmul.f32 %v844, %v2413
    %v2780 = vmul.f32 %v846, %v2415
    %v2781 = vmul.f32 %v848, %v2417
    %v2782 = vmul.f32 %v852, %v2419
    %v2783 = vmul.f32 %v854, %v2421
    %v2784 = vmul.f32 %v856, %v2423
    %v2785 = vmul.f32 %v858, %v2425
    %v2786 = vmul.f32 %v862, %v2427
    %v2787 = vmul.f32 %v864, %v2429
    %v2788 = vmul.f32 %v866, %v2431
    %v2789 = vmul.f32 %v868, %v2433
    %v2790 = vmul.f32 %v872, %v2435
    %v2791 = vmul.f32 %v874, %v2437
    %v2792 = vmul.f32 %v876, %v2439
    %v2793 = vmul.f32 %v878, %v2441
    %v2794 = vmul.f32 %v882, %v2443
    %v2795 = vmul.f32 %v884, %v2445
    %v2796 = vmul.f32 %v886, %v2447
    %v2797 = vmul.f32 %v888, %v2449
    %v2798 = vmul.f32 %v892, %v2451
    %v2799 = vmul.f32 %v894, %v2453
    %v2800 = vmul.f32 %v896, %v2455
    %v2801 = vmul.f32 %v898, %v2457
    %v2802 = vmul.f32 %v902, %v2459
    %v2803 = vmul.f32 %v904, %v2461
    %v2804 = vmul.f32 %v906, %v2463
    %v2805 = vmul.f32 %v908, %v2465
    %v2806 = vmul.f32 %v912, %v2467
    %v2807 = vmul.f32 %v914, %v2469
    %v2808 = vmul.f32 %v916, %v2471
    %v2809 = vmul.f32 %v918, %v2473
    %v2810 = vmul.f32 %v922, %v2475
    %v2811 = vmul.f32 %v924, %v2477
    %v2812 = vmul.f32 %v926, %v2479
    %v2813 = vmul.f32 %v928, %v2481
    %v2814 = vmul.f32 %v932, %v2483
    %v2815 = vmul.f32 %v934, %v2485
    %v2816 = vmul.f32 %v936, %v2487
    %v2817 = vmul.f32 %v938, %v2489
    %v2818 = vmul.f32 %v942, %v2491
    %v2819 = vmul.f32 %v944, %v2493
    %v2820 = vmul.f32 %v946, %v2495
    %v2821 = vmul.f32 %v948, %v2497
    %v2822 = vmul.f32 %v952, %v2499
    %v2823 = vmul.f32 %v954, %v2501
    %v2824 = vmul.f32 %v956, %v2503
    %v2825 = vmul.f32 %v958, %v2505
    %v2826 = vmul.f32 %v962, %v2507
    %v2827 = vmul.f32 %v964, %v2509
    %v2828 = vmul.f32 %v966, %v2511
    %v2829 = vmul.f32 %v968, %v2513
    %v2830 = vmul.f32 %v972, %v2515
    %v2831 = vmul.f32 %v974, %v2517
    %v2832 = vmul.f32 %v976, %v2519
    %v2833 = vmul.f32 %v978, %v2521
    %v2834 = vmul.f32 %v982, %v2523
    %v2835 = vmul.f32 %v984, %v2525
    %v2836 = vmul.f32 %v986, %v2527
    %v2837 = vmul.f32 %v988, %v2529
    %v2838 = vmul.f32 %v992, %v2531
    %v2839 = vmul.f32 %v994, %v2533
    %v2840 = vmul.f32 %v996, %v2535
    %v2841 = vmul.f32 %v998, %v2537
    %v2842 = vmul.f32 %v1002, %v2539
    %v2843 = vmul.f32 %v1004, %v2541
    %v2844 = vmul.f32 %v1006, %v2543
    %v2845 = vmul.f32 %v1008, %v2545
    %v2846 = vmul.f32 %v1012, %v2547
    %v2847 = vmul.f32 %v1014, %v2549
    %v2848 = vmul.f32 %v1016, %v2551
    %v2849 = vmul.f32 %v1018, %v2553
    %v2850 = vmul.f32 %v1022, %v2555
    %v2851 = vmul.f32 %v1024, %v2557
    %v2852 = vmul.f32 %v1026, %v2559
    %v2853 = vmul.f32 %v1028, %v2561
    %v2854 = vmul.f32 %v1032, %v2563
    %v2855 = vmul.f32 %v1034, %v2565
    %v2856 = vmul.f32 %v1036, %v2567
    %v2857 = vmul.f32 %v1038, %v2569
    %v2858 = vmul.f32 %v1042, %v2571
    %v2859 = vmul.f32 %v1044, %v2573
    %v2860 = vmul.f32 %v1046, %v2575
    %v2861 = vmul.f32 %v1048, %v2577
    %v2862 = vmul.f32 %v1052, %v2579
    %v2863 = vmul.f32 %v1054, %v2581
    %v2864 = vmul.f32 %v1056, %v2583
    %v2865 = vmul.f32 %v1058, %v2585
    %v2866 = vmul.f32 %v1062, %v2587
    %v2867 = vmul.f32 %v1064, %v2589
    %v2868 = vmul.f32 %v1066, %v2591
    %v2869 = vmul.f32 %v1068, %v2593
    %v2870 = vmul.f32 %v1072, %v2595
    %v2871 = vmul.f32 %v1074, %v2597
    %v2872 = vmul.f32 %v1076, %v2599
    %v2873 = vmul.f32 %v1078, %v2601
    %v2874 = vmul.f32 %v1082, %v2603
    %v2875 = vmul.f32 %v1084, %v2605
    %v2876 = vmul.f32 %v1086, %v2607
    %v2877 = vmul.f32 %v1088, %v2609
    %v2878 = vmul.f32 %v1092, %v2611
    %v2879 = vmul.f32 %v1094, %v2613
    %v2880 = vmul.f32 %v1096, %v2615
    %v2881 = vmul.f32 %v1098, %v2617
    %v2882 = vmul.f32 %v1102, %v2619
    %v2883 = vmul.f32 %v1104, %v2621
    %v2884 = vmul.f32 %v1106, %v2623
    %v2885 = vmul.f32 %v1108, %v2625
    %v2886 = vmul.f32 %v1112, %v2627
    %v2887 = vmul.f32 %v1114, %v2629
    %v2888 = vmul.f32 %v1116, %v2631
    %v2889 = vmul.f32 %v1118, %v2633
    %v2890 = vmul.f32 %v1122, %v2635
    %v2891 = vmul.f32 %v1124, %v2637
    %v2892 = vmul.f32 %v1126, %v2639
    %v2893 = vmul.f32 %v1128, %v2641
    %v2894 = vpack.c.bf16 %v2644, %v2642
    %v2895 = vpack.c.bf16 %v2645, %v2643
    %v2896 = vpack.c.bf16 %v2648, %v2646
    %v2897 = vpack.c.bf16 %v2649, %v2647
    %v2898 = vpack.c.bf16 %v2652, %v2650
    %v2899 = vpack.c.bf16 %v2653, %v2651
    %v2900 = vpack.c.bf16 %v2656, %v2654
    %v2901 = vpack.c.bf16 %v2657, %v2655
    %v2902 = vpack.c.bf16 %v2660, %v2658
    %v2903 = vpack.c.bf16 %v2661, %v2659
    %v2904 = vpack.c.bf16 %v2664, %v2662
    %v2905 = vpack.c.bf16 %v2665, %v2663
    %v2906 = vpack.c.bf16 %v2668, %v2666
    %v2907 = vpack.c.bf16 %v2669, %v2667
    %v2908 = vpack.c.bf16 %v2672, %v2670
    %v2909 = vpack.c.bf16 %v2673, %v2671
    %v2910 = vpack.c.bf16 %v2676, %v2674
    %v2911 = vpack.c.bf16 %v2677, %v2675
    %v2912 = vpack.c.bf16 %v2680, %v2678
    %v2913 = vpack.c.bf16 %v2681, %v2679
    %v2914 = vpack.c.bf16 %v2684, %v2682
    %v2915 = vpack.c.bf16 %v2685, %v2683
    %v2916 = vpack.c.bf16 %v2688, %v2686
    %v2917 = vpack.c.bf16 %v2689, %v2687
    %v2918 = vpack.c.bf16 %v2692, %v2690
    %v2919 = vpack.c.bf16 %v2693, %v2691
    %v2920 = vpack.c.bf16 %v2696, %v2694
    %v2921 = vpack.c.bf16 %v2697, %v2695
    %v2922 = vpack.c.bf16 %v2700, %v2698
    %v2923 = vpack.c.bf16 %v2701, %v2699
    %v2924 = vpack.c.bf16 %v2704, %v2702
    %v2925 = vpack.c.bf16 %v2705, %v2703
    %v2926 = vpack.c.bf16 %v2708, %v2706
    %v2927 = vpack.c.bf16 %v2709, %v2707
    %v2928 = vpack.c.bf16 %v2712, %v2710
    %v2929 = vpack.c.bf16 %v2713, %v2711
    %v2930 = vpack.c.bf16 %v2716, %v2714
    %v2931 = vpack.c.bf16 %v2717, %v2715
    %v2932 = vpack.c.bf16 %v2720, %v2718
    %v2933 = vpack.c.bf16 %v2721, %v2719
    %v2934 = vpack.c.bf16 %v2724, %v2722
    %v2935 = vpack.c.bf16 %v2725, %v2723
    %v2936 = vpack.c.bf16 %v2728, %v2726
    %v2937 = vpack.c.bf16 %v2729, %v2727
    %v2938 = vpack.c.bf16 %v2732, %v2730
    %v2939 = vpack.c.bf16 %v2733, %v2731
    %v2940 = vpack.c.bf16 %v2736, %v2734
    %v2941 = vpack.c.bf16 %v2737, %v2735
    %v2942 = vpack.c.bf16 %v2740, %v2738
    %v2943 = vpack.c.bf16 %v2741, %v2739
    %v2944 = vpack.c.bf16 %v2744, %v2742
    %v2945 = vpack.c.bf16 %v2745, %v2743
    %v2946 = vpack.c.bf16 %v2748, %v2746
    %v2947 = vpack.c.bf16 %v2749, %v2747
    %v2948 = vpack.c.bf16 %v2752, %v2750
    %v2949 = vpack.c.bf16 %v2753, %v2751
    %v2950 = vpack.c.bf16 %v2756, %v2754
    %v2951 = vpack.c.bf16 %v2757, %v2755
    %v2952 = vpack.c.bf16 %v2760, %v2758
    %v2953 = vpack.c.bf16 %v2761, %v2759
    %v2954 = vpack.c.bf16 %v2764, %v2762
    %v2955 = vpack.c.bf16 %v2765, %v2763
    %v2956 = vpack.c.bf16 %v2768, %v2766
    %v2957 = vpack.c.bf16 %v2769, %v2767
    %v2958 = vpack.c.bf16 %v2772, %v2770
    %v2959 = vpack.c.bf16 %v2773, %v2771
    %v2960 = vpack.c.bf16 %v2776, %v2774
    %v2961 = vpack.c.bf16 %v2777, %v2775
    %v2962 = vpack.c.bf16 %v2780, %v2778
    %v2963 = vpack.c.bf16 %v2781, %v2779
    %v2964 = vpack.c.bf16 %v2784, %v2782
    %v2965 = vpack.c.bf16 %v2785, %v2783
    %v2966 = vpack.c.bf16 %v2788, %v2786
    %v2967 = vpack.c.bf16 %v2789, %v2787
    %v2968 = vpack.c.bf16 %v2792, %v2790
    %v2969 = vpack.c.bf16 %v2793, %v2791
    %v2970 = vpack.c.bf16 %v2796, %v2794
    %v2971 = vpack.c.bf16 %v2797, %v2795
    %v2972 = vpack.c.bf16 %v2800, %v2798
    %v2973 = vpack.c.bf16 %v2801, %v2799
    %v2974 = vpack.c.bf16 %v2804, %v2802
    %v2975 = vpack.c.bf16 %v2805, %v2803
    %v2976 = vpack.c.bf16 %v2808, %v2806
    %v2977 = vpack.c.bf16 %v2809, %v2807
    %v2978 = vpack.c.bf16 %v2812, %v2810
    %v2979 = vpack.c.bf16 %v2813, %v2811
    %v2980 = vpack.c.bf16 %v2816, %v2814
    %v2981 = vpack.c.bf16 %v2817, %v2815
    %v2982 = vpack.c.bf16 %v2820, %v2818
    %v2983 = vpack.c.bf16 %v2821, %v2819
    %v2984 = vpack.c.bf16 %v2824, %v2822
    %v2985 = vpack.c.bf16 %v2825, %v2823
    %v2986 = vpack.c.bf16 %v2828, %v2826
    %v2987 = vpack.c.bf16 %v2829, %v2827
    %v2988 = vpack.c.bf16 %v2832, %v2830
    %v2989 = vpack.c.bf16 %v2833, %v2831
    %v2990 = vpack.c.bf16 %v2836, %v2834
    %v2991 = vpack.c.bf16 %v2837, %v2835
    %v2992 = vpack.c.bf16 %v2840, %v2838
    %v2993 = vpack.c.bf16 %v2841, %v2839
    %v2994 = vpack.c.bf16 %v2844, %v2842
    %v2995 = vpack.c.bf16 %v2845, %v2843
    %v2996 = vpack.c.bf16 %v2848, %v2846
    %v2997 = vpack.c.bf16 %v2849, %v2847
    %v2998 = vpack.c.bf16 %v2852, %v2850
    %v2999 = vpack.c.bf16 %v2853, %v2851
    %v3000 = vpack.c.bf16 %v2856, %v2854
    %v3001 = vpack.c.bf16 %v2857, %v2855
    %v3002 = vpack.c.bf16 %v2860, %v2858
    %v3003 = vpack.c.bf16 %v2861, %v2859
    %v3004 = vpack.c.bf16 %v2864, %v2862
    %v3005 = vpack.c.bf16 %v2865, %v2863
    %v3006 = vpack.c.bf16 %v2868, %v2866
    %v3007 = vpack.c.bf16 %v2869, %v2867
    %v3008 = vpack.c.bf16 %v2872, %v2870
    %v3009 = vpack.c.bf16 %v2873, %v2871
    %v3010 = vpack.c.bf16 %v2876, %v2874
    %v3011 = vpack.c.bf16 %v2877, %v2875
    %v3012 = vpack.c.bf16 %v2880, %v2878
    %v3013 = vpack.c.bf16 %v2881, %v2879
    %v3014 = vpack.c.bf16 %v2884, %v2882
    %v3015 = vpack.c.bf16 %v2885, %v2883
    %v3016 = vpack.c.bf16 %v2888, %v2886
    %v3017 = vpack.c.bf16 %v2889, %v2887
    %v3018 = vpack.c.bf16 %v2892, %v2890
    %v3019 = vpack.c.bf16 %v2893, %v2891
    %v3020 = vld [vmem:[%s3] sm:$0xff]
    %v3021 = vld [vmem:[%s3 + $0x8] sm:$0xff]
    %v3022 = vld [vmem:[%s3 + $0x10] sm:$0xff]
    %v3023 = vld [vmem:[%s3 + $0x18] sm:$0xff]
    %v3024 = vld [vmem:[%s3 + $0x20] sm:$0xff]
    %v3025 = vld [vmem:[%s3 + $0x28] sm:$0xff]
    %v3026 = vld [vmem:[%s3 + $0x30] sm:$0xff]
    %v3027 = vld [vmem:[%s3 + $0x38] sm:$0xff]
    %v3028 = vld [vmem:[%s3 + $0x40] sm:$0xff]
    %v3029 = vld [vmem:[%s3 + $0x48] sm:$0xff]
    %v3030 = vld [vmem:[%s3 + $0x50] sm:$0xff]
    %v3031 = vld [vmem:[%s3 + $0x58] sm:$0xff]
    %v3032 = vld [vmem:[%s3 + $0x60] sm:$0xff]
    %v3033 = vld [vmem:[%s3 + $0x68] sm:$0xff]
    %v3034 = vld [vmem:[%s3 + $0x70] sm:$0xff]
    %v3035 = vld [vmem:[%s3 + $0x78] sm:$0xff]
    %v3036 = vld [vmem:[%s3 + $0x80] sm:$0xff]
    %v3037 = vld [vmem:[%s3 + $0x88] sm:$0xff]
    %v3038 = vld [vmem:[%s3 + $0x90] sm:$0xff]
    %v3039 = vld [vmem:[%s3 + $0x98] sm:$0xff]
    %v3040 = vld [vmem:[%s3 + $0xa0] sm:$0xff]
    %v3041 = vld [vmem:[%s3 + $0xa8] sm:$0xff]
    %v3042 = vld [vmem:[%s3 + $0xb0] sm:$0xff]
    %v3043 = vld [vmem:[%s3 + $0xb8] sm:$0xff]
    %v3044 = vld [vmem:[%s3 + $0xc0] sm:$0xff]
    %v3045 = vld [vmem:[%s3 + $0xc8] sm:$0xff]
    %v3046 = vld [vmem:[%s3 + $0xd0] sm:$0xff]
    %v3047 = vld [vmem:[%s3 + $0xd8] sm:$0xff]
    %v3048 = vld [vmem:[%s3 + $0xe0] sm:$0xff]
    %v3049 = vld [vmem:[%s3 + $0xe8] sm:$0xff]
    %v3050 = vld [vmem:[%s3 + $0xf0] sm:$0xff]
    %v3051 = vld [vmem:[%s3 + $0xf8] sm:$0xff]
    %v3052 = vld [vmem:[%s3 + $0x100] sm:$0xff]
    %v3053 = vld [vmem:[%s3 + $0x108] sm:$0xff]
    %v3054 = vld [vmem:[%s3 + $0x110] sm:$0xff]
    %v3055 = vld [vmem:[%s3 + $0x118] sm:$0xff]
    %v3056 = vld [vmem:[%s3 + $0x120] sm:$0xff]
    %v3057 = vld [vmem:[%s3 + $0x128] sm:$0xff]
    %v3058 = vld [vmem:[%s3 + $0x130] sm:$0xff]
    %v3059 = vld [vmem:[%s3 + $0x138] sm:$0xff]
    %v3060 = vld [vmem:[%s3 + $0x140] sm:$0xff]
    %v3061 = vld [vmem:[%s3 + $0x148] sm:$0xff]
    %v3062 = vld [vmem:[%s3 + $0x150] sm:$0xff]
    %v3063 = vld [vmem:[%s3 + $0x158] sm:$0xff]
    %v3064 = vld [vmem:[%s3 + $0x160] sm:$0xff]
    %v3065 = vld [vmem:[%s3 + $0x168] sm:$0xff]
    %v3066 = vld [vmem:[%s3 + $0x170] sm:$0xff]
    %v3067 = vld [vmem:[%s3 + $0x178] sm:$0xff]
    %v3068 = vld [vmem:[%s3 + $0x180] sm:$0xff]
    %v3069 = vld [vmem:[%s3 + $0x188] sm:$0xff]
    %v3070 = vld [vmem:[%s3 + $0x190] sm:$0xff]
    %v3071 = vld [vmem:[%s3 + $0x198] sm:$0xff]
    %v3072 = vld [vmem:[%s3 + $0x1a0] sm:$0xff]
    %v3073 = vld [vmem:[%s3 + $0x1a8] sm:$0xff]
    %v3074 = vld [vmem:[%s3 + $0x1b0] sm:$0xff]
    %v3075 = vld [vmem:[%s3 + $0x1b8] sm:$0xff]
    %v3076 = vld [vmem:[%s3 + $0x1c0] sm:$0xff]
    %v3077 = vld [vmem:[%s3 + $0x1c8] sm:$0xff]
    %v3078 = vld [vmem:[%s3 + $0x1d0] sm:$0xff]
    %v3079 = vld [vmem:[%s3 + $0x1d8] sm:$0xff]
    %v3080 = vld [vmem:[%s3 + $0x1e0] sm:$0xff]
    %v3081 = vld [vmem:[%s3 + $0x1e8] sm:$0xff]
    %v3082 = vld [vmem:[%s3 + $0x1f0] sm:$0xff]
    %v3083 = vld [vmem:[%s3 + $0x1f8] sm:$0xff]
    %v3084 = vld [vmem:[%s4] sm:$0xf]
    %v3086 = vlaneseq
    %v3087 = vshrl.u32 %v3086, 7
    %v3088 = vsub.s32 0, %v3087
    %v3089 = vrot.slane %v3084, %v3088
    %v3090 = vlaneseq
    %v3091 = vshrl.u32 %v3090, 7
    %v3092 = vsub.s32 1, %v3091
    %v3093 = vrot.slane %v3084, %v3092
    %v3094 = vlaneseq
    %v3095 = vshrl.u32 %v3094, 7
    %v3096 = vsub.s32 2, %v3095
    %v3097 = vrot.slane %v3084, %v3096
    %v3098 = vlaneseq
    %v3099 = vshrl.u32 %v3098, 7
    %v3100 = vsub.s32 3, %v3099
    %v3101 = vrot.slane %v3084, %v3100
    %v3170 = vunpack.c.l.b16 %v3020
    %v3171 = vunpack.c.h.b16 %v3020
    %v3172 = vunpack.c.l.b16 %v3021
    %v3173 = vunpack.c.h.b16 %v3021
    %v3174 = vunpack.c.l.b16 %v3022
    %v3175 = vunpack.c.h.b16 %v3022
    %v3176 = vunpack.c.l.b16 %v3023
    %v3177 = vunpack.c.h.b16 %v3023
    %v3178 = vunpack.c.l.b16 %v3024
    %v3179 = vunpack.c.h.b16 %v3024
    %v3180 = vunpack.c.l.b16 %v3025
    %v3181 = vunpack.c.h.b16 %v3025
    %v3182 = vunpack.c.l.b16 %v3026
    %v3183 = vunpack.c.h.b16 %v3026
    %v3184 = vunpack.c.l.b16 %v3027
    %v3185 = vunpack.c.h.b16 %v3027
    %v3186 = vunpack.c.l.b16 %v3028
    %v3187 = vunpack.c.h.b16 %v3028
    %v3188 = vunpack.c.l.b16 %v3029
    %v3189 = vunpack.c.h.b16 %v3029
    %v3190 = vunpack.c.l.b16 %v3030
    %v3191 = vunpack.c.h.b16 %v3030
    %v3192 = vunpack.c.l.b16 %v3031
    %v3193 = vunpack.c.h.b16 %v3031
    %v3194 = vunpack.c.l.b16 %v3032
    %v3195 = vunpack.c.h.b16 %v3032
    %v3196 = vunpack.c.l.b16 %v3033
    %v3197 = vunpack.c.h.b16 %v3033
    %v3198 = vunpack.c.l.b16 %v3034
    %v3199 = vunpack.c.h.b16 %v3034
    %v3200 = vunpack.c.l.b16 %v3035
    %v3201 = vunpack.c.h.b16 %v3035
    %v3202 = vunpack.c.l.b16 %v3036
    %v3203 = vunpack.c.h.b16 %v3036
    %v3204 = vunpack.c.l.b16 %v3037
    %v3205 = vunpack.c.h.b16 %v3037
    %v3206 = vunpack.c.l.b16 %v3038
    %v3207 = vunpack.c.h.b16 %v3038
    %v3208 = vunpack.c.l.b16 %v3039
    %v3209 = vunpack.c.h.b16 %v3039
    %v3210 = vunpack.c.l.b16 %v3040
    %v3211 = vunpack.c.h.b16 %v3040
    %v3212 = vunpack.c.l.b16 %v3041
    %v3213 = vunpack.c.h.b16 %v3041
    %v3214 = vunpack.c.l.b16 %v3042
    %v3215 = vunpack.c.h.b16 %v3042
    %v3216 = vunpack.c.l.b16 %v3043
    %v3217 = vunpack.c.h.b16 %v3043
    %v3218 = vunpack.c.l.b16 %v3044
    %v3219 = vunpack.c.h.b16 %v3044
    %v3220 = vunpack.c.l.b16 %v3045
    %v3221 = vunpack.c.h.b16 %v3045
    %v3222 = vunpack.c.l.b16 %v3046
    %v3223 = vunpack.c.h.b16 %v3046
    %v3224 = vunpack.c.l.b16 %v3047
    %v3225 = vunpack.c.h.b16 %v3047
    %v3226 = vunpack.c.l.b16 %v3048
    %v3227 = vunpack.c.h.b16 %v3048
    %v3228 = vunpack.c.l.b16 %v3049
    %v3229 = vunpack.c.h.b16 %v3049
    %v3230 = vunpack.c.l.b16 %v3050
    %v3231 = vunpack.c.h.b16 %v3050
    %v3232 = vunpack.c.l.b16 %v3051
    %v3233 = vunpack.c.h.b16 %v3051
    %v3234 = vunpack.c.l.b16 %v3052
    %v3235 = vunpack.c.h.b16 %v3052
    %v3236 = vunpack.c.l.b16 %v3053
    %v3237 = vunpack.c.h.b16 %v3053
    %v3238 = vunpack.c.l.b16 %v3054
    %v3239 = vunpack.c.h.b16 %v3054
    %v3240 = vunpack.c.l.b16 %v3055
    %v3241 = vunpack.c.h.b16 %v3055
    %v3242 = vunpack.c.l.b16 %v3056
    %v3243 = vunpack.c.h.b16 %v3056
    %v3244 = vunpack.c.l.b16 %v3057
    %v3245 = vunpack.c.h.b16 %v3057
    %v3246 = vunpack.c.l.b16 %v3058
    %v3247 = vunpack.c.h.b16 %v3058
    %v3248 = vunpack.c.l.b16 %v3059
    %v3249 = vunpack.c.h.b16 %v3059
    %v3250 = vunpack.c.l.b16 %v3060
    %v3251 = vunpack.c.h.b16 %v3060
    %v3252 = vunpack.c.l.b16 %v3061
    %v3253 = vunpack.c.h.b16 %v3061
    %v3254 = vunpack.c.l.b16 %v3062
    %v3255 = vunpack.c.h.b16 %v3062
    %v3256 = vunpack.c.l.b16 %v3063
    %v3257 = vunpack.c.h.b16 %v3063
    %v3258 = vunpack.c.l.b16 %v3064
    %v3259 = vunpack.c.h.b16 %v3064
    %v3260 = vunpack.c.l.b16 %v3065
    %v3261 = vunpack.c.h.b16 %v3065
    %v3262 = vunpack.c.l.b16 %v3066
    %v3263 = vunpack.c.h.b16 %v3066
    %v3264 = vunpack.c.l.b16 %v3067
    %v3265 = vunpack.c.h.b16 %v3067
    %v3266 = vunpack.c.l.b16 %v3068
    %v3267 = vunpack.c.h.b16 %v3068
    %v3268 = vunpack.c.l.b16 %v3069
    %v3269 = vunpack.c.h.b16 %v3069
    %v3270 = vunpack.c.l.b16 %v3070
    %v3271 = vunpack.c.h.b16 %v3070
    %v3272 = vunpack.c.l.b16 %v3071
    %v3273 = vunpack.c.h.b16 %v3071
    %v3274 = vunpack.c.l.b16 %v3072
    %v3275 = vunpack.c.h.b16 %v3072
    %v3276 = vunpack.c.l.b16 %v3073
    %v3277 = vunpack.c.h.b16 %v3073
    %v3278 = vunpack.c.l.b16 %v3074
    %v3279 = vunpack.c.h.b16 %v3074
    %v3280 = vunpack.c.l.b16 %v3075
    %v3281 = vunpack.c.h.b16 %v3075
    %v3282 = vunpack.c.l.b16 %v3076
    %v3283 = vunpack.c.h.b16 %v3076
    %v3284 = vunpack.c.l.b16 %v3077
    %v3285 = vunpack.c.h.b16 %v3077
    %v3286 = vunpack.c.l.b16 %v3078
    %v3287 = vunpack.c.h.b16 %v3078
    %v3288 = vunpack.c.l.b16 %v3079
    %v3289 = vunpack.c.h.b16 %v3079
    %v3290 = vunpack.c.l.b16 %v3080
    %v3291 = vunpack.c.h.b16 %v3080
    %v3292 = vunpack.c.l.b16 %v3081
    %v3293 = vunpack.c.h.b16 %v3081
    %v3294 = vunpack.c.l.b16 %v3082
    %v3295 = vunpack.c.h.b16 %v3082
    %v3296 = vunpack.c.l.b16 %v3083
    %v3297 = vunpack.c.h.b16 %v3083
    %v3298 = vpack.c.b16 %v3174, %v3170
    %v3299 = vpack.c.b16 %v3175, %v3171
    %v3300 = vpack.c.b16 %v3176, %v3172
    %v3301 = vpack.c.b16 %v3177, %v3173
    %v3302 = vpack.c.b16 %v3182, %v3178
    %v3303 = vpack.c.b16 %v3183, %v3179
    %v3304 = vpack.c.b16 %v3184, %v3180
    %v3305 = vpack.c.b16 %v3185, %v3181
    %v3306 = vpack.c.b16 %v3190, %v3186
    %v3307 = vpack.c.b16 %v3191, %v3187
    %v3308 = vpack.c.b16 %v3192, %v3188
    %v3309 = vpack.c.b16 %v3193, %v3189
    %v3310 = vpack.c.b16 %v3198, %v3194
    %v3311 = vpack.c.b16 %v3199, %v3195
    %v3312 = vpack.c.b16 %v3200, %v3196
    %v3313 = vpack.c.b16 %v3201, %v3197
    %v3314 = vpack.c.b16 %v3206, %v3202
    %v3315 = vpack.c.b16 %v3207, %v3203
    %v3316 = vpack.c.b16 %v3208, %v3204
    %v3317 = vpack.c.b16 %v3209, %v3205
    %v3318 = vpack.c.b16 %v3214, %v3210
    %v3319 = vpack.c.b16 %v3215, %v3211
    %v3320 = vpack.c.b16 %v3216, %v3212
    %v3321 = vpack.c.b16 %v3217, %v3213
    %v3322 = vpack.c.b16 %v3222, %v3218
    %v3323 = vpack.c.b16 %v3223, %v3219
    %v3324 = vpack.c.b16 %v3224, %v3220
    %v3325 = vpack.c.b16 %v3225, %v3221
    %v3326 = vpack.c.b16 %v3230, %v3226
    %v3327 = vpack.c.b16 %v3231, %v3227
    %v3328 = vpack.c.b16 %v3232, %v3228
    %v3329 = vpack.c.b16 %v3233, %v3229
    %v3330 = vpack.c.b16 %v3238, %v3234
    %v3331 = vpack.c.b16 %v3239, %v3235
    %v3332 = vpack.c.b16 %v3240, %v3236
    %v3333 = vpack.c.b16 %v3241, %v3237
    %v3334 = vpack.c.b16 %v3246, %v3242
    %v3335 = vpack.c.b16 %v3247, %v3243
    %v3336 = vpack.c.b16 %v3248, %v3244
    %v3337 = vpack.c.b16 %v3249, %v3245
    %v3338 = vpack.c.b16 %v3254, %v3250
    %v3339 = vpack.c.b16 %v3255, %v3251
    %v3340 = vpack.c.b16 %v3256, %v3252
    %v3341 = vpack.c.b16 %v3257, %v3253
    %v3342 = vpack.c.b16 %v3262, %v3258
    %v3343 = vpack.c.b16 %v3263, %v3259
    %v3344 = vpack.c.b16 %v3264, %v3260
    %v3345 = vpack.c.b16 %v3265, %v3261
    %v3346 = vpack.c.b16 %v3270, %v3266
    %v3347 = vpack.c.b16 %v3271, %v3267
    %v3348 = vpack.c.b16 %v3272, %v3268
    %v3349 = vpack.c.b16 %v3273, %v3269
    %v3350 = vpack.c.b16 %v3278, %v3274
    %v3351 = vpack.c.b16 %v3279, %v3275
    %v3352 = vpack.c.b16 %v3280, %v3276
    %v3353 = vpack.c.b16 %v3281, %v3277
    %v3354 = vpack.c.b16 %v3286, %v3282
    %v3355 = vpack.c.b16 %v3287, %v3283
    %v3356 = vpack.c.b16 %v3288, %v3284
    %v3357 = vpack.c.b16 %v3289, %v3285
    %v3358 = vpack.c.b16 %v3294, %v3290
    %v3359 = vpack.c.b16 %v3295, %v3291
    %v3360 = vpack.c.b16 %v3296, %v3292
    %v3361 = vpack.c.b16 %v3297, %v3293
    %3426 = vmatprep.subr.bf16.mxu0 %v3327
    %3427 = vmatpush1.bf16.msra.mxu0 %v3326
    %3428 = vmatprep.subr.bf16.mxu0 %v3323
    %3429 = vmatpush1.bf16.msra.mxu0 %v3322
    %3430 = vmatprep.subr.bf16.mxu0 %v3319
    %3431 = vmatpush1.bf16.msra.mxu0 %v3318
    %3432 = vmatprep.subr.bf16.mxu0 %v3315
    %3433 = vmatpush1.bf16.msra.mxu0 %v3314
    %3434 = vmatprep.subr.bf16.mxu0 %v3311
    %3435 = vmatpush1.bf16.msra.mxu0 %v3310
    %3436 = vmatprep.subr.bf16.mxu0 %v3307
    %3437 = vmatpush1.bf16.msra.mxu0 %v3306
    %3438 = vmatprep.subr.bf16.mxu0 %v3303
    %3439 = vmatpush1.bf16.msra.mxu0 %v3302
    %3440 = vmatprep.subr.bf16.mxu0 %v3299
    %3441 = vmatpush1.bf16.msra.mxu0 %v3298
    %3442 = vmatprep.subr.bf16.mxu0 %v3359
    %3443 = vmatpush2.bf16.msra.mxu0 %v3358
    %3444 = vmatprep.subr.bf16.mxu0 %v3355
    %3445 = vmatpush2.bf16.msra.mxu0 %v3354
    %3446 = vmatprep.subr.bf16.mxu0 %v3351
    %3447 = vmatpush2.bf16.msra.mxu0 %v3350
    %3448 = vmatprep.subr.bf16.mxu0 %v3347
    %3449 = vmatpush2.bf16.msra.mxu0 %v3346
    %3450 = vmatprep.subr.bf16.mxu0 %v3343
    %3451 = vmatpush2.bf16.msra.mxu0 %v3342
    %3452 = vmatprep.subr.bf16.mxu0 %v3339
    %3453 = vmatpush2.bf16.msra.mxu0 %v3338
    %3454 = vmatprep.subr.bf16.mxu0 %v3335
    %3455 = vmatpush2.bf16.msra.mxu0 %v3334
    %3456 = vmatprep.subr.bf16.mxu0 %v3331
    %3457 = vmatpush2.bf16.msra.mxu0 %v3330
    %3458 = vmatprep.mubr.bf16.mxu0 %v2895
    %3459 = vmatmul.mubr.bf16.gmra.mxu0 %v2894
    %v3460 = vpop.f32.mrf.mxu0
    %v3461 = vadd.f32 %v3089, %v3460
    %v3462 = vpop.f32.mrf.mxu0
    %v3463 = vadd.f32 %v3093, %v3462
    %v3464 = vpop.f32.mrf.mxu0
    %v3465 = vadd.f32 %v3089, %v3464
    %v3466 = vpop.f32.mrf.mxu0
    %v3467 = vadd.f32 %v3093, %v3466
    %3468 = vmatprep.mubr.bf16.mxu0 %v2897
    %3469 = vmatmul.mubr.bf16.gmra.mxu0 %v2896
    %v3470 = vpop.f32.mrf.mxu0
    %v3471 = vadd.f32 %v3089, %v3470
    %v3472 = vpop.f32.mrf.mxu0
    %v3473 = vadd.f32 %v3093, %v3472
    %v3474 = vpop.f32.mrf.mxu0
    %v3475 = vadd.f32 %v3089, %v3474
    %v3476 = vpop.f32.mrf.mxu0
    %v3477 = vadd.f32 %v3093, %v3476
    %3478 = vmatprep.mubr.bf16.mxu0 %v2899
    %3479 = vmatmul.mubr.bf16.gmra.mxu0 %v2898
    %v3480 = vpop.f32.mrf.mxu0
    %v3481 = vadd.f32 %v3089, %v3480
    %v3482 = vpop.f32.mrf.mxu0
    %v3483 = vadd.f32 %v3093, %v3482
    %v3484 = vpop.f32.mrf.mxu0
    %v3485 = vadd.f32 %v3089, %v3484
    %v3486 = vpop.f32.mrf.mxu0
    %v3487 = vadd.f32 %v3093, %v3486
    %3488 = vmatprep.mubr.bf16.mxu0 %v2901
    %3489 = vmatmul.mubr.bf16.gmra.mxu0 %v2900
    %v3490 = vpop.f32.mrf.mxu0
    %v3491 = vadd.f32 %v3089, %v3490
    %v3492 = vpop.f32.mrf.mxu0
    %v3493 = vadd.f32 %v3093, %v3492
    %v3494 = vpop.f32.mrf.mxu0
    %v3495 = vadd.f32 %v3089, %v3494
    %v3496 = vpop.f32.mrf.mxu0
    %v3497 = vadd.f32 %v3093, %v3496
    %3498 = vmatprep.mubr.bf16.mxu0 %v2903
    %3499 = vmatmul.mubr.bf16.gmra.mxu0 %v2902
    %v3500 = vpop.f32.mrf.mxu0
    %v3501 = vadd.f32 %v3089, %v3500
    %v3502 = vpop.f32.mrf.mxu0
    %v3503 = vadd.f32 %v3093, %v3502
    %v3504 = vpop.f32.mrf.mxu0
    %v3505 = vadd.f32 %v3089, %v3504
    %v3506 = vpop.f32.mrf.mxu0
    %v3507 = vadd.f32 %v3093, %v3506
    %3508 = vmatprep.mubr.bf16.mxu0 %v2905
    %3509 = vmatmul.mubr.bf16.gmra.mxu0 %v2904
    %v3510 = vpop.f32.mrf.mxu0
    %v3511 = vadd.f32 %v3089, %v3510
    %v3512 = vpop.f32.mrf.mxu0
    %v3513 = vadd.f32 %v3093, %v3512
    %v3514 = vpop.f32.mrf.mxu0
    %v3515 = vadd.f32 %v3089, %v3514
    %v3516 = vpop.f32.mrf.mxu0
    %v3517 = vadd.f32 %v3093, %v3516
    %3518 = vmatprep.mubr.bf16.mxu0 %v2907
    %3519 = vmatmul.mubr.bf16.gmra.mxu0 %v2906
    %v3520 = vpop.f32.mrf.mxu0
    %v3521 = vadd.f32 %v3089, %v3520
    %v3522 = vpop.f32.mrf.mxu0
    %v3523 = vadd.f32 %v3093, %v3522
    %v3524 = vpop.f32.mrf.mxu0
    %v3525 = vadd.f32 %v3089, %v3524
    %v3526 = vpop.f32.mrf.mxu0
    %v3527 = vadd.f32 %v3093, %v3526
    %3528 = vmatprep.mubr.bf16.mxu0 %v2909
    %3529 = vmatmul.mubr.bf16.gmra.mxu0 %v2908
    %v3530 = vpop.f32.mrf.mxu0
    %v3531 = vadd.f32 %v3089, %v3530
    %v3532 = vpop.f32.mrf.mxu0
    %v3533 = vadd.f32 %v3093, %v3532
    %v3534 = vpop.f32.mrf.mxu0
    %v3535 = vadd.f32 %v3089, %v3534
    %v3536 = vpop.f32.mrf.mxu0
    %v3537 = vadd.f32 %v3093, %v3536
    %3538 = vmatprep.mubr.bf16.mxu0 %v2911
    %3539 = vmatmul.mubr.bf16.gmra.mxu0 %v2910
    %v3540 = vpop.f32.mrf.mxu0
    %v3541 = vadd.f32 %v3089, %v3540
    %v3542 = vpop.f32.mrf.mxu0
    %v3543 = vadd.f32 %v3093, %v3542
    %v3544 = vpop.f32.mrf.mxu0
    %v3545 = vadd.f32 %v3089, %v3544
    %v3546 = vpop.f32.mrf.mxu0
    %v3547 = vadd.f32 %v3093, %v3546
    %3548 = vmatprep.mubr.bf16.mxu0 %v2913
    %3549 = vmatmul.mubr.bf16.gmra.mxu0 %v2912
    %v3550 = vpop.f32.mrf.mxu0
    %v3551 = vadd.f32 %v3089, %v3550
    %v3552 = vpop.f32.mrf.mxu0
    %v3553 = vadd.f32 %v3093, %v3552
    %v3554 = vpop.f32.mrf.mxu0
    %v3555 = vadd.f32 %v3089, %v3554
    %v3556 = vpop.f32.mrf.mxu0
    %v3557 = vadd.f32 %v3093, %v3556
    %3558 = vmatprep.mubr.bf16.mxu0 %v2915
    %3559 = vmatmul.mubr.bf16.gmra.mxu0 %v2914
    %v3560 = vpop.f32.mrf.mxu0
    %v3561 = vadd.f32 %v3089, %v3560
    %v3562 = vpop.f32.mrf.mxu0
    %v3563 = vadd.f32 %v3093, %v3562
    %v3564 = vpop.f32.mrf.mxu0
    %v3565 = vadd.f32 %v3089, %v3564
    %v3566 = vpop.f32.mrf.mxu0
    %v3567 = vadd.f32 %v3093, %v3566
    %3568 = vmatprep.mubr.bf16.mxu0 %v2917
    %3569 = vmatmul.mubr.bf16.gmra.mxu0 %v2916
    %v3570 = vpop.f32.mrf.mxu0
    %v3571 = vadd.f32 %v3089, %v3570
    %v3572 = vpop.f32.mrf.mxu0
    %v3573 = vadd.f32 %v3093, %v3572
    %v3574 = vpop.f32.mrf.mxu0
    %v3575 = vadd.f32 %v3089, %v3574
    %v3576 = vpop.f32.mrf.mxu0
    %v3577 = vadd.f32 %v3093, %v3576
    %3578 = vmatprep.mubr.bf16.mxu0 %v2919
    %3579 = vmatmul.mubr.bf16.gmra.mxu0 %v2918
    %v3580 = vpop.f32.mrf.mxu0
    %v3581 = vadd.f32 %v3089, %v3580
    %v3582 = vpop.f32.mrf.mxu0
    %v3583 = vadd.f32 %v3093, %v3582
    %v3584 = vpop.f32.mrf.mxu0
    %v3585 = vadd.f32 %v3089, %v3584
    %v3586 = vpop.f32.mrf.mxu0
    %v3587 = vadd.f32 %v3093, %v3586
    %3588 = vmatprep.mubr.bf16.mxu0 %v2921
    %3589 = vmatmul.mubr.bf16.gmra.mxu0 %v2920
    %v3590 = vpop.f32.mrf.mxu0
    %v3591 = vadd.f32 %v3089, %v3590
    %v3592 = vpop.f32.mrf.mxu0
    %v3593 = vadd.f32 %v3093, %v3592
    %v3594 = vpop.f32.mrf.mxu0
    %v3595 = vadd.f32 %v3089, %v3594
    %v3596 = vpop.f32.mrf.mxu0
    %v3597 = vadd.f32 %v3093, %v3596
    %3598 = vmatprep.mubr.bf16.mxu0 %v2923
    %3599 = vmatmul.mubr.bf16.gmra.mxu0 %v2922
    %v3600 = vpop.f32.mrf.mxu0
    %v3601 = vadd.f32 %v3089, %v3600
    %v3602 = vpop.f32.mrf.mxu0
    %v3603 = vadd.f32 %v3093, %v3602
    %v3604 = vpop.f32.mrf.mxu0
    %v3605 = vadd.f32 %v3089, %v3604
    %v3606 = vpop.f32.mrf.mxu0
    %v3607 = vadd.f32 %v3093, %v3606
    %3608 = vmatprep.mubr.bf16.mxu0 %v2925
    %3609 = vmatmul.mubr.bf16.gmra.mxu0 %v2924
    %v3610 = vpop.f32.mrf.mxu0
    %v3611 = vadd.f32 %v3089, %v3610
    %v3612 = vpop.f32.mrf.mxu0
    %v3613 = vadd.f32 %v3093, %v3612
    %v3614 = vpop.f32.mrf.mxu0
    %v3615 = vadd.f32 %v3089, %v3614
    %v3616 = vpop.f32.mrf.mxu0
    %v3617 = vadd.f32 %v3093, %v3616
    %3618 = vmatprep.mubr.bf16.mxu0 %v2927
    %3619 = vmatmul.mubr.bf16.gmra.mxu0 %v2926
    %v3620 = vpop.f32.mrf.mxu0
    %v3621 = vadd.f32 %v3089, %v3620
    %v3622 = vpop.f32.mrf.mxu0
    %v3623 = vadd.f32 %v3093, %v3622
    %v3624 = vpop.f32.mrf.mxu0
    %v3625 = vadd.f32 %v3089, %v3624
    %v3626 = vpop.f32.mrf.mxu0
    %v3627 = vadd.f32 %v3093, %v3626
    %3628 = vmatprep.mubr.bf16.mxu0 %v2929
    %3629 = vmatmul.mubr.bf16.gmra.mxu0 %v2928
    %v3630 = vpop.f32.mrf.mxu0
    %v3631 = vadd.f32 %v3089, %v3630
    %v3632 = vpop.f32.mrf.mxu0
    %v3633 = vadd.f32 %v3093, %v3632
    %v3634 = vpop.f32.mrf.mxu0
    %v3635 = vadd.f32 %v3089, %v3634
    %v3636 = vpop.f32.mrf.mxu0
    %v3637 = vadd.f32 %v3093, %v3636
    %3638 = vmatprep.mubr.bf16.mxu0 %v2931
    %3639 = vmatmul.mubr.bf16.gmra.mxu0 %v2930
    %v3640 = vpop.f32.mrf.mxu0
    %v3641 = vadd.f32 %v3089, %v3640
    %v3642 = vpop.f32.mrf.mxu0
    %v3643 = vadd.f32 %v3093, %v3642
    %v3644 = vpop.f32.mrf.mxu0
    %v3645 = vadd.f32 %v3089, %v3644
    %v3646 = vpop.f32.mrf.mxu0
    %v3647 = vadd.f32 %v3093, %v3646
    %3648 = vmatprep.mubr.bf16.mxu0 %v2933
    %3649 = vmatmul.mubr.bf16.gmra.mxu0 %v2932
    %v3650 = vpop.f32.mrf.mxu0
    %v3651 = vadd.f32 %v3089, %v3650
    %v3652 = vpop.f32.mrf.mxu0
    %v3653 = vadd.f32 %v3093, %v3652
    %v3654 = vpop.f32.mrf.mxu0
    %v3655 = vadd.f32 %v3089, %v3654
    %v3656 = vpop.f32.mrf.mxu0
    %v3657 = vadd.f32 %v3093, %v3656
    %3658 = vmatprep.mubr.bf16.mxu0 %v2935
    %3659 = vmatmul.mubr.bf16.gmra.mxu0 %v2934
    %v3660 = vpop.f32.mrf.mxu0
    %v3661 = vadd.f32 %v3089, %v3660
    %v3662 = vpop.f32.mrf.mxu0
    %v3663 = vadd.f32 %v3093, %v3662
    %v3664 = vpop.f32.mrf.mxu0
    %v3665 = vadd.f32 %v3089, %v3664
    %v3666 = vpop.f32.mrf.mxu0
    %v3667 = vadd.f32 %v3093, %v3666
    %3668 = vmatprep.mubr.bf16.mxu0 %v2937
    %3669 = vmatmul.mubr.bf16.gmra.mxu0 %v2936
    %v3670 = vpop.f32.mrf.mxu0
    %v3671 = vadd.f32 %v3089, %v3670
    %v3672 = vpop.f32.mrf.mxu0
    %v3673 = vadd.f32 %v3093, %v3672
    %v3674 = vpop.f32.mrf.mxu0
    %v3675 = vadd.f32 %v3089, %v3674
    %v3676 = vpop.f32.mrf.mxu0
    %v3677 = vadd.f32 %v3093, %v3676
    %3678 = vmatprep.mubr.bf16.mxu0 %v2939
    %3679 = vmatmul.mubr.bf16.gmra.mxu0 %v2938
    %v3680 = vpop.f32.mrf.mxu0
    %v3681 = vadd.f32 %v3089, %v3680
    %v3682 = vpop.f32.mrf.mxu0
    %v3683 = vadd.f32 %v3093, %v3682
    %v3684 = vpop.f32.mrf.mxu0
    %v3685 = vadd.f32 %v3089, %v3684
    %v3686 = vpop.f32.mrf.mxu0
    %v3687 = vadd.f32 %v3093, %v3686
    %3688 = vmatprep.mubr.bf16.mxu0 %v2941
    %3689 = vmatmul.mubr.bf16.gmra.mxu0 %v2940
    %v3690 = vpop.f32.mrf.mxu0
    %v3691 = vadd.f32 %v3089, %v3690
    %v3692 = vpop.f32.mrf.mxu0
    %v3693 = vadd.f32 %v3093, %v3692
    %v3694 = vpop.f32.mrf.mxu0
    %v3695 = vadd.f32 %v3089, %v3694
    %v3696 = vpop.f32.mrf.mxu0
    %v3697 = vadd.f32 %v3093, %v3696
    %3698 = vmatprep.mubr.bf16.mxu0 %v2943
    %3699 = vmatmul.mubr.bf16.gmra.mxu0 %v2942
    %v3700 = vpop.f32.mrf.mxu0
    %v3701 = vadd.f32 %v3089, %v3700
    %v3702 = vpop.f32.mrf.mxu0
    %v3703 = vadd.f32 %v3093, %v3702
    %v3704 = vpop.f32.mrf.mxu0
    %v3705 = vadd.f32 %v3089, %v3704
    %v3706 = vpop.f32.mrf.mxu0
    %v3707 = vadd.f32 %v3093, %v3706
    %3708 = vmatprep.mubr.bf16.mxu0 %v2945
    %3709 = vmatmul.mubr.bf16.gmra.mxu0 %v2944
    %v3710 = vpop.f32.mrf.mxu0
    %v3711 = vadd.f32 %v3089, %v3710
    %v3712 = vpop.f32.mrf.mxu0
    %v3713 = vadd.f32 %v3093, %v3712
    %v3714 = vpop.f32.mrf.mxu0
    %v3715 = vadd.f32 %v3089, %v3714
    %v3716 = vpop.f32.mrf.mxu0
    %v3717 = vadd.f32 %v3093, %v3716
    %3718 = vmatprep.mubr.bf16.mxu0 %v2947
    %3719 = vmatmul.mubr.bf16.gmra.mxu0 %v2946
    %v3720 = vpop.f32.mrf.mxu0
    %v3721 = vadd.f32 %v3089, %v3720
    %v3722 = vpop.f32.mrf.mxu0
    %v3723 = vadd.f32 %v3093, %v3722
    %v3724 = vpop.f32.mrf.mxu0
    %v3725 = vadd.f32 %v3089, %v3724
    %v3726 = vpop.f32.mrf.mxu0
    %v3727 = vadd.f32 %v3093, %v3726
    %3728 = vmatprep.mubr.bf16.mxu0 %v2949
    %3729 = vmatmul.mubr.bf16.gmra.mxu0 %v2948
    %v3730 = vpop.f32.mrf.mxu0
    %v3731 = vadd.f32 %v3089, %v3730
    %v3732 = vpop.f32.mrf.mxu0
    %v3733 = vadd.f32 %v3093, %v3732
    %v3734 = vpop.f32.mrf.mxu0
    %v3735 = vadd.f32 %v3089, %v3734
    %v3736 = vpop.f32.mrf.mxu0
    %v3737 = vadd.f32 %v3093, %v3736
    %3738 = vmatprep.mubr.bf16.mxu0 %v2951
    %3739 = vmatmul.mubr.bf16.gmra.mxu0 %v2950
    %v3740 = vpop.f32.mrf.mxu0
    %v3741 = vadd.f32 %v3089, %v3740
    %v3742 = vpop.f32.mrf.mxu0
    %v3743 = vadd.f32 %v3093, %v3742
    %v3744 = vpop.f32.mrf.mxu0
    %v3745 = vadd.f32 %v3089, %v3744
    %v3746 = vpop.f32.mrf.mxu0
    %v3747 = vadd.f32 %v3093, %v3746
    %3748 = vmatprep.mubr.bf16.mxu0 %v2953
    %3749 = vmatmul.mubr.bf16.gmra.mxu0 %v2952
    %v3750 = vpop.f32.mrf.mxu0
    %v3751 = vadd.f32 %v3089, %v3750
    %v3752 = vpop.f32.mrf.mxu0
    %v3753 = vadd.f32 %v3093, %v3752
    %v3754 = vpop.f32.mrf.mxu0
    %v3755 = vadd.f32 %v3089, %v3754
    %v3756 = vpop.f32.mrf.mxu0
    %v3757 = vadd.f32 %v3093, %v3756
    %3758 = vmatprep.mubr.bf16.mxu0 %v2955
    %3759 = vmatmul.mubr.bf16.gmra.mxu0 %v2954
    %v3760 = vpop.f32.mrf.mxu0
    %v3761 = vadd.f32 %v3089, %v3760
    %v3762 = vpop.f32.mrf.mxu0
    %v3763 = vadd.f32 %v3093, %v3762
    %v3764 = vpop.f32.mrf.mxu0
    %v3765 = vadd.f32 %v3089, %v3764
    %v3766 = vpop.f32.mrf.mxu0
    %v3767 = vadd.f32 %v3093, %v3766
    %3768 = vmatprep.mubr.bf16.mxu0 %v2957
    %3769 = vmatmul.mubr.bf16.gmra.mxu0 %v2956
    %v3770 = vpop.f32.mrf.mxu0
    %v3771 = vadd.f32 %v3089, %v3770
    %v3772 = vpop.f32.mrf.mxu0
    %v3773 = vadd.f32 %v3093, %v3772
    %v3774 = vpop.f32.mrf.mxu0
    %v3775 = vadd.f32 %v3089, %v3774
    %v3776 = vpop.f32.mrf.mxu0
    %v3777 = vadd.f32 %v3093, %v3776
    %3778 = vmatprep.mubr.bf16.mxu0 %v2959
    %3779 = vmatmul.mubr.bf16.gmra.mxu0 %v2958
    %v3780 = vpop.f32.mrf.mxu0
    %v3781 = vadd.f32 %v3089, %v3780
    %v3782 = vpop.f32.mrf.mxu0
    %v3783 = vadd.f32 %v3093, %v3782
    %v3784 = vpop.f32.mrf.mxu0
    %v3785 = vadd.f32 %v3089, %v3784
    %v3786 = vpop.f32.mrf.mxu0
    %v3787 = vadd.f32 %v3093, %v3786
    %3788 = vmatprep.mubr.bf16.mxu0 %v2961
    %3789 = vmatmul.mubr.bf16.gmra.mxu0 %v2960
    %v3790 = vpop.f32.mrf.mxu0
    %v3791 = vadd.f32 %v3089, %v3790
    %v3792 = vpop.f32.mrf.mxu0
    %v3793 = vadd.f32 %v3093, %v3792
    %v3794 = vpop.f32.mrf.mxu0
    %v3795 = vadd.f32 %v3089, %v3794
    %v3796 = vpop.f32.mrf.mxu0
    %v3797 = vadd.f32 %v3093, %v3796
    %3798 = vmatprep.mubr.bf16.mxu0 %v2963
    %3799 = vmatmul.mubr.bf16.gmra.mxu0 %v2962
    %v3800 = vpop.f32.mrf.mxu0
    %v3801 = vadd.f32 %v3089, %v3800
    %v3802 = vpop.f32.mrf.mxu0
    %v3803 = vadd.f32 %v3093, %v3802
    %v3804 = vpop.f32.mrf.mxu0
    %v3805 = vadd.f32 %v3089, %v3804
    %v3806 = vpop.f32.mrf.mxu0
    %v3807 = vadd.f32 %v3093, %v3806
    %3808 = vmatprep.mubr.bf16.mxu0 %v2965
    %3809 = vmatmul.mubr.bf16.gmra.mxu0 %v2964
    %v3810 = vpop.f32.mrf.mxu0
    %v3811 = vadd.f32 %v3089, %v3810
    %v3812 = vpop.f32.mrf.mxu0
    %v3813 = vadd.f32 %v3093, %v3812
    %v3814 = vpop.f32.mrf.mxu0
    %v3815 = vadd.f32 %v3089, %v3814
    %v3816 = vpop.f32.mrf.mxu0
    %v3817 = vadd.f32 %v3093, %v3816
    %3818 = vmatprep.mubr.bf16.mxu0 %v2967
    %3819 = vmatmul.mubr.bf16.gmra.mxu0 %v2966
    %v3820 = vpop.f32.mrf.mxu0
    %v3821 = vadd.f32 %v3089, %v3820
    %v3822 = vpop.f32.mrf.mxu0
    %v3823 = vadd.f32 %v3093, %v3822
    %v3824 = vpop.f32.mrf.mxu0
    %v3825 = vadd.f32 %v3089, %v3824
    %v3826 = vpop.f32.mrf.mxu0
    %v3827 = vadd.f32 %v3093, %v3826
    %3828 = vmatprep.mubr.bf16.mxu0 %v2969
    %3829 = vmatmul.mubr.bf16.gmra.mxu0 %v2968
    %v3830 = vpop.f32.mrf.mxu0
    %v3831 = vadd.f32 %v3089, %v3830
    %v3832 = vpop.f32.mrf.mxu0
    %v3833 = vadd.f32 %v3093, %v3832
    %v3834 = vpop.f32.mrf.mxu0
    %v3835 = vadd.f32 %v3089, %v3834
    %v3836 = vpop.f32.mrf.mxu0
    %v3837 = vadd.f32 %v3093, %v3836
    %3838 = vmatprep.mubr.bf16.mxu0 %v2971
    %3839 = vmatmul.mubr.bf16.gmra.mxu0 %v2970
    %v3840 = vpop.f32.mrf.mxu0
    %v3841 = vadd.f32 %v3089, %v3840
    %v3842 = vpop.f32.mrf.mxu0
    %v3843 = vadd.f32 %v3093, %v3842
    %v3844 = vpop.f32.mrf.mxu0
    %v3845 = vadd.f32 %v3089, %v3844
    %v3846 = vpop.f32.mrf.mxu0
    %v3847 = vadd.f32 %v3093, %v3846
    %3848 = vmatprep.mubr.bf16.mxu0 %v2973
    %3849 = vmatmul.mubr.bf16.gmra.mxu0 %v2972
    %v3850 = vpop.f32.mrf.mxu0
    %v3851 = vadd.f32 %v3089, %v3850
    %v3852 = vpop.f32.mrf.mxu0
    %v3853 = vadd.f32 %v3093, %v3852
    %v3854 = vpop.f32.mrf.mxu0
    %v3855 = vadd.f32 %v3089, %v3854
    %v3856 = vpop.f32.mrf.mxu0
    %v3857 = vadd.f32 %v3093, %v3856
    %3858 = vmatprep.mubr.bf16.mxu0 %v2975
    %3859 = vmatmul.mubr.bf16.gmra.mxu0 %v2974
    %v3860 = vpop.f32.mrf.mxu0
    %v3861 = vadd.f32 %v3089, %v3860
    %v3862 = vpop.f32.mrf.mxu0
    %v3863 = vadd.f32 %v3093, %v3862
    %v3864 = vpop.f32.mrf.mxu0
    %v3865 = vadd.f32 %v3089, %v3864
    %v3866 = vpop.f32.mrf.mxu0
    %v3867 = vadd.f32 %v3093, %v3866
    %3868 = vmatprep.mubr.bf16.mxu0 %v2977
    %3869 = vmatmul.mubr.bf16.gmra.mxu0 %v2976
    %v3870 = vpop.f32.mrf.mxu0
    %v3871 = vadd.f32 %v3089, %v3870
    %v3872 = vpop.f32.mrf.mxu0
    %v3873 = vadd.f32 %v3093, %v3872
    %v3874 = vpop.f32.mrf.mxu0
    %v3875 = vadd.f32 %v3089, %v3874
    %v3876 = vpop.f32.mrf.mxu0
    %v3877 = vadd.f32 %v3093, %v3876
    %3878 = vmatprep.mubr.bf16.mxu0 %v2979
    %3879 = vmatmul.mubr.bf16.gmra.mxu0 %v2978
    %v3880 = vpop.f32.mrf.mxu0
    %v3881 = vadd.f32 %v3089, %v3880
    %v3882 = vpop.f32.mrf.mxu0
    %v3883 = vadd.f32 %v3093, %v3882
    %v3884 = vpop.f32.mrf.mxu0
    %v3885 = vadd.f32 %v3089, %v3884
    %v3886 = vpop.f32.mrf.mxu0
    %v3887 = vadd.f32 %v3093, %v3886
    %3888 = vmatprep.mubr.bf16.mxu0 %v2981
    %3889 = vmatmul.mubr.bf16.gmra.mxu0 %v2980
    %v3890 = vpop.f32.mrf.mxu0
    %v3891 = vadd.f32 %v3089, %v3890
    %v3892 = vpop.f32.mrf.mxu0
    %v3893 = vadd.f32 %v3093, %v3892
    %v3894 = vpop.f32.mrf.mxu0
    %v3895 = vadd.f32 %v3089, %v3894
    %v3896 = vpop.f32.mrf.mxu0
    %v3897 = vadd.f32 %v3093, %v3896
    %3898 = vmatprep.mubr.bf16.mxu0 %v2983
    %3899 = vmatmul.mubr.bf16.gmra.mxu0 %v2982
    %v3900 = vpop.f32.mrf.mxu0
    %v3901 = vadd.f32 %v3089, %v3900
    %v3902 = vpop.f32.mrf.mxu0
    %v3903 = vadd.f32 %v3093, %v3902
    %v3904 = vpop.f32.mrf.mxu0
    %v3905 = vadd.f32 %v3089, %v3904
    %v3906 = vpop.f32.mrf.mxu0
    %v3907 = vadd.f32 %v3093, %v3906
    %3908 = vmatprep.mubr.bf16.mxu0 %v2985
    %3909 = vmatmul.mubr.bf16.gmra.mxu0 %v2984
    %v3910 = vpop.f32.mrf.mxu0
    %v3911 = vadd.f32 %v3089, %v3910
    %v3912 = vpop.f32.mrf.mxu0
    %v3913 = vadd.f32 %v3093, %v3912
    %v3914 = vpop.f32.mrf.mxu0
    %v3915 = vadd.f32 %v3089, %v3914
    %v3916 = vpop.f32.mrf.mxu0
    %v3917 = vadd.f32 %v3093, %v3916
    %3918 = vmatprep.mubr.bf16.mxu0 %v2987
    %3919 = vmatmul.mubr.bf16.gmra.mxu0 %v2986
    %v3920 = vpop.f32.mrf.mxu0
    %v3921 = vadd.f32 %v3089, %v3920
    %v3922 = vpop.f32.mrf.mxu0
    %v3923 = vadd.f32 %v3093, %v3922
    %v3924 = vpop.f32.mrf.mxu0
    %v3925 = vadd.f32 %v3089, %v3924
    %v3926 = vpop.f32.mrf.mxu0
    %v3927 = vadd.f32 %v3093, %v3926
    %3928 = vmatprep.mubr.bf16.mxu0 %v2989
    %3929 = vmatmul.mubr.bf16.gmra.mxu0 %v2988
    %v3930 = vpop.f32.mrf.mxu0
    %v3931 = vadd.f32 %v3089, %v3930
    %v3932 = vpop.f32.mrf.mxu0
    %v3933 = vadd.f32 %v3093, %v3932
    %v3934 = vpop.f32.mrf.mxu0
    %v3935 = vadd.f32 %v3089, %v3934
    %v3936 = vpop.f32.mrf.mxu0
    %v3937 = vadd.f32 %v3093, %v3936
    %3938 = vmatprep.mubr.bf16.mxu0 %v2991
    %3939 = vmatmul.mubr.bf16.gmra.mxu0 %v2990
    %v3940 = vpop.f32.mrf.mxu0
    %v3941 = vadd.f32 %v3089, %v3940
    %v3942 = vpop.f32.mrf.mxu0
    %v3943 = vadd.f32 %v3093, %v3942
    %v3944 = vpop.f32.mrf.mxu0
    %v3945 = vadd.f32 %v3089, %v3944
    %v3946 = vpop.f32.mrf.mxu0
    %v3947 = vadd.f32 %v3093, %v3946
    %3948 = vmatprep.mubr.bf16.mxu0 %v2993
    %3949 = vmatmul.mubr.bf16.gmra.mxu0 %v2992
    %v3950 = vpop.f32.mrf.mxu0
    %v3951 = vadd.f32 %v3089, %v3950
    %v3952 = vpop.f32.mrf.mxu0
    %v3953 = vadd.f32 %v3093, %v3952
    %v3954 = vpop.f32.mrf.mxu0
    %v3955 = vadd.f32 %v3089, %v3954
    %v3956 = vpop.f32.mrf.mxu0
    %v3957 = vadd.f32 %v3093, %v3956
    %3958 = vmatprep.mubr.bf16.mxu0 %v2995
    %3959 = vmatmul.mubr.bf16.gmra.mxu0 %v2994
    %v3960 = vpop.f32.mrf.mxu0
    %v3961 = vadd.f32 %v3089, %v3960
    %v3962 = vpop.f32.mrf.mxu0
    %v3963 = vadd.f32 %v3093, %v3962
    %v3964 = vpop.f32.mrf.mxu0
    %v3965 = vadd.f32 %v3089, %v3964
    %v3966 = vpop.f32.mrf.mxu0
    %v3967 = vadd.f32 %v3093, %v3966
    %3968 = vmatprep.mubr.bf16.mxu0 %v2997
    %3969 = vmatmul.mubr.bf16.gmra.mxu0 %v2996
    %v3970 = vpop.f32.mrf.mxu0
    %v3971 = vadd.f32 %v3089, %v3970
    %v3972 = vpop.f32.mrf.mxu0
    %v3973 = vadd.f32 %v3093, %v3972
    %v3974 = vpop.f32.mrf.mxu0
    %v3975 = vadd.f32 %v3089, %v3974
    %v3976 = vpop.f32.mrf.mxu0
    %v3977 = vadd.f32 %v3093, %v3976
    %3978 = vmatprep.mubr.bf16.mxu0 %v2999
    %3979 = vmatmul.mubr.bf16.gmra.mxu0 %v2998
    %v3980 = vpop.f32.mrf.mxu0
    %v3981 = vadd.f32 %v3089, %v3980
    %v3982 = vpop.f32.mrf.mxu0
    %v3983 = vadd.f32 %v3093, %v3982
    %v3984 = vpop.f32.mrf.mxu0
    %v3985 = vadd.f32 %v3089, %v3984
    %v3986 = vpop.f32.mrf.mxu0
    %v3987 = vadd.f32 %v3093, %v3986
    %3988 = vmatprep.mubr.bf16.mxu0 %v3001
    %3989 = vmatmul.mubr.bf16.gmra.mxu0 %v3000
    %v3990 = vpop.f32.mrf.mxu0
    %v3991 = vadd.f32 %v3089, %v3990
    %v3992 = vpop.f32.mrf.mxu0
    %v3993 = vadd.f32 %v3093, %v3992
    %v3994 = vpop.f32.mrf.mxu0
    %v3995 = vadd.f32 %v3089, %v3994
    %v3996 = vpop.f32.mrf.mxu0
    %v3997 = vadd.f32 %v3093, %v3996
    %3998 = vmatprep.mubr.bf16.mxu0 %v3003
    %3999 = vmatmul.mubr.bf16.gmra.mxu0 %v3002
    %v4000 = vpop.f32.mrf.mxu0
    %v4001 = vadd.f32 %v3089, %v4000
    %v4002 = vpop.f32.mrf.mxu0
    %v4003 = vadd.f32 %v3093, %v4002
    %v4004 = vpop.f32.mrf.mxu0
    %v4005 = vadd.f32 %v3089, %v4004
    %v4006 = vpop.f32.mrf.mxu0
    %v4007 = vadd.f32 %v3093, %v4006
    %4008 = vmatprep.mubr.bf16.mxu0 %v3005
    %4009 = vmatmul.mubr.bf16.gmra.mxu0 %v3004
    %v4010 = vpop.f32.mrf.mxu0
    %v4011 = vadd.f32 %v3089, %v4010
    %v4012 = vpop.f32.mrf.mxu0
    %v4013 = vadd.f32 %v3093, %v4012
    %v4014 = vpop.f32.mrf.mxu0
    %v4015 = vadd.f32 %v3089, %v4014
    %v4016 = vpop.f32.mrf.mxu0
    %v4017 = vadd.f32 %v3093, %v4016
    %4018 = vmatprep.mubr.bf16.mxu0 %v3007
    %4019 = vmatmul.mubr.bf16.gmra.mxu0 %v3006
    %v4020 = vpop.f32.mrf.mxu0
    %v4021 = vadd.f32 %v3089, %v4020
    %v4022 = vpop.f32.mrf.mxu0
    %v4023 = vadd.f32 %v3093, %v4022
    %v4024 = vpop.f32.mrf.mxu0
    %v4025 = vadd.f32 %v3089, %v4024
    %v4026 = vpop.f32.mrf.mxu0
    %v4027 = vadd.f32 %v3093, %v4026
    %4028 = vmatprep.mubr.bf16.mxu0 %v3009
    %4029 = vmatmul.mubr.bf16.gmra.mxu0 %v3008
    %v4030 = vpop.f32.mrf.mxu0
    %v4031 = vadd.f32 %v3089, %v4030
    %v4032 = vpop.f32.mrf.mxu0
    %v4033 = vadd.f32 %v3093, %v4032
    %v4034 = vpop.f32.mrf.mxu0
    %v4035 = vadd.f32 %v3089, %v4034
    %v4036 = vpop.f32.mrf.mxu0
    %v4037 = vadd.f32 %v3093, %v4036
    %4038 = vmatprep.mubr.bf16.mxu0 %v3011
    %4039 = vmatmul.mubr.bf16.gmra.mxu0 %v3010
    %v4040 = vpop.f32.mrf.mxu0
    %v4041 = vadd.f32 %v3089, %v4040
    %v4042 = vpop.f32.mrf.mxu0
    %v4043 = vadd.f32 %v3093, %v4042
    %v4044 = vpop.f32.mrf.mxu0
    %v4045 = vadd.f32 %v3089, %v4044
    %v4046 = vpop.f32.mrf.mxu0
    %v4047 = vadd.f32 %v3093, %v4046
    %4048 = vmatprep.mubr.bf16.mxu0 %v3013
    %4049 = vmatmul.mubr.bf16.gmra.mxu0 %v3012
    %v4050 = vpop.f32.mrf.mxu0
    %v4051 = vadd.f32 %v3089, %v4050
    %v4052 = vpop.f32.mrf.mxu0
    %v4053 = vadd.f32 %v3093, %v4052
    %v4054 = vpop.f32.mrf.mxu0
    %v4055 = vadd.f32 %v3089, %v4054
    %v4056 = vpop.f32.mrf.mxu0
    %v4057 = vadd.f32 %v3093, %v4056
    %4058 = vmatprep.mubr.bf16.mxu0 %v3015
    %4059 = vmatmul.mubr.bf16.gmra.mxu0 %v3014
    %v4060 = vpop.f32.mrf.mxu0
    %v4061 = vadd.f32 %v3089, %v4060
    %v4062 = vpop.f32.mrf.mxu0
    %v4063 = vadd.f32 %v3093, %v4062
    %v4064 = vpop.f32.mrf.mxu0
    %v4065 = vadd.f32 %v3089, %v4064
    %v4066 = vpop.f32.mrf.mxu0
    %v4067 = vadd.f32 %v3093, %v4066
    %4068 = vmatprep.mubr.bf16.mxu0 %v3017
    %4069 = vmatmul.mubr.bf16.gmra.mxu0 %v3016
    %v4070 = vpop.f32.mrf.mxu0
    %v4071 = vadd.f32 %v3089, %v4070
    %v4072 = vpop.f32.mrf.mxu0
    %v4073 = vadd.f32 %v3093, %v4072
    %v4074 = vpop.f32.mrf.mxu0
    %v4075 = vadd.f32 %v3089, %v4074
    %v4076 = vpop.f32.mrf.mxu0
    %v4077 = vadd.f32 %v3093, %v4076
    %4078 = vmatprep.mubr.bf16.mxu0 %v3019
    %4079 = vmatmul.mubr.bf16.gmra.mxu0 %v3018
    %v4080 = vpop.f32.mrf.mxu0
    %v4081 = vadd.f32 %v3089, %v4080
    %v4082 = vpop.f32.mrf.mxu0
    %v4083 = vadd.f32 %v3093, %v4082
    %v4084 = vpop.f32.mrf.mxu0
    %v4085 = vadd.f32 %v3089, %v4084
    %v4086 = vpop.f32.mrf.mxu0
    %v4087 = vadd.f32 %v3093, %v4086
    %4088 = vdwg.mxu0
    %4089 = vmatprep.subr.bf16.mxu0 %v3329
    %4090 = vmatpush1.bf16.msra.mxu0 %v3328
    %4091 = vmatprep.subr.bf16.mxu0 %v3325
    %4092 = vmatpush1.bf16.msra.mxu0 %v3324
    %4093 = vmatprep.subr.bf16.mxu0 %v3321
    %4094 = vmatpush1.bf16.msra.mxu0 %v3320
    %4095 = vmatprep.subr.bf16.mxu0 %v3317
    %4096 = vmatpush1.bf16.msra.mxu0 %v3316
    %4097 = vmatprep.subr.bf16.mxu0 %v3313
    %4098 = vmatpush1.bf16.msra.mxu0 %v3312
    %4099 = vmatprep.subr.bf16.mxu0 %v3309
    %4100 = vmatpush1.bf16.msra.mxu0 %v3308
    %4101 = vmatprep.subr.bf16.mxu0 %v3305
    %4102 = vmatpush1.bf16.msra.mxu0 %v3304
    %4103 = vmatprep.subr.bf16.mxu0 %v3301
    %4104 = vmatpush1.bf16.msra.mxu0 %v3300
    %4105 = vmatprep.subr.bf16.mxu0 %v3361
    %4106 = vmatpush2.bf16.msra.mxu0 %v3360
    %4107 = vmatprep.subr.bf16.mxu0 %v3357
    %4108 = vmatpush2.bf16.msra.mxu0 %v3356
    %4109 = vmatprep.subr.bf16.mxu0 %v3353
    %4110 = vmatpush2.bf16.msra.mxu0 %v3352
    %4111 = vmatprep.subr.bf16.mxu0 %v3349
    %4112 = vmatpush2.bf16.msra.mxu0 %v3348
    %4113 = vmatprep.subr.bf16.mxu0 %v3345
    %4114 = vmatpush2.bf16.msra.mxu0 %v3344
    %4115 = vmatprep.subr.bf16.mxu0 %v3341
    %4116 = vmatpush2.bf16.msra.mxu0 %v3340
    %4117 = vmatprep.subr.bf16.mxu0 %v3337
    %4118 = vmatpush2.bf16.msra.mxu0 %v3336
    %4119 = vmatprep.subr.bf16.mxu0 %v3333
    %4120 = vmatpush2.bf16.msra.mxu0 %v3332
    %4121 = vmatprep.mubr.bf16.mxu0 %v2895
    %4122 = vmatmul.mubr.bf16.gmra.mxu0 %v2894
    %v4123 = vpop.f32.mrf.mxu0
    %v4124 = vadd.f32 %v3097, %v4123
    %v4125 = vpop.f32.mrf.mxu0
    %v4126 = vadd.f32 %v3101, %v4125
    %v4127 = vpop.f32.mrf.mxu0
    %v4128 = vadd.f32 %v3097, %v4127
    %v4129 = vpop.f32.mrf.mxu0
    %v4130 = vadd.f32 %v3101, %v4129
    %4131 = vmatprep.mubr.bf16.mxu0 %v2897
    %4132 = vmatmul.mubr.bf16.gmra.mxu0 %v2896
    %v4133 = vpop.f32.mrf.mxu0
    %v4134 = vadd.f32 %v3097, %v4133
    %v4135 = vpop.f32.mrf.mxu0
    %v4136 = vadd.f32 %v3101, %v4135
    %v4137 = vpop.f32.mrf.mxu0
    %v4138 = vadd.f32 %v3097, %v4137
    %v4139 = vpop.f32.mrf.mxu0
    %v4140 = vadd.f32 %v3101, %v4139
    %4141 = vmatprep.mubr.bf16.mxu0 %v2899
    %4142 = vmatmul.mubr.bf16.gmra.mxu0 %v2898
    %v4143 = vpop.f32.mrf.mxu0
    %v4144 = vadd.f32 %v3097, %v4143
    %v4145 = vpop.f32.mrf.mxu0
    %v4146 = vadd.f32 %v3101, %v4145
    %v4147 = vpop.f32.mrf.mxu0
    %v4148 = vadd.f32 %v3097, %v4147
    %v4149 = vpop.f32.mrf.mxu0
    %v4150 = vadd.f32 %v3101, %v4149
    %4151 = vmatprep.mubr.bf16.mxu0 %v2901
    %4152 = vmatmul.mubr.bf16.gmra.mxu0 %v2900
    %v4153 = vpop.f32.mrf.mxu0
    %v4154 = vadd.f32 %v3097, %v4153
    %v4155 = vpop.f32.mrf.mxu0
    %v4156 = vadd.f32 %v3101, %v4155
    %v4157 = vpop.f32.mrf.mxu0
    %v4158 = vadd.f32 %v3097, %v4157
    %v4159 = vpop.f32.mrf.mxu0
    %v4160 = vadd.f32 %v3101, %v4159
    %4161 = vmatprep.mubr.bf16.mxu0 %v2903
    %4162 = vmatmul.mubr.bf16.gmra.mxu0 %v2902
    %v4163 = vpop.f32.mrf.mxu0
    %v4164 = vadd.f32 %v3097, %v4163
    %v4165 = vpop.f32.mrf.mxu0
    %v4166 = vadd.f32 %v3101, %v4165
    %v4167 = vpop.f32.mrf.mxu0
    %v4168 = vadd.f32 %v3097, %v4167
    %v4169 = vpop.f32.mrf.mxu0
    %v4170 = vadd.f32 %v3101, %v4169
    %4171 = vmatprep.mubr.bf16.mxu0 %v2905
    %4172 = vmatmul.mubr.bf16.gmra.mxu0 %v2904
    %v4173 = vpop.f32.mrf.mxu0
    %v4174 = vadd.f32 %v3097, %v4173
    %v4175 = vpop.f32.mrf.mxu0
    %v4176 = vadd.f32 %v3101, %v4175
    %v4177 = vpop.f32.mrf.mxu0
    %v4178 = vadd.f32 %v3097, %v4177
    %v4179 = vpop.f32.mrf.mxu0
    %v4180 = vadd.f32 %v3101, %v4179
    %4181 = vmatprep.mubr.bf16.mxu0 %v2907
    %4182 = vmatmul.mubr.bf16.gmra.mxu0 %v2906
    %v4183 = vpop.f32.mrf.mxu0
    %v4184 = vadd.f32 %v3097, %v4183
    %v4185 = vpop.f32.mrf.mxu0
    %v4186 = vadd.f32 %v3101, %v4185
    %v4187 = vpop.f32.mrf.mxu0
    %v4188 = vadd.f32 %v3097, %v4187
    %v4189 = vpop.f32.mrf.mxu0
    %v4190 = vadd.f32 %v3101, %v4189
    %4191 = vmatprep.mubr.bf16.mxu0 %v2909
    %4192 = vmatmul.mubr.bf16.gmra.mxu0 %v2908
    %v4193 = vpop.f32.mrf.mxu0
    %v4194 = vadd.f32 %v3097, %v4193
    %v4195 = vpop.f32.mrf.mxu0
    %v4196 = vadd.f32 %v3101, %v4195
    %v4197 = vpop.f32.mrf.mxu0
    %v4198 = vadd.f32 %v3097, %v4197
    %v4199 = vpop.f32.mrf.mxu0
    %v4200 = vadd.f32 %v3101, %v4199
    %4201 = vmatprep.mubr.bf16.mxu0 %v2911
    %4202 = vmatmul.mubr.bf16.gmra.mxu0 %v2910
    %v4203 = vpop.f32.mrf.mxu0
    %v4204 = vadd.f32 %v3097, %v4203
    %v4205 = vpop.f32.mrf.mxu0
    %v4206 = vadd.f32 %v3101, %v4205
    %v4207 = vpop.f32.mrf.mxu0
    %v4208 = vadd.f32 %v3097, %v4207
    %v4209 = vpop.f32.mrf.mxu0
    %v4210 = vadd.f32 %v3101, %v4209
    %4211 = vmatprep.mubr.bf16.mxu0 %v2913
    %4212 = vmatmul.mubr.bf16.gmra.mxu0 %v2912
    %v4213 = vpop.f32.mrf.mxu0
    %v4214 = vadd.f32 %v3097, %v4213
    %v4215 = vpop.f32.mrf.mxu0
    %v4216 = vadd.f32 %v3101, %v4215
    %v4217 = vpop.f32.mrf.mxu0
    %v4218 = vadd.f32 %v3097, %v4217
    %v4219 = vpop.f32.mrf.mxu0
    %v4220 = vadd.f32 %v3101, %v4219
    %4221 = vmatprep.mubr.bf16.mxu0 %v2915
    %4222 = vmatmul.mubr.bf16.gmra.mxu0 %v2914
    %v4223 = vpop.f32.mrf.mxu0
    %v4224 = vadd.f32 %v3097, %v4223
    %v4225 = vpop.f32.mrf.mxu0
    %v4226 = vadd.f32 %v3101, %v4225
    %v4227 = vpop.f32.mrf.mxu0
    %v4228 = vadd.f32 %v3097, %v4227
    %v4229 = vpop.f32.mrf.mxu0
    %v4230 = vadd.f32 %v3101, %v4229
    %4231 = vmatprep.mubr.bf16.mxu0 %v2917
    %4232 = vmatmul.mubr.bf16.gmra.mxu0 %v2916
    %v4233 = vpop.f32.mrf.mxu0
    %v4234 = vadd.f32 %v3097, %v4233
    %v4235 = vpop.f32.mrf.mxu0
    %v4236 = vadd.f32 %v3101, %v4235
    %v4237 = vpop.f32.mrf.mxu0
    %v4238 = vadd.f32 %v3097, %v4237
    %v4239 = vpop.f32.mrf.mxu0
    %v4240 = vadd.f32 %v3101, %v4239
    %4241 = vmatprep.mubr.bf16.mxu0 %v2919
    %4242 = vmatmul.mubr.bf16.gmra.mxu0 %v2918
    %v4243 = vpop.f32.mrf.mxu0
    %v4244 = vadd.f32 %v3097, %v4243
    %v4245 = vpop.f32.mrf.mxu0
    %v4246 = vadd.f32 %v3101, %v4245
    %v4247 = vpop.f32.mrf.mxu0
    %v4248 = vadd.f32 %v3097, %v4247
    %v4249 = vpop.f32.mrf.mxu0
    %v4250 = vadd.f32 %v3101, %v4249
    %4251 = vmatprep.mubr.bf16.mxu0 %v2921
    %4252 = vmatmul.mubr.bf16.gmra.mxu0 %v2920
    %v4253 = vpop.f32.mrf.mxu0
    %v4254 = vadd.f32 %v3097, %v4253
    %v4255 = vpop.f32.mrf.mxu0
    %v4256 = vadd.f32 %v3101, %v4255
    %v4257 = vpop.f32.mrf.mxu0
    %v4258 = vadd.f32 %v3097, %v4257
    %v4259 = vpop.f32.mrf.mxu0
    %v4260 = vadd.f32 %v3101, %v4259
    %4261 = vmatprep.mubr.bf16.mxu0 %v2923
    %4262 = vmatmul.mubr.bf16.gmra.mxu0 %v2922
    %v4263 = vpop.f32.mrf.mxu0
    %v4264 = vadd.f32 %v3097, %v4263
    %v4265 = vpop.f32.mrf.mxu0
    %v4266 = vadd.f32 %v3101, %v4265
    %v4267 = vpop.f32.mrf.mxu0
    %v4268 = vadd.f32 %v3097, %v4267
    %v4269 = vpop.f32.mrf.mxu0
    %v4270 = vadd.f32 %v3101, %v4269
    %4271 = vmatprep.mubr.bf16.mxu0 %v2925
    %4272 = vmatmul.mubr.bf16.gmra.mxu0 %v2924
    %v4273 = vpop.f32.mrf.mxu0
    %v4274 = vadd.f32 %v3097, %v4273
    %v4275 = vpop.f32.mrf.mxu0
    %v4276 = vadd.f32 %v3101, %v4275
    %v4277 = vpop.f32.mrf.mxu0
    %v4278 = vadd.f32 %v3097, %v4277
    %v4279 = vpop.f32.mrf.mxu0
    %v4280 = vadd.f32 %v3101, %v4279
    %4281 = vmatprep.mubr.bf16.mxu0 %v2927
    %4282 = vmatmul.mubr.bf16.gmra.mxu0 %v2926
    %v4283 = vpop.f32.mrf.mxu0
    %v4284 = vadd.f32 %v3097, %v4283
    %v4285 = vpop.f32.mrf.mxu0
    %v4286 = vadd.f32 %v3101, %v4285
    %v4287 = vpop.f32.mrf.mxu0
    %v4288 = vadd.f32 %v3097, %v4287
    %v4289 = vpop.f32.mrf.mxu0
    %v4290 = vadd.f32 %v3101, %v4289
    %4291 = vmatprep.mubr.bf16.mxu0 %v2929
    %4292 = vmatmul.mubr.bf16.gmra.mxu0 %v2928
    %v4293 = vpop.f32.mrf.mxu0
    %v4294 = vadd.f32 %v3097, %v4293
    %v4295 = vpop.f32.mrf.mxu0
    %v4296 = vadd.f32 %v3101, %v4295
    %v4297 = vpop.f32.mrf.mxu0
    %v4298 = vadd.f32 %v3097, %v4297
    %v4299 = vpop.f32.mrf.mxu0
    %v4300 = vadd.f32 %v3101, %v4299
    %4301 = vmatprep.mubr.bf16.mxu0 %v2931
    %4302 = vmatmul.mubr.bf16.gmra.mxu0 %v2930
    %v4303 = vpop.f32.mrf.mxu0
    %v4304 = vadd.f32 %v3097, %v4303
    %v4305 = vpop.f32.mrf.mxu0
    %v4306 = vadd.f32 %v3101, %v4305
    %v4307 = vpop.f32.mrf.mxu0
    %v4308 = vadd.f32 %v3097, %v4307
    %v4309 = vpop.f32.mrf.mxu0
    %v4310 = vadd.f32 %v3101, %v4309
    %4311 = vmatprep.mubr.bf16.mxu0 %v2933
    %4312 = vmatmul.mubr.bf16.gmra.mxu0 %v2932
    %v4313 = vpop.f32.mrf.mxu0
    %v4314 = vadd.f32 %v3097, %v4313
    %v4315 = vpop.f32.mrf.mxu0
    %v4316 = vadd.f32 %v3101, %v4315
    %v4317 = vpop.f32.mrf.mxu0
    %v4318 = vadd.f32 %v3097, %v4317
    %v4319 = vpop.f32.mrf.mxu0
    %v4320 = vadd.f32 %v3101, %v4319
    %4321 = vmatprep.mubr.bf16.mxu0 %v2935
    %4322 = vmatmul.mubr.bf16.gmra.mxu0 %v2934
    %v4323 = vpop.f32.mrf.mxu0
    %v4324 = vadd.f32 %v3097, %v4323
    %v4325 = vpop.f32.mrf.mxu0
    %v4326 = vadd.f32 %v3101, %v4325
    %v4327 = vpop.f32.mrf.mxu0
    %v4328 = vadd.f32 %v3097, %v4327
    %v4329 = vpop.f32.mrf.mxu0
    %v4330 = vadd.f32 %v3101, %v4329
    %4331 = vmatprep.mubr.bf16.mxu0 %v2937
    %4332 = vmatmul.mubr.bf16.gmra.mxu0 %v2936
    %v4333 = vpop.f32.mrf.mxu0
    %v4334 = vadd.f32 %v3097, %v4333
    %v4335 = vpop.f32.mrf.mxu0
    %v4336 = vadd.f32 %v3101, %v4335
    %v4337 = vpop.f32.mrf.mxu0
    %v4338 = vadd.f32 %v3097, %v4337
    %v4339 = vpop.f32.mrf.mxu0
    %v4340 = vadd.f32 %v3101, %v4339
    %4341 = vmatprep.mubr.bf16.mxu0 %v2939
    %4342 = vmatmul.mubr.bf16.gmra.mxu0 %v2938
    %v4343 = vpop.f32.mrf.mxu0
    %v4344 = vadd.f32 %v3097, %v4343
    %v4345 = vpop.f32.mrf.mxu0
    %v4346 = vadd.f32 %v3101, %v4345
    %v4347 = vpop.f32.mrf.mxu0
    %v4348 = vadd.f32 %v3097, %v4347
    %v4349 = vpop.f32.mrf.mxu0
    %v4350 = vadd.f32 %v3101, %v4349
    %4351 = vmatprep.mubr.bf16.mxu0 %v2941
    %4352 = vmatmul.mubr.bf16.gmra.mxu0 %v2940
    %v4353 = vpop.f32.mrf.mxu0
    %v4354 = vadd.f32 %v3097, %v4353
    %v4355 = vpop.f32.mrf.mxu0
    %v4356 = vadd.f32 %v3101, %v4355
    %v4357 = vpop.f32.mrf.mxu0
    %v4358 = vadd.f32 %v3097, %v4357
    %v4359 = vpop.f32.mrf.mxu0
    %v4360 = vadd.f32 %v3101, %v4359
    %4361 = vmatprep.mubr.bf16.mxu0 %v2943
    %4362 = vmatmul.mubr.bf16.gmra.mxu0 %v2942
    %v4363 = vpop.f32.mrf.mxu0
    %v4364 = vadd.f32 %v3097, %v4363
    %v4365 = vpop.f32.mrf.mxu0
    %v4366 = vadd.f32 %v3101, %v4365
    %v4367 = vpop.f32.mrf.mxu0
    %v4368 = vadd.f32 %v3097, %v4367
    %v4369 = vpop.f32.mrf.mxu0
    %v4370 = vadd.f32 %v3101, %v4369
    %4371 = vmatprep.mubr.bf16.mxu0 %v2945
    %4372 = vmatmul.mubr.bf16.gmra.mxu0 %v2944
    %v4373 = vpop.f32.mrf.mxu0
    %v4374 = vadd.f32 %v3097, %v4373
    %v4375 = vpop.f32.mrf.mxu0
    %v4376 = vadd.f32 %v3101, %v4375
    %v4377 = vpop.f32.mrf.mxu0
    %v4378 = vadd.f32 %v3097, %v4377
    %v4379 = vpop.f32.mrf.mxu0
    %v4380 = vadd.f32 %v3101, %v4379
    %4381 = vmatprep.mubr.bf16.mxu0 %v2947
    %4382 = vmatmul.mubr.bf16.gmra.mxu0 %v2946
    %v4383 = vpop.f32.mrf.mxu0
    %v4384 = vadd.f32 %v3097, %v4383
    %v4385 = vpop.f32.mrf.mxu0
    %v4386 = vadd.f32 %v3101, %v4385
    %v4387 = vpop.f32.mrf.mxu0
    %v4388 = vadd.f32 %v3097, %v4387
    %v4389 = vpop.f32.mrf.mxu0
    %v4390 = vadd.f32 %v3101, %v4389
    %4391 = vmatprep.mubr.bf16.mxu0 %v2949
    %4392 = vmatmul.mubr.bf16.gmra.mxu0 %v2948
    %v4393 = vpop.f32.mrf.mxu0
    %v4394 = vadd.f32 %v3097, %v4393
    %v4395 = vpop.f32.mrf.mxu0
    %v4396 = vadd.f32 %v3101, %v4395
    %v4397 = vpop.f32.mrf.mxu0
    %v4398 = vadd.f32 %v3097, %v4397
    %v4399 = vpop.f32.mrf.mxu0
    %v4400 = vadd.f32 %v3101, %v4399
    %4401 = vmatprep.mubr.bf16.mxu0 %v2951
    %4402 = vmatmul.mubr.bf16.gmra.mxu0 %v2950
    %v4403 = vpop.f32.mrf.mxu0
    %v4404 = vadd.f32 %v3097, %v4403
    %v4405 = vpop.f32.mrf.mxu0
    %v4406 = vadd.f32 %v3101, %v4405
    %v4407 = vpop.f32.mrf.mxu0
    %v4408 = vadd.f32 %v3097, %v4407
    %v4409 = vpop.f32.mrf.mxu0
    %v4410 = vadd.f32 %v3101, %v4409
    %4411 = vmatprep.mubr.bf16.mxu0 %v2953
    %4412 = vmatmul.mubr.bf16.gmra.mxu0 %v2952
    %v4413 = vpop.f32.mrf.mxu0
    %v4414 = vadd.f32 %v3097, %v4413
    %v4415 = vpop.f32.mrf.mxu0
    %v4416 = vadd.f32 %v3101, %v4415
    %v4417 = vpop.f32.mrf.mxu0
    %v4418 = vadd.f32 %v3097, %v4417
    %v4419 = vpop.f32.mrf.mxu0
    %v4420 = vadd.f32 %v3101, %v4419
    %4421 = vmatprep.mubr.bf16.mxu0 %v2955
    %4422 = vmatmul.mubr.bf16.gmra.mxu0 %v2954
    %v4423 = vpop.f32.mrf.mxu0
    %v4424 = vadd.f32 %v3097, %v4423
    %v4425 = vpop.f32.mrf.mxu0
    %v4426 = vadd.f32 %v3101, %v4425
    %v4427 = vpop.f32.mrf.mxu0
    %v4428 = vadd.f32 %v3097, %v4427
    %v4429 = vpop.f32.mrf.mxu0
    %v4430 = vadd.f32 %v3101, %v4429
    %4431 = vmatprep.mubr.bf16.mxu0 %v2957
    %4432 = vmatmul.mubr.bf16.gmra.mxu0 %v2956
    %v4433 = vpop.f32.mrf.mxu0
    %v4434 = vadd.f32 %v3097, %v4433
    %v4435 = vpop.f32.mrf.mxu0
    %v4436 = vadd.f32 %v3101, %v4435
    %v4437 = vpop.f32.mrf.mxu0
    %v4438 = vadd.f32 %v3097, %v4437
    %v4439 = vpop.f32.mrf.mxu0
    %v4440 = vadd.f32 %v3101, %v4439
    %4441 = vmatprep.mubr.bf16.mxu0 %v2959
    %4442 = vmatmul.mubr.bf16.gmra.mxu0 %v2958
    %v4443 = vpop.f32.mrf.mxu0
    %v4444 = vadd.f32 %v3097, %v4443
    %v4445 = vpop.f32.mrf.mxu0
    %v4446 = vadd.f32 %v3101, %v4445
    %v4447 = vpop.f32.mrf.mxu0
    %v4448 = vadd.f32 %v3097, %v4447
    %v4449 = vpop.f32.mrf.mxu0
    %v4450 = vadd.f32 %v3101, %v4449
    %4451 = vmatprep.mubr.bf16.mxu0 %v2961
    %4452 = vmatmul.mubr.bf16.gmra.mxu0 %v2960
    %v4453 = vpop.f32.mrf.mxu0
    %v4454 = vadd.f32 %v3097, %v4453
    %v4455 = vpop.f32.mrf.mxu0
    %v4456 = vadd.f32 %v3101, %v4455
    %v4457 = vpop.f32.mrf.mxu0
    %v4458 = vadd.f32 %v3097, %v4457
    %v4459 = vpop.f32.mrf.mxu0
    %v4460 = vadd.f32 %v3101, %v4459
    %4461 = vmatprep.mubr.bf16.mxu0 %v2963
    %4462 = vmatmul.mubr.bf16.gmra.mxu0 %v2962
    %v4463 = vpop.f32.mrf.mxu0
    %v4464 = vadd.f32 %v3097, %v4463
    %v4465 = vpop.f32.mrf.mxu0
    %v4466 = vadd.f32 %v3101, %v4465
    %v4467 = vpop.f32.mrf.mxu0
    %v4468 = vadd.f32 %v3097, %v4467
    %v4469 = vpop.f32.mrf.mxu0
    %v4470 = vadd.f32 %v3101, %v4469
    %4471 = vmatprep.mubr.bf16.mxu0 %v2965
    %4472 = vmatmul.mubr.bf16.gmra.mxu0 %v2964
    %v4473 = vpop.f32.mrf.mxu0
    %v4474 = vadd.f32 %v3097, %v4473
    %v4475 = vpop.f32.mrf.mxu0
    %v4476 = vadd.f32 %v3101, %v4475
    %v4477 = vpop.f32.mrf.mxu0
    %v4478 = vadd.f32 %v3097, %v4477
    %v4479 = vpop.f32.mrf.mxu0
    %v4480 = vadd.f32 %v3101, %v4479
    %4481 = vmatprep.mubr.bf16.mxu0 %v2967
    %4482 = vmatmul.mubr.bf16.gmra.mxu0 %v2966
    %v4483 = vpop.f32.mrf.mxu0
    %v4484 = vadd.f32 %v3097, %v4483
    %v4485 = vpop.f32.mrf.mxu0
    %v4486 = vadd.f32 %v3101, %v4485
    %v4487 = vpop.f32.mrf.mxu0
    %v4488 = vadd.f32 %v3097, %v4487
    %v4489 = vpop.f32.mrf.mxu0
    %v4490 = vadd.f32 %v3101, %v4489
    %4491 = vmatprep.mubr.bf16.mxu0 %v2969
    %4492 = vmatmul.mubr.bf16.gmra.mxu0 %v2968
    %v4493 = vpop.f32.mrf.mxu0
    %v4494 = vadd.f32 %v3097, %v4493
    %v4495 = vpop.f32.mrf.mxu0
    %v4496 = vadd.f32 %v3101, %v4495
    %v4497 = vpop.f32.mrf.mxu0
    %v4498 = vadd.f32 %v3097, %v4497
    %v4499 = vpop.f32.mrf.mxu0
    %v4500 = vadd.f32 %v3101, %v4499
    %4501 = vmatprep.mubr.bf16.mxu0 %v2971
    %4502 = vmatmul.mubr.bf16.gmra.mxu0 %v2970
    %v4503 = vpop.f32.mrf.mxu0
    %v4504 = vadd.f32 %v3097, %v4503
    %v4505 = vpop.f32.mrf.mxu0
    %v4506 = vadd.f32 %v3101, %v4505
    %v4507 = vpop.f32.mrf.mxu0
    %v4508 = vadd.f32 %v3097, %v4507
    %v4509 = vpop.f32.mrf.mxu0
    %v4510 = vadd.f32 %v3101, %v4509
    %4511 = vmatprep.mubr.bf16.mxu0 %v2973
    %4512 = vmatmul.mubr.bf16.gmra.mxu0 %v2972
    %v4513 = vpop.f32.mrf.mxu0
    %v4514 = vadd.f32 %v3097, %v4513
    %v4515 = vpop.f32.mrf.mxu0
    %v4516 = vadd.f32 %v3101, %v4515
    %v4517 = vpop.f32.mrf.mxu0
    %v4518 = vadd.f32 %v3097, %v4517
    %v4519 = vpop.f32.mrf.mxu0
    %v4520 = vadd.f32 %v3101, %v4519
    %4521 = vmatprep.mubr.bf16.mxu0 %v2975
    %4522 = vmatmul.mubr.bf16.gmra.mxu0 %v2974
    %v4523 = vpop.f32.mrf.mxu0
    %v4524 = vadd.f32 %v3097, %v4523
    %v4525 = vpop.f32.mrf.mxu0
    %v4526 = vadd.f32 %v3101, %v4525
    %v4527 = vpop.f32.mrf.mxu0
    %v4528 = vadd.f32 %v3097, %v4527
    %v4529 = vpop.f32.mrf.mxu0
    %v4530 = vadd.f32 %v3101, %v4529
    %4531 = vmatprep.mubr.bf16.mxu0 %v2977
    %4532 = vmatmul.mubr.bf16.gmra.mxu0 %v2976
    %v4533 = vpop.f32.mrf.mxu0
    %v4534 = vadd.f32 %v3097, %v4533
    %v4535 = vpop.f32.mrf.mxu0
    %v4536 = vadd.f32 %v3101, %v4535
    %v4537 = vpop.f32.mrf.mxu0
    %v4538 = vadd.f32 %v3097, %v4537
    %v4539 = vpop.f32.mrf.mxu0
    %v4540 = vadd.f32 %v3101, %v4539
    %4541 = vmatprep.mubr.bf16.mxu0 %v2979
    %4542 = vmatmul.mubr.bf16.gmra.mxu0 %v2978
    %v4543 = vpop.f32.mrf.mxu0
    %v4544 = vadd.f32 %v3097, %v4543
    %v4545 = vpop.f32.mrf.mxu0
    %v4546 = vadd.f32 %v3101, %v4545
    %v4547 = vpop.f32.mrf.mxu0
    %v4548 = vadd.f32 %v3097, %v4547
    %v4549 = vpop.f32.mrf.mxu0
    %v4550 = vadd.f32 %v3101, %v4549
    %4551 = vmatprep.mubr.bf16.mxu0 %v2981
    %4552 = vmatmul.mubr.bf16.gmra.mxu0 %v2980
    %v4553 = vpop.f32.mrf.mxu0
    %v4554 = vadd.f32 %v3097, %v4553
    %v4555 = vpop.f32.mrf.mxu0
    %v4556 = vadd.f32 %v3101, %v4555
    %v4557 = vpop.f32.mrf.mxu0
    %v4558 = vadd.f32 %v3097, %v4557
    %v4559 = vpop.f32.mrf.mxu0
    %v4560 = vadd.f32 %v3101, %v4559
    %4561 = vmatprep.mubr.bf16.mxu0 %v2983
    %4562 = vmatmul.mubr.bf16.gmra.mxu0 %v2982
    %v4563 = vpop.f32.mrf.mxu0
    %v4564 = vadd.f32 %v3097, %v4563
    %v4565 = vpop.f32.mrf.mxu0
    %v4566 = vadd.f32 %v3101, %v4565
    %v4567 = vpop.f32.mrf.mxu0
    %v4568 = vadd.f32 %v3097, %v4567
    %v4569 = vpop.f32.mrf.mxu0
    %v4570 = vadd.f32 %v3101, %v4569
    %4571 = vmatprep.mubr.bf16.mxu0 %v2985
    %4572 = vmatmul.mubr.bf16.gmra.mxu0 %v2984
    %v4573 = vpop.f32.mrf.mxu0
    %v4574 = vadd.f32 %v3097, %v4573
    %v4575 = vpop.f32.mrf.mxu0
    %v4576 = vadd.f32 %v3101, %v4575
    %v4577 = vpop.f32.mrf.mxu0
    %v4578 = vadd.f32 %v3097, %v4577
    %v4579 = vpop.f32.mrf.mxu0
    %v4580 = vadd.f32 %v3101, %v4579
    %4581 = vmatprep.mubr.bf16.mxu0 %v2987
    %4582 = vmatmul.mubr.bf16.gmra.mxu0 %v2986
    %v4583 = vpop.f32.mrf.mxu0
    %v4584 = vadd.f32 %v3097, %v4583
    %v4585 = vpop.f32.mrf.mxu0
    %v4586 = vadd.f32 %v3101, %v4585
    %v4587 = vpop.f32.mrf.mxu0
    %v4588 = vadd.f32 %v3097, %v4587
    %v4589 = vpop.f32.mrf.mxu0
    %v4590 = vadd.f32 %v3101, %v4589
    %4591 = vmatprep.mubr.bf16.mxu0 %v2989
    %4592 = vmatmul.mubr.bf16.gmra.mxu0 %v2988
    %v4593 = vpop.f32.mrf.mxu0
    %v4594 = vadd.f32 %v3097, %v4593
    %v4595 = vpop.f32.mrf.mxu0
    %v4596 = vadd.f32 %v3101, %v4595
    %v4597 = vpop.f32.mrf.mxu0
    %v4598 = vadd.f32 %v3097, %v4597
    %v4599 = vpop.f32.mrf.mxu0
    %v4600 = vadd.f32 %v3101, %v4599
    %4601 = vmatprep.mubr.bf16.mxu0 %v2991
    %4602 = vmatmul.mubr.bf16.gmra.mxu0 %v2990
    %v4603 = vpop.f32.mrf.mxu0
    %v4604 = vadd.f32 %v3097, %v4603
    %v4605 = vpop.f32.mrf.mxu0
    %v4606 = vadd.f32 %v3101, %v4605
    %v4607 = vpop.f32.mrf.mxu0
    %v4608 = vadd.f32 %v3097, %v4607
    %v4609 = vpop.f32.mrf.mxu0
    %v4610 = vadd.f32 %v3101, %v4609
    %4611 = vmatprep.mubr.bf16.mxu0 %v2993
    %4612 = vmatmul.mubr.bf16.gmra.mxu0 %v2992
    %v4613 = vpop.f32.mrf.mxu0
    %v4614 = vadd.f32 %v3097, %v4613
    %v4615 = vpop.f32.mrf.mxu0
    %v4616 = vadd.f32 %v3101, %v4615
    %v4617 = vpop.f32.mrf.mxu0
    %v4618 = vadd.f32 %v3097, %v4617
    %v4619 = vpop.f32.mrf.mxu0
    %v4620 = vadd.f32 %v3101, %v4619
    %4621 = vmatprep.mubr.bf16.mxu0 %v2995
    %4622 = vmatmul.mubr.bf16.gmra.mxu0 %v2994
    %v4623 = vpop.f32.mrf.mxu0
    %v4624 = vadd.f32 %v3097, %v4623
    %v4625 = vpop.f32.mrf.mxu0
    %v4626 = vadd.f32 %v3101, %v4625
    %v4627 = vpop.f32.mrf.mxu0
    %v4628 = vadd.f32 %v3097, %v4627
    %v4629 = vpop.f32.mrf.mxu0
    %v4630 = vadd.f32 %v3101, %v4629
    %4631 = vmatprep.mubr.bf16.mxu0 %v2997
    %4632 = vmatmul.mubr.bf16.gmra.mxu0 %v2996
    %v4633 = vpop.f32.mrf.mxu0
    %v4634 = vadd.f32 %v3097, %v4633
    %v4635 = vpop.f32.mrf.mxu0
    %v4636 = vadd.f32 %v3101, %v4635
    %v4637 = vpop.f32.mrf.mxu0
    %v4638 = vadd.f32 %v3097, %v4637
    %v4639 = vpop.f32.mrf.mxu0
    %v4640 = vadd.f32 %v3101, %v4639
    %4641 = vmatprep.mubr.bf16.mxu0 %v2999
    %4642 = vmatmul.mubr.bf16.gmra.mxu0 %v2998
    %v4643 = vpop.f32.mrf.mxu0
    %v4644 = vadd.f32 %v3097, %v4643
    %v4645 = vpop.f32.mrf.mxu0
    %v4646 = vadd.f32 %v3101, %v4645
    %v4647 = vpop.f32.mrf.mxu0
    %v4648 = vadd.f32 %v3097, %v4647
    %v4649 = vpop.f32.mrf.mxu0
    %v4650 = vadd.f32 %v3101, %v4649
    %4651 = vmatprep.mubr.bf16.mxu0 %v3001
    %4652 = vmatmul.mubr.bf16.gmra.mxu0 %v3000
    %v4653 = vpop.f32.mrf.mxu0
    %v4654 = vadd.f32 %v3097, %v4653
    %v4655 = vpop.f32.mrf.mxu0
    %v4656 = vadd.f32 %v3101, %v4655
    %v4657 = vpop.f32.mrf.mxu0
    %v4658 = vadd.f32 %v3097, %v4657
    %v4659 = vpop.f32.mrf.mxu0
    %v4660 = vadd.f32 %v3101, %v4659
    %4661 = vmatprep.mubr.bf16.mxu0 %v3003
    %4662 = vmatmul.mubr.bf16.gmra.mxu0 %v3002
    %v4663 = vpop.f32.mrf.mxu0
    %v4664 = vadd.f32 %v3097, %v4663
    %v4665 = vpop.f32.mrf.mxu0
    %v4666 = vadd.f32 %v3101, %v4665
    %v4667 = vpop.f32.mrf.mxu0
    %v4668 = vadd.f32 %v3097, %v4667
    %v4669 = vpop.f32.mrf.mxu0
    %v4670 = vadd.f32 %v3101, %v4669
    %4671 = vmatprep.mubr.bf16.mxu0 %v3005
    %4672 = vmatmul.mubr.bf16.gmra.mxu0 %v3004
    %v4673 = vpop.f32.mrf.mxu0
    %v4674 = vadd.f32 %v3097, %v4673
    %v4675 = vpop.f32.mrf.mxu0
    %v4676 = vadd.f32 %v3101, %v4675
    %v4677 = vpop.f32.mrf.mxu0
    %v4678 = vadd.f32 %v3097, %v4677
    %v4679 = vpop.f32.mrf.mxu0
    %v4680 = vadd.f32 %v3101, %v4679
    %4681 = vmatprep.mubr.bf16.mxu0 %v3007
    %4682 = vmatmul.mubr.bf16.gmra.mxu0 %v3006
    %v4683 = vpop.f32.mrf.mxu0
    %v4684 = vadd.f32 %v3097, %v4683
    %v4685 = vpop.f32.mrf.mxu0
    %v4686 = vadd.f32 %v3101, %v4685
    %v4687 = vpop.f32.mrf.mxu0
    %v4688 = vadd.f32 %v3097, %v4687
    %v4689 = vpop.f32.mrf.mxu0
    %v4690 = vadd.f32 %v3101, %v4689
    %4691 = vmatprep.mubr.bf16.mxu0 %v3009
    %4692 = vmatmul.mubr.bf16.gmra.mxu0 %v3008
    %v4693 = vpop.f32.mrf.mxu0
    %v4694 = vadd.f32 %v3097, %v4693
    %v4695 = vpop.f32.mrf.mxu0
    %v4696 = vadd.f32 %v3101, %v4695
    %v4697 = vpop.f32.mrf.mxu0
    %v4698 = vadd.f32 %v3097, %v4697
    %v4699 = vpop.f32.mrf.mxu0
    %v4700 = vadd.f32 %v3101, %v4699
    %4701 = vmatprep.mubr.bf16.mxu0 %v3011
    %4702 = vmatmul.mubr.bf16.gmra.mxu0 %v3010
    %v4703 = vpop.f32.mrf.mxu0
    %v4704 = vadd.f32 %v3097, %v4703
    %v4705 = vpop.f32.mrf.mxu0
    %v4706 = vadd.f32 %v3101, %v4705
    %v4707 = vpop.f32.mrf.mxu0
    %v4708 = vadd.f32 %v3097, %v4707
    %v4709 = vpop.f32.mrf.mxu0
    %v4710 = vadd.f32 %v3101, %v4709
    %4711 = vmatprep.mubr.bf16.mxu0 %v3013
    %4712 = vmatmul.mubr.bf16.gmra.mxu0 %v3012
    %v4713 = vpop.f32.mrf.mxu0
    %v4714 = vadd.f32 %v3097, %v4713
    %v4715 = vpop.f32.mrf.mxu0
    %v4716 = vadd.f32 %v3101, %v4715
    %v4717 = vpop.f32.mrf.mxu0
    %v4718 = vadd.f32 %v3097, %v4717
    %v4719 = vpop.f32.mrf.mxu0
    %v4720 = vadd.f32 %v3101, %v4719
    %4721 = vmatprep.mubr.bf16.mxu0 %v3015
    %4722 = vmatmul.mubr.bf16.gmra.mxu0 %v3014
    %v4723 = vpop.f32.mrf.mxu0
    %v4724 = vadd.f32 %v3097, %v4723
    %v4725 = vpop.f32.mrf.mxu0
    %v4726 = vadd.f32 %v3101, %v4725
    %v4727 = vpop.f32.mrf.mxu0
    %v4728 = vadd.f32 %v3097, %v4727
    %v4729 = vpop.f32.mrf.mxu0
    %v4730 = vadd.f32 %v3101, %v4729
    %4731 = vmatprep.mubr.bf16.mxu0 %v3017
    %4732 = vmatmul.mubr.bf16.gmra.mxu0 %v3016
    %v4733 = vpop.f32.mrf.mxu0
    %v4734 = vadd.f32 %v3097, %v4733
    %v4735 = vpop.f32.mrf.mxu0
    %v4736 = vadd.f32 %v3101, %v4735
    %v4737 = vpop.f32.mrf.mxu0
    %v4738 = vadd.f32 %v3097, %v4737
    %v4739 = vpop.f32.mrf.mxu0
    %v4740 = vadd.f32 %v3101, %v4739
    %4741 = vmatprep.mubr.bf16.mxu0 %v3019
    %4742 = vmatmul.mubr.bf16.gmra.mxu0 %v3018
    %v4743 = vpop.f32.mrf.mxu0
    %v4744 = vadd.f32 %v3097, %v4743
    %v4745 = vpop.f32.mrf.mxu0
    %v4746 = vadd.f32 %v3101, %v4745
    %v4747 = vpop.f32.mrf.mxu0
    %v4748 = vadd.f32 %v3097, %v4747
    %v4749 = vpop.f32.mrf.mxu0
    %v4750 = vadd.f32 %v3101, %v4749
    %4751 = vdwg.mxu0
    %v4752 = vxor.u32 %v3461, 2147483648
    %v4753 = vxor.u32 %v3463, 2147483648
    %v4754 = vxor.u32 %v4124, 2147483648
    %v4755 = vxor.u32 %v4126, 2147483648
    %v4756 = vxor.u32 %v3465, 2147483648
    %v4757 = vxor.u32 %v3467, 2147483648
    %v4758 = vxor.u32 %v4128, 2147483648
    %v4759 = vxor.u32 %v4130, 2147483648
    %v4760 = vxor.u32 %v3471, 2147483648
    %v4761 = vxor.u32 %v3473, 2147483648
    %v4762 = vxor.u32 %v4134, 2147483648
    %v4763 = vxor.u32 %v4136, 2147483648
    %v4764 = vxor.u32 %v3475, 2147483648
    %v4765 = vxor.u32 %v3477, 2147483648
    %v4766 = vxor.u32 %v4138, 2147483648
    %v4767 = vxor.u32 %v4140, 2147483648
    %v4768 = vxor.u32 %v3481, 2147483648
    %v4769 = vxor.u32 %v3483, 2147483648
    %v4770 = vxor.u32 %v4144, 2147483648
    %v4771 = vxor.u32 %v4146, 2147483648
    %v4772 = vxor.u32 %v3485, 2147483648
    %v4773 = vxor.u32 %v3487, 2147483648
    %v4774 = vxor.u32 %v4148, 2147483648
    %v4775 = vxor.u32 %v4150, 2147483648
    %v4776 = vxor.u32 %v3491, 2147483648
    %v4777 = vxor.u32 %v3493, 2147483648
    %v4778 = vxor.u32 %v4154, 2147483648
    %v4779 = vxor.u32 %v4156, 2147483648
    %v4780 = vxor.u32 %v3495, 2147483648
    %v4781 = vxor.u32 %v3497, 2147483648
    %v4782 = vxor.u32 %v4158, 2147483648
    %v4783 = vxor.u32 %v4160, 2147483648
    %v4784 = vxor.u32 %v3501, 2147483648
    %v4785 = vxor.u32 %v3503, 2147483648
    %v4786 = vxor.u32 %v4164, 2147483648
    %v4787 = vxor.u32 %v4166, 2147483648
    %v4788 = vxor.u32 %v3505, 2147483648
    %v4789 = vxor.u32 %v3507, 2147483648
    %v4790 = vxor.u32 %v4168, 2147483648
    %v4791 = vxor.u32 %v4170, 2147483648
    %v4792 = vxor.u32 %v3511, 2147483648
    %v4793 = vxor.u32 %v3513, 2147483648
    %v4794 = vxor.u32 %v4174, 2147483648
    %v4795 = vxor.u32 %v4176, 2147483648
    %v4796 = vxor.u32 %v3515, 2147483648
    %v4797 = vxor.u32 %v3517, 2147483648
    %v4798 = vxor.u32 %v4178, 2147483648
    %v4799 = vxor.u32 %v4180, 2147483648
    %v4800 = vxor.u32 %v3521, 2147483648
    %v4801 = vxor.u32 %v3523, 2147483648
    %v4802 = vxor.u32 %v4184, 2147483648
    %v4803 = vxor.u32 %v4186, 2147483648
    %v4804 = vxor.u32 %v3525, 2147483648
    %v4805 = vxor.u32 %v3527, 2147483648
    %v4806 = vxor.u32 %v4188, 2147483648
    %v4807 = vxor.u32 %v4190, 2147483648
    %v4808 = vxor.u32 %v3531, 2147483648
    %v4809 = vxor.u32 %v3533, 2147483648
    %v4810 = vxor.u32 %v4194, 2147483648
    %v4811 = vxor.u32 %v4196, 2147483648
    %v4812 = vxor.u32 %v3535, 2147483648
    %v4813 = vxor.u32 %v3537, 2147483648
    %v4814 = vxor.u32 %v4198, 2147483648
    %v4815 = vxor.u32 %v4200, 2147483648
    %v4816 = vxor.u32 %v3541, 2147483648
    %v4817 = vxor.u32 %v3543, 2147483648
    %v4818 = vxor.u32 %v4204, 2147483648
    %v4819 = vxor.u32 %v4206, 2147483648
    %v4820 = vxor.u32 %v3545, 2147483648
    %v4821 = vxor.u32 %v3547, 2147483648
    %v4822 = vxor.u32 %v4208, 2147483648
    %v4823 = vxor.u32 %v4210, 2147483648
    %v4824 = vxor.u32 %v3551, 2147483648
    %v4825 = vxor.u32 %v3553, 2147483648
    %v4826 = vxor.u32 %v4214, 2147483648
    %v4827 = vxor.u32 %v4216, 2147483648
    %v4828 = vxor.u32 %v3555, 2147483648
    %v4829 = vxor.u32 %v3557, 2147483648
    %v4830 = vxor.u32 %v4218, 2147483648
    %v4831 = vxor.u32 %v4220, 2147483648
    %v4832 = vxor.u32 %v3561, 2147483648
    %v4833 = vxor.u32 %v3563, 2147483648
    %v4834 = vxor.u32 %v4224, 2147483648
    %v4835 = vxor.u32 %v4226, 2147483648
    %v4836 = vxor.u32 %v3565, 2147483648
    %v4837 = vxor.u32 %v3567, 2147483648
    %v4838 = vxor.u32 %v4228, 2147483648
    %v4839 = vxor.u32 %v4230, 2147483648
    %v4840 = vxor.u32 %v3571, 2147483648
    %v4841 = vxor.u32 %v3573, 2147483648
    %v4842 = vxor.u32 %v4234, 2147483648
    %v4843 = vxor.u32 %v4236, 2147483648
    %v4844 = vxor.u32 %v3575, 2147483648
    %v4845 = vxor.u32 %v3577, 2147483648
    %v4846 = vxor.u32 %v4238, 2147483648
    %v4847 = vxor.u32 %v4240, 2147483648
    %v4848 = vxor.u32 %v3581, 2147483648
    %v4849 = vxor.u32 %v3583, 2147483648
    %v4850 = vxor.u32 %v4244, 2147483648
    %v4851 = vxor.u32 %v4246, 2147483648
    %v4852 = vxor.u32 %v3585, 2147483648
    %v4853 = vxor.u32 %v3587, 2147483648
    %v4854 = vxor.u32 %v4248, 2147483648
    %v4855 = vxor.u32 %v4250, 2147483648
    %v4856 = vxor.u32 %v3591, 2147483648
    %v4857 = vxor.u32 %v3593, 2147483648
    %v4858 = vxor.u32 %v4254, 2147483648
    %v4859 = vxor.u32 %v4256, 2147483648
    %v4860 = vxor.u32 %v3595, 2147483648
    %v4861 = vxor.u32 %v3597, 2147483648
    %v4862 = vxor.u32 %v4258, 2147483648
    %v4863 = vxor.u32 %v4260, 2147483648
    %v4864 = vxor.u32 %v3601, 2147483648
    %v4865 = vxor.u32 %v3603, 2147483648
    %v4866 = vxor.u32 %v4264, 2147483648
    %v4867 = vxor.u32 %v4266, 2147483648
    %v4868 = vxor.u32 %v3605, 2147483648
    %v4869 = vxor.u32 %v3607, 2147483648
    %v4870 = vxor.u32 %v4268, 2147483648
    %v4871 = vxor.u32 %v4270, 2147483648
    %v4872 = vxor.u32 %v3611, 2147483648
    %v4873 = vxor.u32 %v3613, 2147483648
    %v4874 = vxor.u32 %v4274, 2147483648
    %v4875 = vxor.u32 %v4276, 2147483648
    %v4876 = vxor.u32 %v3615, 2147483648
    %v4877 = vxor.u32 %v3617, 2147483648
    %v4878 = vxor.u32 %v4278, 2147483648
    %v4879 = vxor.u32 %v4280, 2147483648
    %v4880 = vxor.u32 %v3621, 2147483648
    %v4881 = vxor.u32 %v3623, 2147483648
    %v4882 = vxor.u32 %v4284, 2147483648
    %v4883 = vxor.u32 %v4286, 2147483648
    %v4884 = vxor.u32 %v3625, 2147483648
    %v4885 = vxor.u32 %v3627, 2147483648
    %v4886 = vxor.u32 %v4288, 2147483648
    %v4887 = vxor.u32 %v4290, 2147483648
    %v4888 = vxor.u32 %v3631, 2147483648
    %v4889 = vxor.u32 %v3633, 2147483648
    %v4890 = vxor.u32 %v4294, 2147483648
    %v4891 = vxor.u32 %v4296, 2147483648
    %v4892 = vxor.u32 %v3635, 2147483648
    %v4893 = vxor.u32 %v3637, 2147483648
    %v4894 = vxor.u32 %v4298, 2147483648
    %v4895 = vxor.u32 %v4300, 2147483648
    %v4896 = vxor.u32 %v3641, 2147483648
    %v4897 = vxor.u32 %v3643, 2147483648
    %v4898 = vxor.u32 %v4304, 2147483648
    %v4899 = vxor.u32 %v4306, 2147483648
    %v4900 = vxor.u32 %v3645, 2147483648
    %v4901 = vxor.u32 %v3647, 2147483648
    %v4902 = vxor.u32 %v4308, 2147483648
    %v4903 = vxor.u32 %v4310, 2147483648
    %v4904 = vxor.u32 %v3651, 2147483648
    %v4905 = vxor.u32 %v3653, 2147483648
    %v4906 = vxor.u32 %v4314, 2147483648
    %v4907 = vxor.u32 %v4316, 2147483648
    %v4908 = vxor.u32 %v3655, 2147483648
    %v4909 = vxor.u32 %v3657, 2147483648
    %v4910 = vxor.u32 %v4318, 2147483648
    %v4911 = vxor.u32 %v4320, 2147483648
    %v4912 = vxor.u32 %v3661, 2147483648
    %v4913 = vxor.u32 %v3663, 2147483648
    %v4914 = vxor.u32 %v4324, 2147483648
    %v4915 = vxor.u32 %v4326, 2147483648
    %v4916 = vxor.u32 %v3665, 2147483648
    %v4917 = vxor.u32 %v3667, 2147483648
    %v4918 = vxor.u32 %v4328, 2147483648
    %v4919 = vxor.u32 %v4330, 2147483648
    %v4920 = vxor.u32 %v3671, 2147483648
    %v4921 = vxor.u32 %v3673, 2147483648
    %v4922 = vxor.u32 %v4334, 2147483648
    %v4923 = vxor.u32 %v4336, 2147483648
    %v4924 = vxor.u32 %v3675, 2147483648
    %v4925 = vxor.u32 %v3677, 2147483648
    %v4926 = vxor.u32 %v4338, 2147483648
    %v4927 = vxor.u32 %v4340, 2147483648
    %v4928 = vxor.u32 %v3681, 2147483648
    %v4929 = vxor.u32 %v3683, 2147483648
    %v4930 = vxor.u32 %v4344, 2147483648
    %v4931 = vxor.u32 %v4346, 2147483648
    %v4932 = vxor.u32 %v3685, 2147483648
    %v4933 = vxor.u32 %v3687, 2147483648
    %v4934 = vxor.u32 %v4348, 2147483648
    %v4935 = vxor.u32 %v4350, 2147483648
    %v4936 = vxor.u32 %v3691, 2147483648
    %v4937 = vxor.u32 %v3693, 2147483648
    %v4938 = vxor.u32 %v4354, 2147483648
    %v4939 = vxor.u32 %v4356, 2147483648
    %v4940 = vxor.u32 %v3695, 2147483648
    %v4941 = vxor.u32 %v3697, 2147483648
    %v4942 = vxor.u32 %v4358, 2147483648
    %v4943 = vxor.u32 %v4360, 2147483648
    %v4944 = vxor.u32 %v3701, 2147483648
    %v4945 = vxor.u32 %v3703, 2147483648
    %v4946 = vxor.u32 %v4364, 2147483648
    %v4947 = vxor.u32 %v4366, 2147483648
    %v4948 = vxor.u32 %v3705, 2147483648
    %v4949 = vxor.u32 %v3707, 2147483648
    %v4950 = vxor.u32 %v4368, 2147483648
    %v4951 = vxor.u32 %v4370, 2147483648
    %v4952 = vxor.u32 %v3711, 2147483648
    %v4953 = vxor.u32 %v3713, 2147483648
    %v4954 = vxor.u32 %v4374, 2147483648
    %v4955 = vxor.u32 %v4376, 2147483648
    %v4956 = vxor.u32 %v3715, 2147483648
    %v4957 = vxor.u32 %v3717, 2147483648
    %v4958 = vxor.u32 %v4378, 2147483648
    %v4959 = vxor.u32 %v4380, 2147483648
    %v4960 = vxor.u32 %v3721, 2147483648
    %v4961 = vxor.u32 %v3723, 2147483648
    %v4962 = vxor.u32 %v4384, 2147483648
    %v4963 = vxor.u32 %v4386, 2147483648
    %v4964 = vxor.u32 %v3725, 2147483648
    %v4965 = vxor.u32 %v3727, 2147483648
    %v4966 = vxor.u32 %v4388, 2147483648
    %v4967 = vxor.u32 %v4390, 2147483648
    %v4968 = vxor.u32 %v3731, 2147483648
    %v4969 = vxor.u32 %v3733, 2147483648
    %v4970 = vxor.u32 %v4394, 2147483648
    %v4971 = vxor.u32 %v4396, 2147483648
    %v4972 = vxor.u32 %v3735, 2147483648
    %v4973 = vxor.u32 %v3737, 2147483648
    %v4974 = vxor.u32 %v4398, 2147483648
    %v4975 = vxor.u32 %v4400, 2147483648
    %v4976 = vxor.u32 %v3741, 2147483648
    %v4977 = vxor.u32 %v3743, 2147483648
    %v4978 = vxor.u32 %v4404, 2147483648
    %v4979 = vxor.u32 %v4406, 2147483648
    %v4980 = vxor.u32 %v3745, 2147483648
    %v4981 = vxor.u32 %v3747, 2147483648
    %v4982 = vxor.u32 %v4408, 2147483648
    %v4983 = vxor.u32 %v4410, 2147483648
    %v4984 = vxor.u32 %v3751, 2147483648
    %v4985 = vxor.u32 %v3753, 2147483648
    %v4986 = vxor.u32 %v4414, 2147483648
    %v4987 = vxor.u32 %v4416, 2147483648
    %v4988 = vxor.u32 %v3755, 2147483648
    %v4989 = vxor.u32 %v3757, 2147483648
    %v4990 = vxor.u32 %v4418, 2147483648
    %v4991 = vxor.u32 %v4420, 2147483648
    %v4992 = vxor.u32 %v3761, 2147483648
    %v4993 = vxor.u32 %v3763, 2147483648
    %v4994 = vxor.u32 %v4424, 2147483648
    %v4995 = vxor.u32 %v4426, 2147483648
    %v4996 = vxor.u32 %v3765, 2147483648
    %v4997 = vxor.u32 %v3767, 2147483648
    %v4998 = vxor.u32 %v4428, 2147483648
    %v4999 = vxor.u32 %v4430, 2147483648
    %v5000 = vxor.u32 %v3771, 2147483648
    %v5001 = vxor.u32 %v3773, 2147483648
    %v5002 = vxor.u32 %v4434, 2147483648
    %v5003 = vxor.u32 %v4436, 2147483648
    %v5004 = vxor.u32 %v3775, 2147483648
    %v5005 = vxor.u32 %v3777, 2147483648
    %v5006 = vxor.u32 %v4438, 2147483648
    %v5007 = vxor.u32 %v4440, 2147483648
    %v5008 = vxor.u32 %v3781, 2147483648
    %v5009 = vxor.u32 %v3783, 2147483648
    %v5010 = vxor.u32 %v4444, 2147483648
    %v5011 = vxor.u32 %v4446, 2147483648
    %v5012 = vxor.u32 %v3785, 2147483648
    %v5013 = vxor.u32 %v3787, 2147483648
    %v5014 = vxor.u32 %v4448, 2147483648
    %v5015 = vxor.u32 %v4450, 2147483648
    %v5016 = vxor.u32 %v3791, 2147483648
    %v5017 = vxor.u32 %v3793, 2147483648
    %v5018 = vxor.u32 %v4454, 2147483648
    %v5019 = vxor.u32 %v4456, 2147483648
    %v5020 = vxor.u32 %v3795, 2147483648
    %v5021 = vxor.u32 %v3797, 2147483648
    %v5022 = vxor.u32 %v4458, 2147483648
    %v5023 = vxor.u32 %v4460, 2147483648
    %v5024 = vxor.u32 %v3801, 2147483648
    %v5025 = vxor.u32 %v3803, 2147483648
    %v5026 = vxor.u32 %v4464, 2147483648
    %v5027 = vxor.u32 %v4466, 2147483648
    %v5028 = vxor.u32 %v3805, 2147483648
    %v5029 = vxor.u32 %v3807, 2147483648
    %v5030 = vxor.u32 %v4468, 2147483648
    %v5031 = vxor.u32 %v4470, 2147483648
    %v5032 = vxor.u32 %v3811, 2147483648
    %v5033 = vxor.u32 %v3813, 2147483648
    %v5034 = vxor.u32 %v4474, 2147483648
    %v5035 = vxor.u32 %v4476, 2147483648
    %v5036 = vxor.u32 %v3815, 2147483648
    %v5037 = vxor.u32 %v3817, 2147483648
    %v5038 = vxor.u32 %v4478, 2147483648
    %v5039 = vxor.u32 %v4480, 2147483648
    %v5040 = vxor.u32 %v3821, 2147483648
    %v5041 = vxor.u32 %v3823, 2147483648
    %v5042 = vxor.u32 %v4484, 2147483648
    %v5043 = vxor.u32 %v4486, 2147483648
    %v5044 = vxor.u32 %v3825, 2147483648
    %v5045 = vxor.u32 %v3827, 2147483648
    %v5046 = vxor.u32 %v4488, 2147483648
    %v5047 = vxor.u32 %v4490, 2147483648
    %v5048 = vxor.u32 %v3831, 2147483648
    %v5049 = vxor.u32 %v3833, 2147483648
    %v5050 = vxor.u32 %v4494, 2147483648
    %v5051 = vxor.u32 %v4496, 2147483648
    %v5052 = vxor.u32 %v3835, 2147483648
    %v5053 = vxor.u32 %v3837, 2147483648
    %v5054 = vxor.u32 %v4498, 2147483648
    %v5055 = vxor.u32 %v4500, 2147483648
    %v5056 = vxor.u32 %v3841, 2147483648
    %v5057 = vxor.u32 %v3843, 2147483648
    %v5058 = vxor.u32 %v4504, 2147483648
    %v5059 = vxor.u32 %v4506, 2147483648
    %v5060 = vxor.u32 %v3845, 2147483648
    %v5061 = vxor.u32 %v3847, 2147483648
    %v5062 = vxor.u32 %v4508, 2147483648
    %v5063 = vxor.u32 %v4510, 2147483648
    %v5064 = vxor.u32 %v3851, 2147483648
    %v5065 = vxor.u32 %v3853, 2147483648
    %v5066 = vxor.u32 %v4514, 2147483648
    %v5067 = vxor.u32 %v4516, 2147483648
    %v5068 = vxor.u32 %v3855, 2147483648
    %v5069 = vxor.u32 %v3857, 2147483648
    %v5070 = vxor.u32 %v4518, 2147483648
    %v5071 = vxor.u32 %v4520, 2147483648
    %v5072 = vxor.u32 %v3861, 2147483648
    %v5073 = vxor.u32 %v3863, 2147483648
    %v5074 = vxor.u32 %v4524, 2147483648
    %v5075 = vxor.u32 %v4526, 2147483648
    %v5076 = vxor.u32 %v3865, 2147483648
    %v5077 = vxor.u32 %v3867, 2147483648
    %v5078 = vxor.u32 %v4528, 2147483648
    %v5079 = vxor.u32 %v4530, 2147483648
    %v5080 = vxor.u32 %v3871, 2147483648
    %v5081 = vxor.u32 %v3873, 2147483648
    %v5082 = vxor.u32 %v4534, 2147483648
    %v5083 = vxor.u32 %v4536, 2147483648
    %v5084 = vxor.u32 %v3875, 2147483648
    %v5085 = vxor.u32 %v3877, 2147483648
    %v5086 = vxor.u32 %v4538, 2147483648
    %v5087 = vxor.u32 %v4540, 2147483648
    %v5088 = vxor.u32 %v3881, 2147483648
    %v5089 = vxor.u32 %v3883, 2147483648
    %v5090 = vxor.u32 %v4544, 2147483648
    %v5091 = vxor.u32 %v4546, 2147483648
    %v5092 = vxor.u32 %v3885, 2147483648
    %v5093 = vxor.u32 %v3887, 2147483648
    %v5094 = vxor.u32 %v4548, 2147483648
    %v5095 = vxor.u32 %v4550, 2147483648
    %v5096 = vxor.u32 %v3891, 2147483648
    %v5097 = vxor.u32 %v3893, 2147483648
    %v5098 = vxor.u32 %v4554, 2147483648
    %v5099 = vxor.u32 %v4556, 2147483648
    %v5100 = vxor.u32 %v3895, 2147483648
    %v5101 = vxor.u32 %v3897, 2147483648
    %v5102 = vxor.u32 %v4558, 2147483648
    %v5103 = vxor.u32 %v4560, 2147483648
    %v5104 = vxor.u32 %v3901, 2147483648
    %v5105 = vxor.u32 %v3903, 2147483648
    %v5106 = vxor.u32 %v4564, 2147483648
    %v5107 = vxor.u32 %v4566, 2147483648
    %v5108 = vxor.u32 %v3905, 2147483648
    %v5109 = vxor.u32 %v3907, 2147483648
    %v5110 = vxor.u32 %v4568, 2147483648
    %v5111 = vxor.u32 %v4570, 2147483648
    %v5112 = vxor.u32 %v3911, 2147483648
    %v5113 = vxor.u32 %v3913, 2147483648
    %v5114 = vxor.u32 %v4574, 2147483648
    %v5115 = vxor.u32 %v4576, 2147483648
    %v5116 = vxor.u32 %v3915, 2147483648
    %v5117 = vxor.u32 %v3917, 2147483648
    %v5118 = vxor.u32 %v4578, 2147483648
    %v5119 = vxor.u32 %v4580, 2147483648
    %v5120 = vxor.u32 %v3921, 2147483648
    %v5121 = vxor.u32 %v3923, 2147483648
    %v5122 = vxor.u32 %v4584, 2147483648
    %v5123 = vxor.u32 %v4586, 2147483648
    %v5124 = vxor.u32 %v3925, 2147483648
    %v5125 = vxor.u32 %v3927, 2147483648
    %v5126 = vxor.u32 %v4588, 2147483648
    %v5127 = vxor.u32 %v4590, 2147483648
    %v5128 = vxor.u32 %v3931, 2147483648
    %v5129 = vxor.u32 %v3933, 2147483648
    %v5130 = vxor.u32 %v4594, 2147483648
    %v5131 = vxor.u32 %v4596, 2147483648
    %v5132 = vxor.u32 %v3935, 2147483648
    %v5133 = vxor.u32 %v3937, 2147483648
    %v5134 = vxor.u32 %v4598, 2147483648
    %v5135 = vxor.u32 %v4600, 2147483648
    %v5136 = vxor.u32 %v3941, 2147483648
    %v5137 = vxor.u32 %v3943, 2147483648
    %v5138 = vxor.u32 %v4604, 2147483648
    %v5139 = vxor.u32 %v4606, 2147483648
    %v5140 = vxor.u32 %v3945, 2147483648
    %v5141 = vxor.u32 %v3947, 2147483648
    %v5142 = vxor.u32 %v4608, 2147483648
    %v5143 = vxor.u32 %v4610, 2147483648
    %v5144 = vxor.u32 %v3951, 2147483648
    %v5145 = vxor.u32 %v3953, 2147483648
    %v5146 = vxor.u32 %v4614, 2147483648
    %v5147 = vxor.u32 %v4616, 2147483648
    %v5148 = vxor.u32 %v3955, 2147483648
    %v5149 = vxor.u32 %v3957, 2147483648
    %v5150 = vxor.u32 %v4618, 2147483648
    %v5151 = vxor.u32 %v4620, 2147483648
    %v5152 = vxor.u32 %v3961, 2147483648
    %v5153 = vxor.u32 %v3963, 2147483648
    %v5154 = vxor.u32 %v4624, 2147483648
    %v5155 = vxor.u32 %v4626, 2147483648
    %v5156 = vxor.u32 %v3965, 2147483648
    %v5157 = vxor.u32 %v3967, 2147483648
    %v5158 = vxor.u32 %v4628, 2147483648
    %v5159 = vxor.u32 %v4630, 2147483648
    %v5160 = vxor.u32 %v3971, 2147483648
    %v5161 = vxor.u32 %v3973, 2147483648
    %v5162 = vxor.u32 %v4634, 2147483648
    %v5163 = vxor.u32 %v4636, 2147483648
    %v5164 = vxor.u32 %v3975, 2147483648
    %v5165 = vxor.u32 %v3977, 2147483648
    %v5166 = vxor.u32 %v4638, 2147483648
    %v5167 = vxor.u32 %v4640, 2147483648
    %v5168 = vxor.u32 %v3981, 2147483648
    %v5169 = vxor.u32 %v3983, 2147483648
    %v5170 = vxor.u32 %v4644, 2147483648
    %v5171 = vxor.u32 %v4646, 2147483648
    %v5172 = vxor.u32 %v3985, 2147483648
    %v5173 = vxor.u32 %v3987, 2147483648
    %v5174 = vxor.u32 %v4648, 2147483648
    %v5175 = vxor.u32 %v4650, 2147483648
    %v5176 = vxor.u32 %v3991, 2147483648
    %v5177 = vxor.u32 %v3993, 2147483648
    %v5178 = vxor.u32 %v4654, 2147483648
    %v5179 = vxor.u32 %v4656, 2147483648
    %v5180 = vxor.u32 %v3995, 2147483648
    %v5181 = vxor.u32 %v3997, 2147483648
    %v5182 = vxor.u32 %v4658, 2147483648
    %v5183 = vxor.u32 %v4660, 2147483648
    %v5184 = vxor.u32 %v4001, 2147483648
    %v5185 = vxor.u32 %v4003, 2147483648
    %v5186 = vxor.u32 %v4664, 2147483648
    %v5187 = vxor.u32 %v4666, 2147483648
    %v5188 = vxor.u32 %v4005, 2147483648
    %v5189 = vxor.u32 %v4007, 2147483648
    %v5190 = vxor.u32 %v4668, 2147483648
    %v5191 = vxor.u32 %v4670, 2147483648
    %v5192 = vxor.u32 %v4011, 2147483648
    %v5193 = vxor.u32 %v4013, 2147483648
    %v5194 = vxor.u32 %v4674, 2147483648
    %v5195 = vxor.u32 %v4676, 2147483648
    %v5196 = vxor.u32 %v4015, 2147483648
    %v5197 = vxor.u32 %v4017, 2147483648
    %v5198 = vxor.u32 %v4678, 2147483648
    %v5199 = vxor.u32 %v4680, 2147483648
    %v5200 = vxor.u32 %v4021, 2147483648
    %v5201 = vxor.u32 %v4023, 2147483648
    %v5202 = vxor.u32 %v4684, 2147483648
    %v5203 = vxor.u32 %v4686, 2147483648
    %v5204 = vxor.u32 %v4025, 2147483648
    %v5205 = vxor.u32 %v4027, 2147483648
    %v5206 = vxor.u32 %v4688, 2147483648
    %v5207 = vxor.u32 %v4690, 2147483648
    %v5208 = vxor.u32 %v4031, 2147483648
    %v5209 = vxor.u32 %v4033, 2147483648
    %v5210 = vxor.u32 %v4694, 2147483648
    %v5211 = vxor.u32 %v4696, 2147483648
    %v5212 = vxor.u32 %v4035, 2147483648
    %v5213 = vxor.u32 %v4037, 2147483648
    %v5214 = vxor.u32 %v4698, 2147483648
    %v5215 = vxor.u32 %v4700, 2147483648
    %v5216 = vxor.u32 %v4041, 2147483648
    %v5217 = vxor.u32 %v4043, 2147483648
    %v5218 = vxor.u32 %v4704, 2147483648
    %v5219 = vxor.u32 %v4706, 2147483648
    %v5220 = vxor.u32 %v4045, 2147483648
    %v5221 = vxor.u32 %v4047, 2147483648
    %v5222 = vxor.u32 %v4708, 2147483648
    %v5223 = vxor.u32 %v4710, 2147483648
    %v5224 = vxor.u32 %v4051, 2147483648
    %v5225 = vxor.u32 %v4053, 2147483648
    %v5226 = vxor.u32 %v4714, 2147483648
    %v5227 = vxor.u32 %v4716, 2147483648
    %v5228 = vxor.u32 %v4055, 2147483648
    %v5229 = vxor.u32 %v4057, 2147483648
    %v5230 = vxor.u32 %v4718, 2147483648
    %v5231 = vxor.u32 %v4720, 2147483648
    %v5232 = vxor.u32 %v4061, 2147483648
    %v5233 = vxor.u32 %v4063, 2147483648
    %v5234 = vxor.u32 %v4724, 2147483648
    %v5235 = vxor.u32 %v4726, 2147483648
    %v5236 = vxor.u32 %v4065, 2147483648
    %v5237 = vxor.u32 %v4067, 2147483648
    %v5238 = vxor.u32 %v4728, 2147483648
    %v5239 = vxor.u32 %v4730, 2147483648
    %v5240 = vxor.u32 %v4071, 2147483648
    %v5241 = vxor.u32 %v4073, 2147483648
    %v5242 = vxor.u32 %v4734, 2147483648
    %v5243 = vxor.u32 %v4736, 2147483648
    %v5244 = vxor.u32 %v4075, 2147483648
    %v5245 = vxor.u32 %v4077, 2147483648
    %v5246 = vxor.u32 %v4738, 2147483648
    %v5247 = vxor.u32 %v4740, 2147483648
    %v5248 = vxor.u32 %v4081, 2147483648
    %v5249 = vxor.u32 %v4083, 2147483648
    %v5250 = vxor.u32 %v4744, 2147483648
    %v5251 = vxor.u32 %v4746, 2147483648
    %v5252 = vxor.u32 %v4085, 2147483648
    %v5253 = vxor.u32 %v4087, 2147483648
    %v5254 = vxor.u32 %v4748, 2147483648
    %v5255 = vxor.u32 %v4750, 2147483648
    %v5256 = vmul.f32 %v4752, 1.442695
    %v5257 = vpow.pop %v5256
    %v5258 = vmul.f32 %v4753, 1.442695
    %v5259 = vpow.pop %v5258
    %v5260 = vmul.f32 %v4754, 1.442695
    %v5261 = vpow.pop %v5260
    %v5262 = vmul.f32 %v4755, 1.442695
    %v5263 = vpow.pop %v5262
    %v5264 = vmul.f32 %v4756, 1.442695
    %v5265 = vpow.pop %v5264
    %v5266 = vmul.f32 %v4757, 1.442695
    %v5267 = vpow.pop %v5266
    %v5268 = vmul.f32 %v4758, 1.442695
    %v5269 = vpow.pop %v5268
    %v5270 = vmul.f32 %v4759, 1.442695
    %v5271 = vpow.pop %v5270
    %v5272 = vmul.f32 %v4760, 1.442695
    %v5273 = vpow.pop %v5272
    %v5274 = vmul.f32 %v4761, 1.442695
    %v5275 = vpow.pop %v5274
    %v5276 = vmul.f32 %v4762, 1.442695
    %v5277 = vpow.pop %v5276
    %v5278 = vmul.f32 %v4763, 1.442695
    %v5279 = vpow.pop %v5278
    %v5280 = vmul.f32 %v4764, 1.442695
    %v5281 = vpow.pop %v5280
    %v5282 = vmul.f32 %v4765, 1.442695
    %v5283 = vpow.pop %v5282
    %v5284 = vmul.f32 %v4766, 1.442695
    %v5285 = vpow.pop %v5284
    %v5286 = vmul.f32 %v4767, 1.442695
    %v5287 = vpow.pop %v5286
    %v5288 = vmul.f32 %v4768, 1.442695
    %v5289 = vpow.pop %v5288
    %v5290 = vmul.f32 %v4769, 1.442695
    %v5291 = vpow.pop %v5290
    %v5292 = vmul.f32 %v4770, 1.442695
    %v5293 = vpow.pop %v5292
    %v5294 = vmul.f32 %v4771, 1.442695
    %v5295 = vpow.pop %v5294
    %v5296 = vmul.f32 %v4772, 1.442695
    %v5297 = vpow.pop %v5296
    %v5298 = vmul.f32 %v4773, 1.442695
    %v5299 = vpow.pop %v5298
    %v5300 = vmul.f32 %v4774, 1.442695
    %v5301 = vpow.pop %v5300
    %v5302 = vmul.f32 %v4775, 1.442695
    %v5303 = vpow.pop %v5302
    %v5304 = vmul.f32 %v4776, 1.442695
    %v5305 = vpow.pop %v5304
    %v5306 = vmul.f32 %v4777, 1.442695
    %v5307 = vpow.pop %v5306
    %v5308 = vmul.f32 %v4778, 1.442695
    %v5309 = vpow.pop %v5308
    %v5310 = vmul.f32 %v4779, 1.442695
    %v5311 = vpow.pop %v5310
    %v5312 = vmul.f32 %v4780, 1.442695
    %v5313 = vpow.pop %v5312
    %v5314 = vmul.f32 %v4781, 1.442695
    %v5315 = vpow.pop %v5314
    %v5316 = vmul.f32 %v4782, 1.442695
    %v5317 = vpow.pop %v5316
    %v5318 = vmul.f32 %v4783, 1.442695
    %v5319 = vpow.pop %v5318
    %v5320 = vmul.f32 %v4784, 1.442695
    %v5321 = vpow.pop %v5320
    %v5322 = vmul.f32 %v4785, 1.442695
    %v5323 = vpow.pop %v5322
    %v5324 = vmul.f32 %v4786, 1.442695
    %v5325 = vpow.pop %v5324
    %v5326 = vmul.f32 %v4787, 1.442695
    %v5327 = vpow.pop %v5326
    %v5328 = vmul.f32 %v4788, 1.442695
    %v5329 = vpow.pop %v5328
    %v5330 = vmul.f32 %v4789, 1.442695
    %v5331 = vpow.pop %v5330
    %v5332 = vmul.f32 %v4790, 1.442695
    %v5333 = vpow.pop %v5332
    %v5334 = vmul.f32 %v4791, 1.442695
    %v5335 = vpow.pop %v5334
    %v5336 = vmul.f32 %v4792, 1.442695
    %v5337 = vpow.pop %v5336
    %v5338 = vmul.f32 %v4793, 1.442695
    %v5339 = vpow.pop %v5338
    %v5340 = vmul.f32 %v4794, 1.442695
    %v5341 = vpow.pop %v5340
    %v5342 = vmul.f32 %v4795, 1.442695
    %v5343 = vpow.pop %v5342
    %v5344 = vmul.f32 %v4796, 1.442695
    %v5345 = vpow.pop %v5344
    %v5346 = vmul.f32 %v4797, 1.442695
    %v5347 = vpow.pop %v5346
    %v5348 = vmul.f32 %v4798, 1.442695
    %v5349 = vpow.pop %v5348
    %v5350 = vmul.f32 %v4799, 1.442695
    %v5351 = vpow.pop %v5350
    %v5352 = vmul.f32 %v4800, 1.442695
    %v5353 = vpow.pop %v5352
    %v5354 = vmul.f32 %v4801, 1.442695
    %v5355 = vpow.pop %v5354
    %v5356 = vmul.f32 %v4802, 1.442695
    %v5357 = vpow.pop %v5356
    %v5358 = vmul.f32 %v4803, 1.442695
    %v5359 = vpow.pop %v5358
    %v5360 = vmul.f32 %v4804, 1.442695
    %v5361 = vpow.pop %v5360
    %v5362 = vmul.f32 %v4805, 1.442695
    %v5363 = vpow.pop %v5362
    %v5364 = vmul.f32 %v4806, 1.442695
    %v5365 = vpow.pop %v5364
    %v5366 = vmul.f32 %v4807, 1.442695
    %v5367 = vpow.pop %v5366
    %v5368 = vmul.f32 %v4808, 1.442695
    %v5369 = vpow.pop %v5368
    %v5370 = vmul.f32 %v4809, 1.442695
    %v5371 = vpow.pop %v5370
    %v5372 = vmul.f32 %v4810, 1.442695
    %v5373 = vpow.pop %v5372
    %v5374 = vmul.f32 %v4811, 1.442695
    %v5375 = vpow.pop %v5374
    %v5376 = vmul.f32 %v4812, 1.442695
    %v5377 = vpow.pop %v5376
    %v5378 = vmul.f32 %v4813, 1.442695
    %v5379 = vpow.pop %v5378
    %v5380 = vmul.f32 %v4814, 1.442695
    %v5381 = vpow.pop %v5380
    %v5382 = vmul.f32 %v4815, 1.442695
    %v5383 = vpow.pop %v5382
    %v5384 = vmul.f32 %v4816, 1.442695
    %v5385 = vpow.pop %v5384
    %v5386 = vmul.f32 %v4817, 1.442695
    %v5387 = vpow.pop %v5386
    %v5388 = vmul.f32 %v4818, 1.442695
    %v5389 = vpow.pop %v5388
    %v5390 = vmul.f32 %v4819, 1.442695
    %v5391 = vpow.pop %v5390
    %v5392 = vmul.f32 %v4820, 1.442695
    %v5393 = vpow.pop %v5392
    %v5394 = vmul.f32 %v4821, 1.442695
    %v5395 = vpow.pop %v5394
    %v5396 = vmul.f32 %v4822, 1.442695
    %v5397 = vpow.pop %v5396
    %v5398 = vmul.f32 %v4823, 1.442695
    %v5399 = vpow.pop %v5398
    %v5400 = vmul.f32 %v4824, 1.442695
    %v5401 = vpow.pop %v5400
    %v5402 = vmul.f32 %v4825, 1.442695
    %v5403 = vpow.pop %v5402
    %v5404 = vmul.f32 %v4826, 1.442695
    %v5405 = vpow.pop %v5404
    %v5406 = vmul.f32 %v4827, 1.442695
    %v5407 = vpow.pop %v5406
    %v5408 = vmul.f32 %v4828, 1.442695
    %v5409 = vpow.pop %v5408
    %v5410 = vmul.f32 %v4829, 1.442695
    %v5411 = vpow.pop %v5410
    %v5412 = vmul.f32 %v4830, 1.442695
    %v5413 = vpow.pop %v5412
    %v5414 = vmul.f32 %v4831, 1.442695
    %v5415 = vpow.pop %v5414
    %v5416 = vmul.f32 %v4832, 1.442695
    %v5417 = vpow.pop %v5416
    %v5418 = vmul.f32 %v4833, 1.442695
    %v5419 = vpow.pop %v5418
    %v5420 = vmul.f32 %v4834, 1.442695
    %v5421 = vpow.pop %v5420
    %v5422 = vmul.f32 %v4835, 1.442695
    %v5423 = vpow.pop %v5422
    %v5424 = vmul.f32 %v4836, 1.442695
    %v5425 = vpow.pop %v5424
    %v5426 = vmul.f32 %v4837, 1.442695
    %v5427 = vpow.pop %v5426
    %v5428 = vmul.f32 %v4838, 1.442695
    %v5429 = vpow.pop %v5428
    %v5430 = vmul.f32 %v4839, 1.442695
    %v5431 = vpow.pop %v5430
    %v5432 = vmul.f32 %v4840, 1.442695
    %v5433 = vpow.pop %v5432
    %v5434 = vmul.f32 %v4841, 1.442695
    %v5435 = vpow.pop %v5434
    %v5436 = vmul.f32 %v4842, 1.442695
    %v5437 = vpow.pop %v5436
    %v5438 = vmul.f32 %v4843, 1.442695
    %v5439 = vpow.pop %v5438
    %v5440 = vmul.f32 %v4844, 1.442695
    %v5441 = vpow.pop %v5440
    %v5442 = vmul.f32 %v4845, 1.442695
    %v5443 = vpow.pop %v5442
    %v5444 = vmul.f32 %v4846, 1.442695
    %v5445 = vpow.pop %v5444
    %v5446 = vmul.f32 %v4847, 1.442695
    %v5447 = vpow.pop %v5446
    %v5448 = vmul.f32 %v4848, 1.442695
    %v5449 = vpow.pop %v5448
    %v5450 = vmul.f32 %v4849, 1.442695
    %v5451 = vpow.pop %v5450
    %v5452 = vmul.f32 %v4850, 1.442695
    %v5453 = vpow.pop %v5452
    %v5454 = vmul.f32 %v4851, 1.442695
    %v5455 = vpow.pop %v5454
    %v5456 = vmul.f32 %v4852, 1.442695
    %v5457 = vpow.pop %v5456
    %v5458 = vmul.f32 %v4853, 1.442695
    %v5459 = vpow.pop %v5458
    %v5460 = vmul.f32 %v4854, 1.442695
    %v5461 = vpow.pop %v5460
    %v5462 = vmul.f32 %v4855, 1.442695
    %v5463 = vpow.pop %v5462
    %v5464 = vmul.f32 %v4856, 1.442695
    %v5465 = vpow.pop %v5464
    %v5466 = vmul.f32 %v4857, 1.442695
    %v5467 = vpow.pop %v5466
    %v5468 = vmul.f32 %v4858, 1.442695
    %v5469 = vpow.pop %v5468
    %v5470 = vmul.f32 %v4859, 1.442695
    %v5471 = vpow.pop %v5470
    %v5472 = vmul.f32 %v4860, 1.442695
    %v5473 = vpow.pop %v5472
    %v5474 = vmul.f32 %v4861, 1.442695
    %v5475 = vpow.pop %v5474
    %v5476 = vmul.f32 %v4862, 1.442695
    %v5477 = vpow.pop %v5476
    %v5478 = vmul.f32 %v4863, 1.442695
    %v5479 = vpow.pop %v5478
    %v5480 = vmul.f32 %v4864, 1.442695
    %v5481 = vpow.pop %v5480
    %v5482 = vmul.f32 %v4865, 1.442695
    %v5483 = vpow.pop %v5482
    %v5484 = vmul.f32 %v4866, 1.442695
    %v5485 = vpow.pop %v5484
    %v5486 = vmul.f32 %v4867, 1.442695
    %v5487 = vpow.pop %v5486
    %v5488 = vmul.f32 %v4868, 1.442695
    %v5489 = vpow.pop %v5488
    %v5490 = vmul.f32 %v4869, 1.442695
    %v5491 = vpow.pop %v5490
    %v5492 = vmul.f32 %v4870, 1.442695
    %v5493 = vpow.pop %v5492
    %v5494 = vmul.f32 %v4871, 1.442695
    %v5495 = vpow.pop %v5494
    %v5496 = vmul.f32 %v4872, 1.442695
    %v5497 = vpow.pop %v5496
    %v5498 = vmul.f32 %v4873, 1.442695
    %v5499 = vpow.pop %v5498
    %v5500 = vmul.f32 %v4874, 1.442695
    %v5501 = vpow.pop %v5500
    %v5502 = vmul.f32 %v4875, 1.442695
    %v5503 = vpow.pop %v5502
    %v5504 = vmul.f32 %v4876, 1.442695
    %v5505 = vpow.pop %v5504
    %v5506 = vmul.f32 %v4877, 1.442695
    %v5507 = vpow.pop %v5506
    %v5508 = vmul.f32 %v4878, 1.442695
    %v5509 = vpow.pop %v5508
    %v5510 = vmul.f32 %v4879, 1.442695
    %v5511 = vpow.pop %v5510
    %v5512 = vmul.f32 %v4880, 1.442695
    %v5513 = vpow.pop %v5512
    %v5514 = vmul.f32 %v4881, 1.442695
    %v5515 = vpow.pop %v5514
    %v5516 = vmul.f32 %v4882, 1.442695
    %v5517 = vpow.pop %v5516
    %v5518 = vmul.f32 %v4883, 1.442695
    %v5519 = vpow.pop %v5518
    %v5520 = vmul.f32 %v4884, 1.442695
    %v5521 = vpow.pop %v5520
    %v5522 = vmul.f32 %v4885, 1.442695
    %v5523 = vpow.pop %v5522
    %v5524 = vmul.f32 %v4886, 1.442695
    %v5525 = vpow.pop %v5524
    %v5526 = vmul.f32 %v4887, 1.442695
    %v5527 = vpow.pop %v5526
    %v5528 = vmul.f32 %v4888, 1.442695
    %v5529 = vpow.pop %v5528
    %v5530 = vmul.f32 %v4889, 1.442695
    %v5531 = vpow.pop %v5530
    %v5532 = vmul.f32 %v4890, 1.442695
    %v5533 = vpow.pop %v5532
    %v5534 = vmul.f32 %v4891, 1.442695
    %v5535 = vpow.pop %v5534
    %v5536 = vmul.f32 %v4892, 1.442695
    %v5537 = vpow.pop %v5536
    %v5538 = vmul.f32 %v4893, 1.442695
    %v5539 = vpow.pop %v5538
    %v5540 = vmul.f32 %v4894, 1.442695
    %v5541 = vpow.pop %v5540
    %v5542 = vmul.f32 %v4895, 1.442695
    %v5543 = vpow.pop %v5542
    %v5544 = vmul.f32 %v4896, 1.442695
    %v5545 = vpow.pop %v5544
    %v5546 = vmul.f32 %v4897, 1.442695
    %v5547 = vpow.pop %v5546
    %v5548 = vmul.f32 %v4898, 1.442695
    %v5549 = vpow.pop %v5548
    %v5550 = vmul.f32 %v4899, 1.442695
    %v5551 = vpow.pop %v5550
    %v5552 = vmul.f32 %v4900, 1.442695
    %v5553 = vpow.pop %v5552
    %v5554 = vmul.f32 %v4901, 1.442695
    %v5555 = vpow.pop %v5554
    %v5556 = vmul.f32 %v4902, 1.442695
    %v5557 = vpow.pop %v5556
    %v5558 = vmul.f32 %v4903, 1.442695
    %v5559 = vpow.pop %v5558
    %v5560 = vmul.f32 %v4904, 1.442695
    %v5561 = vpow.pop %v5560
    %v5562 = vmul.f32 %v4905, 1.442695
    %v5563 = vpow.pop %v5562
    %v5564 = vmul.f32 %v4906, 1.442695
    %v5565 = vpow.pop %v5564
    %v5566 = vmul.f32 %v4907, 1.442695
    %v5567 = vpow.pop %v5566
    %v5568 = vmul.f32 %v4908, 1.442695
    %v5569 = vpow.pop %v5568
    %v5570 = vmul.f32 %v4909, 1.442695
    %v5571 = vpow.pop %v5570
    %v5572 = vmul.f32 %v4910, 1.442695
    %v5573 = vpow.pop %v5572
    %v5574 = vmul.f32 %v4911, 1.442695
    %v5575 = vpow.pop %v5574
    %v5576 = vmul.f32 %v4912, 1.442695
    %v5577 = vpow.pop %v5576
    %v5578 = vmul.f32 %v4913, 1.442695
    %v5579 = vpow.pop %v5578
    %v5580 = vmul.f32 %v4914, 1.442695
    %v5581 = vpow.pop %v5580
    %v5582 = vmul.f32 %v4915, 1.442695
    %v5583 = vpow.pop %v5582
    %v5584 = vmul.f32 %v4916, 1.442695
    %v5585 = vpow.pop %v5584
    %v5586 = vmul.f32 %v4917, 1.442695
    %v5587 = vpow.pop %v5586
    %v5588 = vmul.f32 %v4918, 1.442695
    %v5589 = vpow.pop %v5588
    %v5590 = vmul.f32 %v4919, 1.442695
    %v5591 = vpow.pop %v5590
    %v5592 = vmul.f32 %v4920, 1.442695
    %v5593 = vpow.pop %v5592
    %v5594 = vmul.f32 %v4921, 1.442695
    %v5595 = vpow.pop %v5594
    %v5596 = vmul.f32 %v4922, 1.442695
    %v5597 = vpow.pop %v5596
    %v5598 = vmul.f32 %v4923, 1.442695
    %v5599 = vpow.pop %v5598
    %v5600 = vmul.f32 %v4924, 1.442695
    %v5601 = vpow.pop %v5600
    %v5602 = vmul.f32 %v4925, 1.442695
    %v5603 = vpow.pop %v5602
    %v5604 = vmul.f32 %v4926, 1.442695
    %v5605 = vpow.pop %v5604
    %v5606 = vmul.f32 %v4927, 1.442695
    %v5607 = vpow.pop %v5606
    %v5608 = vmul.f32 %v4928, 1.442695
    %v5609 = vpow.pop %v5608
    %v5610 = vmul.f32 %v4929, 1.442695
    %v5611 = vpow.pop %v5610
    %v5612 = vmul.f32 %v4930, 1.442695
    %v5613 = vpow.pop %v5612
    %v5614 = vmul.f32 %v4931, 1.442695
    %v5615 = vpow.pop %v5614
    %v5616 = vmul.f32 %v4932, 1.442695
    %v5617 = vpow.pop %v5616
    %v5618 = vmul.f32 %v4933, 1.442695
    %v5619 = vpow.pop %v5618
    %v5620 = vmul.f32 %v4934, 1.442695
    %v5621 = vpow.pop %v5620
    %v5622 = vmul.f32 %v4935, 1.442695
    %v5623 = vpow.pop %v5622
    %v5624 = vmul.f32 %v4936, 1.442695
    %v5625 = vpow.pop %v5624
    %v5626 = vmul.f32 %v4937, 1.442695
    %v5627 = vpow.pop %v5626
    %v5628 = vmul.f32 %v4938, 1.442695
    %v5629 = vpow.pop %v5628
    %v5630 = vmul.f32 %v4939, 1.442695
    %v5631 = vpow.pop %v5630
    %v5632 = vmul.f32 %v4940, 1.442695
    %v5633 = vpow.pop %v5632
    %v5634 = vmul.f32 %v4941, 1.442695
    %v5635 = vpow.pop %v5634
    %v5636 = vmul.f32 %v4942, 1.442695
    %v5637 = vpow.pop %v5636
    %v5638 = vmul.f32 %v4943, 1.442695
    %v5639 = vpow.pop %v5638
    %v5640 = vmul.f32 %v4944, 1.442695
    %v5641 = vpow.pop %v5640
    %v5642 = vmul.f32 %v4945, 1.442695
    %v5643 = vpow.pop %v5642
    %v5644 = vmul.f32 %v4946, 1.442695
    %v5645 = vpow.pop %v5644
    %v5646 = vmul.f32 %v4947, 1.442695
    %v5647 = vpow.pop %v5646
    %v5648 = vmul.f32 %v4948, 1.442695
    %v5649 = vpow.pop %v5648
    %v5650 = vmul.f32 %v4949, 1.442695
    %v5651 = vpow.pop %v5650
    %v5652 = vmul.f32 %v4950, 1.442695
    %v5653 = vpow.pop %v5652
    %v5654 = vmul.f32 %v4951, 1.442695
    %v5655 = vpow.pop %v5654
    %v5656 = vmul.f32 %v4952, 1.442695
    %v5657 = vpow.pop %v5656
    %v5658 = vmul.f32 %v4953, 1.442695
    %v5659 = vpow.pop %v5658
    %v5660 = vmul.f32 %v4954, 1.442695
    %v5661 = vpow.pop %v5660
    %v5662 = vmul.f32 %v4955, 1.442695
    %v5663 = vpow.pop %v5662
    %v5664 = vmul.f32 %v4956, 1.442695
    %v5665 = vpow.pop %v5664
    %v5666 = vmul.f32 %v4957, 1.442695
    %v5667 = vpow.pop %v5666
    %v5668 = vmul.f32 %v4958, 1.442695
    %v5669 = vpow.pop %v5668
    %v5670 = vmul.f32 %v4959, 1.442695
    %v5671 = vpow.pop %v5670
    %v5672 = vmul.f32 %v4960, 1.442695
    %v5673 = vpow.pop %v5672
    %v5674 = vmul.f32 %v4961, 1.442695
    %v5675 = vpow.pop %v5674
    %v5676 = vmul.f32 %v4962, 1.442695
    %v5677 = vpow.pop %v5676
    %v5678 = vmul.f32 %v4963, 1.442695
    %v5679 = vpow.pop %v5678
    %v5680 = vmul.f32 %v4964, 1.442695
    %v5681 = vpow.pop %v5680
    %v5682 = vmul.f32 %v4965, 1.442695
    %v5683 = vpow.pop %v5682
    %v5684 = vmul.f32 %v4966, 1.442695
    %v5685 = vpow.pop %v5684
    %v5686 = vmul.f32 %v4967, 1.442695
    %v5687 = vpow.pop %v5686
    %v5688 = vmul.f32 %v4968, 1.442695
    %v5689 = vpow.pop %v5688
    %v5690 = vmul.f32 %v4969, 1.442695
    %v5691 = vpow.pop %v5690
    %v5692 = vmul.f32 %v4970, 1.442695
    %v5693 = vpow.pop %v5692
    %v5694 = vmul.f32 %v4971, 1.442695
    %v5695 = vpow.pop %v5694
    %v5696 = vmul.f32 %v4972, 1.442695
    %v5697 = vpow.pop %v5696
    %v5698 = vmul.f32 %v4973, 1.442695
    %v5699 = vpow.pop %v5698
    %v5700 = vmul.f32 %v4974, 1.442695
    %v5701 = vpow.pop %v5700
    %v5702 = vmul.f32 %v4975, 1.442695
    %v5703 = vpow.pop %v5702
    %v5704 = vmul.f32 %v4976, 1.442695
    %v5705 = vpow.pop %v5704
    %v5706 = vmul.f32 %v4977, 1.442695
    %v5707 = vpow.pop %v5706
    %v5708 = vmul.f32 %v4978, 1.442695
    %v5709 = vpow.pop %v5708
    %v5710 = vmul.f32 %v4979, 1.442695
    %v5711 = vpow.pop %v5710
    %v5712 = vmul.f32 %v4980, 1.442695
    %v5713 = vpow.pop %v5712
    %v5714 = vmul.f32 %v4981, 1.442695
    %v5715 = vpow.pop %v5714
    %v5716 = vmul.f32 %v4982, 1.442695
    %v5717 = vpow.pop %v5716
    %v5718 = vmul.f32 %v4983, 1.442695
    %v5719 = vpow.pop %v5718
    %v5720 = vmul.f32 %v4984, 1.442695
    %v5721 = vpow.pop %v5720
    %v5722 = vmul.f32 %v4985, 1.442695
    %v5723 = vpow.pop %v5722
    %v5724 = vmul.f32 %v4986, 1.442695
    %v5725 = vpow.pop %v5724
    %v5726 = vmul.f32 %v4987, 1.442695
    %v5727 = vpow.pop %v5726
    %v5728 = vmul.f32 %v4988, 1.442695
    %v5729 = vpow.pop %v5728
    %v5730 = vmul.f32 %v4989, 1.442695
    %v5731 = vpow.pop %v5730
    %v5732 = vmul.f32 %v4990, 1.442695
    %v5733 = vpow.pop %v5732
    %v5734 = vmul.f32 %v4991, 1.442695
    %v5735 = vpow.pop %v5734
    %v5736 = vmul.f32 %v4992, 1.442695
    %v5737 = vpow.pop %v5736
    %v5738 = vmul.f32 %v4993, 1.442695
    %v5739 = vpow.pop %v5738
    %v5740 = vmul.f32 %v4994, 1.442695
    %v5741 = vpow.pop %v5740
    %v5742 = vmul.f32 %v4995, 1.442695
    %v5743 = vpow.pop %v5742
    %v5744 = vmul.f32 %v4996, 1.442695
    %v5745 = vpow.pop %v5744
    %v5746 = vmul.f32 %v4997, 1.442695
    %v5747 = vpow.pop %v5746
    %v5748 = vmul.f32 %v4998, 1.442695
    %v5749 = vpow.pop %v5748
    %v5750 = vmul.f32 %v4999, 1.442695
    %v5751 = vpow.pop %v5750
    %v5752 = vmul.f32 %v5000, 1.442695
    %v5753 = vpow.pop %v5752
    %v5754 = vmul.f32 %v5001, 1.442695
    %v5755 = vpow.pop %v5754
    %v5756 = vmul.f32 %v5002, 1.442695
    %v5757 = vpow.pop %v5756
    %v5758 = vmul.f32 %v5003, 1.442695
    %v5759 = vpow.pop %v5758
    %v5760 = vmul.f32 %v5004, 1.442695
    %v5761 = vpow.pop %v5760
    %v5762 = vmul.f32 %v5005, 1.442695
    %v5763 = vpow.pop %v5762
    %v5764 = vmul.f32 %v5006, 1.442695
    %v5765 = vpow.pop %v5764
    %v5766 = vmul.f32 %v5007, 1.442695
    %v5767 = vpow.pop %v5766
    %v5768 = vmul.f32 %v5008, 1.442695
    %v5769 = vpow.pop %v5768
    %v5770 = vmul.f32 %v5009, 1.442695
    %v5771 = vpow.pop %v5770
    %v5772 = vmul.f32 %v5010, 1.442695
    %v5773 = vpow.pop %v5772
    %v5774 = vmul.f32 %v5011, 1.442695
    %v5775 = vpow.pop %v5774
    %v5776 = vmul.f32 %v5012, 1.442695
    %v5777 = vpow.pop %v5776
    %v5778 = vmul.f32 %v5013, 1.442695
    %v5779 = vpow.pop %v5778
    %v5780 = vmul.f32 %v5014, 1.442695
    %v5781 = vpow.pop %v5780
    %v5782 = vmul.f32 %v5015, 1.442695
    %v5783 = vpow.pop %v5782
    %v5784 = vmul.f32 %v5016, 1.442695
    %v5785 = vpow.pop %v5784
    %v5786 = vmul.f32 %v5017, 1.442695
    %v5787 = vpow.pop %v5786
    %v5788 = vmul.f32 %v5018, 1.442695
    %v5789 = vpow.pop %v5788
    %v5790 = vmul.f32 %v5019, 1.442695
    %v5791 = vpow.pop %v5790
    %v5792 = vmul.f32 %v5020, 1.442695
    %v5793 = vpow.pop %v5792
    %v5794 = vmul.f32 %v5021, 1.442695
    %v5795 = vpow.pop %v5794
    %v5796 = vmul.f32 %v5022, 1.442695
    %v5797 = vpow.pop %v5796
    %v5798 = vmul.f32 %v5023, 1.442695
    %v5799 = vpow.pop %v5798
    %v5800 = vmul.f32 %v5024, 1.442695
    %v5801 = vpow.pop %v5800
    %v5802 = vmul.f32 %v5025, 1.442695
    %v5803 = vpow.pop %v5802
    %v5804 = vmul.f32 %v5026, 1.442695
    %v5805 = vpow.pop %v5804
    %v5806 = vmul.f32 %v5027, 1.442695
    %v5807 = vpow.pop %v5806
    %v5808 = vmul.f32 %v5028, 1.442695
    %v5809 = vpow.pop %v5808
    %v5810 = vmul.f32 %v5029, 1.442695
    %v5811 = vpow.pop %v5810
    %v5812 = vmul.f32 %v5030, 1.442695
    %v5813 = vpow.pop %v5812
    %v5814 = vmul.f32 %v5031, 1.442695
    %v5815 = vpow.pop %v5814
    %v5816 = vmul.f32 %v5032, 1.442695
    %v5817 = vpow.pop %v5816
    %v5818 = vmul.f32 %v5033, 1.442695
    %v5819 = vpow.pop %v5818
    %v5820 = vmul.f32 %v5034, 1.442695
    %v5821 = vpow.pop %v5820
    %v5822 = vmul.f32 %v5035, 1.442695
    %v5823 = vpow.pop %v5822
    %v5824 = vmul.f32 %v5036, 1.442695
    %v5825 = vpow.pop %v5824
    %v5826 = vmul.f32 %v5037, 1.442695
    %v5827 = vpow.pop %v5826
    %v5828 = vmul.f32 %v5038, 1.442695
    %v5829 = vpow.pop %v5828
    %v5830 = vmul.f32 %v5039, 1.442695
    %v5831 = vpow.pop %v5830
    %v5832 = vmul.f32 %v5040, 1.442695
    %v5833 = vpow.pop %v5832
    %v5834 = vmul.f32 %v5041, 1.442695
    %v5835 = vpow.pop %v5834
    %v5836 = vmul.f32 %v5042, 1.442695
    %v5837 = vpow.pop %v5836
    %v5838 = vmul.f32 %v5043, 1.442695
    %v5839 = vpow.pop %v5838
    %v5840 = vmul.f32 %v5044, 1.442695
    %v5841 = vpow.pop %v5840
    %v5842 = vmul.f32 %v5045, 1.442695
    %v5843 = vpow.pop %v5842
    %v5844 = vmul.f32 %v5046, 1.442695
    %v5845 = vpow.pop %v5844
    %v5846 = vmul.f32 %v5047, 1.442695
    %v5847 = vpow.pop %v5846
    %v5848 = vmul.f32 %v5048, 1.442695
    %v5849 = vpow.pop %v5848
    %v5850 = vmul.f32 %v5049, 1.442695
    %v5851 = vpow.pop %v5850
    %v5852 = vmul.f32 %v5050, 1.442695
    %v5853 = vpow.pop %v5852
    %v5854 = vmul.f32 %v5051, 1.442695
    %v5855 = vpow.pop %v5854
    %v5856 = vmul.f32 %v5052, 1.442695
    %v5857 = vpow.pop %v5856
    %v5858 = vmul.f32 %v5053, 1.442695
    %v5859 = vpow.pop %v5858
    %v5860 = vmul.f32 %v5054, 1.442695
    %v5861 = vpow.pop %v5860
    %v5862 = vmul.f32 %v5055, 1.442695
    %v5863 = vpow.pop %v5862
    %v5864 = vmul.f32 %v5056, 1.442695
    %v5865 = vpow.pop %v5864
    %v5866 = vmul.f32 %v5057, 1.442695
    %v5867 = vpow.pop %v5866
    %v5868 = vmul.f32 %v5058, 1.442695
    %v5869 = vpow.pop %v5868
    %v5870 = vmul.f32 %v5059, 1.442695
    %v5871 = vpow.pop %v5870
    %v5872 = vmul.f32 %v5060, 1.442695
    %v5873 = vpow.pop %v5872
    %v5874 = vmul.f32 %v5061, 1.442695
    %v5875 = vpow.pop %v5874
    %v5876 = vmul.f32 %v5062, 1.442695
    %v5877 = vpow.pop %v5876
    %v5878 = vmul.f32 %v5063, 1.442695
    %v5879 = vpow.pop %v5878
    %v5880 = vmul.f32 %v5064, 1.442695
    %v5881 = vpow.pop %v5880
    %v5882 = vmul.f32 %v5065, 1.442695
    %v5883 = vpow.pop %v5882
    %v5884 = vmul.f32 %v5066, 1.442695
    %v5885 = vpow.pop %v5884
    %v5886 = vmul.f32 %v5067, 1.442695
    %v5887 = vpow.pop %v5886
    %v5888 = vmul.f32 %v5068, 1.442695
    %v5889 = vpow.pop %v5888
    %v5890 = vmul.f32 %v5069, 1.442695
    %v5891 = vpow.pop %v5890
    %v5892 = vmul.f32 %v5070, 1.442695
    %v5893 = vpow.pop %v5892
    %v5894 = vmul.f32 %v5071, 1.442695
    %v5895 = vpow.pop %v5894
    %v5896 = vmul.f32 %v5072, 1.442695
    %v5897 = vpow.pop %v5896
    %v5898 = vmul.f32 %v5073, 1.442695
    %v5899 = vpow.pop %v5898
    %v5900 = vmul.f32 %v5074, 1.442695
    %v5901 = vpow.pop %v5900
    %v5902 = vmul.f32 %v5075, 1.442695
    %v5903 = vpow.pop %v5902
    %v5904 = vmul.f32 %v5076, 1.442695
    %v5905 = vpow.pop %v5904
    %v5906 = vmul.f32 %v5077, 1.442695
    %v5907 = vpow.pop %v5906
    %v5908 = vmul.f32 %v5078, 1.442695
    %v5909 = vpow.pop %v5908
    %v5910 = vmul.f32 %v5079, 1.442695
    %v5911 = vpow.pop %v5910
    %v5912 = vmul.f32 %v5080, 1.442695
    %v5913 = vpow.pop %v5912
    %v5914 = vmul.f32 %v5081, 1.442695
    %v5915 = vpow.pop %v5914
    %v5916 = vmul.f32 %v5082, 1.442695
    %v5917 = vpow.pop %v5916
    %v5918 = vmul.f32 %v5083, 1.442695
    %v5919 = vpow.pop %v5918
    %v5920 = vmul.f32 %v5084, 1.442695
    %v5921 = vpow.pop %v5920
    %v5922 = vmul.f32 %v5085, 1.442695
    %v5923 = vpow.pop %v5922
    %v5924 = vmul.f32 %v5086, 1.442695
    %v5925 = vpow.pop %v5924
    %v5926 = vmul.f32 %v5087, 1.442695
    %v5927 = vpow.pop %v5926
    %v5928 = vmul.f32 %v5088, 1.442695
    %v5929 = vpow.pop %v5928
    %v5930 = vmul.f32 %v5089, 1.442695
    %v5931 = vpow.pop %v5930
    %v5932 = vmul.f32 %v5090, 1.442695
    %v5933 = vpow.pop %v5932
    %v5934 = vmul.f32 %v5091, 1.442695
    %v5935 = vpow.pop %v5934
    %v5936 = vmul.f32 %v5092, 1.442695
    %v5937 = vpow.pop %v5936
    %v5938 = vmul.f32 %v5093, 1.442695
    %v5939 = vpow.pop %v5938
    %v5940 = vmul.f32 %v5094, 1.442695
    %v5941 = vpow.pop %v5940
    %v5942 = vmul.f32 %v5095, 1.442695
    %v5943 = vpow.pop %v5942
    %v5944 = vmul.f32 %v5096, 1.442695
    %v5945 = vpow.pop %v5944
    %v5946 = vmul.f32 %v5097, 1.442695
    %v5947 = vpow.pop %v5946
    %v5948 = vmul.f32 %v5098, 1.442695
    %v5949 = vpow.pop %v5948
    %v5950 = vmul.f32 %v5099, 1.442695
    %v5951 = vpow.pop %v5950
    %v5952 = vmul.f32 %v5100, 1.442695
    %v5953 = vpow.pop %v5952
    %v5954 = vmul.f32 %v5101, 1.442695
    %v5955 = vpow.pop %v5954
    %v5956 = vmul.f32 %v5102, 1.442695
    %v5957 = vpow.pop %v5956
    %v5958 = vmul.f32 %v5103, 1.442695
    %v5959 = vpow.pop %v5958
    %v5960 = vmul.f32 %v5104, 1.442695
    %v5961 = vpow.pop %v5960
    %v5962 = vmul.f32 %v5105, 1.442695
    %v5963 = vpow.pop %v5962
    %v5964 = vmul.f32 %v5106, 1.442695
    %v5965 = vpow.pop %v5964
    %v5966 = vmul.f32 %v5107, 1.442695
    %v5967 = vpow.pop %v5966
    %v5968 = vmul.f32 %v5108, 1.442695
    %v5969 = vpow.pop %v5968
    %v5970 = vmul.f32 %v5109, 1.442695
    %v5971 = vpow.pop %v5970
    %v5972 = vmul.f32 %v5110, 1.442695
    %v5973 = vpow.pop %v5972
    %v5974 = vmul.f32 %v5111, 1.442695
    %v5975 = vpow.pop %v5974
    %v5976 = vmul.f32 %v5112, 1.442695
    %v5977 = vpow.pop %v5976
    %v5978 = vmul.f32 %v5113, 1.442695
    %v5979 = vpow.pop %v5978
    %v5980 = vmul.f32 %v5114, 1.442695
    %v5981 = vpow.pop %v5980
    %v5982 = vmul.f32 %v5115, 1.442695
    %v5983 = vpow.pop %v5982
    %v5984 = vmul.f32 %v5116, 1.442695
    %v5985 = vpow.pop %v5984
    %v5986 = vmul.f32 %v5117, 1.442695
    %v5987 = vpow.pop %v5986
    %v5988 = vmul.f32 %v5118, 1.442695
    %v5989 = vpow.pop %v5988
    %v5990 = vmul.f32 %v5119, 1.442695
    %v5991 = vpow.pop %v5990
    %v5992 = vmul.f32 %v5120, 1.442695
    %v5993 = vpow.pop %v5992
    %v5994 = vmul.f32 %v5121, 1.442695
    %v5995 = vpow.pop %v5994
    %v5996 = vmul.f32 %v5122, 1.442695
    %v5997 = vpow.pop %v5996
    %v5998 = vmul.f32 %v5123, 1.442695
    %v5999 = vpow.pop %v5998
    %v6000 = vmul.f32 %v5124, 1.442695
    %v6001 = vpow.pop %v6000
    %v6002 = vmul.f32 %v5125, 1.442695
    %v6003 = vpow.pop %v6002
    %v6004 = vmul.f32 %v5126, 1.442695
    %v6005 = vpow.pop %v6004
    %v6006 = vmul.f32 %v5127, 1.442695
    %v6007 = vpow.pop %v6006
    %v6008 = vmul.f32 %v5128, 1.442695
    %v6009 = vpow.pop %v6008
    %v6010 = vmul.f32 %v5129, 1.442695
    %v6011 = vpow.pop %v6010
    %v6012 = vmul.f32 %v5130, 1.442695
    %v6013 = vpow.pop %v6012
    %v6014 = vmul.f32 %v5131, 1.442695
    %v6015 = vpow.pop %v6014
    %v6016 = vmul.f32 %v5132, 1.442695
    %v6017 = vpow.pop %v6016
    %v6018 = vmul.f32 %v5133, 1.442695
    %v6019 = vpow.pop %v6018
    %v6020 = vmul.f32 %v5134, 1.442695
    %v6021 = vpow.pop %v6020
    %v6022 = vmul.f32 %v5135, 1.442695
    %v6023 = vpow.pop %v6022
    %v6024 = vmul.f32 %v5136, 1.442695
    %v6025 = vpow.pop %v6024
    %v6026 = vmul.f32 %v5137, 1.442695
    %v6027 = vpow.pop %v6026
    %v6028 = vmul.f32 %v5138, 1.442695
    %v6029 = vpow.pop %v6028
    %v6030 = vmul.f32 %v5139, 1.442695
    %v6031 = vpow.pop %v6030
    %v6032 = vmul.f32 %v5140, 1.442695
    %v6033 = vpow.pop %v6032
    %v6034 = vmul.f32 %v5141, 1.442695
    %v6035 = vpow.pop %v6034
    %v6036 = vmul.f32 %v5142, 1.442695
    %v6037 = vpow.pop %v6036
    %v6038 = vmul.f32 %v5143, 1.442695
    %v6039 = vpow.pop %v6038
    %v6040 = vmul.f32 %v5144, 1.442695
    %v6041 = vpow.pop %v6040
    %v6042 = vmul.f32 %v5145, 1.442695
    %v6043 = vpow.pop %v6042
    %v6044 = vmul.f32 %v5146, 1.442695
    %v6045 = vpow.pop %v6044
    %v6046 = vmul.f32 %v5147, 1.442695
    %v6047 = vpow.pop %v6046
    %v6048 = vmul.f32 %v5148, 1.442695
    %v6049 = vpow.pop %v6048
    %v6050 = vmul.f32 %v5149, 1.442695
    %v6051 = vpow.pop %v6050
    %v6052 = vmul.f32 %v5150, 1.442695
    %v6053 = vpow.pop %v6052
    %v6054 = vmul.f32 %v5151, 1.442695
    %v6055 = vpow.pop %v6054
    %v6056 = vmul.f32 %v5152, 1.442695
    %v6057 = vpow.pop %v6056
    %v6058 = vmul.f32 %v5153, 1.442695
    %v6059 = vpow.pop %v6058
    %v6060 = vmul.f32 %v5154, 1.442695
    %v6061 = vpow.pop %v6060
    %v6062 = vmul.f32 %v5155, 1.442695
    %v6063 = vpow.pop %v6062
    %v6064 = vmul.f32 %v5156, 1.442695
    %v6065 = vpow.pop %v6064
    %v6066 = vmul.f32 %v5157, 1.442695
    %v6067 = vpow.pop %v6066
    %v6068 = vmul.f32 %v5158, 1.442695
    %v6069 = vpow.pop %v6068
    %v6070 = vmul.f32 %v5159, 1.442695
    %v6071 = vpow.pop %v6070
    %v6072 = vmul.f32 %v5160, 1.442695
    %v6073 = vpow.pop %v6072
    %v6074 = vmul.f32 %v5161, 1.442695
    %v6075 = vpow.pop %v6074
    %v6076 = vmul.f32 %v5162, 1.442695
    %v6077 = vpow.pop %v6076
    %v6078 = vmul.f32 %v5163, 1.442695
    %v6079 = vpow.pop %v6078
    %v6080 = vmul.f32 %v5164, 1.442695
    %v6081 = vpow.pop %v6080
    %v6082 = vmul.f32 %v5165, 1.442695
    %v6083 = vpow.pop %v6082
    %v6084 = vmul.f32 %v5166, 1.442695
    %v6085 = vpow.pop %v6084
    %v6086 = vmul.f32 %v5167, 1.442695
    %v6087 = vpow.pop %v6086
    %v6088 = vmul.f32 %v5168, 1.442695
    %v6089 = vpow.pop %v6088
    %v6090 = vmul.f32 %v5169, 1.442695
    %v6091 = vpow.pop %v6090
    %v6092 = vmul.f32 %v5170, 1.442695
    %v6093 = vpow.pop %v6092
    %v6094 = vmul.f32 %v5171, 1.442695
    %v6095 = vpow.pop %v6094
    %v6096 = vmul.f32 %v5172, 1.442695
    %v6097 = vpow.pop %v6096
    %v6098 = vmul.f32 %v5173, 1.442695
    %v6099 = vpow.pop %v6098
    %v6100 = vmul.f32 %v5174, 1.442695
    %v6101 = vpow.pop %v6100
    %v6102 = vmul.f32 %v5175, 1.442695
    %v6103 = vpow.pop %v6102
    %v6104 = vmul.f32 %v5176, 1.442695
    %v6105 = vpow.pop %v6104
    %v6106 = vmul.f32 %v5177, 1.442695
    %v6107 = vpow.pop %v6106
    %v6108 = vmul.f32 %v5178, 1.442695
    %v6109 = vpow.pop %v6108
    %v6110 = vmul.f32 %v5179, 1.442695
    %v6111 = vpow.pop %v6110
    %v6112 = vmul.f32 %v5180, 1.442695
    %v6113 = vpow.pop %v6112
    %v6114 = vmul.f32 %v5181, 1.442695
    %v6115 = vpow.pop %v6114
    %v6116 = vmul.f32 %v5182, 1.442695
    %v6117 = vpow.pop %v6116
    %v6118 = vmul.f32 %v5183, 1.442695
    %v6119 = vpow.pop %v6118
    %v6120 = vmul.f32 %v5184, 1.442695
    %v6121 = vpow.pop %v6120
    %v6122 = vmul.f32 %v5185, 1.442695
    %v6123 = vpow.pop %v6122
    %v6124 = vmul.f32 %v5186, 1.442695
    %v6125 = vpow.pop %v6124
    %v6126 = vmul.f32 %v5187, 1.442695
    %v6127 = vpow.pop %v6126
    %v6128 = vmul.f32 %v5188, 1.442695
    %v6129 = vpow.pop %v6128
    %v6130 = vmul.f32 %v5189, 1.442695
    %v6131 = vpow.pop %v6130
    %v6132 = vmul.f32 %v5190, 1.442695
    %v6133 = vpow.pop %v6132
    %v6134 = vmul.f32 %v5191, 1.442695
    %v6135 = vpow.pop %v6134
    %v6136 = vmul.f32 %v5192, 1.442695
    %v6137 = vpow.pop %v6136
    %v6138 = vmul.f32 %v5193, 1.442695
    %v6139 = vpow.pop %v6138
    %v6140 = vmul.f32 %v5194, 1.442695
    %v6141 = vpow.pop %v6140
    %v6142 = vmul.f32 %v5195, 1.442695
    %v6143 = vpow.pop %v6142
    %v6144 = vmul.f32 %v5196, 1.442695
    %v6145 = vpow.pop %v6144
    %v6146 = vmul.f32 %v5197, 1.442695
    %v6147 = vpow.pop %v6146
    %v6148 = vmul.f32 %v5198, 1.442695
    %v6149 = vpow.pop %v6148
    %v6150 = vmul.f32 %v5199, 1.442695
    %v6151 = vpow.pop %v6150
    %v6152 = vmul.f32 %v5200, 1.442695
    %v6153 = vpow.pop %v6152
    %v6154 = vmul.f32 %v5201, 1.442695
    %v6155 = vpow.pop %v6154
    %v6156 = vmul.f32 %v5202, 1.442695
    %v6157 = vpow.pop %v6156
    %v6158 = vmul.f32 %v5203, 1.442695
    %v6159 = vpow.pop %v6158
    %v6160 = vmul.f32 %v5204, 1.442695
    %v6161 = vpow.pop %v6160
    %v6162 = vmul.f32 %v5205, 1.442695
    %v6163 = vpow.pop %v6162
    %v6164 = vmul.f32 %v5206, 1.442695
    %v6165 = vpow.pop %v6164
    %v6166 = vmul.f32 %v5207, 1.442695
    %v6167 = vpow.pop %v6166
    %v6168 = vmul.f32 %v5208, 1.442695
    %v6169 = vpow.pop %v6168
    %v6170 = vmul.f32 %v5209, 1.442695
    %v6171 = vpow.pop %v6170
    %v6172 = vmul.f32 %v5210, 1.442695
    %v6173 = vpow.pop %v6172
    %v6174 = vmul.f32 %v5211, 1.442695
    %v6175 = vpow.pop %v6174
    %v6176 = vmul.f32 %v5212, 1.442695
    %v6177 = vpow.pop %v6176
    %v6178 = vmul.f32 %v5213, 1.442695
    %v6179 = vpow.pop %v6178
    %v6180 = vmul.f32 %v5214, 1.442695
    %v6181 = vpow.pop %v6180
    %v6182 = vmul.f32 %v5215, 1.442695
    %v6183 = vpow.pop %v6182
    %v6184 = vmul.f32 %v5216, 1.442695
    %v6185 = vpow.pop %v6184
    %v6186 = vmul.f32 %v5217, 1.442695
    %v6187 = vpow.pop %v6186
    %v6188 = vmul.f32 %v5218, 1.442695
    %v6189 = vpow.pop %v6188
    %v6190 = vmul.f32 %v5219, 1.442695
    %v6191 = vpow.pop %v6190
    %v6192 = vmul.f32 %v5220, 1.442695
    %v6193 = vpow.pop %v6192
    %v6194 = vmul.f32 %v5221, 1.442695
    %v6195 = vpow.pop %v6194
    %v6196 = vmul.f32 %v5222, 1.442695
    %v6197 = vpow.pop %v6196
    %v6198 = vmul.f32 %v5223, 1.442695
    %v6199 = vpow.pop %v6198
    %v6200 = vmul.f32 %v5224, 1.442695
    %v6201 = vpow.pop %v6200
    %v6202 = vmul.f32 %v5225, 1.442695
    %v6203 = vpow.pop %v6202
    %v6204 = vmul.f32 %v5226, 1.442695
    %v6205 = vpow.pop %v6204
    %v6206 = vmul.f32 %v5227, 1.442695
    %v6207 = vpow.pop %v6206
    %v6208 = vmul.f32 %v5228, 1.442695
    %v6209 = vpow.pop %v6208
    %v6210 = vmul.f32 %v5229, 1.442695
    %v6211 = vpow.pop %v6210
    %v6212 = vmul.f32 %v5230, 1.442695
    %v6213 = vpow.pop %v6212
    %v6214 = vmul.f32 %v5231, 1.442695
    %v6215 = vpow.pop %v6214
    %v6216 = vmul.f32 %v5232, 1.442695
    %v6217 = vpow.pop %v6216
    %v6218 = vmul.f32 %v5233, 1.442695
    %v6219 = vpow.pop %v6218
    %v6220 = vmul.f32 %v5234, 1.442695
    %v6221 = vpow.pop %v6220
    %v6222 = vmul.f32 %v5235, 1.442695
    %v6223 = vpow.pop %v6222
    %v6224 = vmul.f32 %v5236, 1.442695
    %v6225 = vpow.pop %v6224
    %v6226 = vmul.f32 %v5237, 1.442695
    %v6227 = vpow.pop %v6226
    %v6228 = vmul.f32 %v5238, 1.442695
    %v6229 = vpow.pop %v6228
    %v6230 = vmul.f32 %v5239, 1.442695
    %v6231 = vpow.pop %v6230
    %v6232 = vmul.f32 %v5240, 1.442695
    %v6233 = vpow.pop %v6232
    %v6234 = vmul.f32 %v5241, 1.442695
    %v6235 = vpow.pop %v6234
    %v6236 = vmul.f32 %v5242, 1.442695
    %v6237 = vpow.pop %v6236
    %v6238 = vmul.f32 %v5243, 1.442695
    %v6239 = vpow.pop %v6238
    %v6240 = vmul.f32 %v5244, 1.442695
    %v6241 = vpow.pop %v6240
    %v6242 = vmul.f32 %v5245, 1.442695
    %v6243 = vpow.pop %v6242
    %v6244 = vmul.f32 %v5246, 1.442695
    %v6245 = vpow.pop %v6244
    %v6246 = vmul.f32 %v5247, 1.442695
    %v6247 = vpow.pop %v6246
    %v6248 = vmul.f32 %v5248, 1.442695
    %v6249 = vpow.pop %v6248
    %v6250 = vmul.f32 %v5249, 1.442695
    %v6251 = vpow.pop %v6250
    %v6252 = vmul.f32 %v5250, 1.442695
    %v6253 = vpow.pop %v6252
    %v6254 = vmul.f32 %v5251, 1.442695
    %v6255 = vpow.pop %v6254
    %v6256 = vmul.f32 %v5252, 1.442695
    %v6257 = vpow.pop %v6256
    %v6258 = vmul.f32 %v5253, 1.442695
    %v6259 = vpow.pop %v6258
    %v6260 = vmul.f32 %v5254, 1.442695
    %v6261 = vpow.pop %v6260
    %v6262 = vmul.f32 %v5255, 1.442695
    %v6263 = vpow.pop %v6262
    %v6264 = vadd.f32 %v5257, 1.0
    %v6265 = vadd.f32 %v5259, 1.0
    %v6266 = vadd.f32 %v5261, 1.0
    %v6267 = vadd.f32 %v5263, 1.0
    %v6268 = vadd.f32 %v5265, 1.0
    %v6269 = vadd.f32 %v5267, 1.0
    %v6270 = vadd.f32 %v5269, 1.0
    %v6271 = vadd.f32 %v5271, 1.0
    %v6272 = vadd.f32 %v5273, 1.0
    %v6273 = vadd.f32 %v5275, 1.0
    %v6274 = vadd.f32 %v5277, 1.0
    %v6275 = vadd.f32 %v5279, 1.0
    %v6276 = vadd.f32 %v5281, 1.0
    %v6277 = vadd.f32 %v5283, 1.0
    %v6278 = vadd.f32 %v5285, 1.0
    %v6279 = vadd.f32 %v5287, 1.0
    %v6280 = vadd.f32 %v5289, 1.0
    %v6281 = vadd.f32 %v5291, 1.0
    %v6282 = vadd.f32 %v5293, 1.0
    %v6283 = vadd.f32 %v5295, 1.0
    %v6284 = vadd.f32 %v5297, 1.0
    %v6285 = vadd.f32 %v5299, 1.0
    %v6286 = vadd.f32 %v5301, 1.0
    %v6287 = vadd.f32 %v5303, 1.0
    %v6288 = vadd.f32 %v5305, 1.0
    %v6289 = vadd.f32 %v5307, 1.0
    %v6290 = vadd.f32 %v5309, 1.0
    %v6291 = vadd.f32 %v5311, 1.0
    %v6292 = vadd.f32 %v5313, 1.0
    %v6293 = vadd.f32 %v5315, 1.0
    %v6294 = vadd.f32 %v5317, 1.0
    %v6295 = vadd.f32 %v5319, 1.0
    %v6296 = vadd.f32 %v5321, 1.0
    %v6297 = vadd.f32 %v5323, 1.0
    %v6298 = vadd.f32 %v5325, 1.0
    %v6299 = vadd.f32 %v5327, 1.0
    %v6300 = vadd.f32 %v5329, 1.0
    %v6301 = vadd.f32 %v5331, 1.0
    %v6302 = vadd.f32 %v5333, 1.0
    %v6303 = vadd.f32 %v5335, 1.0
    %v6304 = vadd.f32 %v5337, 1.0
    %v6305 = vadd.f32 %v5339, 1.0
    %v6306 = vadd.f32 %v5341, 1.0
    %v6307 = vadd.f32 %v5343, 1.0
    %v6308 = vadd.f32 %v5345, 1.0
    %v6309 = vadd.f32 %v5347, 1.0
    %v6310 = vadd.f32 %v5349, 1.0
    %v6311 = vadd.f32 %v5351, 1.0
    %v6312 = vadd.f32 %v5353, 1.0
    %v6313 = vadd.f32 %v5355, 1.0
    %v6314 = vadd.f32 %v5357, 1.0
    %v6315 = vadd.f32 %v5359, 1.0
    %v6316 = vadd.f32 %v5361, 1.0
    %v6317 = vadd.f32 %v5363, 1.0
    %v6318 = vadd.f32 %v5365, 1.0
    %v6319 = vadd.f32 %v5367, 1.0
    %v6320 = vadd.f32 %v5369, 1.0
    %v6321 = vadd.f32 %v5371, 1.0
    %v6322 = vadd.f32 %v5373, 1.0
    %v6323 = vadd.f32 %v5375, 1.0
    %v6324 = vadd.f32 %v5377, 1.0
    %v6325 = vadd.f32 %v5379, 1.0
    %v6326 = vadd.f32 %v5381, 1.0
    %v6327 = vadd.f32 %v5383, 1.0
    %v6328 = vadd.f32 %v5385, 1.0
    %v6329 = vadd.f32 %v5387, 1.0
    %v6330 = vadd.f32 %v5389, 1.0
    %v6331 = vadd.f32 %v5391, 1.0
    %v6332 = vadd.f32 %v5393, 1.0
    %v6333 = vadd.f32 %v5395, 1.0
    %v6334 = vadd.f32 %v5397, 1.0
    %v6335 = vadd.f32 %v5399, 1.0
    %v6336 = vadd.f32 %v5401, 1.0
    %v6337 = vadd.f32 %v5403, 1.0
    %v6338 = vadd.f32 %v5405, 1.0
    %v6339 = vadd.f32 %v5407, 1.0
    %v6340 = vadd.f32 %v5409, 1.0
    %v6341 = vadd.f32 %v5411, 1.0
    %v6342 = vadd.f32 %v5413, 1.0
    %v6343 = vadd.f32 %v5415, 1.0
    %v6344 = vadd.f32 %v5417, 1.0
    %v6345 = vadd.f32 %v5419, 1.0
    %v6346 = vadd.f32 %v5421, 1.0
    %v6347 = vadd.f32 %v5423, 1.0
    %v6348 = vadd.f32 %v5425, 1.0
    %v6349 = vadd.f32 %v5427, 1.0
    %v6350 = vadd.f32 %v5429, 1.0
    %v6351 = vadd.f32 %v5431, 1.0
    %v6352 = vadd.f32 %v5433, 1.0
    %v6353 = vadd.f32 %v5435, 1.0
    %v6354 = vadd.f32 %v5437, 1.0
    %v6355 = vadd.f32 %v5439, 1.0
    %v6356 = vadd.f32 %v5441, 1.0
    %v6357 = vadd.f32 %v5443, 1.0
    %v6358 = vadd.f32 %v5445, 1.0
    %v6359 = vadd.f32 %v5447, 1.0
    %v6360 = vadd.f32 %v5449, 1.0
    %v6361 = vadd.f32 %v5451, 1.0
    %v6362 = vadd.f32 %v5453, 1.0
    %v6363 = vadd.f32 %v5455, 1.0
    %v6364 = vadd.f32 %v5457, 1.0
    %v6365 = vadd.f32 %v5459, 1.0
    %v6366 = vadd.f32 %v5461, 1.0
    %v6367 = vadd.f32 %v5463, 1.0
    %v6368 = vadd.f32 %v5465, 1.0
    %v6369 = vadd.f32 %v5467, 1.0
    %v6370 = vadd.f32 %v5469, 1.0
    %v6371 = vadd.f32 %v5471, 1.0
    %v6372 = vadd.f32 %v5473, 1.0
    %v6373 = vadd.f32 %v5475, 1.0
    %v6374 = vadd.f32 %v5477, 1.0
    %v6375 = vadd.f32 %v5479, 1.0
    %v6376 = vadd.f32 %v5481, 1.0
    %v6377 = vadd.f32 %v5483, 1.0
    %v6378 = vadd.f32 %v5485, 1.0
    %v6379 = vadd.f32 %v5487, 1.0
    %v6380 = vadd.f32 %v5489, 1.0
    %v6381 = vadd.f32 %v5491, 1.0
    %v6382 = vadd.f32 %v5493, 1.0
    %v6383 = vadd.f32 %v5495, 1.0
    %v6384 = vadd.f32 %v5497, 1.0
    %v6385 = vadd.f32 %v5499, 1.0
    %v6386 = vadd.f32 %v5501, 1.0
    %v6387 = vadd.f32 %v5503, 1.0
    %v6388 = vadd.f32 %v5505, 1.0
    %v6389 = vadd.f32 %v5507, 1.0
    %v6390 = vadd.f32 %v5509, 1.0
    %v6391 = vadd.f32 %v5511, 1.0
    %v6392 = vadd.f32 %v5513, 1.0
    %v6393 = vadd.f32 %v5515, 1.0
    %v6394 = vadd.f32 %v5517, 1.0
    %v6395 = vadd.f32 %v5519, 1.0
    %v6396 = vadd.f32 %v5521, 1.0
    %v6397 = vadd.f32 %v5523, 1.0
    %v6398 = vadd.f32 %v5525, 1.0
    %v6399 = vadd.f32 %v5527, 1.0
    %v6400 = vadd.f32 %v5529, 1.0
    %v6401 = vadd.f32 %v5531, 1.0
    %v6402 = vadd.f32 %v5533, 1.0
    %v6403 = vadd.f32 %v5535, 1.0
    %v6404 = vadd.f32 %v5537, 1.0
    %v6405 = vadd.f32 %v5539, 1.0
    %v6406 = vadd.f32 %v5541, 1.0
    %v6407 = vadd.f32 %v5543, 1.0
    %v6408 = vadd.f32 %v5545, 1.0
    %v6409 = vadd.f32 %v5547, 1.0
    %v6410 = vadd.f32 %v5549, 1.0
    %v6411 = vadd.f32 %v5551, 1.0
    %v6412 = vadd.f32 %v5553, 1.0
    %v6413 = vadd.f32 %v5555, 1.0
    %v6414 = vadd.f32 %v5557, 1.0
    %v6415 = vadd.f32 %v5559, 1.0
    %v6416 = vadd.f32 %v5561, 1.0
    %v6417 = vadd.f32 %v5563, 1.0
    %v6418 = vadd.f32 %v5565, 1.0
    %v6419 = vadd.f32 %v5567, 1.0
    %v6420 = vadd.f32 %v5569, 1.0
    %v6421 = vadd.f32 %v5571, 1.0
    %v6422 = vadd.f32 %v5573, 1.0
    %v6423 = vadd.f32 %v5575, 1.0
    %v6424 = vadd.f32 %v5577, 1.0
    %v6425 = vadd.f32 %v5579, 1.0
    %v6426 = vadd.f32 %v5581, 1.0
    %v6427 = vadd.f32 %v5583, 1.0
    %v6428 = vadd.f32 %v5585, 1.0
    %v6429 = vadd.f32 %v5587, 1.0
    %v6430 = vadd.f32 %v5589, 1.0
    %v6431 = vadd.f32 %v5591, 1.0
    %v6432 = vadd.f32 %v5593, 1.0
    %v6433 = vadd.f32 %v5595, 1.0
    %v6434 = vadd.f32 %v5597, 1.0
    %v6435 = vadd.f32 %v5599, 1.0
    %v6436 = vadd.f32 %v5601, 1.0
    %v6437 = vadd.f32 %v5603, 1.0
    %v6438 = vadd.f32 %v5605, 1.0
    %v6439 = vadd.f32 %v5607, 1.0
    %v6440 = vadd.f32 %v5609, 1.0
    %v6441 = vadd.f32 %v5611, 1.0
    %v6442 = vadd.f32 %v5613, 1.0
    %v6443 = vadd.f32 %v5615, 1.0
    %v6444 = vadd.f32 %v5617, 1.0
    %v6445 = vadd.f32 %v5619, 1.0
    %v6446 = vadd.f32 %v5621, 1.0
    %v6447 = vadd.f32 %v5623, 1.0
    %v6448 = vadd.f32 %v5625, 1.0
    %v6449 = vadd.f32 %v5627, 1.0
    %v6450 = vadd.f32 %v5629, 1.0
    %v6451 = vadd.f32 %v5631, 1.0
    %v6452 = vadd.f32 %v5633, 1.0
    %v6453 = vadd.f32 %v5635, 1.0
    %v6454 = vadd.f32 %v5637, 1.0
    %v6455 = vadd.f32 %v5639, 1.0
    %v6456 = vadd.f32 %v5641, 1.0
    %v6457 = vadd.f32 %v5643, 1.0
    %v6458 = vadd.f32 %v5645, 1.0
    %v6459 = vadd.f32 %v5647, 1.0
    %v6460 = vadd.f32 %v5649, 1.0
    %v6461 = vadd.f32 %v5651, 1.0
    %v6462 = vadd.f32 %v5653, 1.0
    %v6463 = vadd.f32 %v5655, 1.0
    %v6464 = vadd.f32 %v5657, 1.0
    %v6465 = vadd.f32 %v5659, 1.0
    %v6466 = vadd.f32 %v5661, 1.0
    %v6467 = vadd.f32 %v5663, 1.0
    %v6468 = vadd.f32 %v5665, 1.0
    %v6469 = vadd.f32 %v5667, 1.0
    %v6470 = vadd.f32 %v5669, 1.0
    %v6471 = vadd.f32 %v5671, 1.0
    %v6472 = vadd.f32 %v5673, 1.0
    %v6473 = vadd.f32 %v5675, 1.0
    %v6474 = vadd.f32 %v5677, 1.0
    %v6475 = vadd.f32 %v5679, 1.0
    %v6476 = vadd.f32 %v5681, 1.0
    %v6477 = vadd.f32 %v5683, 1.0
    %v6478 = vadd.f32 %v5685, 1.0
    %v6479 = vadd.f32 %v5687, 1.0
    %v6480 = vadd.f32 %v5689, 1.0
    %v6481 = vadd.f32 %v5691, 1.0
    %v6482 = vadd.f32 %v5693, 1.0
    %v6483 = vadd.f32 %v5695, 1.0
    %v6484 = vadd.f32 %v5697, 1.0
    %v6485 = vadd.f32 %v5699, 1.0
    %v6486 = vadd.f32 %v5701, 1.0
    %v6487 = vadd.f32 %v5703, 1.0
    %v6488 = vadd.f32 %v5705, 1.0
    %v6489 = vadd.f32 %v5707, 1.0
    %v6490 = vadd.f32 %v5709, 1.0
    %v6491 = vadd.f32 %v5711, 1.0
    %v6492 = vadd.f32 %v5713, 1.0
    %v6493 = vadd.f32 %v5715, 1.0
    %v6494 = vadd.f32 %v5717, 1.0
    %v6495 = vadd.f32 %v5719, 1.0
    %v6496 = vadd.f32 %v5721, 1.0
    %v6497 = vadd.f32 %v5723, 1.0
    %v6498 = vadd.f32 %v5725, 1.0
    %v6499 = vadd.f32 %v5727, 1.0
    %v6500 = vadd.f32 %v5729, 1.0
    %v6501 = vadd.f32 %v5731, 1.0
    %v6502 = vadd.f32 %v5733, 1.0
    %v6503 = vadd.f32 %v5735, 1.0
    %v6504 = vadd.f32 %v5737, 1.0
    %v6505 = vadd.f32 %v5739, 1.0
    %v6506 = vadd.f32 %v5741, 1.0
    %v6507 = vadd.f32 %v5743, 1.0
    %v6508 = vadd.f32 %v5745, 1.0
    %v6509 = vadd.f32 %v5747, 1.0
    %v6510 = vadd.f32 %v5749, 1.0
    %v6511 = vadd.f32 %v5751, 1.0
    %v6512 = vadd.f32 %v5753, 1.0
    %v6513 = vadd.f32 %v5755, 1.0
    %v6514 = vadd.f32 %v5757, 1.0
    %v6515 = vadd.f32 %v5759, 1.0
    %v6516 = vadd.f32 %v5761, 1.0
    %v6517 = vadd.f32 %v5763, 1.0
    %v6518 = vadd.f32 %v5765, 1.0
    %v6519 = vadd.f32 %v5767, 1.0
    %v6520 = vadd.f32 %v5769, 1.0
    %v6521 = vadd.f32 %v5771, 1.0
    %v6522 = vadd.f32 %v5773, 1.0
    %v6523 = vadd.f32 %v5775, 1.0
    %v6524 = vadd.f32 %v5777, 1.0
    %v6525 = vadd.f32 %v5779, 1.0
    %v6526 = vadd.f32 %v5781, 1.0
    %v6527 = vadd.f32 %v5783, 1.0
    %v6528 = vadd.f32 %v5785, 1.0
    %v6529 = vadd.f32 %v5787, 1.0
    %v6530 = vadd.f32 %v5789, 1.0
    %v6531 = vadd.f32 %v5791, 1.0
    %v6532 = vadd.f32 %v5793, 1.0
    %v6533 = vadd.f32 %v5795, 1.0
    %v6534 = vadd.f32 %v5797, 1.0
    %v6535 = vadd.f32 %v5799, 1.0
    %v6536 = vadd.f32 %v5801, 1.0
    %v6537 = vadd.f32 %v5803, 1.0
    %v6538 = vadd.f32 %v5805, 1.0
    %v6539 = vadd.f32 %v5807, 1.0
    %v6540 = vadd.f32 %v5809, 1.0
    %v6541 = vadd.f32 %v5811, 1.0
    %v6542 = vadd.f32 %v5813, 1.0
    %v6543 = vadd.f32 %v5815, 1.0
    %v6544 = vadd.f32 %v5817, 1.0
    %v6545 = vadd.f32 %v5819, 1.0
    %v6546 = vadd.f32 %v5821, 1.0
    %v6547 = vadd.f32 %v5823, 1.0
    %v6548 = vadd.f32 %v5825, 1.0
    %v6549 = vadd.f32 %v5827, 1.0
    %v6550 = vadd.f32 %v5829, 1.0
    %v6551 = vadd.f32 %v5831, 1.0
    %v6552 = vadd.f32 %v5833, 1.0
    %v6553 = vadd.f32 %v5835, 1.0
    %v6554 = vadd.f32 %v5837, 1.0
    %v6555 = vadd.f32 %v5839, 1.0
    %v6556 = vadd.f32 %v5841, 1.0
    %v6557 = vadd.f32 %v5843, 1.0
    %v6558 = vadd.f32 %v5845, 1.0
    %v6559 = vadd.f32 %v5847, 1.0
    %v6560 = vadd.f32 %v5849, 1.0
    %v6561 = vadd.f32 %v5851, 1.0
    %v6562 = vadd.f32 %v5853, 1.0
    %v6563 = vadd.f32 %v5855, 1.0
    %v6564 = vadd.f32 %v5857, 1.0
    %v6565 = vadd.f32 %v5859, 1.0
    %v6566 = vadd.f32 %v5861, 1.0
    %v6567 = vadd.f32 %v5863, 1.0
    %v6568 = vadd.f32 %v5865, 1.0
    %v6569 = vadd.f32 %v5867, 1.0
    %v6570 = vadd.f32 %v5869, 1.0
    %v6571 = vadd.f32 %v5871, 1.0
    %v6572 = vadd.f32 %v5873, 1.0
    %v6573 = vadd.f32 %v5875, 1.0
    %v6574 = vadd.f32 %v5877, 1.0
    %v6575 = vadd.f32 %v5879, 1.0
    %v6576 = vadd.f32 %v5881, 1.0
    %v6577 = vadd.f32 %v5883, 1.0
    %v6578 = vadd.f32 %v5885, 1.0
    %v6579 = vadd.f32 %v5887, 1.0
    %v6580 = vadd.f32 %v5889, 1.0
    %v6581 = vadd.f32 %v5891, 1.0
    %v6582 = vadd.f32 %v5893, 1.0
    %v6583 = vadd.f32 %v5895, 1.0
    %v6584 = vadd.f32 %v5897, 1.0
    %v6585 = vadd.f32 %v5899, 1.0
    %v6586 = vadd.f32 %v5901, 1.0
    %v6587 = vadd.f32 %v5903, 1.0
    %v6588 = vadd.f32 %v5905, 1.0
    %v6589 = vadd.f32 %v5907, 1.0
    %v6590 = vadd.f32 %v5909, 1.0
    %v6591 = vadd.f32 %v5911, 1.0
    %v6592 = vadd.f32 %v5913, 1.0
    %v6593 = vadd.f32 %v5915, 1.0
    %v6594 = vadd.f32 %v5917, 1.0
    %v6595 = vadd.f32 %v5919, 1.0
    %v6596 = vadd.f32 %v5921, 1.0
    %v6597 = vadd.f32 %v5923, 1.0
    %v6598 = vadd.f32 %v5925, 1.0
    %v6599 = vadd.f32 %v5927, 1.0
    %v6600 = vadd.f32 %v5929, 1.0
    %v6601 = vadd.f32 %v5931, 1.0
    %v6602 = vadd.f32 %v5933, 1.0
    %v6603 = vadd.f32 %v5935, 1.0
    %v6604 = vadd.f32 %v5937, 1.0
    %v6605 = vadd.f32 %v5939, 1.0
    %v6606 = vadd.f32 %v5941, 1.0
    %v6607 = vadd.f32 %v5943, 1.0
    %v6608 = vadd.f32 %v5945, 1.0
    %v6609 = vadd.f32 %v5947, 1.0
    %v6610 = vadd.f32 %v5949, 1.0
    %v6611 = vadd.f32 %v5951, 1.0
    %v6612 = vadd.f32 %v5953, 1.0
    %v6613 = vadd.f32 %v5955, 1.0
    %v6614 = vadd.f32 %v5957, 1.0
    %v6615 = vadd.f32 %v5959, 1.0
    %v6616 = vadd.f32 %v5961, 1.0
    %v6617 = vadd.f32 %v5963, 1.0
    %v6618 = vadd.f32 %v5965, 1.0
    %v6619 = vadd.f32 %v5967, 1.0
    %v6620 = vadd.f32 %v5969, 1.0
    %v6621 = vadd.f32 %v5971, 1.0
    %v6622 = vadd.f32 %v5973, 1.0
    %v6623 = vadd.f32 %v5975, 1.0
    %v6624 = vadd.f32 %v5977, 1.0
    %v6625 = vadd.f32 %v5979, 1.0
    %v6626 = vadd.f32 %v5981, 1.0
    %v6627 = vadd.f32 %v5983, 1.0
    %v6628 = vadd.f32 %v5985, 1.0
    %v6629 = vadd.f32 %v5987, 1.0
    %v6630 = vadd.f32 %v5989, 1.0
    %v6631 = vadd.f32 %v5991, 1.0
    %v6632 = vadd.f32 %v5993, 1.0
    %v6633 = vadd.f32 %v5995, 1.0
    %v6634 = vadd.f32 %v5997, 1.0
    %v6635 = vadd.f32 %v5999, 1.0
    %v6636 = vadd.f32 %v6001, 1.0
    %v6637 = vadd.f32 %v6003, 1.0
    %v6638 = vadd.f32 %v6005, 1.0
    %v6639 = vadd.f32 %v6007, 1.0
    %v6640 = vadd.f32 %v6009, 1.0
    %v6641 = vadd.f32 %v6011, 1.0
    %v6642 = vadd.f32 %v6013, 1.0
    %v6643 = vadd.f32 %v6015, 1.0
    %v6644 = vadd.f32 %v6017, 1.0
    %v6645 = vadd.f32 %v6019, 1.0
    %v6646 = vadd.f32 %v6021, 1.0
    %v6647 = vadd.f32 %v6023, 1.0
    %v6648 = vadd.f32 %v6025, 1.0
    %v6649 = vadd.f32 %v6027, 1.0
    %v6650 = vadd.f32 %v6029, 1.0
    %v6651 = vadd.f32 %v6031, 1.0
    %v6652 = vadd.f32 %v6033, 1.0
    %v6653 = vadd.f32 %v6035, 1.0
    %v6654 = vadd.f32 %v6037, 1.0
    %v6655 = vadd.f32 %v6039, 1.0
    %v6656 = vadd.f32 %v6041, 1.0
    %v6657 = vadd.f32 %v6043, 1.0
    %v6658 = vadd.f32 %v6045, 1.0
    %v6659 = vadd.f32 %v6047, 1.0
    %v6660 = vadd.f32 %v6049, 1.0
    %v6661 = vadd.f32 %v6051, 1.0
    %v6662 = vadd.f32 %v6053, 1.0
    %v6663 = vadd.f32 %v6055, 1.0
    %v6664 = vadd.f32 %v6057, 1.0
    %v6665 = vadd.f32 %v6059, 1.0
    %v6666 = vadd.f32 %v6061, 1.0
    %v6667 = vadd.f32 %v6063, 1.0
    %v6668 = vadd.f32 %v6065, 1.0
    %v6669 = vadd.f32 %v6067, 1.0
    %v6670 = vadd.f32 %v6069, 1.0
    %v6671 = vadd.f32 %v6071, 1.0
    %v6672 = vadd.f32 %v6073, 1.0
    %v6673 = vadd.f32 %v6075, 1.0
    %v6674 = vadd.f32 %v6077, 1.0
    %v6675 = vadd.f32 %v6079, 1.0
    %v6676 = vadd.f32 %v6081, 1.0
    %v6677 = vadd.f32 %v6083, 1.0
    %v6678 = vadd.f32 %v6085, 1.0
    %v6679 = vadd.f32 %v6087, 1.0
    %v6680 = vadd.f32 %v6089, 1.0
    %v6681 = vadd.f32 %v6091, 1.0
    %v6682 = vadd.f32 %v6093, 1.0
    %v6683 = vadd.f32 %v6095, 1.0
    %v6684 = vadd.f32 %v6097, 1.0
    %v6685 = vadd.f32 %v6099, 1.0
    %v6686 = vadd.f32 %v6101, 1.0
    %v6687 = vadd.f32 %v6103, 1.0
    %v6688 = vadd.f32 %v6105, 1.0
    %v6689 = vadd.f32 %v6107, 1.0
    %v6690 = vadd.f32 %v6109, 1.0
    %v6691 = vadd.f32 %v6111, 1.0
    %v6692 = vadd.f32 %v6113, 1.0
    %v6693 = vadd.f32 %v6115, 1.0
    %v6694 = vadd.f32 %v6117, 1.0
    %v6695 = vadd.f32 %v6119, 1.0
    %v6696 = vadd.f32 %v6121, 1.0
    %v6697 = vadd.f32 %v6123, 1.0
    %v6698 = vadd.f32 %v6125, 1.0
    %v6699 = vadd.f32 %v6127, 1.0
    %v6700 = vadd.f32 %v6129, 1.0
    %v6701 = vadd.f32 %v6131, 1.0
    %v6702 = vadd.f32 %v6133, 1.0
    %v6703 = vadd.f32 %v6135, 1.0
    %v6704 = vadd.f32 %v6137, 1.0
    %v6705 = vadd.f32 %v6139, 1.0
    %v6706 = vadd.f32 %v6141, 1.0
    %v6707 = vadd.f32 %v6143, 1.0
    %v6708 = vadd.f32 %v6145, 1.0
    %v6709 = vadd.f32 %v6147, 1.0
    %v6710 = vadd.f32 %v6149, 1.0
    %v6711 = vadd.f32 %v6151, 1.0
    %v6712 = vadd.f32 %v6153, 1.0
    %v6713 = vadd.f32 %v6155, 1.0
    %v6714 = vadd.f32 %v6157, 1.0
    %v6715 = vadd.f32 %v6159, 1.0
    %v6716 = vadd.f32 %v6161, 1.0
    %v6717 = vadd.f32 %v6163, 1.0
    %v6718 = vadd.f32 %v6165, 1.0
    %v6719 = vadd.f32 %v6167, 1.0
    %v6720 = vadd.f32 %v6169, 1.0
    %v6721 = vadd.f32 %v6171, 1.0
    %v6722 = vadd.f32 %v6173, 1.0
    %v6723 = vadd.f32 %v6175, 1.0
    %v6724 = vadd.f32 %v6177, 1.0
    %v6725 = vadd.f32 %v6179, 1.0
    %v6726 = vadd.f32 %v6181, 1.0
    %v6727 = vadd.f32 %v6183, 1.0
    %v6728 = vadd.f32 %v6185, 1.0
    %v6729 = vadd.f32 %v6187, 1.0
    %v6730 = vadd.f32 %v6189, 1.0
    %v6731 = vadd.f32 %v6191, 1.0
    %v6732 = vadd.f32 %v6193, 1.0
    %v6733 = vadd.f32 %v6195, 1.0
    %v6734 = vadd.f32 %v6197, 1.0
    %v6735 = vadd.f32 %v6199, 1.0
    %v6736 = vadd.f32 %v6201, 1.0
    %v6737 = vadd.f32 %v6203, 1.0
    %v6738 = vadd.f32 %v6205, 1.0
    %v6739 = vadd.f32 %v6207, 1.0
    %v6740 = vadd.f32 %v6209, 1.0
    %v6741 = vadd.f32 %v6211, 1.0
    %v6742 = vadd.f32 %v6213, 1.0
    %v6743 = vadd.f32 %v6215, 1.0
    %v6744 = vadd.f32 %v6217, 1.0
    %v6745 = vadd.f32 %v6219, 1.0
    %v6746 = vadd.f32 %v6221, 1.0
    %v6747 = vadd.f32 %v6223, 1.0
    %v6748 = vadd.f32 %v6225, 1.0
    %v6749 = vadd.f32 %v6227, 1.0
    %v6750 = vadd.f32 %v6229, 1.0
    %v6751 = vadd.f32 %v6231, 1.0
    %v6752 = vadd.f32 %v6233, 1.0
    %v6753 = vadd.f32 %v6235, 1.0
    %v6754 = vadd.f32 %v6237, 1.0
    %v6755 = vadd.f32 %v6239, 1.0
    %v6756 = vadd.f32 %v6241, 1.0
    %v6757 = vadd.f32 %v6243, 1.0
    %v6758 = vadd.f32 %v6245, 1.0
    %v6759 = vadd.f32 %v6247, 1.0
    %v6760 = vadd.f32 %v6249, 1.0
    %v6761 = vadd.f32 %v6251, 1.0
    %v6762 = vadd.f32 %v6253, 1.0
    %v6763 = vadd.f32 %v6255, 1.0
    %v6764 = vadd.f32 %v6257, 1.0
    %v6765 = vadd.f32 %v6259, 1.0
    %v6766 = vadd.f32 %v6261, 1.0
    %v6767 = vadd.f32 %v6263, 1.0
    %v6768 = vrcp.pop %v6264
    %v6769 = vmul.f32 1.0, %v6768
    %v6770 = vrcp.pop %v6265
    %v6771 = vmul.f32 1.0, %v6770
    %v6772 = vrcp.pop %v6266
    %v6773 = vmul.f32 1.0, %v6772
    %v6774 = vrcp.pop %v6267
    %v6775 = vmul.f32 1.0, %v6774
    %v6776 = vrcp.pop %v6268
    %v6777 = vmul.f32 1.0, %v6776
    %v6778 = vrcp.pop %v6269
    %v6779 = vmul.f32 1.0, %v6778
    %v6780 = vrcp.pop %v6270
    %v6781 = vmul.f32 1.0, %v6780
    %v6782 = vrcp.pop %v6271
    %v6783 = vmul.f32 1.0, %v6782
    %v6784 = vrcp.pop %v6272
    %v6785 = vmul.f32 1.0, %v6784
    %v6786 = vrcp.pop %v6273
    %v6787 = vmul.f32 1.0, %v6786
    %v6788 = vrcp.pop %v6274
    %v6789 = vmul.f32 1.0, %v6788
    %v6790 = vrcp.pop %v6275
    %v6791 = vmul.f32 1.0, %v6790
    %v6792 = vrcp.pop %v6276
    %v6793 = vmul.f32 1.0, %v6792
    %v6794 = vrcp.pop %v6277
    %v6795 = vmul.f32 1.0, %v6794
    %v6796 = vrcp.pop %v6278
    %v6797 = vmul.f32 1.0, %v6796
    %v6798 = vrcp.pop %v6279
    %v6799 = vmul.f32 1.0, %v6798
    %v6800 = vrcp.pop %v6280
    %v6801 = vmul.f32 1.0, %v6800
    %v6802 = vrcp.pop %v6281
    %v6803 = vmul.f32 1.0, %v6802
    %v6804 = vrcp.pop %v6282
    %v6805 = vmul.f32 1.0, %v6804
    %v6806 = vrcp.pop %v6283
    %v6807 = vmul.f32 1.0, %v6806
    %v6808 = vrcp.pop %v6284
    %v6809 = vmul.f32 1.0, %v6808
    %v6810 = vrcp.pop %v6285
    %v6811 = vmul.f32 1.0, %v6810
    %v6812 = vrcp.pop %v6286
    %v6813 = vmul.f32 1.0, %v6812
    %v6814 = vrcp.pop %v6287
    %v6815 = vmul.f32 1.0, %v6814
    %v6816 = vrcp.pop %v6288
    %v6817 = vmul.f32 1.0, %v6816
    %v6818 = vrcp.pop %v6289
    %v6819 = vmul.f32 1.0, %v6818
    %v6820 = vrcp.pop %v6290
    %v6821 = vmul.f32 1.0, %v6820
    %v6822 = vrcp.pop %v6291
    %v6823 = vmul.f32 1.0, %v6822
    %v6824 = vrcp.pop %v6292
    %v6825 = vmul.f32 1.0, %v6824
    %v6826 = vrcp.pop %v6293
    %v6827 = vmul.f32 1.0, %v6826
    %v6828 = vrcp.pop %v6294
    %v6829 = vmul.f32 1.0, %v6828
    %v6830 = vrcp.pop %v6295
    %v6831 = vmul.f32 1.0, %v6830
    %v6832 = vrcp.pop %v6296
    %v6833 = vmul.f32 1.0, %v6832
    %v6834 = vrcp.pop %v6297
    %v6835 = vmul.f32 1.0, %v6834
    %v6836 = vrcp.pop %v6298
    %v6837 = vmul.f32 1.0, %v6836
    %v6838 = vrcp.pop %v6299
    %v6839 = vmul.f32 1.0, %v6838
    %v6840 = vrcp.pop %v6300
    %v6841 = vmul.f32 1.0, %v6840
    %v6842 = vrcp.pop %v6301
    %v6843 = vmul.f32 1.0, %v6842
    %v6844 = vrcp.pop %v6302
    %v6845 = vmul.f32 1.0, %v6844
    %v6846 = vrcp.pop %v6303
    %v6847 = vmul.f32 1.0, %v6846
    %v6848 = vrcp.pop %v6304
    %v6849 = vmul.f32 1.0, %v6848
    %v6850 = vrcp.pop %v6305
    %v6851 = vmul.f32 1.0, %v6850
    %v6852 = vrcp.pop %v6306
    %v6853 = vmul.f32 1.0, %v6852
    %v6854 = vrcp.pop %v6307
    %v6855 = vmul.f32 1.0, %v6854
    %v6856 = vrcp.pop %v6308
    %v6857 = vmul.f32 1.0, %v6856
    %v6858 = vrcp.pop %v6309
    %v6859 = vmul.f32 1.0, %v6858
    %v6860 = vrcp.pop %v6310
    %v6861 = vmul.f32 1.0, %v6860
    %v6862 = vrcp.pop %v6311
    %v6863 = vmul.f32 1.0, %v6862
    %v6864 = vrcp.pop %v6312
    %v6865 = vmul.f32 1.0, %v6864
    %v6866 = vrcp.pop %v6313
    %v6867 = vmul.f32 1.0, %v6866
    %v6868 = vrcp.pop %v6314
    %v6869 = vmul.f32 1.0, %v6868
    %v6870 = vrcp.pop %v6315
    %v6871 = vmul.f32 1.0, %v6870
    %v6872 = vrcp.pop %v6316
    %v6873 = vmul.f32 1.0, %v6872
    %v6874 = vrcp.pop %v6317
    %v6875 = vmul.f32 1.0, %v6874
    %v6876 = vrcp.pop %v6318
    %v6877 = vmul.f32 1.0, %v6876
    %v6878 = vrcp.pop %v6319
    %v6879 = vmul.f32 1.0, %v6878
    %v6880 = vrcp.pop %v6320
    %v6881 = vmul.f32 1.0, %v6880
    %v6882 = vrcp.pop %v6321
    %v6883 = vmul.f32 1.0, %v6882
    %v6884 = vrcp.pop %v6322
    %v6885 = vmul.f32 1.0, %v6884
    %v6886 = vrcp.pop %v6323
    %v6887 = vmul.f32 1.0, %v6886
    %v6888 = vrcp.pop %v6324
    %v6889 = vmul.f32 1.0, %v6888
    %v6890 = vrcp.pop %v6325
    %v6891 = vmul.f32 1.0, %v6890
    %v6892 = vrcp.pop %v6326
    %v6893 = vmul.f32 1.0, %v6892
    %v6894 = vrcp.pop %v6327
    %v6895 = vmul.f32 1.0, %v6894
    %v6896 = vrcp.pop %v6328
    %v6897 = vmul.f32 1.0, %v6896
    %v6898 = vrcp.pop %v6329
    %v6899 = vmul.f32 1.0, %v6898
    %v6900 = vrcp.pop %v6330
    %v6901 = vmul.f32 1.0, %v6900
    %v6902 = vrcp.pop %v6331
    %v6903 = vmul.f32 1.0, %v6902
    %v6904 = vrcp.pop %v6332
    %v6905 = vmul.f32 1.0, %v6904
    %v6906 = vrcp.pop %v6333
    %v6907 = vmul.f32 1.0, %v6906
    %v6908 = vrcp.pop %v6334
    %v6909 = vmul.f32 1.0, %v6908
    %v6910 = vrcp.pop %v6335
    %v6911 = vmul.f32 1.0, %v6910
    %v6912 = vrcp.pop %v6336
    %v6913 = vmul.f32 1.0, %v6912
    %v6914 = vrcp.pop %v6337
    %v6915 = vmul.f32 1.0, %v6914
    %v6916 = vrcp.pop %v6338
    %v6917 = vmul.f32 1.0, %v6916
    %v6918 = vrcp.pop %v6339
    %v6919 = vmul.f32 1.0, %v6918
    %v6920 = vrcp.pop %v6340
    %v6921 = vmul.f32 1.0, %v6920
    %v6922 = vrcp.pop %v6341
    %v6923 = vmul.f32 1.0, %v6922
    %v6924 = vrcp.pop %v6342
    %v6925 = vmul.f32 1.0, %v6924
    %v6926 = vrcp.pop %v6343
    %v6927 = vmul.f32 1.0, %v6926
    %v6928 = vrcp.pop %v6344
    %v6929 = vmul.f32 1.0, %v6928
    %v6930 = vrcp.pop %v6345
    %v6931 = vmul.f32 1.0, %v6930
    %v6932 = vrcp.pop %v6346
    %v6933 = vmul.f32 1.0, %v6932
    %v6934 = vrcp.pop %v6347
    %v6935 = vmul.f32 1.0, %v6934
    %v6936 = vrcp.pop %v6348
    %v6937 = vmul.f32 1.0, %v6936
    %v6938 = vrcp.pop %v6349
    %v6939 = vmul.f32 1.0, %v6938
    %v6940 = vrcp.pop %v6350
    %v6941 = vmul.f32 1.0, %v6940
    %v6942 = vrcp.pop %v6351
    %v6943 = vmul.f32 1.0, %v6942
    %v6944 = vrcp.pop %v6352
    %v6945 = vmul.f32 1.0, %v6944
    %v6946 = vrcp.pop %v6353
    %v6947 = vmul.f32 1.0, %v6946
    %v6948 = vrcp.pop %v6354
    %v6949 = vmul.f32 1.0, %v6948
    %v6950 = vrcp.pop %v6355
    %v6951 = vmul.f32 1.0, %v6950
    %v6952 = vrcp.pop %v6356
    %v6953 = vmul.f32 1.0, %v6952
    %v6954 = vrcp.pop %v6357
    %v6955 = vmul.f32 1.0, %v6954
    %v6956 = vrcp.pop %v6358
    %v6957 = vmul.f32 1.0, %v6956
    %v6958 = vrcp.pop %v6359
    %v6959 = vmul.f32 1.0, %v6958
    %v6960 = vrcp.pop %v6360
    %v6961 = vmul.f32 1.0, %v6960
    %v6962 = vrcp.pop %v6361
    %v6963 = vmul.f32 1.0, %v6962
    %v6964 = vrcp.pop %v6362
    %v6965 = vmul.f32 1.0, %v6964
    %v6966 = vrcp.pop %v6363
    %v6967 = vmul.f32 1.0, %v6966
    %v6968 = vrcp.pop %v6364
    %v6969 = vmul.f32 1.0, %v6968
    %v6970 = vrcp.pop %v6365
    %v6971 = vmul.f32 1.0, %v6970
    %v6972 = vrcp.pop %v6366
    %v6973 = vmul.f32 1.0, %v6972
    %v6974 = vrcp.pop %v6367
    %v6975 = vmul.f32 1.0, %v6974
    %v6976 = vrcp.pop %v6368
    %v6977 = vmul.f32 1.0, %v6976
    %v6978 = vrcp.pop %v6369
    %v6979 = vmul.f32 1.0, %v6978
    %v6980 = vrcp.pop %v6370
    %v6981 = vmul.f32 1.0, %v6980
    %v6982 = vrcp.pop %v6371
    %v6983 = vmul.f32 1.0, %v6982
    %v6984 = vrcp.pop %v6372
    %v6985 = vmul.f32 1.0, %v6984
    %v6986 = vrcp.pop %v6373
    %v6987 = vmul.f32 1.0, %v6986
    %v6988 = vrcp.pop %v6374
    %v6989 = vmul.f32 1.0, %v6988
    %v6990 = vrcp.pop %v6375
    %v6991 = vmul.f32 1.0, %v6990
    %v6992 = vrcp.pop %v6376
    %v6993 = vmul.f32 1.0, %v6992
    %v6994 = vrcp.pop %v6377
    %v6995 = vmul.f32 1.0, %v6994
    %v6996 = vrcp.pop %v6378
    %v6997 = vmul.f32 1.0, %v6996
    %v6998 = vrcp.pop %v6379
    %v6999 = vmul.f32 1.0, %v6998
    %v7000 = vrcp.pop %v6380
    %v7001 = vmul.f32 1.0, %v7000
    %v7002 = vrcp.pop %v6381
    %v7003 = vmul.f32 1.0, %v7002
    %v7004 = vrcp.pop %v6382
    %v7005 = vmul.f32 1.0, %v7004
    %v7006 = vrcp.pop %v6383
    %v7007 = vmul.f32 1.0, %v7006
    %v7008 = vrcp.pop %v6384
    %v7009 = vmul.f32 1.0, %v7008
    %v7010 = vrcp.pop %v6385
    %v7011 = vmul.f32 1.0, %v7010
    %v7012 = vrcp.pop %v6386
    %v7013 = vmul.f32 1.0, %v7012
    %v7014 = vrcp.pop %v6387
    %v7015 = vmul.f32 1.0, %v7014
    %v7016 = vrcp.pop %v6388
    %v7017 = vmul.f32 1.0, %v7016
    %v7018 = vrcp.pop %v6389
    %v7019 = vmul.f32 1.0, %v7018
    %v7020 = vrcp.pop %v6390
    %v7021 = vmul.f32 1.0, %v7020
    %v7022 = vrcp.pop %v6391
    %v7023 = vmul.f32 1.0, %v7022
    %v7024 = vrcp.pop %v6392
    %v7025 = vmul.f32 1.0, %v7024
    %v7026 = vrcp.pop %v6393
    %v7027 = vmul.f32 1.0, %v7026
    %v7028 = vrcp.pop %v6394
    %v7029 = vmul.f32 1.0, %v7028
    %v7030 = vrcp.pop %v6395
    %v7031 = vmul.f32 1.0, %v7030
    %v7032 = vrcp.pop %v6396
    %v7033 = vmul.f32 1.0, %v7032
    %v7034 = vrcp.pop %v6397
    %v7035 = vmul.f32 1.0, %v7034
    %v7036 = vrcp.pop %v6398
    %v7037 = vmul.f32 1.0, %v7036
    %v7038 = vrcp.pop %v6399
    %v7039 = vmul.f32 1.0, %v7038
    %v7040 = vrcp.pop %v6400
    %v7041 = vmul.f32 1.0, %v7040
    %v7042 = vrcp.pop %v6401
    %v7043 = vmul.f32 1.0, %v7042
    %v7044 = vrcp.pop %v6402
    %v7045 = vmul.f32 1.0, %v7044
    %v7046 = vrcp.pop %v6403
    %v7047 = vmul.f32 1.0, %v7046
    %v7048 = vrcp.pop %v6404
    %v7049 = vmul.f32 1.0, %v7048
    %v7050 = vrcp.pop %v6405
    %v7051 = vmul.f32 1.0, %v7050
    %v7052 = vrcp.pop %v6406
    %v7053 = vmul.f32 1.0, %v7052
    %v7054 = vrcp.pop %v6407
    %v7055 = vmul.f32 1.0, %v7054
    %v7056 = vrcp.pop %v6408
    %v7057 = vmul.f32 1.0, %v7056
    %v7058 = vrcp.pop %v6409
    %v7059 = vmul.f32 1.0, %v7058
    %v7060 = vrcp.pop %v6410
    %v7061 = vmul.f32 1.0, %v7060
    %v7062 = vrcp.pop %v6411
    %v7063 = vmul.f32 1.0, %v7062
    %v7064 = vrcp.pop %v6412
    %v7065 = vmul.f32 1.0, %v7064
    %v7066 = vrcp.pop %v6413
    %v7067 = vmul.f32 1.0, %v7066
    %v7068 = vrcp.pop %v6414
    %v7069 = vmul.f32 1.0, %v7068
    %v7070 = vrcp.pop %v6415
    %v7071 = vmul.f32 1.0, %v7070
    %v7072 = vrcp.pop %v6416
    %v7073 = vmul.f32 1.0, %v7072
    %v7074 = vrcp.pop %v6417
    %v7075 = vmul.f32 1.0, %v7074
    %v7076 = vrcp.pop %v6418
    %v7077 = vmul.f32 1.0, %v7076
    %v7078 = vrcp.pop %v6419
    %v7079 = vmul.f32 1.0, %v7078
    %v7080 = vrcp.pop %v6420
    %v7081 = vmul.f32 1.0, %v7080
    %v7082 = vrcp.pop %v6421
    %v7083 = vmul.f32 1.0, %v7082
    %v7084 = vrcp.pop %v6422
    %v7085 = vmul.f32 1.0, %v7084
    %v7086 = vrcp.pop %v6423
    %v7087 = vmul.f32 1.0, %v7086
    %v7088 = vrcp.pop %v6424
    %v7089 = vmul.f32 1.0, %v7088
    %v7090 = vrcp.pop %v6425
    %v7091 = vmul.f32 1.0, %v7090
    %v7092 = vrcp.pop %v6426
    %v7093 = vmul.f32 1.0, %v7092
    %v7094 = vrcp.pop %v6427
    %v7095 = vmul.f32 1.0, %v7094
    %v7096 = vrcp.pop %v6428
    %v7097 = vmul.f32 1.0, %v7096
    %v7098 = vrcp.pop %v6429
    %v7099 = vmul.f32 1.0, %v7098
    %v7100 = vrcp.pop %v6430
    %v7101 = vmul.f32 1.0, %v7100
    %v7102 = vrcp.pop %v6431
    %v7103 = vmul.f32 1.0, %v7102
    %v7104 = vrcp.pop %v6432
    %v7105 = vmul.f32 1.0, %v7104
    %v7106 = vrcp.pop %v6433
    %v7107 = vmul.f32 1.0, %v7106
    %v7108 = vrcp.pop %v6434
    %v7109 = vmul.f32 1.0, %v7108
    %v7110 = vrcp.pop %v6435
    %v7111 = vmul.f32 1.0, %v7110
    %v7112 = vrcp.pop %v6436
    %v7113 = vmul.f32 1.0, %v7112
    %v7114 = vrcp.pop %v6437
    %v7115 = vmul.f32 1.0, %v7114
    %v7116 = vrcp.pop %v6438
    %v7117 = vmul.f32 1.0, %v7116
    %v7118 = vrcp.pop %v6439
    %v7119 = vmul.f32 1.0, %v7118
    %v7120 = vrcp.pop %v6440
    %v7121 = vmul.f32 1.0, %v7120
    %v7122 = vrcp.pop %v6441
    %v7123 = vmul.f32 1.0, %v7122
    %v7124 = vrcp.pop %v6442
    %v7125 = vmul.f32 1.0, %v7124
    %v7126 = vrcp.pop %v6443
    %v7127 = vmul.f32 1.0, %v7126
    %v7128 = vrcp.pop %v6444
    %v7129 = vmul.f32 1.0, %v7128
    %v7130 = vrcp.pop %v6445
    %v7131 = vmul.f32 1.0, %v7130
    %v7132 = vrcp.pop %v6446
    %v7133 = vmul.f32 1.0, %v7132
    %v7134 = vrcp.pop %v6447
    %v7135 = vmul.f32 1.0, %v7134
    %v7136 = vrcp.pop %v6448
    %v7137 = vmul.f32 1.0, %v7136
    %v7138 = vrcp.pop %v6449
    %v7139 = vmul.f32 1.0, %v7138
    %v7140 = vrcp.pop %v6450
    %v7141 = vmul.f32 1.0, %v7140
    %v7142 = vrcp.pop %v6451
    %v7143 = vmul.f32 1.0, %v7142
    %v7144 = vrcp.pop %v6452
    %v7145 = vmul.f32 1.0, %v7144
    %v7146 = vrcp.pop %v6453
    %v7147 = vmul.f32 1.0, %v7146
    %v7148 = vrcp.pop %v6454
    %v7149 = vmul.f32 1.0, %v7148
    %v7150 = vrcp.pop %v6455
    %v7151 = vmul.f32 1.0, %v7150
    %v7152 = vrcp.pop %v6456
    %v7153 = vmul.f32 1.0, %v7152
    %v7154 = vrcp.pop %v6457
    %v7155 = vmul.f32 1.0, %v7154
    %v7156 = vrcp.pop %v6458
    %v7157 = vmul.f32 1.0, %v7156
    %v7158 = vrcp.pop %v6459
    %v7159 = vmul.f32 1.0, %v7158
    %v7160 = vrcp.pop %v6460
    %v7161 = vmul.f32 1.0, %v7160
    %v7162 = vrcp.pop %v6461
    %v7163 = vmul.f32 1.0, %v7162
    %v7164 = vrcp.pop %v6462
    %v7165 = vmul.f32 1.0, %v7164
    %v7166 = vrcp.pop %v6463
    %v7167 = vmul.f32 1.0, %v7166
    %v7168 = vrcp.pop %v6464
    %v7169 = vmul.f32 1.0, %v7168
    %v7170 = vrcp.pop %v6465
    %v7171 = vmul.f32 1.0, %v7170
    %v7172 = vrcp.pop %v6466
    %v7173 = vmul.f32 1.0, %v7172
    %v7174 = vrcp.pop %v6467
    %v7175 = vmul.f32 1.0, %v7174
    %v7176 = vrcp.pop %v6468
    %v7177 = vmul.f32 1.0, %v7176
    %v7178 = vrcp.pop %v6469
    %v7179 = vmul.f32 1.0, %v7178
    %v7180 = vrcp.pop %v6470
    %v7181 = vmul.f32 1.0, %v7180
    %v7182 = vrcp.pop %v6471
    %v7183 = vmul.f32 1.0, %v7182
    %v7184 = vrcp.pop %v6472
    %v7185 = vmul.f32 1.0, %v7184
    %v7186 = vrcp.pop %v6473
    %v7187 = vmul.f32 1.0, %v7186
    %v7188 = vrcp.pop %v6474
    %v7189 = vmul.f32 1.0, %v7188
    %v7190 = vrcp.pop %v6475
    %v7191 = vmul.f32 1.0, %v7190
    %v7192 = vrcp.pop %v6476
    %v7193 = vmul.f32 1.0, %v7192
    %v7194 = vrcp.pop %v6477
    %v7195 = vmul.f32 1.0, %v7194
    %v7196 = vrcp.pop %v6478
    %v7197 = vmul.f32 1.0, %v7196
    %v7198 = vrcp.pop %v6479
    %v7199 = vmul.f32 1.0, %v7198
    %v7200 = vrcp.pop %v6480
    %v7201 = vmul.f32 1.0, %v7200
    %v7202 = vrcp.pop %v6481
    %v7203 = vmul.f32 1.0, %v7202
    %v7204 = vrcp.pop %v6482
    %v7205 = vmul.f32 1.0, %v7204
    %v7206 = vrcp.pop %v6483
    %v7207 = vmul.f32 1.0, %v7206
    %v7208 = vrcp.pop %v6484
    %v7209 = vmul.f32 1.0, %v7208
    %v7210 = vrcp.pop %v6485
    %v7211 = vmul.f32 1.0, %v7210
    %v7212 = vrcp.pop %v6486
    %v7213 = vmul.f32 1.0, %v7212
    %v7214 = vrcp.pop %v6487
    %v7215 = vmul.f32 1.0, %v7214
    %v7216 = vrcp.pop %v6488
    %v7217 = vmul.f32 1.0, %v7216
    %v7218 = vrcp.pop %v6489
    %v7219 = vmul.f32 1.0, %v7218
    %v7220 = vrcp.pop %v6490
    %v7221 = vmul.f32 1.0, %v7220
    %v7222 = vrcp.pop %v6491
    %v7223 = vmul.f32 1.0, %v7222
    %v7224 = vrcp.pop %v6492
    %v7225 = vmul.f32 1.0, %v7224
    %v7226 = vrcp.pop %v6493
    %v7227 = vmul.f32 1.0, %v7226
    %v7228 = vrcp.pop %v6494
    %v7229 = vmul.f32 1.0, %v7228
    %v7230 = vrcp.pop %v6495
    %v7231 = vmul.f32 1.0, %v7230
    %v7232 = vrcp.pop %v6496
    %v7233 = vmul.f32 1.0, %v7232
    %v7234 = vrcp.pop %v6497
    %v7235 = vmul.f32 1.0, %v7234
    %v7236 = vrcp.pop %v6498
    %v7237 = vmul.f32 1.0, %v7236
    %v7238 = vrcp.pop %v6499
    %v7239 = vmul.f32 1.0, %v7238
    %v7240 = vrcp.pop %v6500
    %v7241 = vmul.f32 1.0, %v7240
    %v7242 = vrcp.pop %v6501
    %v7243 = vmul.f32 1.0, %v7242
    %v7244 = vrcp.pop %v6502
    %v7245 = vmul.f32 1.0, %v7244
    %v7246 = vrcp.pop %v6503
    %v7247 = vmul.f32 1.0, %v7246
    %v7248 = vrcp.pop %v6504
    %v7249 = vmul.f32 1.0, %v7248
    %v7250 = vrcp.pop %v6505
    %v7251 = vmul.f32 1.0, %v7250
    %v7252 = vrcp.pop %v6506
    %v7253 = vmul.f32 1.0, %v7252
    %v7254 = vrcp.pop %v6507
    %v7255 = vmul.f32 1.0, %v7254
    %v7256 = vrcp.pop %v6508
    %v7257 = vmul.f32 1.0, %v7256
    %v7258 = vrcp.pop %v6509
    %v7259 = vmul.f32 1.0, %v7258
    %v7260 = vrcp.pop %v6510
    %v7261 = vmul.f32 1.0, %v7260
    %v7262 = vrcp.pop %v6511
    %v7263 = vmul.f32 1.0, %v7262
    %v7264 = vrcp.pop %v6512
    %v7265 = vmul.f32 1.0, %v7264
    %v7266 = vrcp.pop %v6513
    %v7267 = vmul.f32 1.0, %v7266
    %v7268 = vrcp.pop %v6514
    %v7269 = vmul.f32 1.0, %v7268
    %v7270 = vrcp.pop %v6515
    %v7271 = vmul.f32 1.0, %v7270
    %v7272 = vrcp.pop %v6516
    %v7273 = vmul.f32 1.0, %v7272
    %v7274 = vrcp.pop %v6517
    %v7275 = vmul.f32 1.0, %v7274
    %v7276 = vrcp.pop %v6518
    %v7277 = vmul.f32 1.0, %v7276
    %v7278 = vrcp.pop %v6519
    %v7279 = vmul.f32 1.0, %v7278
    %v7280 = vrcp.pop %v6520
    %v7281 = vmul.f32 1.0, %v7280
    %v7282 = vrcp.pop %v6521
    %v7283 = vmul.f32 1.0, %v7282
    %v7284 = vrcp.pop %v6522
    %v7285 = vmul.f32 1.0, %v7284
    %v7286 = vrcp.pop %v6523
    %v7287 = vmul.f32 1.0, %v7286
    %v7288 = vrcp.pop %v6524
    %v7289 = vmul.f32 1.0, %v7288
    %v7290 = vrcp.pop %v6525
    %v7291 = vmul.f32 1.0, %v7290
    %v7292 = vrcp.pop %v6526
    %v7293 = vmul.f32 1.0, %v7292
    %v7294 = vrcp.pop %v6527
    %v7295 = vmul.f32 1.0, %v7294
    %v7296 = vrcp.pop %v6528
    %v7297 = vmul.f32 1.0, %v7296
    %v7298 = vrcp.pop %v6529
    %v7299 = vmul.f32 1.0, %v7298
    %v7300 = vrcp.pop %v6530
    %v7301 = vmul.f32 1.0, %v7300
    %v7302 = vrcp.pop %v6531
    %v7303 = vmul.f32 1.0, %v7302
    %v7304 = vrcp.pop %v6532
    %v7305 = vmul.f32 1.0, %v7304
    %v7306 = vrcp.pop %v6533
    %v7307 = vmul.f32 1.0, %v7306
    %v7308 = vrcp.pop %v6534
    %v7309 = vmul.f32 1.0, %v7308
    %v7310 = vrcp.pop %v6535
    %v7311 = vmul.f32 1.0, %v7310
    %v7312 = vrcp.pop %v6536
    %v7313 = vmul.f32 1.0, %v7312
    %v7314 = vrcp.pop %v6537
    %v7315 = vmul.f32 1.0, %v7314
    %v7316 = vrcp.pop %v6538
    %v7317 = vmul.f32 1.0, %v7316
    %v7318 = vrcp.pop %v6539
    %v7319 = vmul.f32 1.0, %v7318
    %v7320 = vrcp.pop %v6540
    %v7321 = vmul.f32 1.0, %v7320
    %v7322 = vrcp.pop %v6541
    %v7323 = vmul.f32 1.0, %v7322
    %v7324 = vrcp.pop %v6542
    %v7325 = vmul.f32 1.0, %v7324
    %v7326 = vrcp.pop %v6543
    %v7327 = vmul.f32 1.0, %v7326
    %v7328 = vrcp.pop %v6544
    %v7329 = vmul.f32 1.0, %v7328
    %v7330 = vrcp.pop %v6545
    %v7331 = vmul.f32 1.0, %v7330
    %v7332 = vrcp.pop %v6546
    %v7333 = vmul.f32 1.0, %v7332
    %v7334 = vrcp.pop %v6547
    %v7335 = vmul.f32 1.0, %v7334
    %v7336 = vrcp.pop %v6548
    %v7337 = vmul.f32 1.0, %v7336
    %v7338 = vrcp.pop %v6549
    %v7339 = vmul.f32 1.0, %v7338
    %v7340 = vrcp.pop %v6550
    %v7341 = vmul.f32 1.0, %v7340
    %v7342 = vrcp.pop %v6551
    %v7343 = vmul.f32 1.0, %v7342
    %v7344 = vrcp.pop %v6552
    %v7345 = vmul.f32 1.0, %v7344
    %v7346 = vrcp.pop %v6553
    %v7347 = vmul.f32 1.0, %v7346
    %v7348 = vrcp.pop %v6554
    %v7349 = vmul.f32 1.0, %v7348
    %v7350 = vrcp.pop %v6555
    %v7351 = vmul.f32 1.0, %v7350
    %v7352 = vrcp.pop %v6556
    %v7353 = vmul.f32 1.0, %v7352
    %v7354 = vrcp.pop %v6557
    %v7355 = vmul.f32 1.0, %v7354
    %v7356 = vrcp.pop %v6558
    %v7357 = vmul.f32 1.0, %v7356
    %v7358 = vrcp.pop %v6559
    %v7359 = vmul.f32 1.0, %v7358
    %v7360 = vrcp.pop %v6560
    %v7361 = vmul.f32 1.0, %v7360
    %v7362 = vrcp.pop %v6561
    %v7363 = vmul.f32 1.0, %v7362
    %v7364 = vrcp.pop %v6562
    %v7365 = vmul.f32 1.0, %v7364
    %v7366 = vrcp.pop %v6563
    %v7367 = vmul.f32 1.0, %v7366
    %v7368 = vrcp.pop %v6564
    %v7369 = vmul.f32 1.0, %v7368
    %v7370 = vrcp.pop %v6565
    %v7371 = vmul.f32 1.0, %v7370
    %v7372 = vrcp.pop %v6566
    %v7373 = vmul.f32 1.0, %v7372
    %v7374 = vrcp.pop %v6567
    %v7375 = vmul.f32 1.0, %v7374
    %v7376 = vrcp.pop %v6568
    %v7377 = vmul.f32 1.0, %v7376
    %v7378 = vrcp.pop %v6569
    %v7379 = vmul.f32 1.0, %v7378
    %v7380 = vrcp.pop %v6570
    %v7381 = vmul.f32 1.0, %v7380
    %v7382 = vrcp.pop %v6571
    %v7383 = vmul.f32 1.0, %v7382
    %v7384 = vrcp.pop %v6572
    %v7385 = vmul.f32 1.0, %v7384
    %v7386 = vrcp.pop %v6573
    %v7387 = vmul.f32 1.0, %v7386
    %v7388 = vrcp.pop %v6574
    %v7389 = vmul.f32 1.0, %v7388
    %v7390 = vrcp.pop %v6575
    %v7391 = vmul.f32 1.0, %v7390
    %v7392 = vrcp.pop %v6576
    %v7393 = vmul.f32 1.0, %v7392
    %v7394 = vrcp.pop %v6577
    %v7395 = vmul.f32 1.0, %v7394
    %v7396 = vrcp.pop %v6578
    %v7397 = vmul.f32 1.0, %v7396
    %v7398 = vrcp.pop %v6579
    %v7399 = vmul.f32 1.0, %v7398
    %v7400 = vrcp.pop %v6580
    %v7401 = vmul.f32 1.0, %v7400
    %v7402 = vrcp.pop %v6581
    %v7403 = vmul.f32 1.0, %v7402
    %v7404 = vrcp.pop %v6582
    %v7405 = vmul.f32 1.0, %v7404
    %v7406 = vrcp.pop %v6583
    %v7407 = vmul.f32 1.0, %v7406
    %v7408 = vrcp.pop %v6584
    %v7409 = vmul.f32 1.0, %v7408
    %v7410 = vrcp.pop %v6585
    %v7411 = vmul.f32 1.0, %v7410
    %v7412 = vrcp.pop %v6586
    %v7413 = vmul.f32 1.0, %v7412
    %v7414 = vrcp.pop %v6587
    %v7415 = vmul.f32 1.0, %v7414
    %v7416 = vrcp.pop %v6588
    %v7417 = vmul.f32 1.0, %v7416
    %v7418 = vrcp.pop %v6589
    %v7419 = vmul.f32 1.0, %v7418
    %v7420 = vrcp.pop %v6590
    %v7421 = vmul.f32 1.0, %v7420
    %v7422 = vrcp.pop %v6591
    %v7423 = vmul.f32 1.0, %v7422
    %v7424 = vrcp.pop %v6592
    %v7425 = vmul.f32 1.0, %v7424
    %v7426 = vrcp.pop %v6593
    %v7427 = vmul.f32 1.0, %v7426
    %v7428 = vrcp.pop %v6594
    %v7429 = vmul.f32 1.0, %v7428
    %v7430 = vrcp.pop %v6595
    %v7431 = vmul.f32 1.0, %v7430
    %v7432 = vrcp.pop %v6596
    %v7433 = vmul.f32 1.0, %v7432
    %v7434 = vrcp.pop %v6597
    %v7435 = vmul.f32 1.0, %v7434
    %v7436 = vrcp.pop %v6598
    %v7437 = vmul.f32 1.0, %v7436
    %v7438 = vrcp.pop %v6599
    %v7439 = vmul.f32 1.0, %v7438
    %v7440 = vrcp.pop %v6600
    %v7441 = vmul.f32 1.0, %v7440
    %v7442 = vrcp.pop %v6601
    %v7443 = vmul.f32 1.0, %v7442
    %v7444 = vrcp.pop %v6602
    %v7445 = vmul.f32 1.0, %v7444
    %v7446 = vrcp.pop %v6603
    %v7447 = vmul.f32 1.0, %v7446
    %v7448 = vrcp.pop %v6604
    %v7449 = vmul.f32 1.0, %v7448
    %v7450 = vrcp.pop %v6605
    %v7451 = vmul.f32 1.0, %v7450
    %v7452 = vrcp.pop %v6606
    %v7453 = vmul.f32 1.0, %v7452
    %v7454 = vrcp.pop %v6607
    %v7455 = vmul.f32 1.0, %v7454
    %v7456 = vrcp.pop %v6608
    %v7457 = vmul.f32 1.0, %v7456
    %v7458 = vrcp.pop %v6609
    %v7459 = vmul.f32 1.0, %v7458
    %v7460 = vrcp.pop %v6610
    %v7461 = vmul.f32 1.0, %v7460
    %v7462 = vrcp.pop %v6611
    %v7463 = vmul.f32 1.0, %v7462
    %v7464 = vrcp.pop %v6612
    %v7465 = vmul.f32 1.0, %v7464
    %v7466 = vrcp.pop %v6613
    %v7467 = vmul.f32 1.0, %v7466
    %v7468 = vrcp.pop %v6614
    %v7469 = vmul.f32 1.0, %v7468
    %v7470 = vrcp.pop %v6615
    %v7471 = vmul.f32 1.0, %v7470
    %v7472 = vrcp.pop %v6616
    %v7473 = vmul.f32 1.0, %v7472
    %v7474 = vrcp.pop %v6617
    %v7475 = vmul.f32 1.0, %v7474
    %v7476 = vrcp.pop %v6618
    %v7477 = vmul.f32 1.0, %v7476
    %v7478 = vrcp.pop %v6619
    %v7479 = vmul.f32 1.0, %v7478
    %v7480 = vrcp.pop %v6620
    %v7481 = vmul.f32 1.0, %v7480
    %v7482 = vrcp.pop %v6621
    %v7483 = vmul.f32 1.0, %v7482
    %v7484 = vrcp.pop %v6622
    %v7485 = vmul.f32 1.0, %v7484
    %v7486 = vrcp.pop %v6623
    %v7487 = vmul.f32 1.0, %v7486
    %v7488 = vrcp.pop %v6624
    %v7489 = vmul.f32 1.0, %v7488
    %v7490 = vrcp.pop %v6625
    %v7491 = vmul.f32 1.0, %v7490
    %v7492 = vrcp.pop %v6626
    %v7493 = vmul.f32 1.0, %v7492
    %v7494 = vrcp.pop %v6627
    %v7495 = vmul.f32 1.0, %v7494
    %v7496 = vrcp.pop %v6628
    %v7497 = vmul.f32 1.0, %v7496
    %v7498 = vrcp.pop %v6629
    %v7499 = vmul.f32 1.0, %v7498
    %v7500 = vrcp.pop %v6630
    %v7501 = vmul.f32 1.0, %v7500
    %v7502 = vrcp.pop %v6631
    %v7503 = vmul.f32 1.0, %v7502
    %v7504 = vrcp.pop %v6632
    %v7505 = vmul.f32 1.0, %v7504
    %v7506 = vrcp.pop %v6633
    %v7507 = vmul.f32 1.0, %v7506
    %v7508 = vrcp.pop %v6634
    %v7509 = vmul.f32 1.0, %v7508
    %v7510 = vrcp.pop %v6635
    %v7511 = vmul.f32 1.0, %v7510
    %v7512 = vrcp.pop %v6636
    %v7513 = vmul.f32 1.0, %v7512
    %v7514 = vrcp.pop %v6637
    %v7515 = vmul.f32 1.0, %v7514
    %v7516 = vrcp.pop %v6638
    %v7517 = vmul.f32 1.0, %v7516
    %v7518 = vrcp.pop %v6639
    %v7519 = vmul.f32 1.0, %v7518
    %v7520 = vrcp.pop %v6640
    %v7521 = vmul.f32 1.0, %v7520
    %v7522 = vrcp.pop %v6641
    %v7523 = vmul.f32 1.0, %v7522
    %v7524 = vrcp.pop %v6642
    %v7525 = vmul.f32 1.0, %v7524
    %v7526 = vrcp.pop %v6643
    %v7527 = vmul.f32 1.0, %v7526
    %v7528 = vrcp.pop %v6644
    %v7529 = vmul.f32 1.0, %v7528
    %v7530 = vrcp.pop %v6645
    %v7531 = vmul.f32 1.0, %v7530
    %v7532 = vrcp.pop %v6646
    %v7533 = vmul.f32 1.0, %v7532
    %v7534 = vrcp.pop %v6647
    %v7535 = vmul.f32 1.0, %v7534
    %v7536 = vrcp.pop %v6648
    %v7537 = vmul.f32 1.0, %v7536
    %v7538 = vrcp.pop %v6649
    %v7539 = vmul.f32 1.0, %v7538
    %v7540 = vrcp.pop %v6650
    %v7541 = vmul.f32 1.0, %v7540
    %v7542 = vrcp.pop %v6651
    %v7543 = vmul.f32 1.0, %v7542
    %v7544 = vrcp.pop %v6652
    %v7545 = vmul.f32 1.0, %v7544
    %v7546 = vrcp.pop %v6653
    %v7547 = vmul.f32 1.0, %v7546
    %v7548 = vrcp.pop %v6654
    %v7549 = vmul.f32 1.0, %v7548
    %v7550 = vrcp.pop %v6655
    %v7551 = vmul.f32 1.0, %v7550
    %v7552 = vrcp.pop %v6656
    %v7553 = vmul.f32 1.0, %v7552
    %v7554 = vrcp.pop %v6657
    %v7555 = vmul.f32 1.0, %v7554
    %v7556 = vrcp.pop %v6658
    %v7557 = vmul.f32 1.0, %v7556
    %v7558 = vrcp.pop %v6659
    %v7559 = vmul.f32 1.0, %v7558
    %v7560 = vrcp.pop %v6660
    %v7561 = vmul.f32 1.0, %v7560
    %v7562 = vrcp.pop %v6661
    %v7563 = vmul.f32 1.0, %v7562
    %v7564 = vrcp.pop %v6662
    %v7565 = vmul.f32 1.0, %v7564
    %v7566 = vrcp.pop %v6663
    %v7567 = vmul.f32 1.0, %v7566
    %v7568 = vrcp.pop %v6664
    %v7569 = vmul.f32 1.0, %v7568
    %v7570 = vrcp.pop %v6665
    %v7571 = vmul.f32 1.0, %v7570
    %v7572 = vrcp.pop %v6666
    %v7573 = vmul.f32 1.0, %v7572
    %v7574 = vrcp.pop %v6667
    %v7575 = vmul.f32 1.0, %v7574
    %v7576 = vrcp.pop %v6668
    %v7577 = vmul.f32 1.0, %v7576
    %v7578 = vrcp.pop %v6669
    %v7579 = vmul.f32 1.0, %v7578
    %v7580 = vrcp.pop %v6670
    %v7581 = vmul.f32 1.0, %v7580
    %v7582 = vrcp.pop %v6671
    %v7583 = vmul.f32 1.0, %v7582
    %v7584 = vrcp.pop %v6672
    %v7585 = vmul.f32 1.0, %v7584
    %v7586 = vrcp.pop %v6673
    %v7587 = vmul.f32 1.0, %v7586
    %v7588 = vrcp.pop %v6674
    %v7589 = vmul.f32 1.0, %v7588
    %v7590 = vrcp.pop %v6675
    %v7591 = vmul.f32 1.0, %v7590
    %v7592 = vrcp.pop %v6676
    %v7593 = vmul.f32 1.0, %v7592
    %v7594 = vrcp.pop %v6677
    %v7595 = vmul.f32 1.0, %v7594
    %v7596 = vrcp.pop %v6678
    %v7597 = vmul.f32 1.0, %v7596
    %v7598 = vrcp.pop %v6679
    %v7599 = vmul.f32 1.0, %v7598
    %v7600 = vrcp.pop %v6680
    %v7601 = vmul.f32 1.0, %v7600
    %v7602 = vrcp.pop %v6681
    %v7603 = vmul.f32 1.0, %v7602
    %v7604 = vrcp.pop %v6682
    %v7605 = vmul.f32 1.0, %v7604
    %v7606 = vrcp.pop %v6683
    %v7607 = vmul.f32 1.0, %v7606
    %v7608 = vrcp.pop %v6684
    %v7609 = vmul.f32 1.0, %v7608
    %v7610 = vrcp.pop %v6685
    %v7611 = vmul.f32 1.0, %v7610
    %v7612 = vrcp.pop %v6686
    %v7613 = vmul.f32 1.0, %v7612
    %v7614 = vrcp.pop %v6687
    %v7615 = vmul.f32 1.0, %v7614
    %v7616 = vrcp.pop %v6688
    %v7617 = vmul.f32 1.0, %v7616
    %v7618 = vrcp.pop %v6689
    %v7619 = vmul.f32 1.0, %v7618
    %v7620 = vrcp.pop %v6690
    %v7621 = vmul.f32 1.0, %v7620
    %v7622 = vrcp.pop %v6691
    %v7623 = vmul.f32 1.0, %v7622
    %v7624 = vrcp.pop %v6692
    %v7625 = vmul.f32 1.0, %v7624
    %v7626 = vrcp.pop %v6693
    %v7627 = vmul.f32 1.0, %v7626
    %v7628 = vrcp.pop %v6694
    %v7629 = vmul.f32 1.0, %v7628
    %v7630 = vrcp.pop %v6695
    %v7631 = vmul.f32 1.0, %v7630
    %v7632 = vrcp.pop %v6696
    %v7633 = vmul.f32 1.0, %v7632
    %v7634 = vrcp.pop %v6697
    %v7635 = vmul.f32 1.0, %v7634
    %v7636 = vrcp.pop %v6698
    %v7637 = vmul.f32 1.0, %v7636
    %v7638 = vrcp.pop %v6699
    %v7639 = vmul.f32 1.0, %v7638
    %v7640 = vrcp.pop %v6700
    %v7641 = vmul.f32 1.0, %v7640
    %v7642 = vrcp.pop %v6701
    %v7643 = vmul.f32 1.0, %v7642
    %v7644 = vrcp.pop %v6702
    %v7645 = vmul.f32 1.0, %v7644
    %v7646 = vrcp.pop %v6703
    %v7647 = vmul.f32 1.0, %v7646
    %v7648 = vrcp.pop %v6704
    %v7649 = vmul.f32 1.0, %v7648
    %v7650 = vrcp.pop %v6705
    %v7651 = vmul.f32 1.0, %v7650
    %v7652 = vrcp.pop %v6706
    %v7653 = vmul.f32 1.0, %v7652
    %v7654 = vrcp.pop %v6707
    %v7655 = vmul.f32 1.0, %v7654
    %v7656 = vrcp.pop %v6708
    %v7657 = vmul.f32 1.0, %v7656
    %v7658 = vrcp.pop %v6709
    %v7659 = vmul.f32 1.0, %v7658
    %v7660 = vrcp.pop %v6710
    %v7661 = vmul.f32 1.0, %v7660
    %v7662 = vrcp.pop %v6711
    %v7663 = vmul.f32 1.0, %v7662
    %v7664 = vrcp.pop %v6712
    %v7665 = vmul.f32 1.0, %v7664
    %v7666 = vrcp.pop %v6713
    %v7667 = vmul.f32 1.0, %v7666
    %v7668 = vrcp.pop %v6714
    %v7669 = vmul.f32 1.0, %v7668
    %v7670 = vrcp.pop %v6715
    %v7671 = vmul.f32 1.0, %v7670
    %v7672 = vrcp.pop %v6716
    %v7673 = vmul.f32 1.0, %v7672
    %v7674 = vrcp.pop %v6717
    %v7675 = vmul.f32 1.0, %v7674
    %v7676 = vrcp.pop %v6718
    %v7677 = vmul.f32 1.0, %v7676
    %v7678 = vrcp.pop %v6719
    %v7679 = vmul.f32 1.0, %v7678
    %v7680 = vrcp.pop %v6720
    %v7681 = vmul.f32 1.0, %v7680
    %v7682 = vrcp.pop %v6721
    %v7683 = vmul.f32 1.0, %v7682
    %v7684 = vrcp.pop %v6722
    %v7685 = vmul.f32 1.0, %v7684
    %v7686 = vrcp.pop %v6723
    %v7687 = vmul.f32 1.0, %v7686
    %v7688 = vrcp.pop %v6724
    %v7689 = vmul.f32 1.0, %v7688
    %v7690 = vrcp.pop %v6725
    %v7691 = vmul.f32 1.0, %v7690
    %v7692 = vrcp.pop %v6726
    %v7693 = vmul.f32 1.0, %v7692
    %v7694 = vrcp.pop %v6727
    %v7695 = vmul.f32 1.0, %v7694
    %v7696 = vrcp.pop %v6728
    %v7697 = vmul.f32 1.0, %v7696
    %v7698 = vrcp.pop %v6729
    %v7699 = vmul.f32 1.0, %v7698
    %v7700 = vrcp.pop %v6730
    %v7701 = vmul.f32 1.0, %v7700
    %v7702 = vrcp.pop %v6731
    %v7703 = vmul.f32 1.0, %v7702
    %v7704 = vrcp.pop %v6732
    %v7705 = vmul.f32 1.0, %v7704
    %v7706 = vrcp.pop %v6733
    %v7707 = vmul.f32 1.0, %v7706
    %v7708 = vrcp.pop %v6734
    %v7709 = vmul.f32 1.0, %v7708
    %v7710 = vrcp.pop %v6735
    %v7711 = vmul.f32 1.0, %v7710
    %v7712 = vrcp.pop %v6736
    %v7713 = vmul.f32 1.0, %v7712
    %v7714 = vrcp.pop %v6737
    %v7715 = vmul.f32 1.0, %v7714
    %v7716 = vrcp.pop %v6738
    %v7717 = vmul.f32 1.0, %v7716
    %v7718 = vrcp.pop %v6739
    %v7719 = vmul.f32 1.0, %v7718
    %v7720 = vrcp.pop %v6740
    %v7721 = vmul.f32 1.0, %v7720
    %v7722 = vrcp.pop %v6741
    %v7723 = vmul.f32 1.0, %v7722
    %v7724 = vrcp.pop %v6742
    %v7725 = vmul.f32 1.0, %v7724
    %v7726 = vrcp.pop %v6743
    %v7727 = vmul.f32 1.0, %v7726
    %v7728 = vrcp.pop %v6744
    %v7729 = vmul.f32 1.0, %v7728
    %v7730 = vrcp.pop %v6745
    %v7731 = vmul.f32 1.0, %v7730
    %v7732 = vrcp.pop %v6746
    %v7733 = vmul.f32 1.0, %v7732
    %v7734 = vrcp.pop %v6747
    %v7735 = vmul.f32 1.0, %v7734
    %v7736 = vrcp.pop %v6748
    %v7737 = vmul.f32 1.0, %v7736
    %v7738 = vrcp.pop %v6749
    %v7739 = vmul.f32 1.0, %v7738
    %v7740 = vrcp.pop %v6750
    %v7741 = vmul.f32 1.0, %v7740
    %v7742 = vrcp.pop %v6751
    %v7743 = vmul.f32 1.0, %v7742
    %v7744 = vrcp.pop %v6752
    %v7745 = vmul.f32 1.0, %v7744
    %v7746 = vrcp.pop %v6753
    %v7747 = vmul.f32 1.0, %v7746
    %v7748 = vrcp.pop %v6754
    %v7749 = vmul.f32 1.0, %v7748
    %v7750 = vrcp.pop %v6755
    %v7751 = vmul.f32 1.0, %v7750
    %v7752 = vrcp.pop %v6756
    %v7753 = vmul.f32 1.0, %v7752
    %v7754 = vrcp.pop %v6757
    %v7755 = vmul.f32 1.0, %v7754
    %v7756 = vrcp.pop %v6758
    %v7757 = vmul.f32 1.0, %v7756
    %v7758 = vrcp.pop %v6759
    %v7759 = vmul.f32 1.0, %v7758
    %v7760 = vrcp.pop %v6760
    %v7761 = vmul.f32 1.0, %v7760
    %v7762 = vrcp.pop %v6761
    %v7763 = vmul.f32 1.0, %v7762
    %v7764 = vrcp.pop %v6762
    %v7765 = vmul.f32 1.0, %v7764
    %v7766 = vrcp.pop %v6763
    %v7767 = vmul.f32 1.0, %v7766
    %v7768 = vrcp.pop %v6764
    %v7769 = vmul.f32 1.0, %v7768
    %v7770 = vrcp.pop %v6765
    %v7771 = vmul.f32 1.0, %v7770
    %v7772 = vrcp.pop %v6766
    %v7773 = vmul.f32 1.0, %v7772
    %v7774 = vrcp.pop %v6767
    %v7775 = vmul.f32 1.0, %v7774
    %v7776 = vmul.f32 %v3461, %v6769
    %v7777 = vmul.f32 %v3463, %v6771
    %v7778 = vmul.f32 %v4124, %v6773
    %v7779 = vmul.f32 %v4126, %v6775
    %v7780 = vmul.f32 %v3465, %v6777
    %v7781 = vmul.f32 %v3467, %v6779
    %v7782 = vmul.f32 %v4128, %v6781
    %v7783 = vmul.f32 %v4130, %v6783
    %v7784 = vmul.f32 %v3471, %v6785
    %v7785 = vmul.f32 %v3473, %v6787
    %v7786 = vmul.f32 %v4134, %v6789
    %v7787 = vmul.f32 %v4136, %v6791
    %v7788 = vmul.f32 %v3475, %v6793
    %v7789 = vmul.f32 %v3477, %v6795
    %v7790 = vmul.f32 %v4138, %v6797
    %v7791 = vmul.f32 %v4140, %v6799
    %v7792 = vmul.f32 %v3481, %v6801
    %v7793 = vmul.f32 %v3483, %v6803
    %v7794 = vmul.f32 %v4144, %v6805
    %v7795 = vmul.f32 %v4146, %v6807
    %v7796 = vmul.f32 %v3485, %v6809
    %v7797 = vmul.f32 %v3487, %v6811
    %v7798 = vmul.f32 %v4148, %v6813
    %v7799 = vmul.f32 %v4150, %v6815
    %v7800 = vmul.f32 %v3491, %v6817
    %v7801 = vmul.f32 %v3493, %v6819
    %v7802 = vmul.f32 %v4154, %v6821
    %v7803 = vmul.f32 %v4156, %v6823
    %v7804 = vmul.f32 %v3495, %v6825
    %v7805 = vmul.f32 %v3497, %v6827
    %v7806 = vmul.f32 %v4158, %v6829
    %v7807 = vmul.f32 %v4160, %v6831
    %v7808 = vmul.f32 %v3501, %v6833
    %v7809 = vmul.f32 %v3503, %v6835
    %v7810 = vmul.f32 %v4164, %v6837
    %v7811 = vmul.f32 %v4166, %v6839
    %v7812 = vmul.f32 %v3505, %v6841
    %v7813 = vmul.f32 %v3507, %v6843
    %v7814 = vmul.f32 %v4168, %v6845
    %v7815 = vmul.f32 %v4170, %v6847
    %v7816 = vmul.f32 %v3511, %v6849
    %v7817 = vmul.f32 %v3513, %v6851
    %v7818 = vmul.f32 %v4174, %v6853
    %v7819 = vmul.f32 %v4176, %v6855
    %v7820 = vmul.f32 %v3515, %v6857
    %v7821 = vmul.f32 %v3517, %v6859
    %v7822 = vmul.f32 %v4178, %v6861
    %v7823 = vmul.f32 %v4180, %v6863
    %v7824 = vmul.f32 %v3521, %v6865
    %v7825 = vmul.f32 %v3523, %v6867
    %v7826 = vmul.f32 %v4184, %v6869
    %v7827 = vmul.f32 %v4186, %v6871
    %v7828 = vmul.f32 %v3525, %v6873
    %v7829 = vmul.f32 %v3527, %v6875
    %v7830 = vmul.f32 %v4188, %v6877
    %v7831 = vmul.f32 %v4190, %v6879
    %v7832 = vmul.f32 %v3531, %v6881
    %v7833 = vmul.f32 %v3533, %v6883
    %v7834 = vmul.f32 %v4194, %v6885
    %v7835 = vmul.f32 %v4196, %v6887
    %v7836 = vmul.f32 %v3535, %v6889
    %v7837 = vmul.f32 %v3537, %v6891
    %v7838 = vmul.f32 %v4198, %v6893
    %v7839 = vmul.f32 %v4200, %v6895
    %v7840 = vmul.f32 %v3541, %v6897
    %v7841 = vmul.f32 %v3543, %v6899
    %v7842 = vmul.f32 %v4204, %v6901
    %v7843 = vmul.f32 %v4206, %v6903
    %v7844 = vmul.f32 %v3545, %v6905
    %v7845 = vmul.f32 %v3547, %v6907
    %v7846 = vmul.f32 %v4208, %v6909
    %v7847 = vmul.f32 %v4210, %v6911
    %v7848 = vmul.f32 %v3551, %v6913
    %v7849 = vmul.f32 %v3553, %v6915
    %v7850 = vmul.f32 %v4214, %v6917
    %v7851 = vmul.f32 %v4216, %v6919
    %v7852 = vmul.f32 %v3555, %v6921
    %v7853 = vmul.f32 %v3557, %v6923
    %v7854 = vmul.f32 %v4218, %v6925
    %v7855 = vmul.f32 %v4220, %v6927
    %v7856 = vmul.f32 %v3561, %v6929
    %v7857 = vmul.f32 %v3563, %v6931
    %v7858 = vmul.f32 %v4224, %v6933
    %v7859 = vmul.f32 %v4226, %v6935
    %v7860 = vmul.f32 %v3565, %v6937
    %v7861 = vmul.f32 %v3567, %v6939
    %v7862 = vmul.f32 %v4228, %v6941
    %v7863 = vmul.f32 %v4230, %v6943
    %v7864 = vmul.f32 %v3571, %v6945
    %v7865 = vmul.f32 %v3573, %v6947
    %v7866 = vmul.f32 %v4234, %v6949
    %v7867 = vmul.f32 %v4236, %v6951
    %v7868 = vmul.f32 %v3575, %v6953
    %v7869 = vmul.f32 %v3577, %v6955
    %v7870 = vmul.f32 %v4238, %v6957
    %v7871 = vmul.f32 %v4240, %v6959
    %v7872 = vmul.f32 %v3581, %v6961
    %v7873 = vmul.f32 %v3583, %v6963
    %v7874 = vmul.f32 %v4244, %v6965
    %v7875 = vmul.f32 %v4246, %v6967
    %v7876 = vmul.f32 %v3585, %v6969
    %v7877 = vmul.f32 %v3587, %v6971
    %v7878 = vmul.f32 %v4248, %v6973
    %v7879 = vmul.f32 %v4250, %v6975
    %v7880 = vmul.f32 %v3591, %v6977
    %v7881 = vmul.f32 %v3593, %v6979
    %v7882 = vmul.f32 %v4254, %v6981
    %v7883 = vmul.f32 %v4256, %v6983
    %v7884 = vmul.f32 %v3595, %v6985
    %v7885 = vmul.f32 %v3597, %v6987
    %v7886 = vmul.f32 %v4258, %v6989
    %v7887 = vmul.f32 %v4260, %v6991
    %v7888 = vmul.f32 %v3601, %v6993
    %v7889 = vmul.f32 %v3603, %v6995
    %v7890 = vmul.f32 %v4264, %v6997
    %v7891 = vmul.f32 %v4266, %v6999
    %v7892 = vmul.f32 %v3605, %v7001
    %v7893 = vmul.f32 %v3607, %v7003
    %v7894 = vmul.f32 %v4268, %v7005
    %v7895 = vmul.f32 %v4270, %v7007
    %v7896 = vmul.f32 %v3611, %v7009
    %v7897 = vmul.f32 %v3613, %v7011
    %v7898 = vmul.f32 %v4274, %v7013
    %v7899 = vmul.f32 %v4276, %v7015
    %v7900 = vmul.f32 %v3615, %v7017
    %v7901 = vmul.f32 %v3617, %v7019
    %v7902 = vmul.f32 %v4278, %v7021
    %v7903 = vmul.f32 %v4280, %v7023
    %v7904 = vmul.f32 %v3621, %v7025
    %v7905 = vmul.f32 %v3623, %v7027
    %v7906 = vmul.f32 %v4284, %v7029
    %v7907 = vmul.f32 %v4286, %v7031
    %v7908 = vmul.f32 %v3625, %v7033
    %v7909 = vmul.f32 %v3627, %v7035
    %v7910 = vmul.f32 %v4288, %v7037
    %v7911 = vmul.f32 %v4290, %v7039
    %v7912 = vmul.f32 %v3631, %v7041
    %v7913 = vmul.f32 %v3633, %v7043
    %v7914 = vmul.f32 %v4294, %v7045
    %v7915 = vmul.f32 %v4296, %v7047
    %v7916 = vmul.f32 %v3635, %v7049
    %v7917 = vmul.f32 %v3637, %v7051
    %v7918 = vmul.f32 %v4298, %v7053
    %v7919 = vmul.f32 %v4300, %v7055
    %v7920 = vmul.f32 %v3641, %v7057
    %v7921 = vmul.f32 %v3643, %v7059
    %v7922 = vmul.f32 %v4304, %v7061
    %v7923 = vmul.f32 %v4306, %v7063
    %v7924 = vmul.f32 %v3645, %v7065
    %v7925 = vmul.f32 %v3647, %v7067
    %v7926 = vmul.f32 %v4308, %v7069
    %v7927 = vmul.f32 %v4310, %v7071
    %v7928 = vmul.f32 %v3651, %v7073
    %v7929 = vmul.f32 %v3653, %v7075
    %v7930 = vmul.f32 %v4314, %v7077
    %v7931 = vmul.f32 %v4316, %v7079
    %v7932 = vmul.f32 %v3655, %v7081
    %v7933 = vmul.f32 %v3657, %v7083
    %v7934 = vmul.f32 %v4318, %v7085
    %v7935 = vmul.f32 %v4320, %v7087
    %v7936 = vmul.f32 %v3661, %v7089
    %v7937 = vmul.f32 %v3663, %v7091
    %v7938 = vmul.f32 %v4324, %v7093
    %v7939 = vmul.f32 %v4326, %v7095
    %v7940 = vmul.f32 %v3665, %v7097
    %v7941 = vmul.f32 %v3667, %v7099
    %v7942 = vmul.f32 %v4328, %v7101
    %v7943 = vmul.f32 %v4330, %v7103
    %v7944 = vmul.f32 %v3671, %v7105
    %v7945 = vmul.f32 %v3673, %v7107
    %v7946 = vmul.f32 %v4334, %v7109
    %v7947 = vmul.f32 %v4336, %v7111
    %v7948 = vmul.f32 %v3675, %v7113
    %v7949 = vmul.f32 %v3677, %v7115
    %v7950 = vmul.f32 %v4338, %v7117
    %v7951 = vmul.f32 %v4340, %v7119
    %v7952 = vmul.f32 %v3681, %v7121
    %v7953 = vmul.f32 %v3683, %v7123
    %v7954 = vmul.f32 %v4344, %v7125
    %v7955 = vmul.f32 %v4346, %v7127
    %v7956 = vmul.f32 %v3685, %v7129
    %v7957 = vmul.f32 %v3687, %v7131
    %v7958 = vmul.f32 %v4348, %v7133
    %v7959 = vmul.f32 %v4350, %v7135
    %v7960 = vmul.f32 %v3691, %v7137
    %v7961 = vmul.f32 %v3693, %v7139
    %v7962 = vmul.f32 %v4354, %v7141
    %v7963 = vmul.f32 %v4356, %v7143
    %v7964 = vmul.f32 %v3695, %v7145
    %v7965 = vmul.f32 %v3697, %v7147
    %v7966 = vmul.f32 %v4358, %v7149
    %v7967 = vmul.f32 %v4360, %v7151
    %v7968 = vmul.f32 %v3701, %v7153
    %v7969 = vmul.f32 %v3703, %v7155
    %v7970 = vmul.f32 %v4364, %v7157
    %v7971 = vmul.f32 %v4366, %v7159
    %v7972 = vmul.f32 %v3705, %v7161
    %v7973 = vmul.f32 %v3707, %v7163
    %v7974 = vmul.f32 %v4368, %v7165
    %v7975 = vmul.f32 %v4370, %v7167
    %v7976 = vmul.f32 %v3711, %v7169
    %v7977 = vmul.f32 %v3713, %v7171
    %v7978 = vmul.f32 %v4374, %v7173
    %v7979 = vmul.f32 %v4376, %v7175
    %v7980 = vmul.f32 %v3715, %v7177
    %v7981 = vmul.f32 %v3717, %v7179
    %v7982 = vmul.f32 %v4378, %v7181
    %v7983 = vmul.f32 %v4380, %v7183
    %v7984 = vmul.f32 %v3721, %v7185
    %v7985 = vmul.f32 %v3723, %v7187
    %v7986 = vmul.f32 %v4384, %v7189
    %v7987 = vmul.f32 %v4386, %v7191
    %v7988 = vmul.f32 %v3725, %v7193
    %v7989 = vmul.f32 %v3727, %v7195
    %v7990 = vmul.f32 %v4388, %v7197
    %v7991 = vmul.f32 %v4390, %v7199
    %v7992 = vmul.f32 %v3731, %v7201
    %v7993 = vmul.f32 %v3733, %v7203
    %v7994 = vmul.f32 %v4394, %v7205
    %v7995 = vmul.f32 %v4396, %v7207
    %v7996 = vmul.f32 %v3735, %v7209
    %v7997 = vmul.f32 %v3737, %v7211
    %v7998 = vmul.f32 %v4398, %v7213
    %v7999 = vmul.f32 %v4400, %v7215
    %v8000 = vmul.f32 %v3741, %v7217
    %v8001 = vmul.f32 %v3743, %v7219
    %v8002 = vmul.f32 %v4404, %v7221
    %v8003 = vmul.f32 %v4406, %v7223
    %v8004 = vmul.f32 %v3745, %v7225
    %v8005 = vmul.f32 %v3747, %v7227
    %v8006 = vmul.f32 %v4408, %v7229
    %v8007 = vmul.f32 %v4410, %v7231
    %v8008 = vmul.f32 %v3751, %v7233
    %v8009 = vmul.f32 %v3753, %v7235
    %v8010 = vmul.f32 %v4414, %v7237
    %v8011 = vmul.f32 %v4416, %v7239
    %v8012 = vmul.f32 %v3755, %v7241
    %v8013 = vmul.f32 %v3757, %v7243
    %v8014 = vmul.f32 %v4418, %v7245
    %v8015 = vmul.f32 %v4420, %v7247
    %v8016 = vmul.f32 %v3761, %v7249
    %v8017 = vmul.f32 %v3763, %v7251
    %v8018 = vmul.f32 %v4424, %v7253
    %v8019 = vmul.f32 %v4426, %v7255
    %v8020 = vmul.f32 %v3765, %v7257
    %v8021 = vmul.f32 %v3767, %v7259
    %v8022 = vmul.f32 %v4428, %v7261
    %v8023 = vmul.f32 %v4430, %v7263
    %v8024 = vmul.f32 %v3771, %v7265
    %v8025 = vmul.f32 %v3773, %v7267
    %v8026 = vmul.f32 %v4434, %v7269
    %v8027 = vmul.f32 %v4436, %v7271
    %v8028 = vmul.f32 %v3775, %v7273
    %v8029 = vmul.f32 %v3777, %v7275
    %v8030 = vmul.f32 %v4438, %v7277
    %v8031 = vmul.f32 %v4440, %v7279
    %v8032 = vmul.f32 %v3781, %v7281
    %v8033 = vmul.f32 %v3783, %v7283
    %v8034 = vmul.f32 %v4444, %v7285
    %v8035 = vmul.f32 %v4446, %v7287
    %v8036 = vmul.f32 %v3785, %v7289
    %v8037 = vmul.f32 %v3787, %v7291
    %v8038 = vmul.f32 %v4448, %v7293
    %v8039 = vmul.f32 %v4450, %v7295
    %v8040 = vmul.f32 %v3791, %v7297
    %v8041 = vmul.f32 %v3793, %v7299
    %v8042 = vmul.f32 %v4454, %v7301
    %v8043 = vmul.f32 %v4456, %v7303
    %v8044 = vmul.f32 %v3795, %v7305
    %v8045 = vmul.f32 %v3797, %v7307
    %v8046 = vmul.f32 %v4458, %v7309
    %v8047 = vmul.f32 %v4460, %v7311
    %v8048 = vmul.f32 %v3801, %v7313
    %v8049 = vmul.f32 %v3803, %v7315
    %v8050 = vmul.f32 %v4464, %v7317
    %v8051 = vmul.f32 %v4466, %v7319
    %v8052 = vmul.f32 %v3805, %v7321
    %v8053 = vmul.f32 %v3807, %v7323
    %v8054 = vmul.f32 %v4468, %v7325
    %v8055 = vmul.f32 %v4470, %v7327
    %v8056 = vmul.f32 %v3811, %v7329
    %v8057 = vmul.f32 %v3813, %v7331
    %v8058 = vmul.f32 %v4474, %v7333
    %v8059 = vmul.f32 %v4476, %v7335
    %v8060 = vmul.f32 %v3815, %v7337
    %v8061 = vmul.f32 %v3817, %v7339
    %v8062 = vmul.f32 %v4478, %v7341
    %v8063 = vmul.f32 %v4480, %v7343
    %v8064 = vmul.f32 %v3821, %v7345
    %v8065 = vmul.f32 %v3823, %v7347
    %v8066 = vmul.f32 %v4484, %v7349
    %v8067 = vmul.f32 %v4486, %v7351
    %v8068 = vmul.f32 %v3825, %v7353
    %v8069 = vmul.f32 %v3827, %v7355
    %v8070 = vmul.f32 %v4488, %v7357
    %v8071 = vmul.f32 %v4490, %v7359
    %v8072 = vmul.f32 %v3831, %v7361
    %v8073 = vmul.f32 %v3833, %v7363
    %v8074 = vmul.f32 %v4494, %v7365
    %v8075 = vmul.f32 %v4496, %v7367
    %v8076 = vmul.f32 %v3835, %v7369
    %v8077 = vmul.f32 %v3837, %v7371
    %v8078 = vmul.f32 %v4498, %v7373
    %v8079 = vmul.f32 %v4500, %v7375
    %v8080 = vmul.f32 %v3841, %v7377
    %v8081 = vmul.f32 %v3843, %v7379
    %v8082 = vmul.f32 %v4504, %v7381
    %v8083 = vmul.f32 %v4506, %v7383
    %v8084 = vmul.f32 %v3845, %v7385
    %v8085 = vmul.f32 %v3847, %v7387
    %v8086 = vmul.f32 %v4508, %v7389
    %v8087 = vmul.f32 %v4510, %v7391
    %v8088 = vmul.f32 %v3851, %v7393
    %v8089 = vmul.f32 %v3853, %v7395
    %v8090 = vmul.f32 %v4514, %v7397
    %v8091 = vmul.f32 %v4516, %v7399
    %v8092 = vmul.f32 %v3855, %v7401
    %v8093 = vmul.f32 %v3857, %v7403
    %v8094 = vmul.f32 %v4518, %v7405
    %v8095 = vmul.f32 %v4520, %v7407
    %v8096 = vmul.f32 %v3861, %v7409
    %v8097 = vmul.f32 %v3863, %v7411
    %v8098 = vmul.f32 %v4524, %v7413
    %v8099 = vmul.f32 %v4526, %v7415
    %v8100 = vmul.f32 %v3865, %v7417
    %v8101 = vmul.f32 %v3867, %v7419
    %v8102 = vmul.f32 %v4528, %v7421
    %v8103 = vmul.f32 %v4530, %v7423
    %v8104 = vmul.f32 %v3871, %v7425
    %v8105 = vmul.f32 %v3873, %v7427
    %v8106 = vmul.f32 %v4534, %v7429
    %v8107 = vmul.f32 %v4536, %v7431
    %v8108 = vmul.f32 %v3875, %v7433
    %v8109 = vmul.f32 %v3877, %v7435
    %v8110 = vmul.f32 %v4538, %v7437
    %v8111 = vmul.f32 %v4540, %v7439
    %v8112 = vmul.f32 %v3881, %v7441
    %v8113 = vmul.f32 %v3883, %v7443
    %v8114 = vmul.f32 %v4544, %v7445
    %v8115 = vmul.f32 %v4546, %v7447
    %v8116 = vmul.f32 %v3885, %v7449
    %v8117 = vmul.f32 %v3887, %v7451
    %v8118 = vmul.f32 %v4548, %v7453
    %v8119 = vmul.f32 %v4550, %v7455
    %v8120 = vmul.f32 %v3891, %v7457
    %v8121 = vmul.f32 %v3893, %v7459
    %v8122 = vmul.f32 %v4554, %v7461
    %v8123 = vmul.f32 %v4556, %v7463
    %v8124 = vmul.f32 %v3895, %v7465
    %v8125 = vmul.f32 %v3897, %v7467
    %v8126 = vmul.f32 %v4558, %v7469
    %v8127 = vmul.f32 %v4560, %v7471
    %v8128 = vmul.f32 %v3901, %v7473
    %v8129 = vmul.f32 %v3903, %v7475
    %v8130 = vmul.f32 %v4564, %v7477
    %v8131 = vmul.f32 %v4566, %v7479
    %v8132 = vmul.f32 %v3905, %v7481
    %v8133 = vmul.f32 %v3907, %v7483
    %v8134 = vmul.f32 %v4568, %v7485
    %v8135 = vmul.f32 %v4570, %v7487
    %v8136 = vmul.f32 %v3911, %v7489
    %v8137 = vmul.f32 %v3913, %v7491
    %v8138 = vmul.f32 %v4574, %v7493
    %v8139 = vmul.f32 %v4576, %v7495
    %v8140 = vmul.f32 %v3915, %v7497
    %v8141 = vmul.f32 %v3917, %v7499
    %v8142 = vmul.f32 %v4578, %v7501
    %v8143 = vmul.f32 %v4580, %v7503
    %v8144 = vmul.f32 %v3921, %v7505
    %v8145 = vmul.f32 %v3923, %v7507
    %v8146 = vmul.f32 %v4584, %v7509
    %v8147 = vmul.f32 %v4586, %v7511
    %v8148 = vmul.f32 %v3925, %v7513
    %v8149 = vmul.f32 %v3927, %v7515
    %v8150 = vmul.f32 %v4588, %v7517
    %v8151 = vmul.f32 %v4590, %v7519
    %v8152 = vmul.f32 %v3931, %v7521
    %v8153 = vmul.f32 %v3933, %v7523
    %v8154 = vmul.f32 %v4594, %v7525
    %v8155 = vmul.f32 %v4596, %v7527
    %v8156 = vmul.f32 %v3935, %v7529
    %v8157 = vmul.f32 %v3937, %v7531
    %v8158 = vmul.f32 %v4598, %v7533
    %v8159 = vmul.f32 %v4600, %v7535
    %v8160 = vmul.f32 %v3941, %v7537
    %v8161 = vmul.f32 %v3943, %v7539
    %v8162 = vmul.f32 %v4604, %v7541
    %v8163 = vmul.f32 %v4606, %v7543
    %v8164 = vmul.f32 %v3945, %v7545
    %v8165 = vmul.f32 %v3947, %v7547
    %v8166 = vmul.f32 %v4608, %v7549
    %v8167 = vmul.f32 %v4610, %v7551
    %v8168 = vmul.f32 %v3951, %v7553
    %v8169 = vmul.f32 %v3953, %v7555
    %v8170 = vmul.f32 %v4614, %v7557
    %v8171 = vmul.f32 %v4616, %v7559
    %v8172 = vmul.f32 %v3955, %v7561
    %v8173 = vmul.f32 %v3957, %v7563
    %v8174 = vmul.f32 %v4618, %v7565
    %v8175 = vmul.f32 %v4620, %v7567
    %v8176 = vmul.f32 %v3961, %v7569
    %v8177 = vmul.f32 %v3963, %v7571
    %v8178 = vmul.f32 %v4624, %v7573
    %v8179 = vmul.f32 %v4626, %v7575
    %v8180 = vmul.f32 %v3965, %v7577
    %v8181 = vmul.f32 %v3967, %v7579
    %v8182 = vmul.f32 %v4628, %v7581
    %v8183 = vmul.f32 %v4630, %v7583
    %v8184 = vmul.f32 %v3971, %v7585
    %v8185 = vmul.f32 %v3973, %v7587
    %v8186 = vmul.f32 %v4634, %v7589
    %v8187 = vmul.f32 %v4636, %v7591
    %v8188 = vmul.f32 %v3975, %v7593
    %v8189 = vmul.f32 %v3977, %v7595
    %v8190 = vmul.f32 %v4638, %v7597
    %v8191 = vmul.f32 %v4640, %v7599
    %v8192 = vmul.f32 %v3981, %v7601
    %v8193 = vmul.f32 %v3983, %v7603
    %v8194 = vmul.f32 %v4644, %v7605
    %v8195 = vmul.f32 %v4646, %v7607
    %v8196 = vmul.f32 %v3985, %v7609
    %v8197 = vmul.f32 %v3987, %v7611
    %v8198 = vmul.f32 %v4648, %v7613
    %v8199 = vmul.f32 %v4650, %v7615
    %v8200 = vmul.f32 %v3991, %v7617
    %v8201 = vmul.f32 %v3993, %v7619
    %v8202 = vmul.f32 %v4654, %v7621
    %v8203 = vmul.f32 %v4656, %v7623
    %v8204 = vmul.f32 %v3995, %v7625
    %v8205 = vmul.f32 %v3997, %v7627
    %v8206 = vmul.f32 %v4658, %v7629
    %v8207 = vmul.f32 %v4660, %v7631
    %v8208 = vmul.f32 %v4001, %v7633
    %v8209 = vmul.f32 %v4003, %v7635
    %v8210 = vmul.f32 %v4664, %v7637
    %v8211 = vmul.f32 %v4666, %v7639
    %v8212 = vmul.f32 %v4005, %v7641
    %v8213 = vmul.f32 %v4007, %v7643
    %v8214 = vmul.f32 %v4668, %v7645
    %v8215 = vmul.f32 %v4670, %v7647
    %v8216 = vmul.f32 %v4011, %v7649
    %v8217 = vmul.f32 %v4013, %v7651
    %v8218 = vmul.f32 %v4674, %v7653
    %v8219 = vmul.f32 %v4676, %v7655
    %v8220 = vmul.f32 %v4015, %v7657
    %v8221 = vmul.f32 %v4017, %v7659
    %v8222 = vmul.f32 %v4678, %v7661
    %v8223 = vmul.f32 %v4680, %v7663
    %v8224 = vmul.f32 %v4021, %v7665
    %v8225 = vmul.f32 %v4023, %v7667
    %v8226 = vmul.f32 %v4684, %v7669
    %v8227 = vmul.f32 %v4686, %v7671
    %v8228 = vmul.f32 %v4025, %v7673
    %v8229 = vmul.f32 %v4027, %v7675
    %v8230 = vmul.f32 %v4688, %v7677
    %v8231 = vmul.f32 %v4690, %v7679
    %v8232 = vmul.f32 %v4031, %v7681
    %v8233 = vmul.f32 %v4033, %v7683
    %v8234 = vmul.f32 %v4694, %v7685
    %v8235 = vmul.f32 %v4696, %v7687
    %v8236 = vmul.f32 %v4035, %v7689
    %v8237 = vmul.f32 %v4037, %v7691
    %v8238 = vmul.f32 %v4698, %v7693
    %v8239 = vmul.f32 %v4700, %v7695
    %v8240 = vmul.f32 %v4041, %v7697
    %v8241 = vmul.f32 %v4043, %v7699
    %v8242 = vmul.f32 %v4704, %v7701
    %v8243 = vmul.f32 %v4706, %v7703
    %v8244 = vmul.f32 %v4045, %v7705
    %v8245 = vmul.f32 %v4047, %v7707
    %v8246 = vmul.f32 %v4708, %v7709
    %v8247 = vmul.f32 %v4710, %v7711
    %v8248 = vmul.f32 %v4051, %v7713
    %v8249 = vmul.f32 %v4053, %v7715
    %v8250 = vmul.f32 %v4714, %v7717
    %v8251 = vmul.f32 %v4716, %v7719
    %v8252 = vmul.f32 %v4055, %v7721
    %v8253 = vmul.f32 %v4057, %v7723
    %v8254 = vmul.f32 %v4718, %v7725
    %v8255 = vmul.f32 %v4720, %v7727
    %v8256 = vmul.f32 %v4061, %v7729
    %v8257 = vmul.f32 %v4063, %v7731
    %v8258 = vmul.f32 %v4724, %v7733
    %v8259 = vmul.f32 %v4726, %v7735
    %v8260 = vmul.f32 %v4065, %v7737
    %v8261 = vmul.f32 %v4067, %v7739
    %v8262 = vmul.f32 %v4728, %v7741
    %v8263 = vmul.f32 %v4730, %v7743
    %v8264 = vmul.f32 %v4071, %v7745
    %v8265 = vmul.f32 %v4073, %v7747
    %v8266 = vmul.f32 %v4734, %v7749
    %v8267 = vmul.f32 %v4736, %v7751
    %v8268 = vmul.f32 %v4075, %v7753
    %v8269 = vmul.f32 %v4077, %v7755
    %v8270 = vmul.f32 %v4738, %v7757
    %v8271 = vmul.f32 %v4740, %v7759
    %v8272 = vmul.f32 %v4081, %v7761
    %v8273 = vmul.f32 %v4083, %v7763
    %v8274 = vmul.f32 %v4744, %v7765
    %v8275 = vmul.f32 %v4746, %v7767
    %v8276 = vmul.f32 %v4085, %v7769
    %v8277 = vmul.f32 %v4087, %v7771
    %v8278 = vmul.f32 %v4748, %v7773
    %v8279 = vmul.f32 %v4750, %v7775
    %v8280 = vpack.c.bf16 %v7780, %v7776
    %v8281 = vpack.c.bf16 %v7781, %v7777
    %v8282 = vpack.c.bf16 %v7782, %v7778
    %v8283 = vpack.c.bf16 %v7783, %v7779
    %v8284 = vpack.c.bf16 %v7788, %v7784
    %v8285 = vpack.c.bf16 %v7789, %v7785
    %v8286 = vpack.c.bf16 %v7790, %v7786
    %v8287 = vpack.c.bf16 %v7791, %v7787
    %v8288 = vpack.c.bf16 %v7796, %v7792
    %v8289 = vpack.c.bf16 %v7797, %v7793
    %v8290 = vpack.c.bf16 %v7798, %v7794
    %v8291 = vpack.c.bf16 %v7799, %v7795
    %v8292 = vpack.c.bf16 %v7804, %v7800
    %v8293 = vpack.c.bf16 %v7805, %v7801
    %v8294 = vpack.c.bf16 %v7806, %v7802
    %v8295 = vpack.c.bf16 %v7807, %v7803
    %v8296 = vpack.c.bf16 %v7812, %v7808
    %v8297 = vpack.c.bf16 %v7813, %v7809
    %v8298 = vpack.c.bf16 %v7814, %v7810
    %v8299 = vpack.c.bf16 %v7815, %v7811
    %v8300 = vpack.c.bf16 %v7820, %v7816
    %v8301 = vpack.c.bf16 %v7821, %v7817
    %v8302 = vpack.c.bf16 %v7822, %v7818
    %v8303 = vpack.c.bf16 %v7823, %v7819
    %v8304 = vpack.c.bf16 %v7828, %v7824
    %v8305 = vpack.c.bf16 %v7829, %v7825
    %v8306 = vpack.c.bf16 %v7830, %v7826
    %v8307 = vpack.c.bf16 %v7831, %v7827
    %v8308 = vpack.c.bf16 %v7836, %v7832
    %v8309 = vpack.c.bf16 %v7837, %v7833
    %v8310 = vpack.c.bf16 %v7838, %v7834
    %v8311 = vpack.c.bf16 %v7839, %v7835
    %v8312 = vpack.c.bf16 %v7844, %v7840
    %v8313 = vpack.c.bf16 %v7845, %v7841
    %v8314 = vpack.c.bf16 %v7846, %v7842
    %v8315 = vpack.c.bf16 %v7847, %v7843
    %v8316 = vpack.c.bf16 %v7852, %v7848
    %v8317 = vpack.c.bf16 %v7853, %v7849
    %v8318 = vpack.c.bf16 %v7854, %v7850
    %v8319 = vpack.c.bf16 %v7855, %v7851
    %v8320 = vpack.c.bf16 %v7860, %v7856
    %v8321 = vpack.c.bf16 %v7861, %v7857
    %v8322 = vpack.c.bf16 %v7862, %v7858
    %v8323 = vpack.c.bf16 %v7863, %v7859
    %v8324 = vpack.c.bf16 %v7868, %v7864
    %v8325 = vpack.c.bf16 %v7869, %v7865
    %v8326 = vpack.c.bf16 %v7870, %v7866
    %v8327 = vpack.c.bf16 %v7871, %v7867
    %v8328 = vpack.c.bf16 %v7876, %v7872
    %v8329 = vpack.c.bf16 %v7877, %v7873
    %v8330 = vpack.c.bf16 %v7878, %v7874
    %v8331 = vpack.c.bf16 %v7879, %v7875
    %v8332 = vpack.c.bf16 %v7884, %v7880
    %v8333 = vpack.c.bf16 %v7885, %v7881
    %v8334 = vpack.c.bf16 %v7886, %v7882
    %v8335 = vpack.c.bf16 %v7887, %v7883
    %v8336 = vpack.c.bf16 %v7892, %v7888
    %v8337 = vpack.c.bf16 %v7893, %v7889
    %v8338 = vpack.c.bf16 %v7894, %v7890
    %v8339 = vpack.c.bf16 %v7895, %v7891
    %v8340 = vpack.c.bf16 %v7900, %v7896
    %v8341 = vpack.c.bf16 %v7901, %v7897
    %v8342 = vpack.c.bf16 %v7902, %v7898
    %v8343 = vpack.c.bf16 %v7903, %v7899
    %v8344 = vpack.c.bf16 %v7908, %v7904
    %v8345 = vpack.c.bf16 %v7909, %v7905
    %v8346 = vpack.c.bf16 %v7910, %v7906
    %v8347 = vpack.c.bf16 %v7911, %v7907
    %v8348 = vpack.c.bf16 %v7916, %v7912
    %v8349 = vpack.c.bf16 %v7917, %v7913
    %v8350 = vpack.c.bf16 %v7918, %v7914
    %v8351 = vpack.c.bf16 %v7919, %v7915
    %v8352 = vpack.c.bf16 %v7924, %v7920
    %v8353 = vpack.c.bf16 %v7925, %v7921
    %v8354 = vpack.c.bf16 %v7926, %v7922
    %v8355 = vpack.c.bf16 %v7927, %v7923
    %v8356 = vpack.c.bf16 %v7932, %v7928
    %v8357 = vpack.c.bf16 %v7933, %v7929
    %v8358 = vpack.c.bf16 %v7934, %v7930
    %v8359 = vpack.c.bf16 %v7935, %v7931
    %v8360 = vpack.c.bf16 %v7940, %v7936
    %v8361 = vpack.c.bf16 %v7941, %v7937
    %v8362 = vpack.c.bf16 %v7942, %v7938
    %v8363 = vpack.c.bf16 %v7943, %v7939
    %v8364 = vpack.c.bf16 %v7948, %v7944
    %v8365 = vpack.c.bf16 %v7949, %v7945
    %v8366 = vpack.c.bf16 %v7950, %v7946
    %v8367 = vpack.c.bf16 %v7951, %v7947
    %v8368 = vpack.c.bf16 %v7956, %v7952
    %v8369 = vpack.c.bf16 %v7957, %v7953
    %v8370 = vpack.c.bf16 %v7958, %v7954
    %v8371 = vpack.c.bf16 %v7959, %v7955
    %v8372 = vpack.c.bf16 %v7964, %v7960
    %v8373 = vpack.c.bf16 %v7965, %v7961
    %v8374 = vpack.c.bf16 %v7966, %v7962
    %v8375 = vpack.c.bf16 %v7967, %v7963
    %v8376 = vpack.c.bf16 %v7972, %v7968
    %v8377 = vpack.c.bf16 %v7973, %v7969
    %v8378 = vpack.c.bf16 %v7974, %v7970
    %v8379 = vpack.c.bf16 %v7975, %v7971
    %v8380 = vpack.c.bf16 %v7980, %v7976
    %v8381 = vpack.c.bf16 %v7981, %v7977
    %v8382 = vpack.c.bf16 %v7982, %v7978
    %v8383 = vpack.c.bf16 %v7983, %v7979
    %v8384 = vpack.c.bf16 %v7988, %v7984
    %v8385 = vpack.c.bf16 %v7989, %v7985
    %v8386 = vpack.c.bf16 %v7990, %v7986
    %v8387 = vpack.c.bf16 %v7991, %v7987
    %v8388 = vpack.c.bf16 %v7996, %v7992
    %v8389 = vpack.c.bf16 %v7997, %v7993
    %v8390 = vpack.c.bf16 %v7998, %v7994
    %v8391 = vpack.c.bf16 %v7999, %v7995
    %v8392 = vpack.c.bf16 %v8004, %v8000
    %v8393 = vpack.c.bf16 %v8005, %v8001
    %v8394 = vpack.c.bf16 %v8006, %v8002
    %v8395 = vpack.c.bf16 %v8007, %v8003
    %v8396 = vpack.c.bf16 %v8012, %v8008
    %v8397 = vpack.c.bf16 %v8013, %v8009
    %v8398 = vpack.c.bf16 %v8014, %v8010
    %v8399 = vpack.c.bf16 %v8015, %v8011
    %v8400 = vpack.c.bf16 %v8020, %v8016
    %v8401 = vpack.c.bf16 %v8021, %v8017
    %v8402 = vpack.c.bf16 %v8022, %v8018
    %v8403 = vpack.c.bf16 %v8023, %v8019
    %v8404 = vpack.c.bf16 %v8028, %v8024
    %v8405 = vpack.c.bf16 %v8029, %v8025
    %v8406 = vpack.c.bf16 %v8030, %v8026
    %v8407 = vpack.c.bf16 %v8031, %v8027
    %v8408 = vpack.c.bf16 %v8036, %v8032
    %v8409 = vpack.c.bf16 %v8037, %v8033
    %v8410 = vpack.c.bf16 %v8038, %v8034
    %v8411 = vpack.c.bf16 %v8039, %v8035
    %v8412 = vpack.c.bf16 %v8044, %v8040
    %v8413 = vpack.c.bf16 %v8045, %v8041
    %v8414 = vpack.c.bf16 %v8046, %v8042
    %v8415 = vpack.c.bf16 %v8047, %v8043
    %v8416 = vpack.c.bf16 %v8052, %v8048
    %v8417 = vpack.c.bf16 %v8053, %v8049
    %v8418 = vpack.c.bf16 %v8054, %v8050
    %v8419 = vpack.c.bf16 %v8055, %v8051
    %v8420 = vpack.c.bf16 %v8060, %v8056
    %v8421 = vpack.c.bf16 %v8061, %v8057
    %v8422 = vpack.c.bf16 %v8062, %v8058
    %v8423 = vpack.c.bf16 %v8063, %v8059
    %v8424 = vpack.c.bf16 %v8068, %v8064
    %v8425 = vpack.c.bf16 %v8069, %v8065
    %v8426 = vpack.c.bf16 %v8070, %v8066
    %v8427 = vpack.c.bf16 %v8071, %v8067
    %v8428 = vpack.c.bf16 %v8076, %v8072
    %v8429 = vpack.c.bf16 %v8077, %v8073
    %v8430 = vpack.c.bf16 %v8078, %v8074
    %v8431 = vpack.c.bf16 %v8079, %v8075
    %v8432 = vpack.c.bf16 %v8084, %v8080
    %v8433 = vpack.c.bf16 %v8085, %v8081
    %v8434 = vpack.c.bf16 %v8086, %v8082
    %v8435 = vpack.c.bf16 %v8087, %v8083
    %v8436 = vpack.c.bf16 %v8092, %v8088
    %v8437 = vpack.c.bf16 %v8093, %v8089
    %v8438 = vpack.c.bf16 %v8094, %v8090
    %v8439 = vpack.c.bf16 %v8095, %v8091
    %v8440 = vpack.c.bf16 %v8100, %v8096
    %v8441 = vpack.c.bf16 %v8101, %v8097
    %v8442 = vpack.c.bf16 %v8102, %v8098
    %v8443 = vpack.c.bf16 %v8103, %v8099
    %v8444 = vpack.c.bf16 %v8108, %v8104
    %v8445 = vpack.c.bf16 %v8109, %v8105
    %v8446 = vpack.c.bf16 %v8110, %v8106
    %v8447 = vpack.c.bf16 %v8111, %v8107
    %v8448 = vpack.c.bf16 %v8116, %v8112
    %v8449 = vpack.c.bf16 %v8117, %v8113
    %v8450 = vpack.c.bf16 %v8118, %v8114
    %v8451 = vpack.c.bf16 %v8119, %v8115
    %v8452 = vpack.c.bf16 %v8124, %v8120
    %v8453 = vpack.c.bf16 %v8125, %v8121
    %v8454 = vpack.c.bf16 %v8126, %v8122
    %v8455 = vpack.c.bf16 %v8127, %v8123
    %v8456 = vpack.c.bf16 %v8132, %v8128
    %v8457 = vpack.c.bf16 %v8133, %v8129
    %v8458 = vpack.c.bf16 %v8134, %v8130
    %v8459 = vpack.c.bf16 %v8135, %v8131
    %v8460 = vpack.c.bf16 %v8140, %v8136
    %v8461 = vpack.c.bf16 %v8141, %v8137
    %v8462 = vpack.c.bf16 %v8142, %v8138
    %v8463 = vpack.c.bf16 %v8143, %v8139
    %v8464 = vpack.c.bf16 %v8148, %v8144
    %v8465 = vpack.c.bf16 %v8149, %v8145
    %v8466 = vpack.c.bf16 %v8150, %v8146
    %v8467 = vpack.c.bf16 %v8151, %v8147
    %v8468 = vpack.c.bf16 %v8156, %v8152
    %v8469 = vpack.c.bf16 %v8157, %v8153
    %v8470 = vpack.c.bf16 %v8158, %v8154
    %v8471 = vpack.c.bf16 %v8159, %v8155
    %v8472 = vpack.c.bf16 %v8164, %v8160
    %v8473 = vpack.c.bf16 %v8165, %v8161
    %v8474 = vpack.c.bf16 %v8166, %v8162
    %v8475 = vpack.c.bf16 %v8167, %v8163
    %v8476 = vpack.c.bf16 %v8172, %v8168
    %v8477 = vpack.c.bf16 %v8173, %v8169
    %v8478 = vpack.c.bf16 %v8174, %v8170
    %v8479 = vpack.c.bf16 %v8175, %v8171
    %v8480 = vpack.c.bf16 %v8180, %v8176
    %v8481 = vpack.c.bf16 %v8181, %v8177
    %v8482 = vpack.c.bf16 %v8182, %v8178
    %v8483 = vpack.c.bf16 %v8183, %v8179
    %v8484 = vpack.c.bf16 %v8188, %v8184
    %v8485 = vpack.c.bf16 %v8189, %v8185
    %v8486 = vpack.c.bf16 %v8190, %v8186
    %v8487 = vpack.c.bf16 %v8191, %v8187
    %v8488 = vpack.c.bf16 %v8196, %v8192
    %v8489 = vpack.c.bf16 %v8197, %v8193
    %v8490 = vpack.c.bf16 %v8198, %v8194
    %v8491 = vpack.c.bf16 %v8199, %v8195
    %v8492 = vpack.c.bf16 %v8204, %v8200
    %v8493 = vpack.c.bf16 %v8205, %v8201
    %v8494 = vpack.c.bf16 %v8206, %v8202
    %v8495 = vpack.c.bf16 %v8207, %v8203
    %v8496 = vpack.c.bf16 %v8212, %v8208
    %v8497 = vpack.c.bf16 %v8213, %v8209
    %v8498 = vpack.c.bf16 %v8214, %v8210
    %v8499 = vpack.c.bf16 %v8215, %v8211
    %v8500 = vpack.c.bf16 %v8220, %v8216
    %v8501 = vpack.c.bf16 %v8221, %v8217
    %v8502 = vpack.c.bf16 %v8222, %v8218
    %v8503 = vpack.c.bf16 %v8223, %v8219
    %v8504 = vpack.c.bf16 %v8228, %v8224
    %v8505 = vpack.c.bf16 %v8229, %v8225
    %v8506 = vpack.c.bf16 %v8230, %v8226
    %v8507 = vpack.c.bf16 %v8231, %v8227
    %v8508 = vpack.c.bf16 %v8236, %v8232
    %v8509 = vpack.c.bf16 %v8237, %v8233
    %v8510 = vpack.c.bf16 %v8238, %v8234
    %v8511 = vpack.c.bf16 %v8239, %v8235
    %v8512 = vpack.c.bf16 %v8244, %v8240
    %v8513 = vpack.c.bf16 %v8245, %v8241
    %v8514 = vpack.c.bf16 %v8246, %v8242
    %v8515 = vpack.c.bf16 %v8247, %v8243
    %v8516 = vpack.c.bf16 %v8252, %v8248
    %v8517 = vpack.c.bf16 %v8253, %v8249
    %v8518 = vpack.c.bf16 %v8254, %v8250
    %v8519 = vpack.c.bf16 %v8255, %v8251
    %v8520 = vpack.c.bf16 %v8260, %v8256
    %v8521 = vpack.c.bf16 %v8261, %v8257
    %v8522 = vpack.c.bf16 %v8262, %v8258
    %v8523 = vpack.c.bf16 %v8263, %v8259
    %v8524 = vpack.c.bf16 %v8268, %v8264
    %v8525 = vpack.c.bf16 %v8269, %v8265
    %v8526 = vpack.c.bf16 %v8270, %v8266
    %v8527 = vpack.c.bf16 %v8271, %v8267
    %v8528 = vpack.c.bf16 %v8276, %v8272
    %v8529 = vpack.c.bf16 %v8277, %v8273
    %v8530 = vpack.c.bf16 %v8278, %v8274
    %v8531 = vpack.c.bf16 %v8279, %v8275
    %v8532 = vld [vmem:[%s5] sm:$0xf]
    %v8533 = vld [vmem:[%s5 + $0x4] sm:$0xf]
    %v8534 = vld [vmem:[%s5 + $0x8] sm:$0xf]
    %v8535 = vld [vmem:[%s5 + $0xc] sm:$0xf]
    %v8536 = vld [vmem:[%s5 + $0x10] sm:$0xf]
    %v8537 = vld [vmem:[%s5 + $0x14] sm:$0xf]
    %v8538 = vld [vmem:[%s5 + $0x18] sm:$0xf]
    %v8539 = vld [vmem:[%s5 + $0x1c] sm:$0xf]
    %v8540 = vld [vmem:[%s5 + $0x20] sm:$0xf]
    %v8541 = vld [vmem:[%s5 + $0x24] sm:$0xf]
    %v8542 = vld [vmem:[%s5 + $0x28] sm:$0xf]
    %v8543 = vld [vmem:[%s5 + $0x2c] sm:$0xf]
    %v8544 = vld [vmem:[%s5 + $0x30] sm:$0xf]
    %v8545 = vld [vmem:[%s5 + $0x34] sm:$0xf]
    %v8546 = vld [vmem:[%s5 + $0x38] sm:$0xf]
    %v8547 = vld [vmem:[%s5 + $0x3c] sm:$0xf]
    %v8548 = vld [vmem:[%s5 + $0x40] sm:$0xf]
    %v8549 = vld [vmem:[%s5 + $0x44] sm:$0xf]
    %v8550 = vld [vmem:[%s5 + $0x48] sm:$0xf]
    %v8551 = vld [vmem:[%s5 + $0x4c] sm:$0xf]
    %v8552 = vld [vmem:[%s5 + $0x50] sm:$0xf]
    %v8553 = vld [vmem:[%s5 + $0x54] sm:$0xf]
    %v8554 = vld [vmem:[%s5 + $0x58] sm:$0xf]
    %v8555 = vld [vmem:[%s5 + $0x5c] sm:$0xf]
    %v8556 = vld [vmem:[%s5 + $0x60] sm:$0xf]
    %v8557 = vld [vmem:[%s5 + $0x64] sm:$0xf]
    %v8558 = vld [vmem:[%s5 + $0x68] sm:$0xf]
    %v8559 = vld [vmem:[%s5 + $0x6c] sm:$0xf]
    %v8560 = vld [vmem:[%s5 + $0x70] sm:$0xf]
    %v8561 = vld [vmem:[%s5 + $0x74] sm:$0xf]
    %v8562 = vld [vmem:[%s5 + $0x78] sm:$0xf]
    %v8563 = vld [vmem:[%s5 + $0x7c] sm:$0xf]
    %v8564 = vld [vmem:[%s5 + $0x80] sm:$0xf]
    %v8565 = vld [vmem:[%s5 + $0x84] sm:$0xf]
    %v8566 = vld [vmem:[%s5 + $0x88] sm:$0xf]
    %v8567 = vld [vmem:[%s5 + $0x8c] sm:$0xf]
    %v8568 = vld [vmem:[%s5 + $0x90] sm:$0xf]
    %v8569 = vld [vmem:[%s5 + $0x94] sm:$0xf]
    %v8570 = vld [vmem:[%s5 + $0x98] sm:$0xf]
    %v8571 = vld [vmem:[%s5 + $0x9c] sm:$0xf]
    %v8572 = vld [vmem:[%s5 + $0xa0] sm:$0xf]
    %v8573 = vld [vmem:[%s5 + $0xa4] sm:$0xf]
    %v8574 = vld [vmem:[%s5 + $0xa8] sm:$0xf]
    %v8575 = vld [vmem:[%s5 + $0xac] sm:$0xf]
    %v8576 = vld [vmem:[%s5 + $0xb0] sm:$0xf]
    %v8577 = vld [vmem:[%s5 + $0xb4] sm:$0xf]
    %v8578 = vld [vmem:[%s5 + $0xb8] sm:$0xf]
    %v8579 = vld [vmem:[%s5 + $0xbc] sm:$0xf]
    %v8580 = vld [vmem:[%s5 + $0xc0] sm:$0xf]
    %v8581 = vld [vmem:[%s5 + $0xc4] sm:$0xf]
    %v8582 = vld [vmem:[%s5 + $0xc8] sm:$0xf]
    %v8583 = vld [vmem:[%s5 + $0xcc] sm:$0xf]
    %v8584 = vld [vmem:[%s5 + $0xd0] sm:$0xf]
    %v8585 = vld [vmem:[%s5 + $0xd4] sm:$0xf]
    %v8586 = vld [vmem:[%s5 + $0xd8] sm:$0xf]
    %v8587 = vld [vmem:[%s5 + $0xdc] sm:$0xf]
    %v8588 = vld [vmem:[%s5 + $0xe0] sm:$0xf]
    %v8589 = vld [vmem:[%s5 + $0xe4] sm:$0xf]
    %v8590 = vld [vmem:[%s5 + $0xe8] sm:$0xf]
    %v8591 = vld [vmem:[%s5 + $0xec] sm:$0xf]
    %v8592 = vld [vmem:[%s5 + $0xf0] sm:$0xf]
    %v8593 = vld [vmem:[%s5 + $0xf4] sm:$0xf]
    %v8594 = vld [vmem:[%s5 + $0xf8] sm:$0xf]
    %v8595 = vld [vmem:[%s5 + $0xfc] sm:$0xf]
    %v8596 = vld [vmem:[%s6] sm:$0x1]
    %v8598 = vlaneseq
    %v8599 = vshrl.u32 %v8598, 7
    %v8600 = vsub.s32 0, %v8599
    %v8601 = vrot.slane %v8596, %v8600
    %v8667 = vunpack.c.l.b16 %v8532
    %v8668 = vunpack.c.l.b16 %v8533
    %v8669 = vunpack.c.l.b16 %v8534
    %v8670 = vunpack.c.l.b16 %v8535
    %v8671 = vunpack.c.l.b16 %v8536
    %v8672 = vunpack.c.l.b16 %v8537
    %v8673 = vunpack.c.l.b16 %v8538
    %v8674 = vunpack.c.l.b16 %v8539
    %v8675 = vunpack.c.l.b16 %v8540
    %v8676 = vunpack.c.l.b16 %v8541
    %v8677 = vunpack.c.l.b16 %v8542
    %v8678 = vunpack.c.l.b16 %v8543
    %v8679 = vunpack.c.l.b16 %v8544
    %v8680 = vunpack.c.l.b16 %v8545
    %v8681 = vunpack.c.l.b16 %v8546
    %v8682 = vunpack.c.l.b16 %v8547
    %v8683 = vunpack.c.l.b16 %v8548
    %v8684 = vunpack.c.l.b16 %v8549
    %v8685 = vunpack.c.l.b16 %v8550
    %v8686 = vunpack.c.l.b16 %v8551
    %v8687 = vunpack.c.l.b16 %v8552
    %v8688 = vunpack.c.l.b16 %v8553
    %v8689 = vunpack.c.l.b16 %v8554
    %v8690 = vunpack.c.l.b16 %v8555
    %v8691 = vunpack.c.l.b16 %v8556
    %v8692 = vunpack.c.l.b16 %v8557
    %v8693 = vunpack.c.l.b16 %v8558
    %v8694 = vunpack.c.l.b16 %v8559
    %v8695 = vunpack.c.l.b16 %v8560
    %v8696 = vunpack.c.l.b16 %v8561
    %v8697 = vunpack.c.l.b16 %v8562
    %v8698 = vunpack.c.l.b16 %v8563
    %v8699 = vunpack.c.l.b16 %v8564
    %v8700 = vunpack.c.l.b16 %v8565
    %v8701 = vunpack.c.l.b16 %v8566
    %v8702 = vunpack.c.l.b16 %v8567
    %v8703 = vunpack.c.l.b16 %v8568
    %v8704 = vunpack.c.l.b16 %v8569
    %v8705 = vunpack.c.l.b16 %v8570
    %v8706 = vunpack.c.l.b16 %v8571
    %v8707 = vunpack.c.l.b16 %v8572
    %v8708 = vunpack.c.l.b16 %v8573
    %v8709 = vunpack.c.l.b16 %v8574
    %v8710 = vunpack.c.l.b16 %v8575
    %v8711 = vunpack.c.l.b16 %v8576
    %v8712 = vunpack.c.l.b16 %v8577
    %v8713 = vunpack.c.l.b16 %v8578
    %v8714 = vunpack.c.l.b16 %v8579
    %v8715 = vunpack.c.l.b16 %v8580
    %v8716 = vunpack.c.l.b16 %v8581
    %v8717 = vunpack.c.l.b16 %v8582
    %v8718 = vunpack.c.l.b16 %v8583
    %v8719 = vunpack.c.l.b16 %v8584
    %v8720 = vunpack.c.l.b16 %v8585
    %v8721 = vunpack.c.l.b16 %v8586
    %v8722 = vunpack.c.l.b16 %v8587
    %v8723 = vunpack.c.l.b16 %v8588
    %v8724 = vunpack.c.l.b16 %v8589
    %v8725 = vunpack.c.l.b16 %v8590
    %v8726 = vunpack.c.l.b16 %v8591
    %v8727 = vunpack.c.l.b16 %v8592
    %v8728 = vunpack.c.l.b16 %v8593
    %v8729 = vunpack.c.l.b16 %v8594
    %v8730 = vunpack.c.l.b16 %v8595
    %v8731 = vpack.c.b16 %v8668, %v8667
    %v8732 = vpack.c.b16 %v8670, %v8669
    %v8733 = vpack.c.b16 %v8672, %v8671
    %v8734 = vpack.c.b16 %v8674, %v8673
    %v8735 = vpack.c.b16 %v8676, %v8675
    %v8736 = vpack.c.b16 %v8678, %v8677
    %v8737 = vpack.c.b16 %v8680, %v8679
    %v8738 = vpack.c.b16 %v8682, %v8681
    %v8739 = vpack.c.b16 %v8684, %v8683
    %v8740 = vpack.c.b16 %v8686, %v8685
    %v8741 = vpack.c.b16 %v8688, %v8687
    %v8742 = vpack.c.b16 %v8690, %v8689
    %v8743 = vpack.c.b16 %v8692, %v8691
    %v8744 = vpack.c.b16 %v8694, %v8693
    %v8745 = vpack.c.b16 %v8696, %v8695
    %v8746 = vpack.c.b16 %v8698, %v8697
    %v8747 = vpack.c.b16 %v8700, %v8699
    %v8748 = vpack.c.b16 %v8702, %v8701
    %v8749 = vpack.c.b16 %v8704, %v8703
    %v8750 = vpack.c.b16 %v8706, %v8705
    %v8751 = vpack.c.b16 %v8708, %v8707
    %v8752 = vpack.c.b16 %v8710, %v8709
    %v8753 = vpack.c.b16 %v8712, %v8711
    %v8754 = vpack.c.b16 %v8714, %v8713
    %v8755 = vpack.c.b16 %v8716, %v8715
    %v8756 = vpack.c.b16 %v8718, %v8717
    %v8757 = vpack.c.b16 %v8720, %v8719
    %v8758 = vpack.c.b16 %v8722, %v8721
    %v8759 = vpack.c.b16 %v8724, %v8723
    %v8760 = vpack.c.b16 %v8726, %v8725
    %v8761 = vpack.c.b16 %v8728, %v8727
    %v8762 = vpack.c.b16 %v8730, %v8729
    %8795 = vmatprep.subr.bf16.mxu0 0
    %8796 = vmatpush1.bf16.msra.mxu0 %v8738
    %8797 = vmatprep.subr.bf16.mxu0 0
    %8798 = vmatpush1.bf16.msra.mxu0 %v8737
    %8799 = vmatprep.subr.bf16.mxu0 0
    %8800 = vmatpush1.bf16.msra.mxu0 %v8736
    %8801 = vmatprep.subr.bf16.mxu0 0
    %8802 = vmatpush1.bf16.msra.mxu0 %v8735
    %8803 = vmatprep.subr.bf16.mxu0 0
    %8804 = vmatpush1.bf16.msra.mxu0 %v8734
    %8805 = vmatprep.subr.bf16.mxu0 0
    %8806 = vmatpush1.bf16.msra.mxu0 %v8733
    %8807 = vmatprep.subr.bf16.mxu0 0
    %8808 = vmatpush1.bf16.msra.mxu0 %v8732
    %8809 = vmatprep.subr.bf16.mxu0 0
    %8810 = vmatpush1.bf16.msra.mxu0 %v8731
    %8811 = vmatprep.subr.bf16.mxu0 0
    %8812 = vmatpush2.bf16.msra.mxu0 %v8746
    %8813 = vmatprep.subr.bf16.mxu0 0
    %8814 = vmatpush2.bf16.msra.mxu0 %v8745
    %8815 = vmatprep.subr.bf16.mxu0 0
    %8816 = vmatpush2.bf16.msra.mxu0 %v8744
    %8817 = vmatprep.subr.bf16.mxu0 0
    %8818 = vmatpush2.bf16.msra.mxu0 %v8743
    %8819 = vmatprep.subr.bf16.mxu0 0
    %8820 = vmatpush2.bf16.msra.mxu0 %v8742
    %8821 = vmatprep.subr.bf16.mxu0 0
    %8822 = vmatpush2.bf16.msra.mxu0 %v8741
    %8823 = vmatprep.subr.bf16.mxu0 0
    %8824 = vmatpush2.bf16.msra.mxu0 %v8740
    %8825 = vmatprep.subr.bf16.mxu0 0
    %8826 = vmatpush2.bf16.msra.mxu0 %v8739
    %8827 = vmatprep.mubr.bf16.mxu0 %v8281
    %8828 = vmatmul.mubr.bf16.gmra.mxu0 %v8280
    %v8829 = vpop.f32.mrf.mxu0
    %v8830 = vadd.f32 %v8601, %v8829
    %v8831 = vpop.f32.mrf.mxu0
    %v8832 = vpop.f32.mrf.mxu0
    %v8833 = vadd.f32 %v8601, %v8832
    %v8834 = vpop.f32.mrf.mxu0
    %8835 = vmatprep.mubr.bf16.mxu0 %v8285
    %8836 = vmatmul.mubr.bf16.gmra.mxu0 %v8284
    %v8837 = vpop.f32.mrf.mxu0
    %v8838 = vadd.f32 %v8601, %v8837
    %v8839 = vpop.f32.mrf.mxu0
    %v8840 = vpop.f32.mrf.mxu0
    %v8841 = vadd.f32 %v8601, %v8840
    %v8842 = vpop.f32.mrf.mxu0
    %8843 = vmatprep.mubr.bf16.mxu0 %v8289
    %8844 = vmatmul.mubr.bf16.gmra.mxu0 %v8288
    %v8845 = vpop.f32.mrf.mxu0
    %v8846 = vadd.f32 %v8601, %v8845
    %v8847 = vpop.f32.mrf.mxu0
    %v8848 = vpop.f32.mrf.mxu0
    %v8849 = vadd.f32 %v8601, %v8848
    %v8850 = vpop.f32.mrf.mxu0
    %8851 = vmatprep.mubr.bf16.mxu0 %v8293
    %8852 = vmatmul.mubr.bf16.gmra.mxu0 %v8292
    %v8853 = vpop.f32.mrf.mxu0
    %v8854 = vadd.f32 %v8601, %v8853
    %v8855 = vpop.f32.mrf.mxu0
    %v8856 = vpop.f32.mrf.mxu0
    %v8857 = vadd.f32 %v8601, %v8856
    %v8858 = vpop.f32.mrf.mxu0
    %8859 = vmatprep.mubr.bf16.mxu0 %v8297
    %8860 = vmatmul.mubr.bf16.gmra.mxu0 %v8296
    %v8861 = vpop.f32.mrf.mxu0
    %v8862 = vadd.f32 %v8601, %v8861
    %v8863 = vpop.f32.mrf.mxu0
    %v8864 = vpop.f32.mrf.mxu0
    %v8865 = vadd.f32 %v8601, %v8864
    %v8866 = vpop.f32.mrf.mxu0
    %8867 = vmatprep.mubr.bf16.mxu0 %v8301
    %8868 = vmatmul.mubr.bf16.gmra.mxu0 %v8300
    %v8869 = vpop.f32.mrf.mxu0
    %v8870 = vadd.f32 %v8601, %v8869
    %v8871 = vpop.f32.mrf.mxu0
    %v8872 = vpop.f32.mrf.mxu0
    %v8873 = vadd.f32 %v8601, %v8872
    %v8874 = vpop.f32.mrf.mxu0
    %8875 = vmatprep.mubr.bf16.mxu0 %v8305
    %8876 = vmatmul.mubr.bf16.gmra.mxu0 %v8304
    %v8877 = vpop.f32.mrf.mxu0
    %v8878 = vadd.f32 %v8601, %v8877
    %v8879 = vpop.f32.mrf.mxu0
    %v8880 = vpop.f32.mrf.mxu0
    %v8881 = vadd.f32 %v8601, %v8880
    %v8882 = vpop.f32.mrf.mxu0
    %8883 = vmatprep.mubr.bf16.mxu0 %v8309
    %8884 = vmatmul.mubr.bf16.gmra.mxu0 %v8308
    %v8885 = vpop.f32.mrf.mxu0
    %v8886 = vadd.f32 %v8601, %v8885
    %v8887 = vpop.f32.mrf.mxu0
    %v8888 = vpop.f32.mrf.mxu0
    %v8889 = vadd.f32 %v8601, %v8888
    %v8890 = vpop.f32.mrf.mxu0
    %8891 = vmatprep.mubr.bf16.mxu0 %v8313
    %8892 = vmatmul.mubr.bf16.gmra.mxu0 %v8312
    %v8893 = vpop.f32.mrf.mxu0
    %v8894 = vadd.f32 %v8601, %v8893
    %v8895 = vpop.f32.mrf.mxu0
    %v8896 = vpop.f32.mrf.mxu0
    %v8897 = vadd.f32 %v8601, %v8896
    %v8898 = vpop.f32.mrf.mxu0
    %8899 = vmatprep.mubr.bf16.mxu0 %v8317
    %8900 = vmatmul.mubr.bf16.gmra.mxu0 %v8316
    %v8901 = vpop.f32.mrf.mxu0
    %v8902 = vadd.f32 %v8601, %v8901
    %v8903 = vpop.f32.mrf.mxu0
    %v8904 = vpop.f32.mrf.mxu0
    %v8905 = vadd.f32 %v8601, %v8904
    %v8906 = vpop.f32.mrf.mxu0
    %8907 = vmatprep.mubr.bf16.mxu0 %v8321
    %8908 = vmatmul.mubr.bf16.gmra.mxu0 %v8320
    %v8909 = vpop.f32.mrf.mxu0
    %v8910 = vadd.f32 %v8601, %v8909
    %v8911 = vpop.f32.mrf.mxu0
    %v8912 = vpop.f32.mrf.mxu0
    %v8913 = vadd.f32 %v8601, %v8912
    %v8914 = vpop.f32.mrf.mxu0
    %8915 = vmatprep.mubr.bf16.mxu0 %v8325
    %8916 = vmatmul.mubr.bf16.gmra.mxu0 %v8324
    %v8917 = vpop.f32.mrf.mxu0
    %v8918 = vadd.f32 %v8601, %v8917
    %v8919 = vpop.f32.mrf.mxu0
    %v8920 = vpop.f32.mrf.mxu0
    %v8921 = vadd.f32 %v8601, %v8920
    %v8922 = vpop.f32.mrf.mxu0
    %8923 = vmatprep.mubr.bf16.mxu0 %v8329
    %8924 = vmatmul.mubr.bf16.gmra.mxu0 %v8328
    %v8925 = vpop.f32.mrf.mxu0
    %v8926 = vadd.f32 %v8601, %v8925
    %v8927 = vpop.f32.mrf.mxu0
    %v8928 = vpop.f32.mrf.mxu0
    %v8929 = vadd.f32 %v8601, %v8928
    %v8930 = vpop.f32.mrf.mxu0
    %8931 = vmatprep.mubr.bf16.mxu0 %v8333
    %8932 = vmatmul.mubr.bf16.gmra.mxu0 %v8332
    %v8933 = vpop.f32.mrf.mxu0
    %v8934 = vadd.f32 %v8601, %v8933
    %v8935 = vpop.f32.mrf.mxu0
    %v8936 = vpop.f32.mrf.mxu0
    %v8937 = vadd.f32 %v8601, %v8936
    %v8938 = vpop.f32.mrf.mxu0
    %8939 = vmatprep.mubr.bf16.mxu0 %v8337
    %8940 = vmatmul.mubr.bf16.gmra.mxu0 %v8336
    %v8941 = vpop.f32.mrf.mxu0
    %v8942 = vadd.f32 %v8601, %v8941
    %v8943 = vpop.f32.mrf.mxu0
    %v8944 = vpop.f32.mrf.mxu0
    %v8945 = vadd.f32 %v8601, %v8944
    %v8946 = vpop.f32.mrf.mxu0
    %8947 = vmatprep.mubr.bf16.mxu0 %v8341
    %8948 = vmatmul.mubr.bf16.gmra.mxu0 %v8340
    %v8949 = vpop.f32.mrf.mxu0
    %v8950 = vadd.f32 %v8601, %v8949
    %v8951 = vpop.f32.mrf.mxu0
    %v8952 = vpop.f32.mrf.mxu0
    %v8953 = vadd.f32 %v8601, %v8952
    %v8954 = vpop.f32.mrf.mxu0
    %8955 = vmatprep.mubr.bf16.mxu0 %v8345
    %8956 = vmatmul.mubr.bf16.gmra.mxu0 %v8344
    %v8957 = vpop.f32.mrf.mxu0
    %v8958 = vadd.f32 %v8601, %v8957
    %v8959 = vpop.f32.mrf.mxu0
    %v8960 = vpop.f32.mrf.mxu0
    %v8961 = vadd.f32 %v8601, %v8960
    %v8962 = vpop.f32.mrf.mxu0
    %8963 = vmatprep.mubr.bf16.mxu0 %v8349
    %8964 = vmatmul.mubr.bf16.gmra.mxu0 %v8348
    %v8965 = vpop.f32.mrf.mxu0
    %v8966 = vadd.f32 %v8601, %v8965
    %v8967 = vpop.f32.mrf.mxu0
    %v8968 = vpop.f32.mrf.mxu0
    %v8969 = vadd.f32 %v8601, %v8968
    %v8970 = vpop.f32.mrf.mxu0
    %8971 = vmatprep.mubr.bf16.mxu0 %v8353
    %8972 = vmatmul.mubr.bf16.gmra.mxu0 %v8352
    %v8973 = vpop.f32.mrf.mxu0
    %v8974 = vadd.f32 %v8601, %v8973
    %v8975 = vpop.f32.mrf.mxu0
    %v8976 = vpop.f32.mrf.mxu0
    %v8977 = vadd.f32 %v8601, %v8976
    %v8978 = vpop.f32.mrf.mxu0
    %8979 = vmatprep.mubr.bf16.mxu0 %v8357
    %8980 = vmatmul.mubr.bf16.gmra.mxu0 %v8356
    %v8981 = vpop.f32.mrf.mxu0
    %v8982 = vadd.f32 %v8601, %v8981
    %v8983 = vpop.f32.mrf.mxu0
    %v8984 = vpop.f32.mrf.mxu0
    %v8985 = vadd.f32 %v8601, %v8984
    %v8986 = vpop.f32.mrf.mxu0
    %8987 = vmatprep.mubr.bf16.mxu0 %v8361
    %8988 = vmatmul.mubr.bf16.gmra.mxu0 %v8360
    %v8989 = vpop.f32.mrf.mxu0
    %v8990 = vadd.f32 %v8601, %v8989
    %v8991 = vpop.f32.mrf.mxu0
    %v8992 = vpop.f32.mrf.mxu0
    %v8993 = vadd.f32 %v8601, %v8992
    %v8994 = vpop.f32.mrf.mxu0
    %8995 = vmatprep.mubr.bf16.mxu0 %v8365
    %8996 = vmatmul.mubr.bf16.gmra.mxu0 %v8364
    %v8997 = vpop.f32.mrf.mxu0
    %v8998 = vadd.f32 %v8601, %v8997
    %v8999 = vpop.f32.mrf.mxu0
    %v9000 = vpop.f32.mrf.mxu0
    %v9001 = vadd.f32 %v8601, %v9000
    %v9002 = vpop.f32.mrf.mxu0
    %9003 = vmatprep.mubr.bf16.mxu0 %v8369
    %9004 = vmatmul.mubr.bf16.gmra.mxu0 %v8368
    %v9005 = vpop.f32.mrf.mxu0
    %v9006 = vadd.f32 %v8601, %v9005
    %v9007 = vpop.f32.mrf.mxu0
    %v9008 = vpop.f32.mrf.mxu0
    %v9009 = vadd.f32 %v8601, %v9008
    %v9010 = vpop.f32.mrf.mxu0
    %9011 = vmatprep.mubr.bf16.mxu0 %v8373
    %9012 = vmatmul.mubr.bf16.gmra.mxu0 %v8372
    %v9013 = vpop.f32.mrf.mxu0
    %v9014 = vadd.f32 %v8601, %v9013
    %v9015 = vpop.f32.mrf.mxu0
    %v9016 = vpop.f32.mrf.mxu0
    %v9017 = vadd.f32 %v8601, %v9016
    %v9018 = vpop.f32.mrf.mxu0
    %9019 = vmatprep.mubr.bf16.mxu0 %v8377
    %9020 = vmatmul.mubr.bf16.gmra.mxu0 %v8376
    %v9021 = vpop.f32.mrf.mxu0
    %v9022 = vadd.f32 %v8601, %v9021
    %v9023 = vpop.f32.mrf.mxu0
    %v9024 = vpop.f32.mrf.mxu0
    %v9025 = vadd.f32 %v8601, %v9024
    %v9026 = vpop.f32.mrf.mxu0
    %9027 = vmatprep.mubr.bf16.mxu0 %v8381
    %9028 = vmatmul.mubr.bf16.gmra.mxu0 %v8380
    %v9029 = vpop.f32.mrf.mxu0
    %v9030 = vadd.f32 %v8601, %v9029
    %v9031 = vpop.f32.mrf.mxu0
    %v9032 = vpop.f32.mrf.mxu0
    %v9033 = vadd.f32 %v8601, %v9032
    %v9034 = vpop.f32.mrf.mxu0
    %9035 = vmatprep.mubr.bf16.mxu0 %v8385
    %9036 = vmatmul.mubr.bf16.gmra.mxu0 %v8384
    %v9037 = vpop.f32.mrf.mxu0
    %v9038 = vadd.f32 %v8601, %v9037
    %v9039 = vpop.f32.mrf.mxu0
    %v9040 = vpop.f32.mrf.mxu0
    %v9041 = vadd.f32 %v8601, %v9040
    %v9042 = vpop.f32.mrf.mxu0
    %9043 = vmatprep.mubr.bf16.mxu0 %v8389
    %9044 = vmatmul.mubr.bf16.gmra.mxu0 %v8388
    %v9045 = vpop.f32.mrf.mxu0
    %v9046 = vadd.f32 %v8601, %v9045
    %v9047 = vpop.f32.mrf.mxu0
    %v9048 = vpop.f32.mrf.mxu0
    %v9049 = vadd.f32 %v8601, %v9048
    %v9050 = vpop.f32.mrf.mxu0
    %9051 = vmatprep.mubr.bf16.mxu0 %v8393
    %9052 = vmatmul.mubr.bf16.gmra.mxu0 %v8392
    %v9053 = vpop.f32.mrf.mxu0
    %v9054 = vadd.f32 %v8601, %v9053
    %v9055 = vpop.f32.mrf.mxu0
    %v9056 = vpop.f32.mrf.mxu0
    %v9057 = vadd.f32 %v8601, %v9056
    %v9058 = vpop.f32.mrf.mxu0
    %9059 = vmatprep.mubr.bf16.mxu0 %v8397
    %9060 = vmatmul.mubr.bf16.gmra.mxu0 %v8396
    %v9061 = vpop.f32.mrf.mxu0
    %v9062 = vadd.f32 %v8601, %v9061
    %v9063 = vpop.f32.mrf.mxu0
    %v9064 = vpop.f32.mrf.mxu0
    %v9065 = vadd.f32 %v8601, %v9064
    %v9066 = vpop.f32.mrf.mxu0
    %9067 = vmatprep.mubr.bf16.mxu0 %v8401
    %9068 = vmatmul.mubr.bf16.gmra.mxu0 %v8400
    %v9069 = vpop.f32.mrf.mxu0
    %v9070 = vadd.f32 %v8601, %v9069
    %v9071 = vpop.f32.mrf.mxu0
    %v9072 = vpop.f32.mrf.mxu0
    %v9073 = vadd.f32 %v8601, %v9072
    %v9074 = vpop.f32.mrf.mxu0
    %9075 = vmatprep.mubr.bf16.mxu0 %v8405
    %9076 = vmatmul.mubr.bf16.gmra.mxu0 %v8404
    %v9077 = vpop.f32.mrf.mxu0
    %v9078 = vadd.f32 %v8601, %v9077
    %v9079 = vpop.f32.mrf.mxu0
    %v9080 = vpop.f32.mrf.mxu0
    %v9081 = vadd.f32 %v8601, %v9080
    %v9082 = vpop.f32.mrf.mxu0
    %9083 = vmatprep.mubr.bf16.mxu0 %v8409
    %9084 = vmatmul.mubr.bf16.gmra.mxu0 %v8408
    %v9085 = vpop.f32.mrf.mxu0
    %v9086 = vadd.f32 %v8601, %v9085
    %v9087 = vpop.f32.mrf.mxu0
    %v9088 = vpop.f32.mrf.mxu0
    %v9089 = vadd.f32 %v8601, %v9088
    %v9090 = vpop.f32.mrf.mxu0
    %9091 = vmatprep.mubr.bf16.mxu0 %v8413
    %9092 = vmatmul.mubr.bf16.gmra.mxu0 %v8412
    %v9093 = vpop.f32.mrf.mxu0
    %v9094 = vadd.f32 %v8601, %v9093
    %v9095 = vpop.f32.mrf.mxu0
    %v9096 = vpop.f32.mrf.mxu0
    %v9097 = vadd.f32 %v8601, %v9096
    %v9098 = vpop.f32.mrf.mxu0
    %9099 = vmatprep.mubr.bf16.mxu0 %v8417
    %9100 = vmatmul.mubr.bf16.gmra.mxu0 %v8416
    %v9101 = vpop.f32.mrf.mxu0
    %v9102 = vadd.f32 %v8601, %v9101
    %v9103 = vpop.f32.mrf.mxu0
    %v9104 = vpop.f32.mrf.mxu0
    %v9105 = vadd.f32 %v8601, %v9104
    %v9106 = vpop.f32.mrf.mxu0
    %9107 = vmatprep.mubr.bf16.mxu0 %v8421
    %9108 = vmatmul.mubr.bf16.gmra.mxu0 %v8420
    %v9109 = vpop.f32.mrf.mxu0
    %v9110 = vadd.f32 %v8601, %v9109
    %v9111 = vpop.f32.mrf.mxu0
    %v9112 = vpop.f32.mrf.mxu0
    %v9113 = vadd.f32 %v8601, %v9112
    %v9114 = vpop.f32.mrf.mxu0
    %9115 = vmatprep.mubr.bf16.mxu0 %v8425
    %9116 = vmatmul.mubr.bf16.gmra.mxu0 %v8424
    %v9117 = vpop.f32.mrf.mxu0
    %v9118 = vadd.f32 %v8601, %v9117
    %v9119 = vpop.f32.mrf.mxu0
    %v9120 = vpop.f32.mrf.mxu0
    %v9121 = vadd.f32 %v8601, %v9120
    %v9122 = vpop.f32.mrf.mxu0
    %9123 = vmatprep.mubr.bf16.mxu0 %v8429
    %9124 = vmatmul.mubr.bf16.gmra.mxu0 %v8428
    %v9125 = vpop.f32.mrf.mxu0
    %v9126 = vadd.f32 %v8601, %v9125
    %v9127 = vpop.f32.mrf.mxu0
    %v9128 = vpop.f32.mrf.mxu0
    %v9129 = vadd.f32 %v8601, %v9128
    %v9130 = vpop.f32.mrf.mxu0
    %9131 = vmatprep.mubr.bf16.mxu0 %v8433
    %9132 = vmatmul.mubr.bf16.gmra.mxu0 %v8432
    %v9133 = vpop.f32.mrf.mxu0
    %v9134 = vadd.f32 %v8601, %v9133
    %v9135 = vpop.f32.mrf.mxu0
    %v9136 = vpop.f32.mrf.mxu0
    %v9137 = vadd.f32 %v8601, %v9136
    %v9138 = vpop.f32.mrf.mxu0
    %9139 = vmatprep.mubr.bf16.mxu0 %v8437
    %9140 = vmatmul.mubr.bf16.gmra.mxu0 %v8436
    %v9141 = vpop.f32.mrf.mxu0
    %v9142 = vadd.f32 %v8601, %v9141
    %v9143 = vpop.f32.mrf.mxu0
    %v9144 = vpop.f32.mrf.mxu0
    %v9145 = vadd.f32 %v8601, %v9144
    %v9146 = vpop.f32.mrf.mxu0
    %9147 = vmatprep.mubr.bf16.mxu0 %v8441
    %9148 = vmatmul.mubr.bf16.gmra.mxu0 %v8440
    %v9149 = vpop.f32.mrf.mxu0
    %v9150 = vadd.f32 %v8601, %v9149
    %v9151 = vpop.f32.mrf.mxu0
    %v9152 = vpop.f32.mrf.mxu0
    %v9153 = vadd.f32 %v8601, %v9152
    %v9154 = vpop.f32.mrf.mxu0
    %9155 = vmatprep.mubr.bf16.mxu0 %v8445
    %9156 = vmatmul.mubr.bf16.gmra.mxu0 %v8444
    %v9157 = vpop.f32.mrf.mxu0
    %v9158 = vadd.f32 %v8601, %v9157
    %v9159 = vpop.f32.mrf.mxu0
    %v9160 = vpop.f32.mrf.mxu0
    %v9161 = vadd.f32 %v8601, %v9160
    %v9162 = vpop.f32.mrf.mxu0
    %9163 = vmatprep.mubr.bf16.mxu0 %v8449
    %9164 = vmatmul.mubr.bf16.gmra.mxu0 %v8448
    %v9165 = vpop.f32.mrf.mxu0
    %v9166 = vadd.f32 %v8601, %v9165
    %v9167 = vpop.f32.mrf.mxu0
    %v9168 = vpop.f32.mrf.mxu0
    %v9169 = vadd.f32 %v8601, %v9168
    %v9170 = vpop.f32.mrf.mxu0
    %9171 = vmatprep.mubr.bf16.mxu0 %v8453
    %9172 = vmatmul.mubr.bf16.gmra.mxu0 %v8452
    %v9173 = vpop.f32.mrf.mxu0
    %v9174 = vadd.f32 %v8601, %v9173
    %v9175 = vpop.f32.mrf.mxu0
    %v9176 = vpop.f32.mrf.mxu0
    %v9177 = vadd.f32 %v8601, %v9176
    %v9178 = vpop.f32.mrf.mxu0
    %9179 = vmatprep.mubr.bf16.mxu0 %v8457
    %9180 = vmatmul.mubr.bf16.gmra.mxu0 %v8456
    %v9181 = vpop.f32.mrf.mxu0
    %v9182 = vadd.f32 %v8601, %v9181
    %v9183 = vpop.f32.mrf.mxu0
    %v9184 = vpop.f32.mrf.mxu0
    %v9185 = vadd.f32 %v8601, %v9184
    %v9186 = vpop.f32.mrf.mxu0
    %9187 = vmatprep.mubr.bf16.mxu0 %v8461
    %9188 = vmatmul.mubr.bf16.gmra.mxu0 %v8460
    %v9189 = vpop.f32.mrf.mxu0
    %v9190 = vadd.f32 %v8601, %v9189
    %v9191 = vpop.f32.mrf.mxu0
    %v9192 = vpop.f32.mrf.mxu0
    %v9193 = vadd.f32 %v8601, %v9192
    %v9194 = vpop.f32.mrf.mxu0
    %9195 = vmatprep.mubr.bf16.mxu0 %v8465
    %9196 = vmatmul.mubr.bf16.gmra.mxu0 %v8464
    %v9197 = vpop.f32.mrf.mxu0
    %v9198 = vadd.f32 %v8601, %v9197
    %v9199 = vpop.f32.mrf.mxu0
    %v9200 = vpop.f32.mrf.mxu0
    %v9201 = vadd.f32 %v8601, %v9200
    %v9202 = vpop.f32.mrf.mxu0
    %9203 = vmatprep.mubr.bf16.mxu0 %v8469
    %9204 = vmatmul.mubr.bf16.gmra.mxu0 %v8468
    %v9205 = vpop.f32.mrf.mxu0
    %v9206 = vadd.f32 %v8601, %v9205
    %v9207 = vpop.f32.mrf.mxu0
    %v9208 = vpop.f32.mrf.mxu0
    %v9209 = vadd.f32 %v8601, %v9208
    %v9210 = vpop.f32.mrf.mxu0
    %9211 = vmatprep.mubr.bf16.mxu0 %v8473
    %9212 = vmatmul.mubr.bf16.gmra.mxu0 %v8472
    %v9213 = vpop.f32.mrf.mxu0
    %v9214 = vadd.f32 %v8601, %v9213
    %v9215 = vpop.f32.mrf.mxu0
    %v9216 = vpop.f32.mrf.mxu0
    %v9217 = vadd.f32 %v8601, %v9216
    %v9218 = vpop.f32.mrf.mxu0
    %9219 = vmatprep.mubr.bf16.mxu0 %v8477
    %9220 = vmatmul.mubr.bf16.gmra.mxu0 %v8476
    %v9221 = vpop.f32.mrf.mxu0
    %v9222 = vadd.f32 %v8601, %v9221
    %v9223 = vpop.f32.mrf.mxu0
    %v9224 = vpop.f32.mrf.mxu0
    %v9225 = vadd.f32 %v8601, %v9224
    %v9226 = vpop.f32.mrf.mxu0
    %9227 = vmatprep.mubr.bf16.mxu0 %v8481
    %9228 = vmatmul.mubr.bf16.gmra.mxu0 %v8480
    %v9229 = vpop.f32.mrf.mxu0
    %v9230 = vadd.f32 %v8601, %v9229
    %v9231 = vpop.f32.mrf.mxu0
    %v9232 = vpop.f32.mrf.mxu0
    %v9233 = vadd.f32 %v8601, %v9232
    %v9234 = vpop.f32.mrf.mxu0
    %9235 = vmatprep.mubr.bf16.mxu0 %v8485
    %9236 = vmatmul.mubr.bf16.gmra.mxu0 %v8484
    %v9237 = vpop.f32.mrf.mxu0
    %v9238 = vadd.f32 %v8601, %v9237
    %v9239 = vpop.f32.mrf.mxu0
    %v9240 = vpop.f32.mrf.mxu0
    %v9241 = vadd.f32 %v8601, %v9240
    %v9242 = vpop.f32.mrf.mxu0
    %9243 = vmatprep.mubr.bf16.mxu0 %v8489
    %9244 = vmatmul.mubr.bf16.gmra.mxu0 %v8488
    %v9245 = vpop.f32.mrf.mxu0
    %v9246 = vadd.f32 %v8601, %v9245
    %v9247 = vpop.f32.mrf.mxu0
    %v9248 = vpop.f32.mrf.mxu0
    %v9249 = vadd.f32 %v8601, %v9248
    %v9250 = vpop.f32.mrf.mxu0
    %9251 = vmatprep.mubr.bf16.mxu0 %v8493
    %9252 = vmatmul.mubr.bf16.gmra.mxu0 %v8492
    %v9253 = vpop.f32.mrf.mxu0
    %v9254 = vadd.f32 %v8601, %v9253
    %v9255 = vpop.f32.mrf.mxu0
    %v9256 = vpop.f32.mrf.mxu0
    %v9257 = vadd.f32 %v8601, %v9256
    %v9258 = vpop.f32.mrf.mxu0
    %9259 = vmatprep.mubr.bf16.mxu0 %v8497
    %9260 = vmatmul.mubr.bf16.gmra.mxu0 %v8496
    %v9261 = vpop.f32.mrf.mxu0
    %v9262 = vadd.f32 %v8601, %v9261
    %v9263 = vpop.f32.mrf.mxu0
    %v9264 = vpop.f32.mrf.mxu0
    %v9265 = vadd.f32 %v8601, %v9264
    %v9266 = vpop.f32.mrf.mxu0
    %9267 = vmatprep.mubr.bf16.mxu0 %v8501
    %9268 = vmatmul.mubr.bf16.gmra.mxu0 %v8500
    %v9269 = vpop.f32.mrf.mxu0
    %v9270 = vadd.f32 %v8601, %v9269
    %v9271 = vpop.f32.mrf.mxu0
    %v9272 = vpop.f32.mrf.mxu0
    %v9273 = vadd.f32 %v8601, %v9272
    %v9274 = vpop.f32.mrf.mxu0
    %9275 = vmatprep.mubr.bf16.mxu0 %v8505
    %9276 = vmatmul.mubr.bf16.gmra.mxu0 %v8504
    %v9277 = vpop.f32.mrf.mxu0
    %v9278 = vadd.f32 %v8601, %v9277
    %v9279 = vpop.f32.mrf.mxu0
    %v9280 = vpop.f32.mrf.mxu0
    %v9281 = vadd.f32 %v8601, %v9280
    %v9282 = vpop.f32.mrf.mxu0
    %9283 = vmatprep.mubr.bf16.mxu0 %v8509
    %9284 = vmatmul.mubr.bf16.gmra.mxu0 %v8508
    %v9285 = vpop.f32.mrf.mxu0
    %v9286 = vadd.f32 %v8601, %v9285
    %v9287 = vpop.f32.mrf.mxu0
    %v9288 = vpop.f32.mrf.mxu0
    %v9289 = vadd.f32 %v8601, %v9288
    %v9290 = vpop.f32.mrf.mxu0
    %9291 = vmatprep.mubr.bf16.mxu0 %v8513
    %9292 = vmatmul.mubr.bf16.gmra.mxu0 %v8512
    %v9293 = vpop.f32.mrf.mxu0
    %v9294 = vadd.f32 %v8601, %v9293
    %v9295 = vpop.f32.mrf.mxu0
    %v9296 = vpop.f32.mrf.mxu0
    %v9297 = vadd.f32 %v8601, %v9296
    %v9298 = vpop.f32.mrf.mxu0
    %9299 = vmatprep.mubr.bf16.mxu0 %v8517
    %9300 = vmatmul.mubr.bf16.gmra.mxu0 %v8516
    %v9301 = vpop.f32.mrf.mxu0
    %v9302 = vadd.f32 %v8601, %v9301
    %v9303 = vpop.f32.mrf.mxu0
    %v9304 = vpop.f32.mrf.mxu0
    %v9305 = vadd.f32 %v8601, %v9304
    %v9306 = vpop.f32.mrf.mxu0
    %9307 = vmatprep.mubr.bf16.mxu0 %v8521
    %9308 = vmatmul.mubr.bf16.gmra.mxu0 %v8520
    %v9309 = vpop.f32.mrf.mxu0
    %v9310 = vadd.f32 %v8601, %v9309
    %v9311 = vpop.f32.mrf.mxu0
    %v9312 = vpop.f32.mrf.mxu0
    %v9313 = vadd.f32 %v8601, %v9312
    %v9314 = vpop.f32.mrf.mxu0
    %9315 = vmatprep.mubr.bf16.mxu0 %v8525
    %9316 = vmatmul.mubr.bf16.gmra.mxu0 %v8524
    %v9317 = vpop.f32.mrf.mxu0
    %v9318 = vadd.f32 %v8601, %v9317
    %v9319 = vpop.f32.mrf.mxu0
    %v9320 = vpop.f32.mrf.mxu0
    %v9321 = vadd.f32 %v8601, %v9320
    %v9322 = vpop.f32.mrf.mxu0
    %9323 = vmatprep.mubr.bf16.mxu0 %v8529
    %9324 = vmatmul.mubr.bf16.gmra.mxu0 %v8528
    %v9325 = vpop.f32.mrf.mxu0
    %v9326 = vadd.f32 %v8601, %v9325
    %v9327 = vpop.f32.mrf.mxu0
    %v9328 = vpop.f32.mrf.mxu0
    %v9329 = vadd.f32 %v8601, %v9328
    %v9330 = vpop.f32.mrf.mxu0
    %9331 = vdwg.mxu0
    %9332 = vmatprep.subr.bf16.mxu0 0
    %9333 = vmatpush1.bf16.msra.mxu0 %v8754
    %9334 = vmatprep.subr.bf16.mxu0 0
    %9335 = vmatpush1.bf16.msra.mxu0 %v8753
    %9336 = vmatprep.subr.bf16.mxu0 0
    %9337 = vmatpush1.bf16.msra.mxu0 %v8752
    %9338 = vmatprep.subr.bf16.mxu0 0
    %9339 = vmatpush1.bf16.msra.mxu0 %v8751
    %9340 = vmatprep.subr.bf16.mxu0 0
    %9341 = vmatpush1.bf16.msra.mxu0 %v8750
    %9342 = vmatprep.subr.bf16.mxu0 0
    %9343 = vmatpush1.bf16.msra.mxu0 %v8749
    %9344 = vmatprep.subr.bf16.mxu0 0
    %9345 = vmatpush1.bf16.msra.mxu0 %v8748
    %9346 = vmatprep.subr.bf16.mxu0 0
    %9347 = vmatpush1.bf16.msra.mxu0 %v8747
    %9348 = vmatprep.subr.bf16.mxu0 0
    %9349 = vmatpush2.bf16.msra.mxu0 %v8762
    %9350 = vmatprep.subr.bf16.mxu0 0
    %9351 = vmatpush2.bf16.msra.mxu0 %v8761
    %9352 = vmatprep.subr.bf16.mxu0 0
    %9353 = vmatpush2.bf16.msra.mxu0 %v8760
    %9354 = vmatprep.subr.bf16.mxu0 0
    %9355 = vmatpush2.bf16.msra.mxu0 %v8759
    %9356 = vmatprep.subr.bf16.mxu0 0
    %9357 = vmatpush2.bf16.msra.mxu0 %v8758
    %9358 = vmatprep.subr.bf16.mxu0 0
    %9359 = vmatpush2.bf16.msra.mxu0 %v8757
    %9360 = vmatprep.subr.bf16.mxu0 0
    %9361 = vmatpush2.bf16.msra.mxu0 %v8756
    %9362 = vmatprep.subr.bf16.mxu0 0
    %9363 = vmatpush2.bf16.msra.mxu0 %v8755
    %9364 = vmatprep.mubr.bf16.mxu0 %v8283
    %9365 = vmatmul.mubr.bf16.gmra.mxu0 %v8282
    %v9366 = vpop.f32.mrf.mxu0
    %v9367 = vadd.f32 %v8830, %v9366
    %v9368 = vpop.f32.mrf.mxu0
    %v9369 = vpop.f32.mrf.mxu0
    %v9370 = vadd.f32 %v8833, %v9369
    %v9371 = vpop.f32.mrf.mxu0
    %9372 = vmatprep.mubr.bf16.mxu0 %v8287
    %9373 = vmatmul.mubr.bf16.gmra.mxu0 %v8286
    %v9374 = vpop.f32.mrf.mxu0
    %v9375 = vadd.f32 %v8838, %v9374
    %v9376 = vpop.f32.mrf.mxu0
    %v9377 = vpop.f32.mrf.mxu0
    %v9378 = vadd.f32 %v8841, %v9377
    %v9379 = vpop.f32.mrf.mxu0
    %9380 = vmatprep.mubr.bf16.mxu0 %v8291
    %9381 = vmatmul.mubr.bf16.gmra.mxu0 %v8290
    %v9382 = vpop.f32.mrf.mxu0
    %v9383 = vadd.f32 %v8846, %v9382
    %v9384 = vpop.f32.mrf.mxu0
    %v9385 = vpop.f32.mrf.mxu0
    %v9386 = vadd.f32 %v8849, %v9385
    %v9387 = vpop.f32.mrf.mxu0
    %9388 = vmatprep.mubr.bf16.mxu0 %v8295
    %9389 = vmatmul.mubr.bf16.gmra.mxu0 %v8294
    %v9390 = vpop.f32.mrf.mxu0
    %v9391 = vadd.f32 %v8854, %v9390
    %v9392 = vpop.f32.mrf.mxu0
    %v9393 = vpop.f32.mrf.mxu0
    %v9394 = vadd.f32 %v8857, %v9393
    %v9395 = vpop.f32.mrf.mxu0
    %9396 = vmatprep.mubr.bf16.mxu0 %v8299
    %9397 = vmatmul.mubr.bf16.gmra.mxu0 %v8298
    %v9398 = vpop.f32.mrf.mxu0
    %v9399 = vadd.f32 %v8862, %v9398
    %v9400 = vpop.f32.mrf.mxu0
    %v9401 = vpop.f32.mrf.mxu0
    %v9402 = vadd.f32 %v8865, %v9401
    %v9403 = vpop.f32.mrf.mxu0
    %9404 = vmatprep.mubr.bf16.mxu0 %v8303
    %9405 = vmatmul.mubr.bf16.gmra.mxu0 %v8302
    %v9406 = vpop.f32.mrf.mxu0
    %v9407 = vadd.f32 %v8870, %v9406
    %v9408 = vpop.f32.mrf.mxu0
    %v9409 = vpop.f32.mrf.mxu0
    %v9410 = vadd.f32 %v8873, %v9409
    %v9411 = vpop.f32.mrf.mxu0
    %9412 = vmatprep.mubr.bf16.mxu0 %v8307
    %9413 = vmatmul.mubr.bf16.gmra.mxu0 %v8306
    %v9414 = vpop.f32.mrf.mxu0
    %v9415 = vadd.f32 %v8878, %v9414
    %v9416 = vpop.f32.mrf.mxu0
    %v9417 = vpop.f32.mrf.mxu0
    %v9418 = vadd.f32 %v8881, %v9417
    %v9419 = vpop.f32.mrf.mxu0
    %9420 = vmatprep.mubr.bf16.mxu0 %v8311
    %9421 = vmatmul.mubr.bf16.gmra.mxu0 %v8310
    %v9422 = vpop.f32.mrf.mxu0
    %v9423 = vadd.f32 %v8886, %v9422
    %v9424 = vpop.f32.mrf.mxu0
    %v9425 = vpop.f32.mrf.mxu0
    %v9426 = vadd.f32 %v8889, %v9425
    %v9427 = vpop.f32.mrf.mxu0
    %9428 = vmatprep.mubr.bf16.mxu0 %v8315
    %9429 = vmatmul.mubr.bf16.gmra.mxu0 %v8314
    %v9430 = vpop.f32.mrf.mxu0
    %v9431 = vadd.f32 %v8894, %v9430
    %v9432 = vpop.f32.mrf.mxu0
    %v9433 = vpop.f32.mrf.mxu0
    %v9434 = vadd.f32 %v8897, %v9433
    %v9435 = vpop.f32.mrf.mxu0
    %9436 = vmatprep.mubr.bf16.mxu0 %v8319
    %9437 = vmatmul.mubr.bf16.gmra.mxu0 %v8318
    %v9438 = vpop.f32.mrf.mxu0
    %v9439 = vadd.f32 %v8902, %v9438
    %v9440 = vpop.f32.mrf.mxu0
    %v9441 = vpop.f32.mrf.mxu0
    %v9442 = vadd.f32 %v8905, %v9441
    %v9443 = vpop.f32.mrf.mxu0
    %9444 = vmatprep.mubr.bf16.mxu0 %v8323
    %9445 = vmatmul.mubr.bf16.gmra.mxu0 %v8322
    %v9446 = vpop.f32.mrf.mxu0
    %v9447 = vadd.f32 %v8910, %v9446
    %v9448 = vpop.f32.mrf.mxu0
    %v9449 = vpop.f32.mrf.mxu0
    %v9450 = vadd.f32 %v8913, %v9449
    %v9451 = vpop.f32.mrf.mxu0
    %9452 = vmatprep.mubr.bf16.mxu0 %v8327
    %9453 = vmatmul.mubr.bf16.gmra.mxu0 %v8326
    %v9454 = vpop.f32.mrf.mxu0
    %v9455 = vadd.f32 %v8918, %v9454
    %v9456 = vpop.f32.mrf.mxu0
    %v9457 = vpop.f32.mrf.mxu0
    %v9458 = vadd.f32 %v8921, %v9457
    %v9459 = vpop.f32.mrf.mxu0
    %9460 = vmatprep.mubr.bf16.mxu0 %v8331
    %9461 = vmatmul.mubr.bf16.gmra.mxu0 %v8330
    %v9462 = vpop.f32.mrf.mxu0
    %v9463 = vadd.f32 %v8926, %v9462
    %v9464 = vpop.f32.mrf.mxu0
    %v9465 = vpop.f32.mrf.mxu0
    %v9466 = vadd.f32 %v8929, %v9465
    %v9467 = vpop.f32.mrf.mxu0
    %9468 = vmatprep.mubr.bf16.mxu0 %v8335
    %9469 = vmatmul.mubr.bf16.gmra.mxu0 %v8334
    %v9470 = vpop.f32.mrf.mxu0
    %v9471 = vadd.f32 %v8934, %v9470
    %v9472 = vpop.f32.mrf.mxu0
    %v9473 = vpop.f32.mrf.mxu0
    %v9474 = vadd.f32 %v8937, %v9473
    %v9475 = vpop.f32.mrf.mxu0
    %9476 = vmatprep.mubr.bf16.mxu0 %v8339
    %9477 = vmatmul.mubr.bf16.gmra.mxu0 %v8338
    %v9478 = vpop.f32.mrf.mxu0
    %v9479 = vadd.f32 %v8942, %v9478
    %v9480 = vpop.f32.mrf.mxu0
    %v9481 = vpop.f32.mrf.mxu0
    %v9482 = vadd.f32 %v8945, %v9481
    %v9483 = vpop.f32.mrf.mxu0
    %9484 = vmatprep.mubr.bf16.mxu0 %v8343
    %9485 = vmatmul.mubr.bf16.gmra.mxu0 %v8342
    %v9486 = vpop.f32.mrf.mxu0
    %v9487 = vadd.f32 %v8950, %v9486
    %v9488 = vpop.f32.mrf.mxu0
    %v9489 = vpop.f32.mrf.mxu0
    %v9490 = vadd.f32 %v8953, %v9489
    %v9491 = vpop.f32.mrf.mxu0
    %9492 = vmatprep.mubr.bf16.mxu0 %v8347
    %9493 = vmatmul.mubr.bf16.gmra.mxu0 %v8346
    %v9494 = vpop.f32.mrf.mxu0
    %v9495 = vadd.f32 %v8958, %v9494
    %v9496 = vpop.f32.mrf.mxu0
    %v9497 = vpop.f32.mrf.mxu0
    %v9498 = vadd.f32 %v8961, %v9497
    %v9499 = vpop.f32.mrf.mxu0
    %9500 = vmatprep.mubr.bf16.mxu0 %v8351
    %9501 = vmatmul.mubr.bf16.gmra.mxu0 %v8350
    %v9502 = vpop.f32.mrf.mxu0
    %v9503 = vadd.f32 %v8966, %v9502
    %v9504 = vpop.f32.mrf.mxu0
    %v9505 = vpop.f32.mrf.mxu0
    %v9506 = vadd.f32 %v8969, %v9505
    %v9507 = vpop.f32.mrf.mxu0
    %9508 = vmatprep.mubr.bf16.mxu0 %v8355
    %9509 = vmatmul.mubr.bf16.gmra.mxu0 %v8354
    %v9510 = vpop.f32.mrf.mxu0
    %v9511 = vadd.f32 %v8974, %v9510
    %v9512 = vpop.f32.mrf.mxu0
    %v9513 = vpop.f32.mrf.mxu0
    %v9514 = vadd.f32 %v8977, %v9513
    %v9515 = vpop.f32.mrf.mxu0
    %9516 = vmatprep.mubr.bf16.mxu0 %v8359
    %9517 = vmatmul.mubr.bf16.gmra.mxu0 %v8358
    %v9518 = vpop.f32.mrf.mxu0
    %v9519 = vadd.f32 %v8982, %v9518
    %v9520 = vpop.f32.mrf.mxu0
    %v9521 = vpop.f32.mrf.mxu0
    %v9522 = vadd.f32 %v8985, %v9521
    %v9523 = vpop.f32.mrf.mxu0
    %9524 = vmatprep.mubr.bf16.mxu0 %v8363
    %9525 = vmatmul.mubr.bf16.gmra.mxu0 %v8362
    %v9526 = vpop.f32.mrf.mxu0
    %v9527 = vadd.f32 %v8990, %v9526
    %v9528 = vpop.f32.mrf.mxu0
    %v9529 = vpop.f32.mrf.mxu0
    %v9530 = vadd.f32 %v8993, %v9529
    %v9531 = vpop.f32.mrf.mxu0
    %9532 = vmatprep.mubr.bf16.mxu0 %v8367
    %9533 = vmatmul.mubr.bf16.gmra.mxu0 %v8366
    %v9534 = vpop.f32.mrf.mxu0
    %v9535 = vadd.f32 %v8998, %v9534
    %v9536 = vpop.f32.mrf.mxu0
    %v9537 = vpop.f32.mrf.mxu0
    %v9538 = vadd.f32 %v9001, %v9537
    %v9539 = vpop.f32.mrf.mxu0
    %9540 = vmatprep.mubr.bf16.mxu0 %v8371
    %9541 = vmatmul.mubr.bf16.gmra.mxu0 %v8370
    %v9542 = vpop.f32.mrf.mxu0
    %v9543 = vadd.f32 %v9006, %v9542
    %v9544 = vpop.f32.mrf.mxu0
    %v9545 = vpop.f32.mrf.mxu0
    %v9546 = vadd.f32 %v9009, %v9545
    %v9547 = vpop.f32.mrf.mxu0
    %9548 = vmatprep.mubr.bf16.mxu0 %v8375
    %9549 = vmatmul.mubr.bf16.gmra.mxu0 %v8374
    %v9550 = vpop.f32.mrf.mxu0
    %v9551 = vadd.f32 %v9014, %v9550
    %v9552 = vpop.f32.mrf.mxu0
    %v9553 = vpop.f32.mrf.mxu0
    %v9554 = vadd.f32 %v9017, %v9553
    %v9555 = vpop.f32.mrf.mxu0
    %9556 = vmatprep.mubr.bf16.mxu0 %v8379
    %9557 = vmatmul.mubr.bf16.gmra.mxu0 %v8378
    %v9558 = vpop.f32.mrf.mxu0
    %v9559 = vadd.f32 %v9022, %v9558
    %v9560 = vpop.f32.mrf.mxu0
    %v9561 = vpop.f32.mrf.mxu0
    %v9562 = vadd.f32 %v9025, %v9561
    %v9563 = vpop.f32.mrf.mxu0
    %9564 = vmatprep.mubr.bf16.mxu0 %v8383
    %9565 = vmatmul.mubr.bf16.gmra.mxu0 %v8382
    %v9566 = vpop.f32.mrf.mxu0
    %v9567 = vadd.f32 %v9030, %v9566
    %v9568 = vpop.f32.mrf.mxu0
    %v9569 = vpop.f32.mrf.mxu0
    %v9570 = vadd.f32 %v9033, %v9569
    %v9571 = vpop.f32.mrf.mxu0
    %9572 = vmatprep.mubr.bf16.mxu0 %v8387
    %9573 = vmatmul.mubr.bf16.gmra.mxu0 %v8386
    %v9574 = vpop.f32.mrf.mxu0
    %v9575 = vadd.f32 %v9038, %v9574
    %v9576 = vpop.f32.mrf.mxu0
    %v9577 = vpop.f32.mrf.mxu0
    %v9578 = vadd.f32 %v9041, %v9577
    %v9579 = vpop.f32.mrf.mxu0
    %9580 = vmatprep.mubr.bf16.mxu0 %v8391
    %9581 = vmatmul.mubr.bf16.gmra.mxu0 %v8390
    %v9582 = vpop.f32.mrf.mxu0
    %v9583 = vadd.f32 %v9046, %v9582
    %v9584 = vpop.f32.mrf.mxu0
    %v9585 = vpop.f32.mrf.mxu0
    %v9586 = vadd.f32 %v9049, %v9585
    %v9587 = vpop.f32.mrf.mxu0
    %9588 = vmatprep.mubr.bf16.mxu0 %v8395
    %9589 = vmatmul.mubr.bf16.gmra.mxu0 %v8394
    %v9590 = vpop.f32.mrf.mxu0
    %v9591 = vadd.f32 %v9054, %v9590
    %v9592 = vpop.f32.mrf.mxu0
    %v9593 = vpop.f32.mrf.mxu0
    %v9594 = vadd.f32 %v9057, %v9593
    %v9595 = vpop.f32.mrf.mxu0
    %9596 = vmatprep.mubr.bf16.mxu0 %v8399
    %9597 = vmatmul.mubr.bf16.gmra.mxu0 %v8398
    %v9598 = vpop.f32.mrf.mxu0
    %v9599 = vadd.f32 %v9062, %v9598
    %v9600 = vpop.f32.mrf.mxu0
    %v9601 = vpop.f32.mrf.mxu0
    %v9602 = vadd.f32 %v9065, %v9601
    %v9603 = vpop.f32.mrf.mxu0
    %9604 = vmatprep.mubr.bf16.mxu0 %v8403
    %9605 = vmatmul.mubr.bf16.gmra.mxu0 %v8402
    %v9606 = vpop.f32.mrf.mxu0
    %v9607 = vadd.f32 %v9070, %v9606
    %v9608 = vpop.f32.mrf.mxu0
    %v9609 = vpop.f32.mrf.mxu0
    %v9610 = vadd.f32 %v9073, %v9609
    %v9611 = vpop.f32.mrf.mxu0
    %9612 = vmatprep.mubr.bf16.mxu0 %v8407
    %9613 = vmatmul.mubr.bf16.gmra.mxu0 %v8406
    %v9614 = vpop.f32.mrf.mxu0
    %v9615 = vadd.f32 %v9078, %v9614
    %v9616 = vpop.f32.mrf.mxu0
    %v9617 = vpop.f32.mrf.mxu0
    %v9618 = vadd.f32 %v9081, %v9617
    %v9619 = vpop.f32.mrf.mxu0
    %9620 = vmatprep.mubr.bf16.mxu0 %v8411
    %9621 = vmatmul.mubr.bf16.gmra.mxu0 %v8410
    %v9622 = vpop.f32.mrf.mxu0
    %v9623 = vadd.f32 %v9086, %v9622
    %v9624 = vpop.f32.mrf.mxu0
    %v9625 = vpop.f32.mrf.mxu0
    %v9626 = vadd.f32 %v9089, %v9625
    %v9627 = vpop.f32.mrf.mxu0
    %9628 = vmatprep.mubr.bf16.mxu0 %v8415
    %9629 = vmatmul.mubr.bf16.gmra.mxu0 %v8414
    %v9630 = vpop.f32.mrf.mxu0
    %v9631 = vadd.f32 %v9094, %v9630
    %v9632 = vpop.f32.mrf.mxu0
    %v9633 = vpop.f32.mrf.mxu0
    %v9634 = vadd.f32 %v9097, %v9633
    %v9635 = vpop.f32.mrf.mxu0
    %9636 = vmatprep.mubr.bf16.mxu0 %v8419
    %9637 = vmatmul.mubr.bf16.gmra.mxu0 %v8418
    %v9638 = vpop.f32.mrf.mxu0
    %v9639 = vadd.f32 %v9102, %v9638
    %v9640 = vpop.f32.mrf.mxu0
    %v9641 = vpop.f32.mrf.mxu0
    %v9642 = vadd.f32 %v9105, %v9641
    %v9643 = vpop.f32.mrf.mxu0
    %9644 = vmatprep.mubr.bf16.mxu0 %v8423
    %9645 = vmatmul.mubr.bf16.gmra.mxu0 %v8422
    %v9646 = vpop.f32.mrf.mxu0
    %v9647 = vadd.f32 %v9110, %v9646
    %v9648 = vpop.f32.mrf.mxu0
    %v9649 = vpop.f32.mrf.mxu0
    %v9650 = vadd.f32 %v9113, %v9649
    %v9651 = vpop.f32.mrf.mxu0
    %9652 = vmatprep.mubr.bf16.mxu0 %v8427
    %9653 = vmatmul.mubr.bf16.gmra.mxu0 %v8426
    %v9654 = vpop.f32.mrf.mxu0
    %v9655 = vadd.f32 %v9118, %v9654
    %v9656 = vpop.f32.mrf.mxu0
    %v9657 = vpop.f32.mrf.mxu0
    %v9658 = vadd.f32 %v9121, %v9657
    %v9659 = vpop.f32.mrf.mxu0
    %9660 = vmatprep.mubr.bf16.mxu0 %v8431
    %9661 = vmatmul.mubr.bf16.gmra.mxu0 %v8430
    %v9662 = vpop.f32.mrf.mxu0
    %v9663 = vadd.f32 %v9126, %v9662
    %v9664 = vpop.f32.mrf.mxu0
    %v9665 = vpop.f32.mrf.mxu0
    %v9666 = vadd.f32 %v9129, %v9665
    %v9667 = vpop.f32.mrf.mxu0
    %9668 = vmatprep.mubr.bf16.mxu0 %v8435
    %9669 = vmatmul.mubr.bf16.gmra.mxu0 %v8434
    %v9670 = vpop.f32.mrf.mxu0
    %v9671 = vadd.f32 %v9134, %v9670
    %v9672 = vpop.f32.mrf.mxu0
    %v9673 = vpop.f32.mrf.mxu0
    %v9674 = vadd.f32 %v9137, %v9673
    %v9675 = vpop.f32.mrf.mxu0
    %9676 = vmatprep.mubr.bf16.mxu0 %v8439
    %9677 = vmatmul.mubr.bf16.gmra.mxu0 %v8438
    %v9678 = vpop.f32.mrf.mxu0
    %v9679 = vadd.f32 %v9142, %v9678
    %v9680 = vpop.f32.mrf.mxu0
    %v9681 = vpop.f32.mrf.mxu0
    %v9682 = vadd.f32 %v9145, %v9681
    %v9683 = vpop.f32.mrf.mxu0
    %9684 = vmatprep.mubr.bf16.mxu0 %v8443
    %9685 = vmatmul.mubr.bf16.gmra.mxu0 %v8442
    %v9686 = vpop.f32.mrf.mxu0
    %v9687 = vadd.f32 %v9150, %v9686
    %v9688 = vpop.f32.mrf.mxu0
    %v9689 = vpop.f32.mrf.mxu0
    %v9690 = vadd.f32 %v9153, %v9689
    %v9691 = vpop.f32.mrf.mxu0
    %9692 = vmatprep.mubr.bf16.mxu0 %v8447
    %9693 = vmatmul.mubr.bf16.gmra.mxu0 %v8446
    %v9694 = vpop.f32.mrf.mxu0
    %v9695 = vadd.f32 %v9158, %v9694
    %v9696 = vpop.f32.mrf.mxu0
    %v9697 = vpop.f32.mrf.mxu0
    %v9698 = vadd.f32 %v9161, %v9697
    %v9699 = vpop.f32.mrf.mxu0
    %9700 = vmatprep.mubr.bf16.mxu0 %v8451
    %9701 = vmatmul.mubr.bf16.gmra.mxu0 %v8450
    %v9702 = vpop.f32.mrf.mxu0
    %v9703 = vadd.f32 %v9166, %v9702
    %v9704 = vpop.f32.mrf.mxu0
    %v9705 = vpop.f32.mrf.mxu0
    %v9706 = vadd.f32 %v9169, %v9705
    %v9707 = vpop.f32.mrf.mxu0
    %9708 = vmatprep.mubr.bf16.mxu0 %v8455
    %9709 = vmatmul.mubr.bf16.gmra.mxu0 %v8454
    %v9710 = vpop.f32.mrf.mxu0
    %v9711 = vadd.f32 %v9174, %v9710
    %v9712 = vpop.f32.mrf.mxu0
    %v9713 = vpop.f32.mrf.mxu0
    %v9714 = vadd.f32 %v9177, %v9713
    %v9715 = vpop.f32.mrf.mxu0
    %9716 = vmatprep.mubr.bf16.mxu0 %v8459
    %9717 = vmatmul.mubr.bf16.gmra.mxu0 %v8458
    %v9718 = vpop.f32.mrf.mxu0
    %v9719 = vadd.f32 %v9182, %v9718
    %v9720 = vpop.f32.mrf.mxu0
    %v9721 = vpop.f32.mrf.mxu0
    %v9722 = vadd.f32 %v9185, %v9721
    %v9723 = vpop.f32.mrf.mxu0
    %9724 = vmatprep.mubr.bf16.mxu0 %v8463
    %9725 = vmatmul.mubr.bf16.gmra.mxu0 %v8462
    %v9726 = vpop.f32.mrf.mxu0
    %v9727 = vadd.f32 %v9190, %v9726
    %v9728 = vpop.f32.mrf.mxu0
    %v9729 = vpop.f32.mrf.mxu0
    %v9730 = vadd.f32 %v9193, %v9729
    %v9731 = vpop.f32.mrf.mxu0
    %9732 = vmatprep.mubr.bf16.mxu0 %v8467
    %9733 = vmatmul.mubr.bf16.gmra.mxu0 %v8466
    %v9734 = vpop.f32.mrf.mxu0
    %v9735 = vadd.f32 %v9198, %v9734
    %v9736 = vpop.f32.mrf.mxu0
    %v9737 = vpop.f32.mrf.mxu0
    %v9738 = vadd.f32 %v9201, %v9737
    %v9739 = vpop.f32.mrf.mxu0
    %9740 = vmatprep.mubr.bf16.mxu0 %v8471
    %9741 = vmatmul.mubr.bf16.gmra.mxu0 %v8470
    %v9742 = vpop.f32.mrf.mxu0
    %v9743 = vadd.f32 %v9206, %v9742
    %v9744 = vpop.f32.mrf.mxu0
    %v9745 = vpop.f32.mrf.mxu0
    %v9746 = vadd.f32 %v9209, %v9745
    %v9747 = vpop.f32.mrf.mxu0
    %9748 = vmatprep.mubr.bf16.mxu0 %v8475
    %9749 = vmatmul.mubr.bf16.gmra.mxu0 %v8474
    %v9750 = vpop.f32.mrf.mxu0
    %v9751 = vadd.f32 %v9214, %v9750
    %v9752 = vpop.f32.mrf.mxu0
    %v9753 = vpop.f32.mrf.mxu0
    %v9754 = vadd.f32 %v9217, %v9753
    %v9755 = vpop.f32.mrf.mxu0
    %9756 = vmatprep.mubr.bf16.mxu0 %v8479
    %9757 = vmatmul.mubr.bf16.gmra.mxu0 %v8478
    %v9758 = vpop.f32.mrf.mxu0
    %v9759 = vadd.f32 %v9222, %v9758
    %v9760 = vpop.f32.mrf.mxu0
    %v9761 = vpop.f32.mrf.mxu0
    %v9762 = vadd.f32 %v9225, %v9761
    %v9763 = vpop.f32.mrf.mxu0
    %9764 = vmatprep.mubr.bf16.mxu0 %v8483
    %9765 = vmatmul.mubr.bf16.gmra.mxu0 %v8482
    %v9766 = vpop.f32.mrf.mxu0
    %v9767 = vadd.f32 %v9230, %v9766
    %v9768 = vpop.f32.mrf.mxu0
    %v9769 = vpop.f32.mrf.mxu0
    %v9770 = vadd.f32 %v9233, %v9769
    %v9771 = vpop.f32.mrf.mxu0
    %9772 = vmatprep.mubr.bf16.mxu0 %v8487
    %9773 = vmatmul.mubr.bf16.gmra.mxu0 %v8486
    %v9774 = vpop.f32.mrf.mxu0
    %v9775 = vadd.f32 %v9238, %v9774
    %v9776 = vpop.f32.mrf.mxu0
    %v9777 = vpop.f32.mrf.mxu0
    %v9778 = vadd.f32 %v9241, %v9777
    %v9779 = vpop.f32.mrf.mxu0
    %9780 = vmatprep.mubr.bf16.mxu0 %v8491
    %9781 = vmatmul.mubr.bf16.gmra.mxu0 %v8490
    %v9782 = vpop.f32.mrf.mxu0
    %v9783 = vadd.f32 %v9246, %v9782
    %v9784 = vpop.f32.mrf.mxu0
    %v9785 = vpop.f32.mrf.mxu0
    %v9786 = vadd.f32 %v9249, %v9785
    %v9787 = vpop.f32.mrf.mxu0
    %9788 = vmatprep.mubr.bf16.mxu0 %v8495
    %9789 = vmatmul.mubr.bf16.gmra.mxu0 %v8494
    %v9790 = vpop.f32.mrf.mxu0
    %v9791 = vadd.f32 %v9254, %v9790
    %v9792 = vpop.f32.mrf.mxu0
    %v9793 = vpop.f32.mrf.mxu0
    %v9794 = vadd.f32 %v9257, %v9793
    %v9795 = vpop.f32.mrf.mxu0
    %9796 = vmatprep.mubr.bf16.mxu0 %v8499
    %9797 = vmatmul.mubr.bf16.gmra.mxu0 %v8498
    %v9798 = vpop.f32.mrf.mxu0
    %v9799 = vadd.f32 %v9262, %v9798
    %v9800 = vpop.f32.mrf.mxu0
    %v9801 = vpop.f32.mrf.mxu0
    %v9802 = vadd.f32 %v9265, %v9801
    %v9803 = vpop.f32.mrf.mxu0
    %9804 = vmatprep.mubr.bf16.mxu0 %v8503
    %9805 = vmatmul.mubr.bf16.gmra.mxu0 %v8502
    %v9806 = vpop.f32.mrf.mxu0
    %v9807 = vadd.f32 %v9270, %v9806
    %v9808 = vpop.f32.mrf.mxu0
    %v9809 = vpop.f32.mrf.mxu0
    %v9810 = vadd.f32 %v9273, %v9809
    %v9811 = vpop.f32.mrf.mxu0
    %9812 = vmatprep.mubr.bf16.mxu0 %v8507
    %9813 = vmatmul.mubr.bf16.gmra.mxu0 %v8506
    %v9814 = vpop.f32.mrf.mxu0
    %v9815 = vadd.f32 %v9278, %v9814
    %v9816 = vpop.f32.mrf.mxu0
    %v9817 = vpop.f32.mrf.mxu0
    %v9818 = vadd.f32 %v9281, %v9817
    %v9819 = vpop.f32.mrf.mxu0
    %9820 = vmatprep.mubr.bf16.mxu0 %v8511
    %9821 = vmatmul.mubr.bf16.gmra.mxu0 %v8510
    %v9822 = vpop.f32.mrf.mxu0
    %v9823 = vadd.f32 %v9286, %v9822
    %v9824 = vpop.f32.mrf.mxu0
    %v9825 = vpop.f32.mrf.mxu0
    %v9826 = vadd.f32 %v9289, %v9825
    %v9827 = vpop.f32.mrf.mxu0
    %9828 = vmatprep.mubr.bf16.mxu0 %v8515
    %9829 = vmatmul.mubr.bf16.gmra.mxu0 %v8514
    %v9830 = vpop.f32.mrf.mxu0
    %v9831 = vadd.f32 %v9294, %v9830
    %v9832 = vpop.f32.mrf.mxu0
    %v9833 = vpop.f32.mrf.mxu0
    %v9834 = vadd.f32 %v9297, %v9833
    %v9835 = vpop.f32.mrf.mxu0
    %9836 = vmatprep.mubr.bf16.mxu0 %v8519
    %9837 = vmatmul.mubr.bf16.gmra.mxu0 %v8518
    %v9838 = vpop.f32.mrf.mxu0
    %v9839 = vadd.f32 %v9302, %v9838
    %v9840 = vpop.f32.mrf.mxu0
    %v9841 = vpop.f32.mrf.mxu0
    %v9842 = vadd.f32 %v9305, %v9841
    %v9843 = vpop.f32.mrf.mxu0
    %9844 = vmatprep.mubr.bf16.mxu0 %v8523
    %9845 = vmatmul.mubr.bf16.gmra.mxu0 %v8522
    %v9846 = vpop.f32.mrf.mxu0
    %v9847 = vadd.f32 %v9310, %v9846
    %v9848 = vpop.f32.mrf.mxu0
    %v9849 = vpop.f32.mrf.mxu0
    %v9850 = vadd.f32 %v9313, %v9849
    %v9851 = vpop.f32.mrf.mxu0
    %9852 = vmatprep.mubr.bf16.mxu0 %v8527
    %9853 = vmatmul.mubr.bf16.gmra.mxu0 %v8526
    %v9854 = vpop.f32.mrf.mxu0
    %v9855 = vadd.f32 %v9318, %v9854
    %v9856 = vpop.f32.mrf.mxu0
    %v9857 = vpop.f32.mrf.mxu0
    %v9858 = vadd.f32 %v9321, %v9857
    %v9859 = vpop.f32.mrf.mxu0
    %9860 = vmatprep.mubr.bf16.mxu0 %v8531
    %9861 = vmatmul.mubr.bf16.gmra.mxu0 %v8530
    %v9862 = vpop.f32.mrf.mxu0
    %v9863 = vadd.f32 %v9326, %v9862
    %v9864 = vpop.f32.mrf.mxu0
    %v9865 = vpop.f32.mrf.mxu0
    %v9866 = vadd.f32 %v9329, %v9865
    %v9867 = vpop.f32.mrf.mxu0
    %9868 = vdwg.mxu0
    %v9869 = vlaneseq
    %v9870 = vand.u32 %v9869, 127
    %vm9871 = vcmp.ge.s32.totalorder %v9870, 32
    %v9872 = vmul.f32 %v9367, 0.5
    %v9873 = vmul.f32 %v9370, 0.5
    %v9874 = vmul.f32 %v9375, 0.5
    %v9875 = vmul.f32 %v9378, 0.5
    %v9876 = vmul.f32 %v9383, 0.5
    %v9877 = vmul.f32 %v9386, 0.5
    %v9878 = vmul.f32 %v9391, 0.5
    %v9879 = vmul.f32 %v9394, 0.5
    %v9880 = vmul.f32 %v9399, 0.5
    %v9881 = vmul.f32 %v9402, 0.5
    %v9882 = vmul.f32 %v9407, 0.5
    %v9883 = vmul.f32 %v9410, 0.5
    %v9884 = vmul.f32 %v9415, 0.5
    %v9885 = vmul.f32 %v9418, 0.5
    %v9886 = vmul.f32 %v9423, 0.5
    %v9887 = vmul.f32 %v9426, 0.5
    %v9888 = vmul.f32 %v9431, 0.5
    %v9889 = vmul.f32 %v9434, 0.5
    %v9890 = vmul.f32 %v9439, 0.5
    %v9891 = vmul.f32 %v9442, 0.5
    %v9892 = vmul.f32 %v9447, 0.5
    %v9893 = vmul.f32 %v9450, 0.5
    %v9894 = vmul.f32 %v9455, 0.5
    %v9895 = vmul.f32 %v9458, 0.5
    %v9896 = vmul.f32 %v9463, 0.5
    %v9897 = vmul.f32 %v9466, 0.5
    %v9898 = vmul.f32 %v9471, 0.5
    %v9899 = vmul.f32 %v9474, 0.5
    %v9900 = vmul.f32 %v9479, 0.5
    %v9901 = vmul.f32 %v9482, 0.5
    %v9902 = vmul.f32 %v9487, 0.5
    %v9903 = vmul.f32 %v9490, 0.5
    %v9904 = vmul.f32 %v9495, 0.5
    %v9905 = vmul.f32 %v9498, 0.5
    %v9906 = vmul.f32 %v9503, 0.5
    %v9907 = vmul.f32 %v9506, 0.5
    %v9908 = vmul.f32 %v9511, 0.5
    %v9909 = vmul.f32 %v9514, 0.5
    %v9910 = vmul.f32 %v9519, 0.5
    %v9911 = vmul.f32 %v9522, 0.5
    %v9912 = vmul.f32 %v9527, 0.5
    %v9913 = vmul.f32 %v9530, 0.5
    %v9914 = vmul.f32 %v9535, 0.5
    %v9915 = vmul.f32 %v9538, 0.5
    %v9916 = vmul.f32 %v9543, 0.5
    %v9917 = vmul.f32 %v9546, 0.5
    %v9918 = vmul.f32 %v9551, 0.5
    %v9919 = vmul.f32 %v9554, 0.5
    %v9920 = vmul.f32 %v9559, 0.5
    %v9921 = vmul.f32 %v9562, 0.5
    %v9922 = vmul.f32 %v9567, 0.5
    %v9923 = vmul.f32 %v9570, 0.5
    %v9924 = vmul.f32 %v9575, 0.5
    %v9925 = vmul.f32 %v9578, 0.5
    %v9926 = vmul.f32 %v9583, 0.5
    %v9927 = vmul.f32 %v9586, 0.5
    %v9928 = vmul.f32 %v9591, 0.5
    %v9929 = vmul.f32 %v9594, 0.5
    %v9930 = vmul.f32 %v9599, 0.5
    %v9931 = vmul.f32 %v9602, 0.5
    %v9932 = vmul.f32 %v9607, 0.5
    %v9933 = vmul.f32 %v9610, 0.5
    %v9934 = vmul.f32 %v9615, 0.5
    %v9935 = vmul.f32 %v9618, 0.5
    %v9936 = vmul.f32 %v9623, 0.5
    %v9937 = vmul.f32 %v9626, 0.5
    %v9938 = vmul.f32 %v9631, 0.5
    %v9939 = vmul.f32 %v9634, 0.5
    %v9940 = vmul.f32 %v9639, 0.5
    %v9941 = vmul.f32 %v9642, 0.5
    %v9942 = vmul.f32 %v9647, 0.5
    %v9943 = vmul.f32 %v9650, 0.5
    %v9944 = vmul.f32 %v9655, 0.5
    %v9945 = vmul.f32 %v9658, 0.5
    %v9946 = vmul.f32 %v9663, 0.5
    %v9947 = vmul.f32 %v9666, 0.5
    %v9948 = vmul.f32 %v9671, 0.5
    %v9949 = vmul.f32 %v9674, 0.5
    %v9950 = vmul.f32 %v9679, 0.5
    %v9951 = vmul.f32 %v9682, 0.5
    %v9952 = vmul.f32 %v9687, 0.5
    %v9953 = vmul.f32 %v9690, 0.5
    %v9954 = vmul.f32 %v9695, 0.5
    %v9955 = vmul.f32 %v9698, 0.5
    %v9956 = vmul.f32 %v9703, 0.5
    %v9957 = vmul.f32 %v9706, 0.5
    %v9958 = vmul.f32 %v9711, 0.5
    %v9959 = vmul.f32 %v9714, 0.5
    %v9960 = vmul.f32 %v9719, 0.5
    %v9961 = vmul.f32 %v9722, 0.5
    %v9962 = vmul.f32 %v9727, 0.5
    %v9963 = vmul.f32 %v9730, 0.5
    %v9964 = vmul.f32 %v9735, 0.5
    %v9965 = vmul.f32 %v9738, 0.5
    %v9966 = vmul.f32 %v9743, 0.5
    %v9967 = vmul.f32 %v9746, 0.5
    %v9968 = vmul.f32 %v9751, 0.5
    %v9969 = vmul.f32 %v9754, 0.5
    %v9970 = vmul.f32 %v9759, 0.5
    %v9971 = vmul.f32 %v9762, 0.5
    %v9972 = vmul.f32 %v9767, 0.5
    %v9973 = vmul.f32 %v9770, 0.5
    %v9974 = vmul.f32 %v9775, 0.5
    %v9975 = vmul.f32 %v9778, 0.5
    %v9976 = vmul.f32 %v9783, 0.5
    %v9977 = vmul.f32 %v9786, 0.5
    %v9978 = vmul.f32 %v9791, 0.5
    %v9979 = vmul.f32 %v9794, 0.5
    %v9980 = vmul.f32 %v9799, 0.5
    %v9981 = vmul.f32 %v9802, 0.5
    %v9982 = vmul.f32 %v9807, 0.5
    %v9983 = vmul.f32 %v9810, 0.5
    %v9984 = vmul.f32 %v9815, 0.5
    %v9985 = vmul.f32 %v9818, 0.5
    %v9986 = vmul.f32 %v9823, 0.5
    %v9987 = vmul.f32 %v9826, 0.5
    %v9988 = vmul.f32 %v9831, 0.5
    %v9989 = vmul.f32 %v9834, 0.5
    %v9990 = vmul.f32 %v9839, 0.5
    %v9991 = vmul.f32 %v9842, 0.5
    %v9992 = vmul.f32 %v9847, 0.5
    %v9993 = vmul.f32 %v9850, 0.5
    %v9994 = vmul.f32 %v9855, 0.5
    %v9995 = vmul.f32 %v9858, 0.5
    %v9996 = vmul.f32 %v9863, 0.5
    %v9997 = vmul.f32 %v9866, 0.5
    %v9998 = vmul.f32 %v9872, 1.442695
    %v9999 = vpow.pop %v9998
    %v10000 = vmul.f32 %v9873, 1.442695
    %v10001 = vpow.pop %v10000
    %v10002 = vmul.f32 %v9874, 1.442695
    %v10003 = vpow.pop %v10002
    %v10004 = vmul.f32 %v9875, 1.442695
    %v10005 = vpow.pop %v10004
    %v10006 = vmul.f32 %v9876, 1.442695
    %v10007 = vpow.pop %v10006
    %v10008 = vmul.f32 %v9877, 1.442695
    %v10009 = vpow.pop %v10008
    %v10010 = vmul.f32 %v9878, 1.442695
    %v10011 = vpow.pop %v10010
    %v10012 = vmul.f32 %v9879, 1.442695
    %v10013 = vpow.pop %v10012
    %v10014 = vmul.f32 %v9880, 1.442695
    %v10015 = vpow.pop %v10014
    %v10016 = vmul.f32 %v9881, 1.442695
    %v10017 = vpow.pop %v10016
    %v10018 = vmul.f32 %v9882, 1.442695
    %v10019 = vpow.pop %v10018
    %v10020 = vmul.f32 %v9883, 1.442695
    %v10021 = vpow.pop %v10020
    %v10022 = vmul.f32 %v9884, 1.442695
    %v10023 = vpow.pop %v10022
    %v10024 = vmul.f32 %v9885, 1.442695
    %v10025 = vpow.pop %v10024
    %v10026 = vmul.f32 %v9886, 1.442695
    %v10027 = vpow.pop %v10026
    %v10028 = vmul.f32 %v9887, 1.442695
    %v10029 = vpow.pop %v10028
    %v10030 = vmul.f32 %v9888, 1.442695
    %v10031 = vpow.pop %v10030
    %v10032 = vmul.f32 %v9889, 1.442695
    %v10033 = vpow.pop %v10032
    %v10034 = vmul.f32 %v9890, 1.442695
    %v10035 = vpow.pop %v10034
    %v10036 = vmul.f32 %v9891, 1.442695
    %v10037 = vpow.pop %v10036
    %v10038 = vmul.f32 %v9892, 1.442695
    %v10039 = vpow.pop %v10038
    %v10040 = vmul.f32 %v9893, 1.442695
    %v10041 = vpow.pop %v10040
    %v10042 = vmul.f32 %v9894, 1.442695
    %v10043 = vpow.pop %v10042
    %v10044 = vmul.f32 %v9895, 1.442695
    %v10045 = vpow.pop %v10044
    %v10046 = vmul.f32 %v9896, 1.442695
    %v10047 = vpow.pop %v10046
    %v10048 = vmul.f32 %v9897, 1.442695
    %v10049 = vpow.pop %v10048
    %v10050 = vmul.f32 %v9898, 1.442695
    %v10051 = vpow.pop %v10050
    %v10052 = vmul.f32 %v9899, 1.442695
    %v10053 = vpow.pop %v10052
    %v10054 = vmul.f32 %v9900, 1.442695
    %v10055 = vpow.pop %v10054
    %v10056 = vmul.f32 %v9901, 1.442695
    %v10057 = vpow.pop %v10056
    %v10058 = vmul.f32 %v9902, 1.442695
    %v10059 = vpow.pop %v10058
    %v10060 = vmul.f32 %v9903, 1.442695
    %v10061 = vpow.pop %v10060
    %v10062 = vmul.f32 %v9904, 1.442695
    %v10063 = vpow.pop %v10062
    %v10064 = vmul.f32 %v9905, 1.442695
    %v10065 = vpow.pop %v10064
    %v10066 = vmul.f32 %v9906, 1.442695
    %v10067 = vpow.pop %v10066
    %v10068 = vmul.f32 %v9907, 1.442695
    %v10069 = vpow.pop %v10068
    %v10070 = vmul.f32 %v9908, 1.442695
    %v10071 = vpow.pop %v10070
    %v10072 = vmul.f32 %v9909, 1.442695
    %v10073 = vpow.pop %v10072
    %v10074 = vmul.f32 %v9910, 1.442695
    %v10075 = vpow.pop %v10074
    %v10076 = vmul.f32 %v9911, 1.442695
    %v10077 = vpow.pop %v10076
    %v10078 = vmul.f32 %v9912, 1.442695
    %v10079 = vpow.pop %v10078
    %v10080 = vmul.f32 %v9913, 1.442695
    %v10081 = vpow.pop %v10080
    %v10082 = vmul.f32 %v9914, 1.442695
    %v10083 = vpow.pop %v10082
    %v10084 = vmul.f32 %v9915, 1.442695
    %v10085 = vpow.pop %v10084
    %v10086 = vmul.f32 %v9916, 1.442695
    %v10087 = vpow.pop %v10086
    %v10088 = vmul.f32 %v9917, 1.442695
    %v10089 = vpow.pop %v10088
    %v10090 = vmul.f32 %v9918, 1.442695
    %v10091 = vpow.pop %v10090
    %v10092 = vmul.f32 %v9919, 1.442695
    %v10093 = vpow.pop %v10092
    %v10094 = vmul.f32 %v9920, 1.442695
    %v10095 = vpow.pop %v10094
    %v10096 = vmul.f32 %v9921, 1.442695
    %v10097 = vpow.pop %v10096
    %v10098 = vmul.f32 %v9922, 1.442695
    %v10099 = vpow.pop %v10098
    %v10100 = vmul.f32 %v9923, 1.442695
    %v10101 = vpow.pop %v10100
    %v10102 = vmul.f32 %v9924, 1.442695
    %v10103 = vpow.pop %v10102
    %v10104 = vmul.f32 %v9925, 1.442695
    %v10105 = vpow.pop %v10104
    %v10106 = vmul.f32 %v9926, 1.442695
    %v10107 = vpow.pop %v10106
    %v10108 = vmul.f32 %v9927, 1.442695
    %v10109 = vpow.pop %v10108
    %v10110 = vmul.f32 %v9928, 1.442695
    %v10111 = vpow.pop %v10110
    %v10112 = vmul.f32 %v9929, 1.442695
    %v10113 = vpow.pop %v10112
    %v10114 = vmul.f32 %v9930, 1.442695
    %v10115 = vpow.pop %v10114
    %v10116 = vmul.f32 %v9931, 1.442695
    %v10117 = vpow.pop %v10116
    %v10118 = vmul.f32 %v9932, 1.442695
    %v10119 = vpow.pop %v10118
    %v10120 = vmul.f32 %v9933, 1.442695
    %v10121 = vpow.pop %v10120
    %v10122 = vmul.f32 %v9934, 1.442695
    %v10123 = vpow.pop %v10122
    %v10124 = vmul.f32 %v9935, 1.442695
    %v10125 = vpow.pop %v10124
    %v10126 = vmul.f32 %v9936, 1.442695
    %v10127 = vpow.pop %v10126
    %v10128 = vmul.f32 %v9937, 1.442695
    %v10129 = vpow.pop %v10128
    %v10130 = vmul.f32 %v9938, 1.442695
    %v10131 = vpow.pop %v10130
    %v10132 = vmul.f32 %v9939, 1.442695
    %v10133 = vpow.pop %v10132
    %v10134 = vmul.f32 %v9940, 1.442695
    %v10135 = vpow.pop %v10134
    %v10136 = vmul.f32 %v9941, 1.442695
    %v10137 = vpow.pop %v10136
    %v10138 = vmul.f32 %v9942, 1.442695
    %v10139 = vpow.pop %v10138
    %v10140 = vmul.f32 %v9943, 1.442695
    %v10141 = vpow.pop %v10140
    %v10142 = vmul.f32 %v9944, 1.442695
    %v10143 = vpow.pop %v10142
    %v10144 = vmul.f32 %v9945, 1.442695
    %v10145 = vpow.pop %v10144
    %v10146 = vmul.f32 %v9946, 1.442695
    %v10147 = vpow.pop %v10146
    %v10148 = vmul.f32 %v9947, 1.442695
    %v10149 = vpow.pop %v10148
    %v10150 = vmul.f32 %v9948, 1.442695
    %v10151 = vpow.pop %v10150
    %v10152 = vmul.f32 %v9949, 1.442695
    %v10153 = vpow.pop %v10152
    %v10154 = vmul.f32 %v9950, 1.442695
    %v10155 = vpow.pop %v10154
    %v10156 = vmul.f32 %v9951, 1.442695
    %v10157 = vpow.pop %v10156
    %v10158 = vmul.f32 %v9952, 1.442695
    %v10159 = vpow.pop %v10158
    %v10160 = vmul.f32 %v9953, 1.442695
    %v10161 = vpow.pop %v10160
    %v10162 = vmul.f32 %v9954, 1.442695
    %v10163 = vpow.pop %v10162
    %v10164 = vmul.f32 %v9955, 1.442695
    %v10165 = vpow.pop %v10164
    %v10166 = vmul.f32 %v9956, 1.442695
    %v10167 = vpow.pop %v10166
    %v10168 = vmul.f32 %v9957, 1.442695
    %v10169 = vpow.pop %v10168
    %v10170 = vmul.f32 %v9958, 1.442695
    %v10171 = vpow.pop %v10170
    %v10172 = vmul.f32 %v9959, 1.442695
    %v10173 = vpow.pop %v10172
    %v10174 = vmul.f32 %v9960, 1.442695
    %v10175 = vpow.pop %v10174
    %v10176 = vmul.f32 %v9961, 1.442695
    %v10177 = vpow.pop %v10176
    %v10178 = vmul.f32 %v9962, 1.442695
    %v10179 = vpow.pop %v10178
    %v10180 = vmul.f32 %v9963, 1.442695
    %v10181 = vpow.pop %v10180
    %v10182 = vmul.f32 %v9964, 1.442695
    %v10183 = vpow.pop %v10182
    %v10184 = vmul.f32 %v9965, 1.442695
    %v10185 = vpow.pop %v10184
    %v10186 = vmul.f32 %v9966, 1.442695
    %v10187 = vpow.pop %v10186
    %v10188 = vmul.f32 %v9967, 1.442695
    %v10189 = vpow.pop %v10188
    %v10190 = vmul.f32 %v9968, 1.442695
    %v10191 = vpow.pop %v10190
    %v10192 = vmul.f32 %v9969, 1.442695
    %v10193 = vpow.pop %v10192
    %v10194 = vmul.f32 %v9970, 1.442695
    %v10195 = vpow.pop %v10194
    %v10196 = vmul.f32 %v9971, 1.442695
    %v10197 = vpow.pop %v10196
    %v10198 = vmul.f32 %v9972, 1.442695
    %v10199 = vpow.pop %v10198
    %v10200 = vmul.f32 %v9973, 1.442695
    %v10201 = vpow.pop %v10200
    %v10202 = vmul.f32 %v9974, 1.442695
    %v10203 = vpow.pop %v10202
    %v10204 = vmul.f32 %v9975, 1.442695
    %v10205 = vpow.pop %v10204
    %v10206 = vmul.f32 %v9976, 1.442695
    %v10207 = vpow.pop %v10206
    %v10208 = vmul.f32 %v9977, 1.442695
    %v10209 = vpow.pop %v10208
    %v10210 = vmul.f32 %v9978, 1.442695
    %v10211 = vpow.pop %v10210
    %v10212 = vmul.f32 %v9979, 1.442695
    %v10213 = vpow.pop %v10212
    %v10214 = vmul.f32 %v9980, 1.442695
    %v10215 = vpow.pop %v10214
    %v10216 = vmul.f32 %v9981, 1.442695
    %v10217 = vpow.pop %v10216
    %v10218 = vmul.f32 %v9982, 1.442695
    %v10219 = vpow.pop %v10218
    %v10220 = vmul.f32 %v9983, 1.442695
    %v10221 = vpow.pop %v10220
    %v10222 = vmul.f32 %v9984, 1.442695
    %v10223 = vpow.pop %v10222
    %v10224 = vmul.f32 %v9985, 1.442695
    %v10225 = vpow.pop %v10224
    %v10226 = vmul.f32 %v9986, 1.442695
    %v10227 = vpow.pop %v10226
    %v10228 = vmul.f32 %v9987, 1.442695
    %v10229 = vpow.pop %v10228
    %v10230 = vmul.f32 %v9988, 1.442695
    %v10231 = vpow.pop %v10230
    %v10232 = vmul.f32 %v9989, 1.442695
    %v10233 = vpow.pop %v10232
    %v10234 = vmul.f32 %v9990, 1.442695
    %v10235 = vpow.pop %v10234
    %v10236 = vmul.f32 %v9991, 1.442695
    %v10237 = vpow.pop %v10236
    %v10238 = vmul.f32 %v9992, 1.442695
    %v10239 = vpow.pop %v10238
    %v10240 = vmul.f32 %v9993, 1.442695
    %v10241 = vpow.pop %v10240
    %v10242 = vmul.f32 %v9994, 1.442695
    %v10243 = vpow.pop %v10242
    %v10244 = vmul.f32 %v9995, 1.442695
    %v10245 = vpow.pop %v10244
    %v10246 = vmul.f32 %v9996, 1.442695
    %v10247 = vpow.pop %v10246
    %v10248 = vmul.f32 %v9997, 1.442695
    %v10249 = vpow.pop %v10248
    %v10250 = vsel %vm9871, 1, 0
    %vm10251 = vcmp.eq.s32.totalorder %v10250, 1
    %v10252 = vsel %vm10251, %v9999, %v9367
    %v10253 = vsel %vm10251, %v10001, %v9370
    %v10254 = vsel %vm10251, %v10003, %v9375
    %v10255 = vsel %vm10251, %v10005, %v9378
    %v10256 = vsel %vm10251, %v10007, %v9383
    %v10257 = vsel %vm10251, %v10009, %v9386
    %v10258 = vsel %vm10251, %v10011, %v9391
    %v10259 = vsel %vm10251, %v10013, %v9394
    %v10260 = vsel %vm10251, %v10015, %v9399
    %v10261 = vsel %vm10251, %v10017, %v9402
    %v10262 = vsel %vm10251, %v10019, %v9407
    %v10263 = vsel %vm10251, %v10021, %v9410
    %v10264 = vsel %vm10251, %v10023, %v9415
    %v10265 = vsel %vm10251, %v10025, %v9418
    %v10266 = vsel %vm10251, %v10027, %v9423
    %v10267 = vsel %vm10251, %v10029, %v9426
    %v10268 = vsel %vm10251, %v10031, %v9431
    %v10269 = vsel %vm10251, %v10033, %v9434
    %v10270 = vsel %vm10251, %v10035, %v9439
    %v10271 = vsel %vm10251, %v10037, %v9442
    %v10272 = vsel %vm10251, %v10039, %v9447
    %v10273 = vsel %vm10251, %v10041, %v9450
    %v10274 = vsel %vm10251, %v10043, %v9455
    %v10275 = vsel %vm10251, %v10045, %v9458
    %v10276 = vsel %vm10251, %v10047, %v9463
    %v10277 = vsel %vm10251, %v10049, %v9466
    %v10278 = vsel %vm10251, %v10051, %v9471
    %v10279 = vsel %vm10251, %v10053, %v9474
    %v10280 = vsel %vm10251, %v10055, %v9479
    %v10281 = vsel %vm10251, %v10057, %v9482
    %v10282 = vsel %vm10251, %v10059, %v9487
    %v10283 = vsel %vm10251, %v10061, %v9490
    %v10284 = vsel %vm10251, %v10063, %v9495
    %v10285 = vsel %vm10251, %v10065, %v9498
    %v10286 = vsel %vm10251, %v10067, %v9503
    %v10287 = vsel %vm10251, %v10069, %v9506
    %v10288 = vsel %vm10251, %v10071, %v9511
    %v10289 = vsel %vm10251, %v10073, %v9514
    %v10290 = vsel %vm10251, %v10075, %v9519
    %v10291 = vsel %vm10251, %v10077, %v9522
    %v10292 = vsel %vm10251, %v10079, %v9527
    %v10293 = vsel %vm10251, %v10081, %v9530
    %v10294 = vsel %vm10251, %v10083, %v9535
    %v10295 = vsel %vm10251, %v10085, %v9538
    %v10296 = vsel %vm10251, %v10087, %v9543
    %v10297 = vsel %vm10251, %v10089, %v9546
    %v10298 = vsel %vm10251, %v10091, %v9551
    %v10299 = vsel %vm10251, %v10093, %v9554
    %v10300 = vsel %vm10251, %v10095, %v9559
    %v10301 = vsel %vm10251, %v10097, %v9562
    %v10302 = vsel %vm10251, %v10099, %v9567
    %v10303 = vsel %vm10251, %v10101, %v9570
    %v10304 = vsel %vm10251, %v10103, %v9575
    %v10305 = vsel %vm10251, %v10105, %v9578
    %v10306 = vsel %vm10251, %v10107, %v9583
    %v10307 = vsel %vm10251, %v10109, %v9586
    %v10308 = vsel %vm10251, %v10111, %v9591
    %v10309 = vsel %vm10251, %v10113, %v9594
    %v10310 = vsel %vm10251, %v10115, %v9599
    %v10311 = vsel %vm10251, %v10117, %v9602
    %v10312 = vsel %vm10251, %v10119, %v9607
    %v10313 = vsel %vm10251, %v10121, %v9610
    %v10314 = vsel %vm10251, %v10123, %v9615
    %v10315 = vsel %vm10251, %v10125, %v9618
    %v10316 = vsel %vm10251, %v10127, %v9623
    %v10317 = vsel %vm10251, %v10129, %v9626
    %v10318 = vsel %vm10251, %v10131, %v9631
    %v10319 = vsel %vm10251, %v10133, %v9634
    %v10320 = vsel %vm10251, %v10135, %v9639
    %v10321 = vsel %vm10251, %v10137, %v9642
    %v10322 = vsel %vm10251, %v10139, %v9647
    %v10323 = vsel %vm10251, %v10141, %v9650
    %v10324 = vsel %vm10251, %v10143, %v9655
    %v10325 = vsel %vm10251, %v10145, %v9658
    %v10326 = vsel %vm10251, %v10147, %v9663
    %v10327 = vsel %vm10251, %v10149, %v9666
    %v10328 = vsel %vm10251, %v10151, %v9671
    %v10329 = vsel %vm10251, %v10153, %v9674
    %v10330 = vsel %vm10251, %v10155, %v9679
    %v10331 = vsel %vm10251, %v10157, %v9682
    %v10332 = vsel %vm10251, %v10159, %v9687
    %v10333 = vsel %vm10251, %v10161, %v9690
    %v10334 = vsel %vm10251, %v10163, %v9695
    %v10335 = vsel %vm10251, %v10165, %v9698
    %v10336 = vsel %vm10251, %v10167, %v9703
    %v10337 = vsel %vm10251, %v10169, %v9706
    %v10338 = vsel %vm10251, %v10171, %v9711
    %v10339 = vsel %vm10251, %v10173, %v9714
    %v10340 = vsel %vm10251, %v10175, %v9719
    %v10341 = vsel %vm10251, %v10177, %v9722
    %v10342 = vsel %vm10251, %v10179, %v9727
    %v10343 = vsel %vm10251, %v10181, %v9730
    %v10344 = vsel %vm10251, %v10183, %v9735
    %v10345 = vsel %vm10251, %v10185, %v9738
    %v10346 = vsel %vm10251, %v10187, %v9743
    %v10347 = vsel %vm10251, %v10189, %v9746
    %v10348 = vsel %vm10251, %v10191, %v9751
    %v10349 = vsel %vm10251, %v10193, %v9754
    %v10350 = vsel %vm10251, %v10195, %v9759
    %v10351 = vsel %vm10251, %v10197, %v9762
    %v10352 = vsel %vm10251, %v10199, %v9767
    %v10353 = vsel %vm10251, %v10201, %v9770
    %v10354 = vsel %vm10251, %v10203, %v9775
    %v10355 = vsel %vm10251, %v10205, %v9778
    %v10356 = vsel %vm10251, %v10207, %v9783
    %v10357 = vsel %vm10251, %v10209, %v9786
    %v10358 = vsel %vm10251, %v10211, %v9791
    %v10359 = vsel %vm10251, %v10213, %v9794
    %v10360 = vsel %vm10251, %v10215, %v9799
    %v10361 = vsel %vm10251, %v10217, %v9802
    %v10362 = vsel %vm10251, %v10219, %v9807
    %v10363 = vsel %vm10251, %v10221, %v9810
    %v10364 = vsel %vm10251, %v10223, %v9815
    %v10365 = vsel %vm10251, %v10225, %v9818
    %v10366 = vsel %vm10251, %v10227, %v9823
    %v10367 = vsel %vm10251, %v10229, %v9826
    %v10368 = vsel %vm10251, %v10231, %v9831
    %v10369 = vsel %vm10251, %v10233, %v9834
    %v10370 = vsel %vm10251, %v10235, %v9839
    %v10371 = vsel %vm10251, %v10237, %v9842
    %v10372 = vsel %vm10251, %v10239, %v9847
    %v10373 = vsel %vm10251, %v10241, %v9850
    %v10374 = vsel %vm10251, %v10243, %v9855
    %v10375 = vsel %vm10251, %v10245, %v9858
    %v10376 = vsel %vm10251, %v10247, %v9863
    %v10377 = vsel %vm10251, %v10249, %v9866
    %10378 = vst [vmem:[#allocation2] sm:$0xff] %v10252
    %10379 = vst [vmem:[#allocation2 + $0x8] sm:$0xff] %v10253
    %10380 = vst [vmem:[#allocation2 + $0x10] sm:$0xff] %v10254
    %10381 = vst [vmem:[#allocation2 + $0x18] sm:$0xff] %v10255
    %10382 = vst [vmem:[#allocation2 + $0x20] sm:$0xff] %v10256
    %10383 = vst [vmem:[#allocation2 + $0x28] sm:$0xff] %v10257
    %10384 = vst [vmem:[#allocation2 + $0x30] sm:$0xff] %v10258
    %10385 = vst [vmem:[#allocation2 + $0x38] sm:$0xff] %v10259
    %10386 = vst [vmem:[#allocation2 + $0x40] sm:$0xff] %v10260
    %10387 = vst [vmem:[#allocation2 + $0x48] sm:$0xff] %v10261
    %10388 = vst [vmem:[#allocation2 + $0x50] sm:$0xff] %v10262
    %10389 = vst [vmem:[#allocation2 + $0x58] sm:$0xff] %v10263
    %10390 = vst [vmem:[#allocation2 + $0x60] sm:$0xff] %v10264
    %10391 = vst [vmem:[#allocation2 + $0x68] sm:$0xff] %v10265
    %10392 = vst [vmem:[#allocation2 + $0x70] sm:$0xff] %v10266
    %10393 = vst [vmem:[#allocation2 + $0x78] sm:$0xff] %v10267
    %10394 = vst [vmem:[#allocation2 + $0x80] sm:$0xff] %v10268
    %10395 = vst [vmem:[#allocation2 + $0x88] sm:$0xff] %v10269
    %10396 = vst [vmem:[#allocation2 + $0x90] sm:$0xff] %v10270
    %10397 = vst [vmem:[#allocation2 + $0x98] sm:$0xff] %v10271
    %10398 = vst [vmem:[#allocation2 + $0xa0] sm:$0xff] %v10272
    %10399 = vst [vmem:[#allocation2 + $0xa8] sm:$0xff] %v10273
    %10400 = vst [vmem:[#allocation2 + $0xb0] sm:$0xff] %v10274
    %10401 = vst [vmem:[#allocation2 + $0xb8] sm:$0xff] %v10275
    %10402 = vst [vmem:[#allocation2 + $0xc0] sm:$0xff] %v10276
    %10403 = vst [vmem:[#allocation2 + $0xc8] sm:$0xff] %v10277
    %10404 = vst [vmem:[#allocation2 + $0xd0] sm:$0xff] %v10278
    %10405 = vst [vmem:[#allocation2 + $0xd8] sm:$0xff] %v10279
    %10406 = vst [vmem:[#allocation2 + $0xe0] sm:$0xff] %v10280
    %10407 = vst [vmem:[#allocation2 + $0xe8] sm:$0xff] %v10281
    %10408 = vst [vmem:[#allocation2 + $0xf0] sm:$0xff] %v10282
    %10409 = vst [vmem:[#allocation2 + $0xf8] sm:$0xff] %v10283
    %10410 = vst [vmem:[#allocation2 + $0x100] sm:$0xff] %v10284
    %10411 = vst [vmem:[#allocation2 + $0x108] sm:$0xff] %v10285
    %10412 = vst [vmem:[#allocation2 + $0x110] sm:$0xff] %v10286
    %10413 = vst [vmem:[#allocation2 + $0x118] sm:$0xff] %v10287
    %10414 = vst [vmem:[#allocation2 + $0x120] sm:$0xff] %v10288
    %10415 = vst [vmem:[#allocation2 + $0x128] sm:$0xff] %v10289
    %10416 = vst [vmem:[#allocation2 + $0x130] sm:$0xff] %v10290
    %10417 = vst [vmem:[#allocation2 + $0x138] sm:$0xff] %v10291
    %10418 = vst [vmem:[#allocation2 + $0x140] sm:$0xff] %v10292
    %10419 = vst [vmem:[#allocation2 + $0x148] sm:$0xff] %v10293
    %10420 = vst [vmem:[#allocation2 + $0x150] sm:$0xff] %v10294
    %10421 = vst [vmem:[#allocation2 + $0x158] sm:$0xff] %v10295
    %10422 = vst [vmem:[#allocation2 + $0x160] sm:$0xff] %v10296
    %10423 = vst [vmem:[#allocation2 + $0x168] sm:$0xff] %v10297
    %10424 = vst [vmem:[#allocation2 + $0x170] sm:$0xff] %v10298
    %10425 = vst [vmem:[#allocation2 + $0x178] sm:$0xff] %v10299
    %10426 = vst [vmem:[#allocation2 + $0x180] sm:$0xff] %v10300
    %10427 = vst [vmem:[#allocation2 + $0x188] sm:$0xff] %v10301
    %10428 = vst [vmem:[#allocation2 + $0x190] sm:$0xff] %v10302
    %10429 = vst [vmem:[#allocation2 + $0x198] sm:$0xff] %v10303
    %10430 = vst [vmem:[#allocation2 + $0x1a0] sm:$0xff] %v10304
    %10431 = vst [vmem:[#allocation2 + $0x1a8] sm:$0xff] %v10305
    %10432 = vst [vmem:[#allocation2 + $0x1b0] sm:$0xff] %v10306
    %10433 = vst [vmem:[#allocation2 + $0x1b8] sm:$0xff] %v10307
    %10434 = vst [vmem:[#allocation2 + $0x1c0] sm:$0xff] %v10308
    %10435 = vst [vmem:[#allocation2 + $0x1c8] sm:$0xff] %v10309
    %10436 = vst [vmem:[#allocation2 + $0x1d0] sm:$0xff] %v10310
    %10437 = vst [vmem:[#allocation2 + $0x1d8] sm:$0xff] %v10311
    %10438 = vst [vmem:[#allocation2 + $0x1e0] sm:$0xff] %v10312
    %10439 = vst [vmem:[#allocation2 + $0x1e8] sm:$0xff] %v10313
    %10440 = vst [vmem:[#allocation2 + $0x1f0] sm:$0xff] %v10314
    %10441 = vst [vmem:[#allocation2 + $0x1f8] sm:$0xff] %v10315
    %10442 = vst [vmem:[#allocation2 + $0x200] sm:$0xff] %v10316
    %10443 = vst [vmem:[#allocation2 + $0x208] sm:$0xff] %v10317
    %10444 = vst [vmem:[#allocation2 + $0x210] sm:$0xff] %v10318
    %10445 = vst [vmem:[#allocation2 + $0x218] sm:$0xff] %v10319
    %10446 = vst [vmem:[#allocation2 + $0x220] sm:$0xff] %v10320
    %10447 = vst [vmem:[#allocation2 + $0x228] sm:$0xff] %v10321
    %10448 = vst [vmem:[#allocation2 + $0x230] sm:$0xff] %v10322
    %10449 = vst [vmem:[#allocation2 + $0x238] sm:$0xff] %v10323
    %10450 = vst [vmem:[#allocation2 + $0x240] sm:$0xff] %v10324
    %10451 = vst [vmem:[#allocation2 + $0x248] sm:$0xff] %v10325
    %10452 = vst [vmem:[#allocation2 + $0x250] sm:$0xff] %v10326
    %10453 = vst [vmem:[#allocation2 + $0x258] sm:$0xff] %v10327
    %10454 = vst [vmem:[#allocation2 + $0x260] sm:$0xff] %v10328
    %10455 = vst [vmem:[#allocation2 + $0x268] sm:$0xff] %v10329
    %10456 = vst [vmem:[#allocation2 + $0x270] sm:$0xff] %v10330
    %10457 = vst [vmem:[#allocation2 + $0x278] sm:$0xff] %v10331
    %10458 = vst [vmem:[#allocation2 + $0x280] sm:$0xff] %v10332
    %10459 = vst [vmem:[#allocation2 + $0x288] sm:$0xff] %v10333
    %10460 = vst [vmem:[#allocation2 + $0x290] sm:$0xff] %v10334
    %10461 = vst [vmem:[#allocation2 + $0x298] sm:$0xff] %v10335
    %10462 = vst [vmem:[#allocation2 + $0x2a0] sm:$0xff] %v10336
    %10463 = vst [vmem:[#allocation2 + $0x2a8] sm:$0xff] %v10337
    %10464 = vst [vmem:[#allocation2 + $0x2b0] sm:$0xff] %v10338
    %10465 = vst [vmem:[#allocation2 + $0x2b8] sm:$0xff] %v10339
    %10466 = vst [vmem:[#allocation2 + $0x2c0] sm:$0xff] %v10340
    %10467 = vst [vmem:[#allocation2 + $0x2c8] sm:$0xff] %v10341
    %10468 = vst [vmem:[#allocation2 + $0x2d0] sm:$0xff] %v10342
    %10469 = vst [vmem:[#allocation2 + $0x2d8] sm:$0xff] %v10343
    %10470 = vst [vmem:[#allocation2 + $0x2e0] sm:$0xff] %v10344
    %10471 = vst [vmem:[#allocation2 + $0x2e8] sm:$0xff] %v10345
    %10472 = vst [vmem:[#allocation2 + $0x2f0] sm:$0xff] %v10346
    %10473 = vst [vmem:[#allocation2 + $0x2f8] sm:$0xff] %v10347
    %10474 = vst [vmem:[#allocation2 + $0x300] sm:$0xff] %v10348
    %10475 = vst [vmem:[#allocation2 + $0x308] sm:$0xff] %v10349
    %10476 = vst [vmem:[#allocation2 + $0x310] sm:$0xff] %v10350
    %10477 = vst [vmem:[#allocation2 + $0x318] sm:$0xff] %v10351
    %10478 = vst [vmem:[#allocation2 + $0x320] sm:$0xff] %v10352
    %10479 = vst [vmem:[#allocation2 + $0x328] sm:$0xff] %v10353
    %10480 = vst [vmem:[#allocation2 + $0x330] sm:$0xff] %v10354
    %10481 = vst [vmem:[#allocation2 + $0x338] sm:$0xff] %v10355
    %10482 = vst [vmem:[#allocation2 + $0x340] sm:$0xff] %v10356
    %10483 = vst [vmem:[#allocation2 + $0x348] sm:$0xff] %v10357
    %10484 = vst [vmem:[#allocation2 + $0x350] sm:$0xff] %v10358
    %10485 = vst [vmem:[#allocation2 + $0x358] sm:$0xff] %v10359
    %10486 = vst [vmem:[#allocation2 + $0x360] sm:$0xff] %v10360
    %10487 = vst [vmem:[#allocation2 + $0x368] sm:$0xff] %v10361
    %10488 = vst [vmem:[#allocation2 + $0x370] sm:$0xff] %v10362
    %10489 = vst [vmem:[#allocation2 + $0x378] sm:$0xff] %v10363
    %10490 = vst [vmem:[#allocation2 + $0x380] sm:$0xff] %v10364
    %10491 = vst [vmem:[#allocation2 + $0x388] sm:$0xff] %v10365
    %10492 = vst [vmem:[#allocation2 + $0x390] sm:$0xff] %v10366
    %10493 = vst [vmem:[#allocation2 + $0x398] sm:$0xff] %v10367
    %10494 = vst [vmem:[#allocation2 + $0x3a0] sm:$0xff] %v10368
    %10495 = vst [vmem:[#allocation2 + $0x3a8] sm:$0xff] %v10369
    %10496 = vst [vmem:[#allocation2 + $0x3b0] sm:$0xff] %v10370
    %10497 = vst [vmem:[#allocation2 + $0x3b8] sm:$0xff] %v10371
    %10498 = vst [vmem:[#allocation2 + $0x3c0] sm:$0xff] %v10372
    %10499 = vst [vmem:[#allocation2 + $0x3c8] sm:$0xff] %v10373
    %10500 = vst [vmem:[#allocation2 + $0x3d0] sm:$0xff] %v10374
    %10501 = vst [vmem:[#allocation2 + $0x3d8] sm:$0xff] %v10375
    %10502 = vst [vmem:[#allocation2 + $0x3e0] sm:$0xff] %v10376
    %10503 = vst [vmem:[#allocation2 + $0x3e8] sm:$0xff] %v10377
    // Predicated region
    $region30: #{tpu_custom_call.1} parent=1 // pred_check
      _
    $region31: #{tpu_custom_call.1} parent=1 // pred_check_branch
      %10505 = sbr.rel (0) target = $region33
    $region32: #{tpu_custom_call.1} parent=1 // pred_region
      %s10507 = ssub.s32 16128, 16000
      %10508 = vsyncadd [#allocation3], %s10507
      %s10509 = sshll.u32 [#allocation2], 4
      %s10510 = int_to_ptr.vmem [resolvable:$true] %s10509
      %10515 = dma.vmem_to_hbm [thread:$0]  %s10510, 16000, %s7, [#allocation3], 128, 128, 8
    $region33: #{tpu_custom_call.1} parent=1 // pred_fallthru
      _
    // Predicated region
    $region34: #{tpu_custom_call.1} parent=1 // pred_check
      _
    $region35: #{tpu_custom_call.1} parent=1 // pred_check_branch
      %10517 = sbr.rel (0) target = $region37
    $region36: #{tpu_custom_call.1} parent=1 // pred_region
      %10518 = dma.done [#allocation3], 16128
    $region37: #{tpu_custom_call.1} parent=1 // pred_fallthru
      _
    %10519 = vsyncpa [#allocation3], 1

</llo_original>
